<compile_context>
chip_gen: v7x
topology: tpu7x:2x2x1
jax: 0.10.0
libtpu: 0.0.40
codegen_flags: <defaults>
</compile_context>

<pallas_src>
import functools

import jax
import jax.numpy as jnp
from jax.experimental import pallas as pl
from jax.experimental.pallas import tpu as pltpu


# ----------------------------------------------------------------------------
# Helpers
# ----------------------------------------------------------------------------
def _round_up(v, m):
    return ((v + m - 1) // m) * m


def _padded_tile_bytes(rows, cols, bytes_per_elem):
    """VMEM footprint of a (rows, cols) tile after (8,128) layout padding."""
    return _round_up(max(rows, 1), 8) * _round_up(max(cols, 1), 128) * bytes_per_elem


# ----------------------------------------------------------------------------
# Pallas kernels
# ----------------------------------------------------------------------------
def _mm_bn_act_kernel(*refs, n_pairs, has_residual, relu):
    """sum_p (x_p @ w_p)  ->  *scale + shift  [+ residual]  [ReLU].

    refs = x_0..x_{P-1} (TM, K_p) bf16, w_0..w_{P-1} (K_p, Cout) bf16,
           scale (1, Cout) f32, shift (1, Cout) f32,
           [residual (TM, Cout)], out (TM, Cout).
    """
    o_ref = refs[-1]
    x_refs = refs[:n_pairs]
    w_refs = refs[n_pairs:2 * n_pairs]
    scale_ref = refs[2 * n_pairs]
    shift_ref = refs[2 * n_pairs + 1]

    acc = jnp.dot(x_refs[0][...], w_refs[0][...],
                  preferred_element_type=jnp.float32)
    for p in range(1, n_pairs):
        acc = acc + jnp.dot(x_refs[p][...], w_refs[p][...],
                            preferred_element_type=jnp.float32)

    y = acc * scale_ref[...] + shift_ref[...]
    if has_residual:
        y = y + refs[2 * n_pairs + 2][...].astype(jnp.float32)
    if relu:
        y = jnp.maximum(y, 0.0)
    o_ref[...] = y.astype(o_ref.dtype)


def _tapmax_kernel(x_ref, o_ref):
    """Max-pool: running max over the (leading) tap axis, single grid step.

    x_ref: (T, TM, C), o_ref: (TM, C).
    """
    acc = x_ref[0].astype(jnp.float32)
    for t in range(1, x_ref.shape[0]):
        acc = jnp.maximum(acc, x_ref[t].astype(jnp.float32))
    o_ref[...] = acc.astype(o_ref.dtype)


def _gap_kernel(x_ref, o_ref):
    """Global average pool over spatial dims. x: (1,H,W,C) -> o: (1,1,1,C)."""
    h = x_ref.shape[1]
    w = x_ref.shape[2]
    s = jnp.sum(x_ref[0].astype(jnp.float32), axis=0)      # (W, C)
    s = jnp.sum(s, axis=0, keepdims=True)                   # (1, C)
    o_ref[...] = (s * (1.0 / float(h * w))).reshape(1, 1, 1, -1).astype(o_ref.dtype)


# ----------------------------------------------------------------------------
# Fused matmul + BN + act wrapper (shared by all convs)
# ----------------------------------------------------------------------------
def _matmul_bn_act(pairs, scale, shift, *, relu, residual=None,
                   out_dtype=jnp.float32, tile_m=512):
    """pairs = [(x (M, K_p), w (K_p, Cout)), ...]; output (M, Cout)."""
    m = pairs[0][0].shape[0]
    cout = pairs[0][1].shape[1]

    tm = min(tile_m, _round_up(m, 8))
    m_pad = _round_up(m, tm)

    xs, ws = [], []
    for xp, wp in pairs:
        xb = xp.astype(jnp.bfloat16)
        if m_pad != m:
            xb = jnp.pad(xb, ((0, m_pad - m), (0, 0)))
        xs.append(xb)
        ws.append(wp.astype(jnp.bfloat16))

    inputs = list(xs) + list(ws) + [scale, shift]
    in_specs = ([pl.BlockSpec((tm, xb.shape[1]), lambda i: (i, 0)) for xb in xs]
                + [pl.BlockSpec(tuple(wb.shape), lambda i: (0, 0)) for wb in ws]
                + [pl.BlockSpec((1, cout), lambda i: (0, 0)),
                   pl.BlockSpec((1, cout), lambda i: (0, 0))])

    has_residual = residual is not None
    if has_residual:
        r = residual
        if m_pad != m:
            r = jnp.pad(r, ((0, m_pad - m), (0, 0)))
        inputs.append(r)
        in_specs.append(pl.BlockSpec((tm, cout), lambda i: (i, 0)))

    # Explicit VMEM budget: double-buffered tiles, (8,128) padding, 2x margin.
    est = 0
    for xb in xs:
        est += _padded_tile_bytes(tm, xb.shape[1], 2)
    for wb in ws:
        est += _padded_tile_bytes(wb.shape[0], wb.shape[1], 2)
    est += 2 * _padded_tile_bytes(1, cout, 4)
    if has_residual:
        est += _padded_tile_bytes(tm, cout, 4)
    est += _padded_tile_bytes(tm, cout, jnp.dtype(out_dtype).itemsize)
    vmem_limit = int(min(max(4 * est + (4 << 20), 8 << 20), 64 << 20))

    kernel = functools.partial(_mm_bn_act_kernel, n_pairs=len(pairs),
                               has_residual=has_residual, relu=relu)
    out = pl.pallas_call(
        kernel,
        out_shape=jax.ShapeDtypeStruct((m_pad, cout), out_dtype),
        grid=(m_pad // tm,),
        in_specs=in_specs,
        out_specs=pl.BlockSpec((tm, cout), lambda i: (i, 0)),
        compiler_params=pltpu.CompilerParams(
            dimension_semantics=("parallel",),
            vmem_limit_bytes=vmem_limit),
    )(*inputs)
    if m_pad != m:
        out = out[:m]
    return out


def conv_bn_act(x, w, scale, shift, *, stride=1, pad=0, dil=1, relu=True,
                residual=None):
    """Conv2d + BatchNorm(inference) + optional residual-add + ReLU, NHWC.

    Taps are folded into the contraction dimension: one matmul per M-tile.
    """
    n, h, wd, cin = x.shape
    kh, kw, _, cout = w.shape

    if kh == 1 and kw == 1 and stride == 1 and pad == 0:
        ho, wo = h, wd
        patches = x.reshape(n * ho * wo, cin)
    else:
        xp = jnp.pad(x, ((0, 0), (pad, pad), (pad, pad), (0, 0)))
        hp, wp = h + 2 * pad, wd + 2 * pad
        ho = (hp - dil * (kh - 1) - 1) // stride + 1
        wo = (wp - dil * (kw - 1) - 1) // stride + 1
        # im2col (layout glue): one strided/dilated shift per tap, concatenated
        # along channels -> (M, T*Cin); built once, cast to bf16 in the wrapper.
        taps = []
        for i in range(kh):
            for j in range(kw):
                sl = xp[:, i * dil: i * dil + (ho - 1) * stride + 1: stride,
                           j * dil: j * dil + (wo - 1) * stride + 1: stride, :]
                taps.append(sl)
        patches = jnp.concatenate(taps, axis=-1).reshape(n * ho * wo, kh * kw * cin)

    wk = w.reshape(kh * kw * cin, cout)
    res2d = None
    if residual is not None:
        res2d = residual.reshape(n * ho * wo, cout)

    out2d = _matmul_bn_act([(patches, wk)], scale, shift, relu=relu,
                           residual=res2d, out_dtype=x.dtype)
    return out2d.reshape(n, ho, wo, cout)


def max_pool(x, *, k=3, stride=2, pad=1, tile_m=512):
    """MaxPool2d (floor mode), NHWC. Single grid pass, M tiled."""
    n, h, wd, c = x.shape
    xp = jnp.pad(x, ((0, 0), (pad, pad), (pad, pad), (0, 0)),
                 constant_values=-3.0e38)
    hp, wp = h + 2 * pad, wd + 2 * pad
    ho = (hp - k) // stride + 1
    wo = (wp - k) // stride + 1
    taps = []
    for i in range(k):
        for j in range(k):
            sl = xp[:, i: i + (ho - 1) * stride + 1: stride,
                       j: j + (wo - 1) * stride + 1: stride, :]
            taps.append(sl.reshape(n * ho * wo, c))
    xt = jnp.stack(taps, axis=0)                               # (T, M, C)

    m = n * ho * wo
    t = k * k
    tm = min(tile_m, _round_up(m, 8))
    m_pad = _round_up(m, tm)
    if m_pad != m:
        xt = jnp.pad(xt, ((0, 0), (0, m_pad - m), (0, 0)),
                     constant_values=-3.0e38)

    est = (t + 1) * _padded_tile_bytes(tm, c, 4)
    out = pl.pallas_call(
        _tapmax_kernel,
        out_shape=jax.ShapeDtypeStruct((m_pad, c), x.dtype),
        grid=(m_pad // tm,),
        in_specs=[pl.BlockSpec((t, tm, c), lambda i: (0, i, 0))],
        out_specs=pl.BlockSpec((tm, c), lambda i: (i, 0)),
        compiler_params=pltpu.CompilerParams(
            dimension_semantics=("parallel",),
            vmem_limit_bytes=int(min(max(4 * est + (4 << 20), 8 << 20), 64 << 20))),
    )(xt)
    if m_pad != m:
        out = out[:m]
    return out.reshape(n, ho, wo, c)


def global_avg_pool(x):
    n, h, w, c = x.shape
    return pl.pallas_call(
        _gap_kernel,
        out_shape=jax.ShapeDtypeStruct((n, 1, 1, c), x.dtype),
        grid=(n,),
        in_specs=[pl.BlockSpec((1, h, w, c), lambda i: (i, 0, 0, 0))],
        out_specs=pl.BlockSpec((1, 1, 1, c), lambda i: (i, 0, 0, 0)),
        compiler_params=pltpu.CompilerParams(dimension_semantics=("parallel",)),
    )(x)


# ----------------------------------------------------------------------------
# Deterministic parameter construction
# ----------------------------------------------------------------------------
class _PG:
    def __init__(self, key):
        self._key = key
        self._i = 0

    def take(self):
        self._i += 1
        return jax.random.fold_in(self._key, self._i)


def _conv_params(pg, kh, kw, cin, cout):
    """Conv weight + inference BatchNorm folded to per-channel scale/shift."""
    w = jax.random.normal(pg.take(), (kh, kw, cin, cout), jnp.float32)
    w = w * (1.0 / float(kh * kw * cin) ** 0.5)
    gamma = 1.0 + 0.1 * jax.random.normal(pg.take(), (cout,), jnp.float32)
    beta = 0.1 * jax.random.normal(pg.take(), (cout,), jnp.float32)
    mean = 0.1 * jax.random.normal(pg.take(), (cout,), jnp.float32)
    var = jax.random.uniform(pg.take(), (cout,), jnp.float32, 0.5, 1.5)
    scale = gamma / jnp.sqrt(var + 1e-5)
    shift = beta - mean * scale
    return {"w": w, "scale": scale.reshape(1, cout), "shift": shift.reshape(1, cout)}


def _bottleneck_params(pg, cin, planes, stride):
    cout = planes * 4
    return {
        "c1": _conv_params(pg, 1, 1, cin, planes),
        "c2": _conv_params(pg, 3, 3, planes, planes),
        "c3": _conv_params(pg, 1, 1, planes, cout),
        "down": (_conv_params(pg, 1, 1, cin, cout)
                 if (stride != 1 or cin != cout) else None),
    }


def build_encoder_params(key, *, in_ch=3, base=8, blocks=(1, 1, 1)):
    pg = _PG(key)
    params = {"stem": {"conv1": _conv_params(pg, 7, 7, in_ch, base)}}
    cin = base
    layer_strides = (1, 2, 2)
    layers = []
    for li, (nblk, s) in enumerate(zip(blocks, layer_strides)):
        planes = base * (2 ** li)
        layer = []
        for b in range(nblk):
            stride = s if b == 0 else 1
            layer.append({"stride": stride,
                          "p": _bottleneck_params(pg, cin, planes, stride)})
            cin = planes * 4
        layers.append(layer)
    params["layer1"], params["layer2"], params["layer3"] = layers

    in_c = cin            # ASPP input channels (backbone layer3 output)
    out_c = in_c          # reference ASPP requires in_c == out_c (header note)
    params["aspp"] = {
        "conv": _conv_params(pg, 1, 1, in_c, out_c),
        "x1": _conv_params(pg, 1, 1, out_c, out_c),
        "x6": _conv_params(pg, 3, 3, out_c, out_c),
        "x12": _conv_params(pg, 3, 3, out_c, out_c),
        "x18": _conv_params(pg, 3, 3, out_c, out_c),
    }
    params["final"] = _conv_params(pg, 1, 1, out_c * 5, out_c)
    params["_meta"] = {"base": base, "out_c": out_c}
    return params


# ----------------------------------------------------------------------------
# Forward pass (mirrors encoder.forward)
# ----------------------------------------------------------------------------
def _bottleneck_forward(x, p, stride):
    if p["down"] is not None:
        identity = conv_bn_act(x, **p["down"], stride=stride, pad=0, relu=False)
    else:
        identity = x
    y = conv_bn_act(x, **p["c1"], pad=0, relu=True)
    y = conv_bn_act(y, **p["c2"], stride=stride, pad=1, relu=True)
    # Residual add + ReLU fused into the c3 conv epilogue.
    y = conv_bn_act(y, **p["c3"], pad=0, relu=True, residual=identity)
    return y


def encoder_forward(params, x_nchw):
    x = jnp.transpose(x_nchw, (0, 2, 3, 1))                  # NCHW -> NHWC

    # feature_extractor_a = backbone children[:5] (conv1,bn1,relu,maxpool,layer1)
    y = conv_bn_act(x, **params["stem"]["conv1"], stride=2, pad=3, relu=True)
    y = max_pool(y, k=3, stride=2, pad=1)
    for blk in params["layer1"]:
        y = _bottleneck_forward(y, blk["p"], blk["stride"])
    output_a = y

    # feature_extractor_b = backbone children[:7] (... + layer2 + layer3)
    for blk in params["layer2"]:
        y = _bottleneck_forward(y, blk["p"], blk["stride"])
    for blk in params["layer3"]:
        y = _bottleneck_forward(y, blk["p"], blk["stride"])

    # ---- ASPP ----
    a = params["aspp"]
    n, h, w, _ = y.shape
    pooled = global_avg_pool(y)                               # AvgPool2d((H,W))
    pooled = conv_bn_act(pooled, **a["conv"], pad=0, relu=True)
    # UpsamplingBilinear2d of a 1x1 map == broadcast (glue).
    x_up = jnp.broadcast_to(pooled, (n, h, w, pooled.shape[-1]))
    x_1 = conv_bn_act(y, **a["x1"], pad=0, relu=True)         # dropout: identity
    x_6 = conv_bn_act(y, **a["x6"], pad=6, dil=6, relu=True)
    x_12 = conv_bn_act(y, **a["x12"], pad=12, dil=12, relu=True)
    x_18 = conv_bn_act(y, **a["x18"], pad=18, dil=18, relu=True)

    # Final 1x1 conv over the concat == sum of 5 partial matmuls; no HBM concat.
    out_c = params["_meta"]["out_c"]
    f = params["final"]
    fw = f["w"].reshape(5 * out_c, out_c)
    m = n * h * w
    pairs = [(branch.reshape(m, out_c), fw[i * out_c:(i + 1) * out_c, :])
             for i, branch in enumerate([x_up, x_1, x_6, x_12, x_18])]
    out2d = _matmul_bn_act(pairs, f["scale"], f["shift"], relu=True,
                           out_dtype=y.dtype)
    output_b = out2d.reshape(n, h, w, out_c)

    # back to NCHW to match PyTorch conventions
    return (jnp.transpose(output_a, (0, 3, 1, 2)),
            jnp.transpose(output_b, (0, 3, 1, 2)))


# ----------------------------------------------------------------------------
if __name__ == "__main__":
    key = jax.random.PRNGKey(0)
    params = build_encoder_params(key, in_ch=3, base=8, blocks=(1, 1, 1))

    x = jax.random.normal(jax.random.fold_in(key, 999), (2, 3, 64, 64), jnp.float32)

    fwd = jax.jit(lambda xin: encoder_forward(params, xin))
    out_a, out_b = fwd(x)
    jax.block_until_ready((out_a, out_b))

    base = params["_meta"]["base"]
    out_c = params["_meta"]["out_c"]
    assert out_a.shape == (2, base * 4, 16, 16), out_a.shape      # (2, 32, 16, 16)
    assert out_b.shape == (2, out_c, 4, 4), out_b.shape           # (2, 128, 4, 4)
    assert jnp.all(jnp.isfinite(out_a)) and jnp.all(jnp.isfinite(out_b))
    print("KERNEL_OK")
</pallas_src>

<mosaic_0001>
module attributes {stable_mosaic.version = 11 : i64} {
  func.func @_mm_bn_act_kernel(%arg0: i32, %arg1: memref<512x147xbf16, #tpu.memory_space<vmem>>, %arg2: memref<147x8xbf16, #tpu.memory_space<vmem>>, %arg3: memref<1x8xf32, #tpu.memory_space<vmem>>, %arg4: memref<1x8xf32, #tpu.memory_space<vmem>>, %arg5: memref<512x8xf32, #tpu.memory_space<vmem>>) attributes {dimension_semantics = [#tpu.dimension_semantics<parallel>], iteration_bounds = array<i64: 4>, scalar_prefetch = 0 : i64, scratch_operands = 0 : i64, tpu.core_type = #tpu.core_type<tc>, window_params = [{transform_indices = @transform_0, window_bounds = array<i64: 512, 147>}, {pipeline_mode = #tpu.pipeline_mode<synchronous>, transform_indices = @transform_1, window_bounds = array<i64: 147, 8>}, {pipeline_mode = #tpu.pipeline_mode<synchronous>, transform_indices = @transform_2, window_bounds = array<i64: 1, 8>}, {pipeline_mode = #tpu.pipeline_mode<synchronous>, transform_indices = @transform_3, window_bounds = array<i64: 1, 8>}, {transform_indices = @transform_4, window_bounds = array<i64: 512, 8>}]} {
    %c0 = arith.constant 0 : index
    %c0_0 = arith.constant 0 : index
    %0 = vector.load %arg1[%c0, %c0_0] : memref<512x147xbf16, #tpu.memory_space<vmem>>, vector<512x147xbf16>
    %c0_1 = arith.constant 0 : index
    %c0_2 = arith.constant 0 : index
    %1 = vector.load %arg2[%c0_1, %c0_2] : memref<147x8xbf16, #tpu.memory_space<vmem>>, vector<147x8xbf16>
    %cst = arith.constant dense<0.000000e+00> : vector<512x8xf32>
    %2 = tpu.matmul %0, %1, %cst {dimension_numbers = #tpu.dot_dimension_numbers<[1], [0], [0], [1], [0, 0, 1, 1], [], []>} : vector<512x147xbf16>, vector<147x8xbf16>, vector<512x8xf32> -> vector<512x8xf32>
    %c0_3 = arith.constant 0 : index
    %c0_4 = arith.constant 0 : index
    %3 = vector.load %arg3[%c0_3, %c0_4] : memref<1x8xf32, #tpu.memory_space<vmem>>, vector<1x8xf32>
    %4 = vector.broadcast %3 : vector<1x8xf32> to vector<512x8xf32>
    %5 = arith.mulf %2, %4 : vector<512x8xf32>
    %c0_5 = arith.constant 0 : index
    %c0_6 = arith.constant 0 : index
    %6 = vector.load %arg4[%c0_5, %c0_6] : memref<1x8xf32, #tpu.memory_space<vmem>>, vector<1x8xf32>
    %7 = vector.broadcast %6 : vector<1x8xf32> to vector<512x8xf32>
    %8 = arith.addf %5, %7 : vector<512x8xf32>
    %cst_7 = arith.constant 0.000000e+00 : f32
    %9 = vector.broadcast %cst_7 : f32 to vector<512x8xf32>
    %10 = arith.maximumf %8, %9 : vector<512x8xf32>
    %c0_8 = arith.constant 0 : index
    %c0_9 = arith.constant 0 : index
    %11 = vector.load %arg5[%c0_8, %c0_9] : memref<512x8xf32, #tpu.memory_space<vmem>>, vector<512x8xf32>
    tpu.vector_store %arg5[%c0_8, %c0_9], %10 {strides = array<i32>} : memref<512x8xf32, #tpu.memory_space<vmem>>, vector<512x8xf32>,
    return
  }
  func.func @transform_0(%arg0: i32) -> (i32, i32) {
    %c0_i32 = arith.constant 0 : i32
    %c0_i32_0 = arith.constant 0 : i32
    return %arg0, %c0_i32 : i32, i32
  }
  func.func @transform_1(%arg0: i32) -> (i32, i32) {
    %c0_i32 = arith.constant 0 : i32
    %c0_i32_0 = arith.constant 0 : i32
    %c0_i32_1 = arith.constant 0 : i32
    return %c0_i32, %c0_i32_0 : i32, i32
  }
  func.func @transform_2(%arg0: i32) -> (i32, i32) {
    %c0_i32 = arith.constant 0 : i32
    %c0_i32_0 = arith.constant 0 : i32
    %c0_i32_1 = arith.constant 0 : i32
    return %c0_i32, %c0_i32_0 : i32, i32
  }
  func.func @transform_3(%arg0: i32) -> (i32, i32) {
    %c0_i32 = arith.constant 0 : i32
    %c0_i32_0 = arith.constant 0 : i32
    %c0_i32_1 = arith.constant 0 : i32
    return %c0_i32, %c0_i32_0 : i32, i32
  }
  func.func @transform_4(%arg0: i32) -> (i32, i32) {
    %c0_i32 = arith.constant 0 : i32
    %c0_i32_0 = arith.constant 0 : i32
    return %arg0, %c0_i32 : i32, i32
  }
}

module attributes {stable_mosaic.version = 11 : i64} {
  func.func @_tapmax_kernel(%arg0: i32, %arg1: memref<9x512x8xf32, #tpu.memory_space<vmem>>, %arg2: memref<512x8xf32, #tpu.memory_space<vmem>>) attributes {dimension_semantics = [#tpu.dimension_semantics<parallel>], iteration_bounds = array<i64: 1>, scalar_prefetch = 0 : i64, scratch_operands = 0 : i64, tpu.core_type = #tpu.core_type<tc>, window_params = [{transform_indices = @transform_0, window_bounds = array<i64: 9, 512, 8>}, {transform_indices = @transform_1, window_bounds = array<i64: 512, 8>}]} {
    %c0 = arith.constant 0 : index
    %c0_0 = arith.constant 0 : index
    %c0_1 = arith.constant 0 : index
    %0 = vector.load %arg1[%c0, %c0_0, %c0_1] : memref<9x512x8xf32, #tpu.memory_space<vmem>>, vector<1x512x8xf32>
    %1 = vector.shape_cast %0 : vector<1x512x8xf32> to vector<512x8xf32>
    %c1 = arith.constant 1 : index
    %c0_2 = arith.constant 0 : index
    %c0_3 = arith.constant 0 : index
    %2 = vector.load %arg1[%c1, %c0_2, %c0_3] : memref<9x512x8xf32, #tpu.memory_space<vmem>>, vector<1x512x8xf32>
    %3 = vector.shape_cast %2 : vector<1x512x8xf32> to vector<512x8xf32>
    %4 = arith.maximumf %1, %3 : vector<512x8xf32>
    %c2 = arith.constant 2 : index
    %c0_4 = arith.constant 0 : index
    %c0_5 = arith.constant 0 : index
    %5 = vector.load %arg1[%c2, %c0_4, %c0_5] : memref<9x512x8xf32, #tpu.memory_space<vmem>>, vector<1x512x8xf32>
    %6 = vector.shape_cast %5 : vector<1x512x8xf32> to vector<512x8xf32>
    %7 = arith.maximumf %4, %6 : vector<512x8xf32>
    %c3 = arith.constant 3 : index
    %c0_6 = arith.constant 0 : index
    %c0_7 = arith.constant 0 : index
    %8 = vector.load %arg1[%c3, %c0_6, %c0_7] : memref<9x512x8xf32, #tpu.memory_space<vmem>>, vector<1x512x8xf32>
    %9 = vector.shape_cast %8 : vector<1x512x8xf32> to vector<512x8xf32>
    %10 = arith.maximumf %7, %9 : vector<512x8xf32>
    %c4 = arith.constant 4 : index
    %c0_8 = arith.constant 0 : index
    %c0_9 = arith.constant 0 : index
    %11 = vector.load %arg1[%c4, %c0_8, %c0_9] : memref<9x512x8xf32, #tpu.memory_space<vmem>>, vector<1x512x8xf32>
    %12 = vector.shape_cast %11 : vector<1x512x8xf32> to vector<512x8xf32>
    %13 = arith.maximumf %10, %12 : vector<512x8xf32>
    %c5 = arith.constant 5 : index
    %c0_10 = arith.constant 0 : index
    %c0_11 = arith.constant 0 : index
    %14 = vector.load %arg1[%c5, %c0_10, %c0_11] : memref<9x512x8xf32, #tpu.memory_space<vmem>>, vector<1x512x8xf32>
    %15 = vector.shape_cast %14 : vector<1x512x8xf32> to vector<512x8xf32>
    %16 = arith.maximumf %13, %15 : vector<512x8xf32>
    %c6 = arith.constant 6 : index
    %c0_12 = arith.constant 0 : index
    %c0_13 = arith.constant 0 : index
    %17 = vector.load %arg1[%c6, %c0_12, %c0_13] : memref<9x512x8xf32, #tpu.memory_space<vmem>>, vector<1x512x8xf32>
    %18 = vector.shape_cast %17 : vector<1x512x8xf32> to vector<512x8xf32>
    %19 = arith.maximumf %16, %18 : vector<512x8xf32>
    %c7 = arith.constant 7 : index
    %c0_14 = arith.constant 0 : index
    %c0_15 = arith.constant 0 : index
    %20 = vector.load %arg1[%c7, %c0_14, %c0_15] : memref<9x512x8xf32, #tpu.memory_space<vmem>>, vector<1x512x8xf32>
    %21 = vector.shape_cast %20 : vector<1x512x8xf32> to vector<512x8xf32>
    %22 = arith.maximumf %19, %21 : vector<512x8xf32>
    %c8 = arith.constant 8 : index
    %c0_16 = arith.constant 0 : index
    %c0_17 = arith.constant 0 : index
    %23 = vector.load %arg1[%c8, %c0_16, %c0_17] : memref<9x512x8xf32, #tpu.memory_space<vmem>>, vector<1x512x8xf32>
    %24 = vector.shape_cast %23 : vector<1x512x8xf32> to vector<512x8xf32>
    %25 = arith.maximumf %22, %24 : vector<512x8xf32>
    %c0_18 = arith.constant 0 : index
    %c0_19 = arith.constant 0 : index
    %26 = vector.load %arg2[%c0_18, %c0_19] : memref<512x8xf32, #tpu.memory_space<vmem>>, vector<512x8xf32>
    tpu.vector_store %arg2[%c0_18, %c0_19], %25 {strides = array<i32>} : memref<512x8xf32, #tpu.memory_space<vmem>>, vector<512x8xf32>,
    return
  }
  func.func @transform_0(%arg0: i32) -> (i32, i32, i32) {
    %c0_i32 = arith.constant 0 : i32
    %c0_i32_0 = arith.constant 0 : i32
    %c0_i32_1 = arith.constant 0 : i32
    return %c0_i32, %arg0, %c0_i32_0 : i32, i32, i32
  }
  func.func @transform_1(%arg0: i32) -> (i32, i32) {
    %c0_i32 = arith.constant 0 : i32
    %c0_i32_0 = arith.constant 0 : i32
    return %arg0, %c0_i32 : i32, i32
  }
}

module attributes {stable_mosaic.version = 11 : i64} {
  func.func @_mm_bn_act_kernel(%arg0: i32, %arg1: memref<512x8xbf16, #tpu.memory_space<vmem>>, %arg2: memref<8x8xbf16, #tpu.memory_space<vmem>>, %arg3: memref<1x8xf32, #tpu.memory_space<vmem>>, %arg4: memref<1x8xf32, #tpu.memory_space<vmem>>, %arg5: memref<512x8xf32, #tpu.memory_space<vmem>>) attributes {dimension_semantics = [#tpu.dimension_semantics<parallel>], iteration_bounds = array<i64: 1>, scalar_prefetch = 0 : i64, scratch_operands = 0 : i64, tpu.core_type = #tpu.core_type<tc>, window_params = [{transform_indices = @transform_0, window_bounds = array<i64: 512, 8>}, {pipeline_mode = #tpu.pipeline_mode<synchronous>, transform_indices = @transform_1, window_bounds = array<i64: 8, 8>}, {pipeline_mode = #tpu.pipeline_mode<synchronous>, transform_indices = @transform_2, window_bounds = array<i64: 1, 8>}, {pipeline_mode = #tpu.pipeline_mode<synchronous>, transform_indices = @transform_3, window_bounds = array<i64: 1, 8>}, {transform_indices = @transform_4, window_bounds = array<i64: 512, 8>}]} {
    %c0 = arith.constant 0 : index
    %c0_0 = arith.constant 0 : index
    %0 = vector.load %arg1[%c0, %c0_0] : memref<512x8xbf16, #tpu.memory_space<vmem>>, vector<512x8xbf16>
    %c0_1 = arith.constant 0 : index
    %c0_2 = arith.constant 0 : index
    %1 = vector.load %arg2[%c0_1, %c0_2] : memref<8x8xbf16, #tpu.memory_space<vmem>>, vector<8x8xbf16>
    %cst = arith.constant dense<0.000000e+00> : vector<512x8xf32>
    %2 = tpu.matmul %0, %1, %cst {dimension_numbers = #tpu.dot_dimension_numbers<[1], [0], [0], [1], [0, 0, 1, 1], [], []>} : vector<512x8xbf16>, vector<8x8xbf16>, vector<512x8xf32> -> vector<512x8xf32>
    %c0_3 = arith.constant 0 : index
    %c0_4 = arith.constant 0 : index
    %3 = vector.load %arg3[%c0_3, %c0_4] : memref<1x8xf32, #tpu.memory_space<vmem>>, vector<1x8xf32>
    %4 = vector.broadcast %3 : vector<1x8xf32> to vector<512x8xf32>
    %5 = arith.mulf %2, %4 : vector<512x8xf32>
    %c0_5 = arith.constant 0 : index
    %c0_6 = arith.constant 0 : index
    %6 = vector.load %arg4[%c0_5, %c0_6] : memref<1x8xf32, #tpu.memory_space<vmem>>, vector<1x8xf32>
    %7 = vector.broadcast %6 : vector<1x8xf32> to vector<512x8xf32>
    %8 = arith.addf %5, %7 : vector<512x8xf32>
    %cst_7 = arith.constant 0.000000e+00 : f32
    %9 = vector.broadcast %cst_7 : f32 to vector<512x8xf32>
    %10 = arith.maximumf %8, %9 : vector<512x8xf32>
    %c0_8 = arith.constant 0 : index
    %c0_9 = arith.constant 0 : index
    %11 = vector.load %arg5[%c0_8, %c0_9] : memref<512x8xf32, #tpu.memory_space<vmem>>, vector<512x8xf32>
    tpu.vector_store %arg5[%c0_8, %c0_9], %10 {strides = array<i32>} : memref<512x8xf32, #tpu.memory_space<vmem>>, vector<512x8xf32>,
    return
  }
  func.func @transform_0(%arg0: i32) -> (i32, i32) {
    %c0_i32 = arith.constant 0 : i32
    %c0_i32_0 = arith.constant 0 : i32
    return %arg0, %c0_i32 : i32, i32
  }
  func.func @transform_1(%arg0: i32) -> (i32, i32) {
    %c0_i32 = arith.constant 0 : i32
    %c0_i32_0 = arith.constant 0 : i32
    %c0_i32_1 = arith.constant 0 : i32
    return %c0_i32, %c0_i32_0 : i32, i32
  }
  func.func @transform_2(%arg0: i32) -> (i32, i32) {
    %c0_i32 = arith.constant 0 : i32
    %c0_i32_0 = arith.constant 0 : i32
    %c0_i32_1 = arith.constant 0 : i32
    return %c0_i32, %c0_i32_0 : i32, i32
  }
  func.func @transform_3(%arg0: i32) -> (i32, i32) {
    %c0_i32 = arith.constant 0 : i32
    %c0_i32_0 = arith.constant 0 : i32
    %c0_i32_1 = arith.constant 0 : i32
    return %c0_i32, %c0_i32_0 : i32, i32
  }
  func.func @transform_4(%arg0: i32) -> (i32, i32) {
    %c0_i32 = arith.constant 0 : i32
    %c0_i32_0 = arith.constant 0 : i32
    return %arg0, %c0_i32 : i32, i32
  }
}

module attributes {stable_mosaic.version = 11 : i64} {
  func.func @_mm_bn_act_kernel(%arg0: i32, %arg1: memref<512x72xbf16, #tpu.memory_space<vmem>>, %arg2: memref<72x8xbf16, #tpu.memory_space<vmem>>, %arg3: memref<1x8xf32, #tpu.memory_space<vmem>>, %arg4: memref<1x8xf32, #tpu.memory_space<vmem>>, %arg5: memref<512x8xf32, #tpu.memory_space<vmem>>) attributes {dimension_semantics = [#tpu.dimension_semantics<parallel>], iteration_bounds = array<i64: 1>, scalar_prefetch = 0 : i64, scratch_operands = 0 : i64, tpu.core_type = #tpu.core_type<tc>, window_params = [{transform_indices = @transform_0, window_bounds = array<i64: 512, 72>}, {pipeline_mode = #tpu.pipeline_mode<synchronous>, transform_indices = @transform_1, window_bounds = array<i64: 72, 8>}, {pipeline_mode = #tpu.pipeline_mode<synchronous>, transform_indices = @transform_2, window_bounds = array<i64: 1, 8>}, {pipeline_mode = #tpu.pipeline_mode<synchronous>, transform_indices = @transform_3, window_bounds = array<i64: 1, 8>}, {transform_indices = @transform_4, window_bounds = array<i64: 512, 8>}]} {
    %c0 = arith.constant 0 : index
    %c0_0 = arith.constant 0 : index
    %0 = vector.load %arg1[%c0, %c0_0] : memref<512x72xbf16, #tpu.memory_space<vmem>>, vector<512x72xbf16>
    %c0_1 = arith.constant 0 : index
    %c0_2 = arith.constant 0 : index
    %1 = vector.load %arg2[%c0_1, %c0_2] : memref<72x8xbf16, #tpu.memory_space<vmem>>, vector<72x8xbf16>
    %cst = arith.constant dense<0.000000e+00> : vector<512x8xf32>
    %2 = tpu.matmul %0, %1, %cst {dimension_numbers = #tpu.dot_dimension_numbers<[1], [0], [0], [1], [0, 0, 1, 1], [], []>} : vector<512x72xbf16>, vector<72x8xbf16>, vector<512x8xf32> -> vector<512x8xf32>
    %c0_3 = arith.constant 0 : index
    %c0_4 = arith.constant 0 : index
    %3 = vector.load %arg3[%c0_3, %c0_4] : memref<1x8xf32, #tpu.memory_space<vmem>>, vector<1x8xf32>
    %4 = vector.broadcast %3 : vector<1x8xf32> to vector<512x8xf32>
    %5 = arith.mulf %2, %4 : vector<512x8xf32>
    %c0_5 = arith.constant 0 : index
    %c0_6 = arith.constant 0 : index
    %6 = vector.load %arg4[%c0_5, %c0_6] : memref<1x8xf32, #tpu.memory_space<vmem>>, vector<1x8xf32>
    %7 = vector.broadcast %6 : vector<1x8xf32> to vector<512x8xf32>
    %8 = arith.addf %5, %7 : vector<512x8xf32>
    %cst_7 = arith.constant 0.000000e+00 : f32
    %9 = vector.broadcast %cst_7 : f32 to vector<512x8xf32>
    %10 = arith.maximumf %8, %9 : vector<512x8xf32>
    %c0_8 = arith.constant 0 : index
    %c0_9 = arith.constant 0 : index
    %11 = vector.load %arg5[%c0_8, %c0_9] : memref<512x8xf32, #tpu.memory_space<vmem>>, vector<512x8xf32>
    tpu.vector_store %arg5[%c0_8, %c0_9], %10 {strides = array<i32>} : memref<512x8xf32, #tpu.memory_space<vmem>>, vector<512x8xf32>,
    return
  }
  func.func @transform_0(%arg0: i32) -> (i32, i32) {
    %c0_i32 = arith.constant 0 : i32
    %c0_i32_0 = arith.constant 0 : i32
    return %arg0, %c0_i32 : i32, i32
  }
  func.func @transform_1(%arg0: i32) -> (i32, i32) {
    %c0_i32 = arith.constant 0 : i32
    %c0_i32_0 = arith.constant 0 : i32
    %c0_i32_1 = arith.constant 0 : i32
    return %c0_i32, %c0_i32_0 : i32, i32
  }
  func.func @transform_2(%arg0: i32) -> (i32, i32) {
    %c0_i32 = arith.constant 0 : i32
    %c0_i32_0 = arith.constant 0 : i32
    %c0_i32_1 = arith.constant 0 : i32
    return %c0_i32, %c0_i32_0 : i32, i32
  }
  func.func @transform_3(%arg0: i32) -> (i32, i32) {
    %c0_i32 = arith.constant 0 : i32
    %c0_i32_0 = arith.constant 0 : i32
    %c0_i32_1 = arith.constant 0 : i32
    return %c0_i32, %c0_i32_0 : i32, i32
  }
  func.func @transform_4(%arg0: i32) -> (i32, i32) {
    %c0_i32 = arith.constant 0 : i32
    %c0_i32_0 = arith.constant 0 : i32
    return %arg0, %c0_i32 : i32, i32
  }
}

module attributes {stable_mosaic.version = 11 : i64} {
  func.func @_mm_bn_act_kernel(%arg0: i32, %arg1: memref<512x8xbf16, #tpu.memory_space<vmem>>, %arg2: memref<8x32xbf16, #tpu.memory_space<vmem>>, %arg3: memref<1x32xf32, #tpu.memory_space<vmem>>, %arg4: memref<1x32xf32, #tpu.memory_space<vmem>>, %arg5: memref<512x32xf32, #tpu.memory_space<vmem>>) attributes {dimension_semantics = [#tpu.dimension_semantics<parallel>], iteration_bounds = array<i64: 1>, scalar_prefetch = 0 : i64, scratch_operands = 0 : i64, tpu.core_type = #tpu.core_type<tc>, window_params = [{transform_indices = @transform_0, window_bounds = array<i64: 512, 8>}, {pipeline_mode = #tpu.pipeline_mode<synchronous>, transform_indices = @transform_1, window_bounds = array<i64: 8, 32>}, {pipeline_mode = #tpu.pipeline_mode<synchronous>, transform_indices = @transform_2, window_bounds = array<i64: 1, 32>}, {pipeline_mode = #tpu.pipeline_mode<synchronous>, transform_indices = @transform_3, window_bounds = array<i64: 1, 32>}, {transform_indices = @transform_4, window_bounds = array<i64: 512, 32>}]} {
    %c0 = arith.constant 0 : index
    %c0_0 = arith.constant 0 : index
    %0 = vector.load %arg1[%c0, %c0_0] : memref<512x8xbf16, #tpu.memory_space<vmem>>, vector<512x8xbf16>
    %c0_1 = arith.constant 0 : index
    %c0_2 = arith.constant 0 : index
    %1 = vector.load %arg2[%c0_1, %c0_2] : memref<8x32xbf16, #tpu.memory_space<vmem>>, vector<8x32xbf16>
    %cst = arith.constant dense<0.000000e+00> : vector<512x32xf32>
    %2 = tpu.matmul %0, %1, %cst {dimension_numbers = #tpu.dot_dimension_numbers<[1], [0], [0], [1], [0, 0, 1, 1], [], []>} : vector<512x8xbf16>, vector<8x32xbf16>, vector<512x32xf32> -> vector<512x32xf32>
    %c0_3 = arith.constant 0 : index
    %c0_4 = arith.constant 0 : index
    %3 = vector.load %arg3[%c0_3, %c0_4] : memref<1x32xf32, #tpu.memory_space<vmem>>, vector<1x32xf32>
    %4 = vector.broadcast %3 : vector<1x32xf32> to vector<512x32xf32>
    %5 = arith.mulf %2, %4 : vector<512x32xf32>
    %c0_5 = arith.constant 0 : index
    %c0_6 = arith.constant 0 : index
    %6 = vector.load %arg4[%c0_5, %c0_6] : memref<1x32xf32, #tpu.memory_space<vmem>>, vector<1x32xf32>
    %7 = vector.broadcast %6 : vector<1x32xf32> to vector<512x32xf32>
    %8 = arith.addf %5, %7 : vector<512x32xf32>
    %c0_7 = arith.constant 0 : index
    %c0_8 = arith.constant 0 : index
    %9 = vector.load %arg5[%c0_7, %c0_8] : memref<512x32xf32, #tpu.memory_space<vmem>>, vector<512x32xf32>
    tpu.vector_store %arg5[%c0_7, %c0_8], %8 {strides = array<i32>} : memref<512x32xf32, #tpu.memory_space<vmem>>, vector<512x32xf32>,
    return
  }
  func.func @transform_0(%arg0: i32) -> (i32, i32) {
    %c0_i32 = arith.constant 0 : i32
    %c0_i32_0 = arith.constant 0 : i32
    return %arg0, %c0_i32 : i32, i32
  }
  func.func @transform_1(%arg0: i32) -> (i32, i32) {
    %c0_i32 = arith.constant 0 : i32
    %c0_i32_0 = arith.constant 0 : i32
    %c0_i32_1 = arith.constant 0 : i32
    return %c0_i32, %c0_i32_0 : i32, i32
  }
  func.func @transform_2(%arg0: i32) -> (i32, i32) {
    %c0_i32 = arith.constant 0 : i32
    %c0_i32_0 = arith.constant 0 : i32
    %c0_i32_1 = arith.constant 0 : i32
    return %c0_i32, %c0_i32_0 : i32, i32
  }
  func.func @transform_3(%arg0: i32) -> (i32, i32) {
    %c0_i32 = arith.constant 0 : i32
    %c0_i32_0 = arith.constant 0 : i32
    %c0_i32_1 = arith.constant 0 : i32
    return %c0_i32, %c0_i32_0 : i32, i32
  }
  func.func @transform_4(%arg0: i32) -> (i32, i32) {
    %c0_i32 = arith.constant 0 : i32
    %c0_i32_0 = arith.constant 0 : i32
    return %arg0, %c0_i32 : i32, i32
  }
}

module attributes {stable_mosaic.version = 11 : i64} {
  func.func @_mm_bn_act_kernel(%arg0: i32, %arg1: memref<512x8xbf16, #tpu.memory_space<vmem>>, %arg2: memref<8x32xbf16, #tpu.memory_space<vmem>>, %arg3: memref<1x32xf32, #tpu.memory_space<vmem>>, %arg4: memref<1x32xf32, #tpu.memory_space<vmem>>, %arg5: memref<512x32xf32, #tpu.memory_space<vmem>>, %arg6: memref<512x32xf32, #tpu.memory_space<vmem>>) attributes {dimension_semantics = [#tpu.dimension_semantics<parallel>], iteration_bounds = array<i64: 1>, scalar_prefetch = 0 : i64, scratch_operands = 0 : i64, tpu.core_type = #tpu.core_type<tc>, window_params = [{transform_indices = @transform_0, window_bounds = array<i64: 512, 8>}, {pipeline_mode = #tpu.pipeline_mode<synchronous>, transform_indices = @transform_1, window_bounds = array<i64: 8, 32>}, {pipeline_mode = #tpu.pipeline_mode<synchronous>, transform_indices = @transform_2, window_bounds = array<i64: 1, 32>}, {pipeline_mode = #tpu.pipeline_mode<synchronous>, transform_indices = @transform_3, window_bounds = array<i64: 1, 32>}, {transform_indices = @transform_4, window_bounds = array<i64: 512, 32>}, {transform_indices = @transform_5, window_bounds = array<i64: 512, 32>}]} {
    %c0 = arith.constant 0 : index
    %c0_0 = arith.constant 0 : index
    %0 = vector.load %arg1[%c0, %c0_0] : memref<512x8xbf16, #tpu.memory_space<vmem>>, vector<512x8xbf16>
    %c0_1 = arith.constant 0 : index
    %c0_2 = arith.constant 0 : index
    %1 = vector.load %arg2[%c0_1, %c0_2] : memref<8x32xbf16, #tpu.memory_space<vmem>>, vector<8x32xbf16>
    %cst = arith.constant dense<0.000000e+00> : vector<512x32xf32>
    %2 = tpu.matmul %0, %1, %cst {dimension_numbers = #tpu.dot_dimension_numbers<[1], [0], [0], [1], [0, 0, 1, 1], [], []>} : vector<512x8xbf16>, vector<8x32xbf16>, vector<512x32xf32> -> vector<512x32xf32>
    %c0_3 = arith.constant 0 : index
    %c0_4 = arith.constant 0 : index
    %3 = vector.load %arg3[%c0_3, %c0_4] : memref<1x32xf32, #tpu.memory_space<vmem>>, vector<1x32xf32>
    %4 = vector.broadcast %3 : vector<1x32xf32> to vector<512x32xf32>
    %5 = arith.mulf %2, %4 : vector<512x32xf32>
    %c0_5 = arith.constant 0 : index
    %c0_6 = arith.constant 0 : index
    %6 = vector.load %arg4[%c0_5, %c0_6] : memref<1x32xf32, #tpu.memory_space<vmem>>, vector<1x32xf32>
    %7 = vector.broadcast %6 : vector<1x32xf32> to vector<512x32xf32>
    %8 = arith.addf %5, %7 : vector<512x32xf32>
    %c0_7 = arith.constant 0 : index
    %c0_8 = arith.constant 0 : index
    %9 = vector.load %arg5[%c0_7, %c0_8] : memref<512x32xf32, #tpu.memory_space<vmem>>, vector<512x32xf32>
    %10 = arith.addf %8, %9 : vector<512x32xf32>
    %cst_9 = arith.constant 0.000000e+00 : f32
    %11 = vector.broadcast %cst_9 : f32 to vector<512x32xf32>
    %12 = arith.maximumf %10, %11 : vector<512x32xf32>
    %c0_10 = arith.constant 0 : index
    %c0_11 = arith.constant 0 : index
    %13 = vector.load %arg6[%c0_10, %c0_11] : memref<512x32xf32, #tpu.memory_space<vmem>>, vector<512x32xf32>
    tpu.vector_store %arg6[%c0_10, %c0_11], %12 {strides = array<i32>} : memref<512x32xf32, #tpu.memory_space<vmem>>, vector<512x32xf32>,
    return
  }
  func.func @transform_0(%arg0: i32) -> (i32, i32) {
    %c0_i32 = arith.constant 0 : i32
    %c0_i32_0 = arith.constant 0 : i32
    return %arg0, %c0_i32 : i32, i32
  }
  func.func @transform_1(%arg0: i32) -> (i32, i32) {
    %c0_i32 = arith.constant 0 : i32
    %c0_i32_0 = arith.constant 0 : i32
    %c0_i32_1 = arith.constant 0 : i32
    return %c0_i32, %c0_i32_0 : i32, i32
  }
  func.func @transform_2(%arg0: i32) -> (i32, i32) {
    %c0_i32 = arith.constant 0 : i32
    %c0_i32_0 = arith.constant 0 : i32
    %c0_i32_1 = arith.constant 0 : i32
    return %c0_i32, %c0_i32_0 : i32, i32
  }
  func.func @transform_3(%arg0: i32) -> (i32, i32) {
    %c0_i32 = arith.constant 0 : i32
    %c0_i32_0 = arith.constant 0 : i32
    %c0_i32_1 = arith.constant 0 : i32
    return %c0_i32, %c0_i32_0 : i32, i32
  }
  func.func @transform_4(%arg0: i32) -> (i32, i32) {
    %c0_i32 = arith.constant 0 : i32
    %c0_i32_0 = arith.constant 0 : i32
    return %arg0, %c0_i32 : i32, i32
  }
  func.func @transform_5(%arg0: i32) -> (i32, i32) {
    %c0_i32 = arith.constant 0 : i32
    %c0_i32_0 = arith.constant 0 : i32
    return %arg0, %c0_i32 : i32, i32
  }
}

module attributes {stable_mosaic.version = 11 : i64} {
  func.func @_mm_bn_act_kernel(%arg0: i32, %arg1: memref<512x32xbf16, #tpu.memory_space<vmem>>, %arg2: memref<32x16xbf16, #tpu.memory_space<vmem>>, %arg3: memref<1x16xf32, #tpu.memory_space<vmem>>, %arg4: memref<1x16xf32, #tpu.memory_space<vmem>>, %arg5: memref<512x16xf32, #tpu.memory_space<vmem>>) attributes {dimension_semantics = [#tpu.dimension_semantics<parallel>], iteration_bounds = array<i64: 1>, scalar_prefetch = 0 : i64, scratch_operands = 0 : i64, tpu.core_type = #tpu.core_type<tc>, window_params = [{transform_indices = @transform_0, window_bounds = array<i64: 512, 32>}, {pipeline_mode = #tpu.pipeline_mode<synchronous>, transform_indices = @transform_1, window_bounds = array<i64: 32, 16>}, {pipeline_mode = #tpu.pipeline_mode<synchronous>, transform_indices = @transform_2, window_bounds = array<i64: 1, 16>}, {pipeline_mode = #tpu.pipeline_mode<synchronous>, transform_indices = @transform_3, window_bounds = array<i64: 1, 16>}, {transform_indices = @transform_4, window_bounds = array<i64: 512, 16>}]} {
    %c0 = arith.constant 0 : index
    %c0_0 = arith.constant 0 : index
    %0 = vector.load %arg1[%c0, %c0_0] : memref<512x32xbf16, #tpu.memory_space<vmem>>, vector<512x32xbf16>
    %c0_1 = arith.constant 0 : index
    %c0_2 = arith.constant 0 : index
    %1 = vector.load %arg2[%c0_1, %c0_2] : memref<32x16xbf16, #tpu.memory_space<vmem>>, vector<32x16xbf16>
    %cst = arith.constant dense<0.000000e+00> : vector<512x16xf32>
    %2 = tpu.matmul %0, %1, %cst {dimension_numbers = #tpu.dot_dimension_numbers<[1], [0], [0], [1], [0, 0, 1, 1], [], []>} : vector<512x32xbf16>, vector<32x16xbf16>, vector<512x16xf32> -> vector<512x16xf32>
    %c0_3 = arith.constant 0 : index
    %c0_4 = arith.constant 0 : index
    %3 = vector.load %arg3[%c0_3, %c0_4] : memref<1x16xf32, #tpu.memory_space<vmem>>, vector<1x16xf32>
    %4 = vector.broadcast %3 : vector<1x16xf32> to vector<512x16xf32>
    %5 = arith.mulf %2, %4 : vector<512x16xf32>
    %c0_5 = arith.constant 0 : index
    %c0_6 = arith.constant 0 : index
    %6 = vector.load %arg4[%c0_5, %c0_6] : memref<1x16xf32, #tpu.memory_space<vmem>>, vector<1x16xf32>
    %7 = vector.broadcast %6 : vector<1x16xf32> to vector<512x16xf32>
    %8 = arith.addf %5, %7 : vector<512x16xf32>
    %cst_7 = arith.constant 0.000000e+00 : f32
    %9 = vector.broadcast %cst_7 : f32 to vector<512x16xf32>
    %10 = arith.maximumf %8, %9 : vector<512x16xf32>
    %c0_8 = arith.constant 0 : index
    %c0_9 = arith.constant 0 : index
    %11 = vector.load %arg5[%c0_8, %c0_9] : memref<512x16xf32, #tpu.memory_space<vmem>>, vector<512x16xf32>
    tpu.vector_store %arg5[%c0_8, %c0_9], %10 {strides = array<i32>} : memref<512x16xf32, #tpu.memory_space<vmem>>, vector<512x16xf32>,
    return
  }
  func.func @transform_0(%arg0: i32) -> (i32, i32) {
    %c0_i32 = arith.constant 0 : i32
    %c0_i32_0 = arith.constant 0 : i32
    return %arg0, %c0_i32 : i32, i32
  }
  func.func @transform_1(%arg0: i32) -> (i32, i32) {
    %c0_i32 = arith.constant 0 : i32
    %c0_i32_0 = arith.constant 0 : i32
    %c0_i32_1 = arith.constant 0 : i32
    return %c0_i32, %c0_i32_0 : i32, i32
  }
  func.func @transform_2(%arg0: i32) -> (i32, i32) {
    %c0_i32 = arith.constant 0 : i32
    %c0_i32_0 = arith.constant 0 : i32
    %c0_i32_1 = arith.constant 0 : i32
    return %c0_i32, %c0_i32_0 : i32, i32
  }
  func.func @transform_3(%arg0: i32) -> (i32, i32) {
    %c0_i32 = arith.constant 0 : i32
    %c0_i32_0 = arith.constant 0 : i32
    %c0_i32_1 = arith.constant 0 : i32
    return %c0_i32, %c0_i32_0 : i32, i32
  }
  func.func @transform_4(%arg0: i32) -> (i32, i32) {
    %c0_i32 = arith.constant 0 : i32
    %c0_i32_0 = arith.constant 0 : i32
    return %arg0, %c0_i32 : i32, i32
  }
}

module attributes {stable_mosaic.version = 11 : i64} {
  func.func @_mm_bn_act_kernel(%arg0: i32, %arg1: memref<128x144xbf16, #tpu.memory_space<vmem>>, %arg2: memref<144x16xbf16, #tpu.memory_space<vmem>>, %arg3: memref<1x16xf32, #tpu.memory_space<vmem>>, %arg4: memref<1x16xf32, #tpu.memory_space<vmem>>, %arg5: memref<128x16xf32, #tpu.memory_space<vmem>>) attributes {dimension_semantics = [#tpu.dimension_semantics<parallel>], iteration_bounds = array<i64: 1>, scalar_prefetch = 0 : i64, scratch_operands = 0 : i64, tpu.core_type = #tpu.core_type<tc>, window_params = [{transform_indices = @transform_0, window_bounds = array<i64: 128, 144>}, {pipeline_mode = #tpu.pipeline_mode<synchronous>, transform_indices = @transform_1, window_bounds = array<i64: 144, 16>}, {pipeline_mode = #tpu.pipeline_mode<synchronous>, transform_indices = @transform_2, window_bounds = array<i64: 1, 16>}, {pipeline_mode = #tpu.pipeline_mode<synchronous>, transform_indices = @transform_3, window_bounds = array<i64: 1, 16>}, {transform_indices = @transform_4, window_bounds = array<i64: 128, 16>}]} {
    %c0 = arith.constant 0 : index
    %c0_0 = arith.constant 0 : index
    %0 = vector.load %arg1[%c0, %c0_0] : memref<128x144xbf16, #tpu.memory_space<vmem>>, vector<128x144xbf16>
    %c0_1 = arith.constant 0 : index
    %c0_2 = arith.constant 0 : index
    %1 = vector.load %arg2[%c0_1, %c0_2] : memref<144x16xbf16, #tpu.memory_space<vmem>>, vector<144x16xbf16>
    %cst = arith.constant dense<0.000000e+00> : vector<128x16xf32>
    %2 = tpu.matmul %0, %1, %cst {dimension_numbers = #tpu.dot_dimension_numbers<[1], [0], [0], [1], [0, 0, 1, 1], [], []>} : vector<128x144xbf16>, vector<144x16xbf16>, vector<128x16xf32> -> vector<128x16xf32>
    %c0_3 = arith.constant 0 : index
    %c0_4 = arith.constant 0 : index
    %3 = vector.load %arg3[%c0_3, %c0_4] : memref<1x16xf32, #tpu.memory_space<vmem>>, vector<1x16xf32>
    %4 = vector.broadcast %3 : vector<1x16xf32> to vector<128x16xf32>
    %5 = arith.mulf %2, %4 : vector<128x16xf32>
    %c0_5 = arith.constant 0 : index
    %c0_6 = arith.constant 0 : index
    %6 = vector.load %arg4[%c0_5, %c0_6] : memref<1x16xf32, #tpu.memory_space<vmem>>, vector<1x16xf32>
    %7 = vector.broadcast %6 : vector<1x16xf32> to vector<128x16xf32>
    %8 = arith.addf %5, %7 : vector<128x16xf32>
    %cst_7 = arith.constant 0.000000e+00 : f32
    %9 = vector.broadcast %cst_7 : f32 to vector<128x16xf32>
    %10 = arith.maximumf %8, %9 : vector<128x16xf32>
    %c0_8 = arith.constant 0 : index
    %c0_9 = arith.constant 0 : index
    %11 = vector.load %arg5[%c0_8, %c0_9] : memref<128x16xf32, #tpu.memory_space<vmem>>, vector<128x16xf32>
    tpu.vector_store %arg5[%c0_8, %c0_9], %10 {strides = array<i32>} : memref<128x16xf32, #tpu.memory_space<vmem>>, vector<128x16xf32>,
    return
  }
  func.func @transform_0(%arg0: i32) -> (i32, i32) {
    %c0_i32 = arith.constant 0 : i32
    %c0_i32_0 = arith.constant 0 : i32
    return %arg0, %c0_i32 : i32, i32
  }
  func.func @transform_1(%arg0: i32) -> (i32, i32) {
    %c0_i32 = arith.constant 0 : i32
    %c0_i32_0 = arith.constant 0 : i32
    %c0_i32_1 = arith.constant 0 : i32
    return %c0_i32, %c0_i32_0 : i32, i32
  }
  func.func @transform_2(%arg0: i32) -> (i32, i32) {
    %c0_i32 = arith.constant 0 : i32
    %c0_i32_0 = arith.constant 0 : i32
    %c0_i32_1 = arith.constant 0 : i32
    return %c0_i32, %c0_i32_0 : i32, i32
  }
  func.func @transform_3(%arg0: i32) -> (i32, i32) {
    %c0_i32 = arith.constant 0 : i32
    %c0_i32_0 = arith.constant 0 : i32
    %c0_i32_1 = arith.constant 0 : i32
    return %c0_i32, %c0_i32_0 : i32, i32
  }
  func.func @transform_4(%arg0: i32) -> (i32, i32) {
    %c0_i32 = arith.constant 0 : i32
    %c0_i32_0 = arith.constant 0 : i32
    return %arg0, %c0_i32 : i32, i32
  }
}

module attributes {stable_mosaic.version = 11 : i64} {
  func.func @_mm_bn_act_kernel(%arg0: i32, %arg1: memref<128x32xbf16, #tpu.memory_space<vmem>>, %arg2: memref<32x64xbf16, #tpu.memory_space<vmem>>, %arg3: memref<1x64xf32, #tpu.memory_space<vmem>>, %arg4: memref<1x64xf32, #tpu.memory_space<vmem>>, %arg5: memref<128x64xf32, #tpu.memory_space<vmem>>) attributes {dimension_semantics = [#tpu.dimension_semantics<parallel>], iteration_bounds = array<i64: 1>, scalar_prefetch = 0 : i64, scratch_operands = 0 : i64, tpu.core_type = #tpu.core_type<tc>, window_params = [{transform_indices = @transform_0, window_bounds = array<i64: 128, 32>}, {pipeline_mode = #tpu.pipeline_mode<synchronous>, transform_indices = @transform_1, window_bounds = array<i64: 32, 64>}, {pipeline_mode = #tpu.pipeline_mode<synchronous>, transform_indices = @transform_2, window_bounds = array<i64: 1, 64>}, {pipeline_mode = #tpu.pipeline_mode<synchronous>, transform_indices = @transform_3, window_bounds = array<i64: 1, 64>}, {transform_indices = @transform_4, window_bounds = array<i64: 128, 64>}]} {
    %c0 = arith.constant 0 : index
    %c0_0 = arith.constant 0 : index
    %0 = vector.load %arg1[%c0, %c0_0] : memref<128x32xbf16, #tpu.memory_space<vmem>>, vector<128x32xbf16>
    %c0_1 = arith.constant 0 : index
    %c0_2 = arith.constant 0 : index
    %1 = vector.load %arg2[%c0_1, %c0_2] : memref<32x64xbf16, #tpu.memory_space<vmem>>, vector<32x64xbf16>
    %cst = arith.constant dense<0.000000e+00> : vector<128x64xf32>
    %2 = tpu.matmul %0, %1, %cst {dimension_numbers = #tpu.dot_dimension_numbers<[1], [0], [0], [1], [0, 0, 1, 1], [], []>} : vector<128x32xbf16>, vector<32x64xbf16>, vector<128x64xf32> -> vector<128x64xf32>
    %c0_3 = arith.constant 0 : index
    %c0_4 = arith.constant 0 : index
    %3 = vector.load %arg3[%c0_3, %c0_4] : memref<1x64xf32, #tpu.memory_space<vmem>>, vector<1x64xf32>
    %4 = vector.broadcast %3 : vector<1x64xf32> to vector<128x64xf32>
    %5 = arith.mulf %2, %4 : vector<128x64xf32>
    %c0_5 = arith.constant 0 : index
    %c0_6 = arith.constant 0 : index
    %6 = vector.load %arg4[%c0_5, %c0_6] : memref<1x64xf32, #tpu.memory_space<vmem>>, vector<1x64xf32>
    %7 = vector.broadcast %6 : vector<1x64xf32> to vector<128x64xf32>
    %8 = arith.addf %5, %7 : vector<128x64xf32>
    %c0_7 = arith.constant 0 : index
    %c0_8 = arith.constant 0 : index
    %9 = vector.load %arg5[%c0_7, %c0_8] : memref<128x64xf32, #tpu.memory_space<vmem>>, vector<128x64xf32>
    tpu.vector_store %arg5[%c0_7, %c0_8], %8 {strides = array<i32>} : memref<128x64xf32, #tpu.memory_space<vmem>>, vector<128x64xf32>,
    return
  }
  func.func @transform_0(%arg0: i32) -> (i32, i32) {
    %c0_i32 = arith.constant 0 : i32
    %c0_i32_0 = arith.constant 0 : i32
    return %arg0, %c0_i32 : i32, i32
  }
  func.func @transform_1(%arg0: i32) -> (i32, i32) {
    %c0_i32 = arith.constant 0 : i32
    %c0_i32_0 = arith.constant 0 : i32
    %c0_i32_1 = arith.constant 0 : i32
    return %c0_i32, %c0_i32_0 : i32, i32
  }
  func.func @transform_2(%arg0: i32) -> (i32, i32) {
    %c0_i32 = arith.constant 0 : i32
    %c0_i32_0 = arith.constant 0 : i32
    %c0_i32_1 = arith.constant 0 : i32
    return %c0_i32, %c0_i32_0 : i32, i32
  }
  func.func @transform_3(%arg0: i32) -> (i32, i32) {
    %c0_i32 = arith.constant 0 : i32
    %c0_i32_0 = arith.constant 0 : i32
    %c0_i32_1 = arith.constant 0 : i32
    return %c0_i32, %c0_i32_0 : i32, i32
  }
  func.func @transform_4(%arg0: i32) -> (i32, i32) {
    %c0_i32 = arith.constant 0 : i32
    %c0_i32_0 = arith.constant 0 : i32
    return %arg0, %c0_i32 : i32, i32
  }
}

module attributes {stable_mosaic.version = 11 : i64} {
  func.func @_mm_bn_act_kernel(%arg0: i32, %arg1: memref<128x16xbf16, #tpu.memory_space<vmem>>, %arg2: memref<16x64xbf16, #tpu.memory_space<vmem>>, %arg3: memref<1x64xf32, #tpu.memory_space<vmem>>, %arg4: memref<1x64xf32, #tpu.memory_space<vmem>>, %arg5: memref<128x64xf32, #tpu.memory_space<vmem>>, %arg6: memref<128x64xf32, #tpu.memory_space<vmem>>) attributes {dimension_semantics = [#tpu.dimension_semantics<parallel>], iteration_bounds = array<i64: 1>, scalar_prefetch = 0 : i64, scratch_operands = 0 : i64, tpu.core_type = #tpu.core_type<tc>, window_params = [{transform_indices = @transform_0, window_bounds = array<i64: 128, 16>}, {pipeline_mode = #tpu.pipeline_mode<synchronous>, transform_indices = @transform_1, window_bounds = array<i64: 16, 64>}, {pipeline_mode = #tpu.pipeline_mode<synchronous>, transform_indices = @transform_2, window_bounds = array<i64: 1, 64>}, {pipeline_mode = #tpu.pipeline_mode<synchronous>, transform_indices = @transform_3, window_bounds = array<i64: 1, 64>}, {transform_indices = @transform_4, window_bounds = array<i64: 128, 64>}, {transform_indices = @transform_5, window_bounds = array<i64: 128, 64>}]} {
    %c0 = arith.constant 0 : index
    %c0_0 = arith.constant 0 : index
    %0 = vector.load %arg1[%c0, %c0_0] : memref<128x16xbf16, #tpu.memory_space<vmem>>, vector<128x16xbf16>
    %c0_1 = arith.constant 0 : index
    %c0_2 = arith.constant 0 : index
    %1 = vector.load %arg2[%c0_1, %c0_2] : memref<16x64xbf16, #tpu.memory_space<vmem>>, vector<16x64xbf16>
    %cst = arith.constant dense<0.000000e+00> : vector<128x64xf32>
    %2 = tpu.matmul %0, %1, %cst {dimension_numbers = #tpu.dot_dimension_numbers<[1], [0], [0], [1], [0, 0, 1, 1], [], []>} : vector<128x16xbf16>, vector<16x64xbf16>, vector<128x64xf32> -> vector<128x64xf32>
    %c0_3 = arith.constant 0 : index
    %c0_4 = arith.constant 0 : index
    %3 = vector.load %arg3[%c0_3, %c0_4] : memref<1x64xf32, #tpu.memory_space<vmem>>, vector<1x64xf32>
    %4 = vector.broadcast %3 : vector<1x64xf32> to vector<128x64xf32>
    %5 = arith.mulf %2, %4 : vector<128x64xf32>
    %c0_5 = arith.constant 0 : index
    %c0_6 = arith.constant 0 : index
    %6 = vector.load %arg4[%c0_5, %c0_6] : memref<1x64xf32, #tpu.memory_space<vmem>>, vector<1x64xf32>
    %7 = vector.broadcast %6 : vector<1x64xf32> to vector<128x64xf32>
    %8 = arith.addf %5, %7 : vector<128x64xf32>
    %c0_7 = arith.constant 0 : index
    %c0_8 = arith.constant 0 : index
    %9 = vector.load %arg5[%c0_7, %c0_8] : memref<128x64xf32, #tpu.memory_space<vmem>>, vector<128x64xf32>
    %10 = arith.addf %8, %9 : vector<128x64xf32>
    %cst_9 = arith.constant 0.000000e+00 : f32
    %11 = vector.broadcast %cst_9 : f32 to vector<128x64xf32>
    %12 = arith.maximumf %10, %11 : vector<128x64xf32>
    %c0_10 = arith.constant 0 : index
    %c0_11 = arith.constant 0 : index
    %13 = vector.load %arg6[%c0_10, %c0_11] : memref<128x64xf32, #tpu.memory_space<vmem>>, vector<128x64xf32>
    tpu.vector_store %arg6[%c0_10, %c0_11], %12 {strides = array<i32>} : memref<128x64xf32, #tpu.memory_space<vmem>>, vector<128x64xf32>,
    return
  }
  func.func @transform_0(%arg0: i32) -> (i32, i32) {
    %c0_i32 = arith.constant 0 : i32
    %c0_i32_0 = arith.constant 0 : i32
    return %arg0, %c0_i32 : i32, i32
  }
  func.func @transform_1(%arg0: i32) -> (i32, i32) {
    %c0_i32 = arith.constant 0 : i32
    %c0_i32_0 = arith.constant 0 : i32
    %c0_i32_1 = arith.constant 0 : i32
    return %c0_i32, %c0_i32_0 : i32, i32
  }
  func.func @transform_2(%arg0: i32) -> (i32, i32) {
    %c0_i32 = arith.constant 0 : i32
    %c0_i32_0 = arith.constant 0 : i32
    %c0_i32_1 = arith.constant 0 : i32
    return %c0_i32, %c0_i32_0 : i32, i32
  }
  func.func @transform_3(%arg0: i32) -> (i32, i32) {
    %c0_i32 = arith.constant 0 : i32
    %c0_i32_0 = arith.constant 0 : i32
    %c0_i32_1 = arith.constant 0 : i32
    return %c0_i32, %c0_i32_0 : i32, i32
  }
  func.func @transform_4(%arg0: i32) -> (i32, i32) {
    %c0_i32 = arith.constant 0 : i32
    %c0_i32_0 = arith.constant 0 : i32
    return %arg0, %c0_i32 : i32, i32
  }
  func.func @transform_5(%arg0: i32) -> (i32, i32) {
    %c0_i32 = arith.constant 0 : i32
    %c0_i32_0 = arith.constant 0 : i32
    return %arg0, %c0_i32 : i32, i32
  }
}

module attributes {stable_mosaic.version = 11 : i64} {
  func.func @_mm_bn_act_kernel(%arg0: i32, %arg1: memref<128x64xbf16, #tpu.memory_space<vmem>>, %arg2: memref<64x32xbf16, #tpu.memory_space<vmem>>, %arg3: memref<1x32xf32, #tpu.memory_space<vmem>>, %arg4: memref<1x32xf32, #tpu.memory_space<vmem>>, %arg5: memref<128x32xf32, #tpu.memory_space<vmem>>) attributes {dimension_semantics = [#tpu.dimension_semantics<parallel>], iteration_bounds = array<i64: 1>, scalar_prefetch = 0 : i64, scratch_operands = 0 : i64, tpu.core_type = #tpu.core_type<tc>, window_params = [{transform_indices = @transform_0, window_bounds = array<i64: 128, 64>}, {pipeline_mode = #tpu.pipeline_mode<synchronous>, transform_indices = @transform_1, window_bounds = array<i64: 64, 32>}, {pipeline_mode = #tpu.pipeline_mode<synchronous>, transform_indices = @transform_2, window_bounds = array<i64: 1, 32>}, {pipeline_mode = #tpu.pipeline_mode<synchronous>, transform_indices = @transform_3, window_bounds = array<i64: 1, 32>}, {transform_indices = @transform_4, window_bounds = array<i64: 128, 32>}]} {
    %c0 = arith.constant 0 : index
    %c0_0 = arith.constant 0 : index
    %0 = vector.load %arg1[%c0, %c0_0] : memref<128x64xbf16, #tpu.memory_space<vmem>>, vector<128x64xbf16>
    %c0_1 = arith.constant 0 : index
    %c0_2 = arith.constant 0 : index
    %1 = vector.load %arg2[%c0_1, %c0_2] : memref<64x32xbf16, #tpu.memory_space<vmem>>, vector<64x32xbf16>
    %cst = arith.constant dense<0.000000e+00> : vector<128x32xf32>
    %2 = tpu.matmul %0, %1, %cst {dimension_numbers = #tpu.dot_dimension_numbers<[1], [0], [0], [1], [0, 0, 1, 1], [], []>} : vector<128x64xbf16>, vector<64x32xbf16>, vector<128x32xf32> -> vector<128x32xf32>
    %c0_3 = arith.constant 0 : index
    %c0_4 = arith.constant 0 : index
    %3 = vector.load %arg3[%c0_3, %c0_4] : memref<1x32xf32, #tpu.memory_space<vmem>>, vector<1x32xf32>
    %4 = vector.broadcast %3 : vector<1x32xf32> to vector<128x32xf32>
    %5 = arith.mulf %2, %4 : vector<128x32xf32>
    %c0_5 = arith.constant 0 : index
    %c0_6 = arith.constant 0 : index
    %6 = vector.load %arg4[%c0_5, %c0_6] : memref<1x32xf32, #tpu.memory_space<vmem>>, vector<1x32xf32>
    %7 = vector.broadcast %6 : vector<1x32xf32> to vector<128x32xf32>
    %8 = arith.addf %5, %7 : vector<128x32xf32>
    %cst_7 = arith.constant 0.000000e+00 : f32
    %9 = vector.broadcast %cst_7 : f32 to vector<128x32xf32>
    %10 = arith.maximumf %8, %9 : vector<128x32xf32>
    %c0_8 = arith.constant 0 : index
    %c0_9 = arith.constant 0 : index
    %11 = vector.load %arg5[%c0_8, %c0_9] : memref<128x32xf32, #tpu.memory_space<vmem>>, vector<128x32xf32>
    tpu.vector_store %arg5[%c0_8, %c0_9], %10 {strides = array<i32>} : memref<128x32xf32, #tpu.memory_space<vmem>>, vector<128x32xf32>,
    return
  }
  func.func @transform_0(%arg0: i32) -> (i32, i32) {
    %c0_i32 = arith.constant 0 : i32
    %c0_i32_0 = arith.constant 0 : i32
    return %arg0, %c0_i32 : i32, i32
  }
  func.func @transform_1(%arg0: i32) -> (i32, i32) {
    %c0_i32 = arith.constant 0 : i32
    %c0_i32_0 = arith.constant 0 : i32
    %c0_i32_1 = arith.constant 0 : i32
    return %c0_i32, %c0_i32_0 : i32, i32
  }
  func.func @transform_2(%arg0: i32) -> (i32, i32) {
    %c0_i32 = arith.constant 0 : i32
    %c0_i32_0 = arith.constant 0 : i32
    %c0_i32_1 = arith.constant 0 : i32
    return %c0_i32, %c0_i32_0 : i32, i32
  }
  func.func @transform_3(%arg0: i32) -> (i32, i32) {
    %c0_i32 = arith.constant 0 : i32
    %c0_i32_0 = arith.constant 0 : i32
    %c0_i32_1 = arith.constant 0 : i32
    return %c0_i32, %c0_i32_0 : i32, i32
  }
  func.func @transform_4(%arg0: i32) -> (i32, i32) {
    %c0_i32 = arith.constant 0 : i32
    %c0_i32_0 = arith.constant 0 : i32
    return %arg0, %c0_i32 : i32, i32
  }
}

module attributes {stable_mosaic.version = 11 : i64} {
  func.func @_mm_bn_act_kernel(%arg0: i32, %arg1: memref<32x288xbf16, #tpu.memory_space<vmem>>, %arg2: memref<288x32xbf16, #tpu.memory_space<vmem>>, %arg3: memref<1x32xf32, #tpu.memory_space<vmem>>, %arg4: memref<1x32xf32, #tpu.memory_space<vmem>>, %arg5: memref<32x32xf32, #tpu.memory_space<vmem>>) attributes {dimension_semantics = [#tpu.dimension_semantics<parallel>], iteration_bounds = array<i64: 1>, scalar_prefetch = 0 : i64, scratch_operands = 0 : i64, tpu.core_type = #tpu.core_type<tc>, window_params = [{transform_indices = @transform_0, window_bounds = array<i64: 32, 288>}, {pipeline_mode = #tpu.pipeline_mode<synchronous>, transform_indices = @transform_1, window_bounds = array<i64: 288, 32>}, {pipeline_mode = #tpu.pipeline_mode<synchronous>, transform_indices = @transform_2, window_bounds = array<i64: 1, 32>}, {pipeline_mode = #tpu.pipeline_mode<synchronous>, transform_indices = @transform_3, window_bounds = array<i64: 1, 32>}, {transform_indices = @transform_4, window_bounds = array<i64: 32, 32>}]} {
    %c0 = arith.constant 0 : index
    %c0_0 = arith.constant 0 : index
    %0 = vector.load %arg1[%c0, %c0_0] : memref<32x288xbf16, #tpu.memory_space<vmem>>, vector<32x288xbf16>
    %c0_1 = arith.constant 0 : index
    %c0_2 = arith.constant 0 : index
    %1 = vector.load %arg2[%c0_1, %c0_2] : memref<288x32xbf16, #tpu.memory_space<vmem>>, vector<288x32xbf16>
    %cst = arith.constant dense<0.000000e+00> : vector<32x32xf32>
    %2 = tpu.matmul %0, %1, %cst {dimension_numbers = #tpu.dot_dimension_numbers<[1], [0], [0], [1], [0, 0, 1, 1], [], []>} : vector<32x288xbf16>, vector<288x32xbf16>, vector<32x32xf32> -> vector<32x32xf32>
    %c0_3 = arith.constant 0 : index
    %c0_4 = arith.constant 0 : index
    %3 = vector.load %arg3[%c0_3, %c0_4] : memref<1x32xf32, #tpu.memory_space<vmem>>, vector<1x32xf32>
    %4 = vector.broadcast %3 : vector<1x32xf32> to vector<32x32xf32>
    %5 = arith.mulf %2, %4 : vector<32x32xf32>
    %c0_5 = arith.constant 0 : index
    %c0_6 = arith.constant 0 : index
    %6 = vector.load %arg4[%c0_5, %c0_6] : memref<1x32xf32, #tpu.memory_space<vmem>>, vector<1x32xf32>
    %7 = vector.broadcast %6 : vector<1x32xf32> to vector<32x32xf32>
    %8 = arith.addf %5, %7 : vector<32x32xf32>
    %cst_7 = arith.constant 0.000000e+00 : f32
    %9 = vector.broadcast %cst_7 : f32 to vector<32x32xf32>
    %10 = arith.maximumf %8, %9 : vector<32x32xf32>
    %c0_8 = arith.constant 0 : index
    %c0_9 = arith.constant 0 : index
    %11 = vector.load %arg5[%c0_8, %c0_9] : memref<32x32xf32, #tpu.memory_space<vmem>>, vector<32x32xf32>
    tpu.vector_store %arg5[%c0_8, %c0_9], %10 {strides = array<i32>} : memref<32x32xf32, #tpu.memory_space<vmem>>, vector<32x32xf32>,
    return
  }
  func.func @transform_0(%arg0: i32) -> (i32, i32) {
    %c0_i32 = arith.constant 0 : i32
    %c0_i32_0 = arith.constant 0 : i32
    return %arg0, %c0_i32 : i32, i32
  }
  func.func @transform_1(%arg0: i32) -> (i32, i32) {
    %c0_i32 = arith.constant 0 : i32
    %c0_i32_0 = arith.constant 0 : i32
    %c0_i32_1 = arith.constant 0 : i32
    return %c0_i32, %c0_i32_0 : i32, i32
  }
  func.func @transform_2(%arg0: i32) -> (i32, i32) {
    %c0_i32 = arith.constant 0 : i32
    %c0_i32_0 = arith.constant 0 : i32
    %c0_i32_1 = arith.constant 0 : i32
    return %c0_i32, %c0_i32_0 : i32, i32
  }
  func.func @transform_3(%arg0: i32) -> (i32, i32) {
    %c0_i32 = arith.constant 0 : i32
    %c0_i32_0 = arith.constant 0 : i32
    %c0_i32_1 = arith.constant 0 : i32
    return %c0_i32, %c0_i32_0 : i32, i32
  }
  func.func @transform_4(%arg0: i32) -> (i32, i32) {
    %c0_i32 = arith.constant 0 : i32
    %c0_i32_0 = arith.constant 0 : i32
    return %arg0, %c0_i32 : i32, i32
  }
}

module attributes {stable_mosaic.version = 11 : i64} {
  func.func @_mm_bn_act_kernel(%arg0: i32, %arg1: memref<32x64xbf16, #tpu.memory_space<vmem>>, %arg2: memref<64x128xbf16, #tpu.memory_space<vmem>>, %arg3: memref<1x128xf32, #tpu.memory_space<vmem>>, %arg4: memref<1x128xf32, #tpu.memory_space<vmem>>, %arg5: memref<32x128xf32, #tpu.memory_space<vmem>>) attributes {dimension_semantics = [#tpu.dimension_semantics<parallel>], iteration_bounds = array<i64: 1>, scalar_prefetch = 0 : i64, scratch_operands = 0 : i64, tpu.core_type = #tpu.core_type<tc>, window_params = [{transform_indices = @transform_0, window_bounds = array<i64: 32, 64>}, {pipeline_mode = #tpu.pipeline_mode<synchronous>, transform_indices = @transform_1, window_bounds = array<i64: 64, 128>}, {pipeline_mode = #tpu.pipeline_mode<synchronous>, transform_indices = @transform_2, window_bounds = array<i64: 1, 128>}, {pipeline_mode = #tpu.pipeline_mode<synchronous>, transform_indices = @transform_3, window_bounds = array<i64: 1, 128>}, {transform_indices = @transform_4, window_bounds = array<i64: 32, 128>}]} {
    %c0 = arith.constant 0 : index
    %c0_0 = arith.constant 0 : index
    %0 = vector.load %arg1[%c0, %c0_0] : memref<32x64xbf16, #tpu.memory_space<vmem>>, vector<32x64xbf16>
    %c0_1 = arith.constant 0 : index
    %c0_2 = arith.constant 0 : index
    %1 = vector.load %arg2[%c0_1, %c0_2] : memref<64x128xbf16, #tpu.memory_space<vmem>>, vector<64x128xbf16>
    %cst = arith.constant dense<0.000000e+00> : vector<32x128xf32>
    %2 = tpu.matmul %0, %1, %cst {dimension_numbers = #tpu.dot_dimension_numbers<[1], [0], [0], [1], [0, 0, 1, 1], [], []>} : vector<32x64xbf16>, vector<64x128xbf16>, vector<32x128xf32> -> vector<32x128xf32>
    %c0_3 = arith.constant 0 : index
    %c0_4 = arith.constant 0 : index
    %3 = vector.load %arg3[%c0_3, %c0_4] : memref<1x128xf32, #tpu.memory_space<vmem>>, vector<1x128xf32>
    %4 = vector.broadcast %3 : vector<1x128xf32> to vector<32x128xf32>
    %5 = arith.mulf %2, %4 : vector<32x128xf32>
    %c0_5 = arith.constant 0 : index
    %c0_6 = arith.constant 0 : index
    %6 = vector.load %arg4[%c0_5, %c0_6] : memref<1x128xf32, #tpu.memory_space<vmem>>, vector<1x128xf32>
    %7 = vector.broadcast %6 : vector<1x128xf32> to vector<32x128xf32>
    %8 = arith.addf %5, %7 : vector<32x128xf32>
    %c0_7 = arith.constant 0 : index
    %c0_8 = arith.constant 0 : index
    %9 = vector.load %arg5[%c0_7, %c0_8] : memref<32x128xf32, #tpu.memory_space<vmem>>, vector<32x128xf32>
    tpu.vector_store %arg5[%c0_7, %c0_8], %8 {strides = array<i32>} : memref<32x128xf32, #tpu.memory_space<vmem>>, vector<32x128xf32>,
    return
  }
  func.func @transform_0(%arg0: i32) -> (i32, i32) {
    %c0_i32 = arith.constant 0 : i32
    %c0_i32_0 = arith.constant 0 : i32
    return %arg0, %c0_i32 : i32, i32
  }
  func.func @transform_1(%arg0: i32) -> (i32, i32) {
    %c0_i32 = arith.constant 0 : i32
    %c0_i32_0 = arith.constant 0 : i32
    %c0_i32_1 = arith.constant 0 : i32
    return %c0_i32, %c0_i32_0 : i32, i32
  }
  func.func @transform_2(%arg0: i32) -> (i32, i32) {
    %c0_i32 = arith.constant 0 : i32
    %c0_i32_0 = arith.constant 0 : i32
    %c0_i32_1 = arith.constant 0 : i32
    return %c0_i32, %c0_i32_0 : i32, i32
  }
  func.func @transform_3(%arg0: i32) -> (i32, i32) {
    %c0_i32 = arith.constant 0 : i32
    %c0_i32_0 = arith.constant 0 : i32
    %c0_i32_1 = arith.constant 0 : i32
    return %c0_i32, %c0_i32_0 : i32, i32
  }
  func.func @transform_4(%arg0: i32) -> (i32, i32) {
    %c0_i32 = arith.constant 0 : i32
    %c0_i32_0 = arith.constant 0 : i32
    return %arg0, %c0_i32 : i32, i32
  }
}

module attributes {stable_mosaic.version = 11 : i64} {
  func.func @_mm_bn_act_kernel(%arg0: i32, %arg1: memref<32x32xbf16, #tpu.memory_space<vmem>>, %arg2: memref<32x128xbf16, #tpu.memory_space<vmem>>, %arg3: memref<1x128xf32, #tpu.memory_space<vmem>>, %arg4: memref<1x128xf32, #tpu.memory_space<vmem>>, %arg5: memref<32x128xf32, #tpu.memory_space<vmem>>, %arg6: memref<32x128xf32, #tpu.memory_space<vmem>>) attributes {dimension_semantics = [#tpu.dimension_semantics<parallel>], iteration_bounds = array<i64: 1>, scalar_prefetch = 0 : i64, scratch_operands = 0 : i64, tpu.core_type = #tpu.core_type<tc>, window_params = [{transform_indices = @transform_0, window_bounds = array<i64: 32, 32>}, {pipeline_mode = #tpu.pipeline_mode<synchronous>, transform_indices = @transform_1, window_bounds = array<i64: 32, 128>}, {pipeline_mode = #tpu.pipeline_mode<synchronous>, transform_indices = @transform_2, window_bounds = array<i64: 1, 128>}, {pipeline_mode = #tpu.pipeline_mode<synchronous>, transform_indices = @transform_3, window_bounds = array<i64: 1, 128>}, {transform_indices = @transform_4, window_bounds = array<i64: 32, 128>}, {transform_indices = @transform_5, window_bounds = array<i64: 32, 128>}]} {
    %c0 = arith.constant 0 : index
    %c0_0 = arith.constant 0 : index
    %0 = vector.load %arg1[%c0, %c0_0] : memref<32x32xbf16, #tpu.memory_space<vmem>>, vector<32x32xbf16>
    %c0_1 = arith.constant 0 : index
    %c0_2 = arith.constant 0 : index
    %1 = vector.load %arg2[%c0_1, %c0_2] : memref<32x128xbf16, #tpu.memory_space<vmem>>, vector<32x128xbf16>
    %cst = arith.constant dense<0.000000e+00> : vector<32x128xf32>
    %2 = tpu.matmul %0, %1, %cst {dimension_numbers = #tpu.dot_dimension_numbers<[1], [0], [0], [1], [0, 0, 1, 1], [], []>} : vector<32x32xbf16>, vector<32x128xbf16>, vector<32x128xf32> -> vector<32x128xf32>
    %c0_3 = arith.constant 0 : index
    %c0_4 = arith.constant 0 : index
    %3 = vector.load %arg3[%c0_3, %c0_4] : memref<1x128xf32, #tpu.memory_space<vmem>>, vector<1x128xf32>
    %4 = vector.broadcast %3 : vector<1x128xf32> to vector<32x128xf32>
    %5 = arith.mulf %2, %4 : vector<32x128xf32>
    %c0_5 = arith.constant 0 : index
    %c0_6 = arith.constant 0 : index
    %6 = vector.load %arg4[%c0_5, %c0_6] : memref<1x128xf32, #tpu.memory_space<vmem>>, vector<1x128xf32>
    %7 = vector.broadcast %6 : vector<1x128xf32> to vector<32x128xf32>
    %8 = arith.addf %5, %7 : vector<32x128xf32>
    %c0_7 = arith.constant 0 : index
    %c0_8 = arith.constant 0 : index
    %9 = vector.load %arg5[%c0_7, %c0_8] : memref<32x128xf32, #tpu.memory_space<vmem>>, vector<32x128xf32>
    %10 = arith.addf %8, %9 : vector<32x128xf32>
    %cst_9 = arith.constant 0.000000e+00 : f32
    %11 = vector.broadcast %cst_9 : f32 to vector<32x128xf32>
    %12 = arith.maximumf %10, %11 : vector<32x128xf32>
    %c0_10 = arith.constant 0 : index
    %c0_11 = arith.constant 0 : index
    %13 = vector.load %arg6[%c0_10, %c0_11] : memref<32x128xf32, #tpu.memory_space<vmem>>, vector<32x128xf32>
    tpu.vector_store %arg6[%c0_10, %c0_11], %12 {strides = array<i32>} : memref<32x128xf32, #tpu.memory_space<vmem>>, vector<32x128xf32>,
    return
  }
  func.func @transform_0(%arg0: i32) -> (i32, i32) {
    %c0_i32 = arith.constant 0 : i32
    %c0_i32_0 = arith.constant 0 : i32
    return %arg0, %c0_i32 : i32, i32
  }
  func.func @transform_1(%arg0: i32) -> (i32, i32) {
    %c0_i32 = arith.constant 0 : i32
    %c0_i32_0 = arith.constant 0 : i32
    %c0_i32_1 = arith.constant 0 : i32
    return %c0_i32, %c0_i32_0 : i32, i32
  }
  func.func @transform_2(%arg0: i32) -> (i32, i32) {
    %c0_i32 = arith.constant 0 : i32
    %c0_i32_0 = arith.constant 0 : i32
    %c0_i32_1 = arith.constant 0 : i32
    return %c0_i32, %c0_i32_0 : i32, i32
  }
  func.func @transform_3(%arg0: i32) -> (i32, i32) {
    %c0_i32 = arith.constant 0 : i32
    %c0_i32_0 = arith.constant 0 : i32
    %c0_i32_1 = arith.constant 0 : i32
    return %c0_i32, %c0_i32_0 : i32, i32
  }
  func.func @transform_4(%arg0: i32) -> (i32, i32) {
    %c0_i32 = arith.constant 0 : i32
    %c0_i32_0 = arith.constant 0 : i32
    return %arg0, %c0_i32 : i32, i32
  }
  func.func @transform_5(%arg0: i32) -> (i32, i32) {
    %c0_i32 = arith.constant 0 : i32
    %c0_i32_0 = arith.constant 0 : i32
    return %arg0, %c0_i32 : i32, i32
  }
}

module attributes {stable_mosaic.version = 11 : i64} {
  func.func @_gap_kernel(%arg0: i32, %arg1: memref<1x4x4x128xf32, #tpu.memory_space<vmem>>, %arg2: memref<1x1x1x128xf32, #tpu.memory_space<vmem>>) attributes {dimension_semantics = [#tpu.dimension_semantics<parallel>], iteration_bounds = array<i64: 2>, scalar_prefetch = 0 : i64, scratch_operands = 0 : i64, tpu.core_type = #tpu.core_type<tc>, window_params = [{transform_indices = @transform_0, window_bounds = array<i64: 1, 4, 4, 128>}, {transform_indices = @transform_1, window_bounds = array<i64: 1, 1, 1, 128>}]} {
    %c0 = arith.constant 0 : index
    %c0_0 = arith.constant 0 : index
    %c0_1 = arith.constant 0 : index
    %c0_2 = arith.constant 0 : index
    %0 = vector.load %arg1[%c0, %c0_0, %c0_1, %c0_2] : memref<1x4x4x128xf32, #tpu.memory_space<vmem>>, vector<1x4x4x128xf32>
    %1 = vector.shape_cast %0 : vector<1x4x4x128xf32> to vector<4x4x128xf32>
    %cst = arith.constant dense<0.000000e+00> : vector<4x128xf32>
    %2 = vector.multi_reduction <add>, %1, %cst [0] : vector<4x4x128xf32> to vector<4x128xf32>
    %cst_3 = arith.constant dense<0.000000e+00> : vector<128xf32>
    %3 = vector.multi_reduction <add>, %2, %cst_3 [0] : vector<4x128xf32> to vector<128xf32>
    %4 = vector.shape_cast %3 : vector<128xf32> to vector<1x128xf32>
    %cst_4 = arith.constant 6.250000e-02 : f32
    %5 = vector.broadcast %cst_4 : f32 to vector<1x128xf32>
    %6 = arith.mulf %4, %5 : vector<1x128xf32>
    %7 = vector.shape_cast %6 : vector<1x128xf32> to vector<1x1x1x128xf32>
    %c0_5 = arith.constant 0 : index
    %c0_6 = arith.constant 0 : index
    %c0_7 = arith.constant 0 : index
    %c0_8 = arith.constant 0 : index
    %8 = vector.load %arg2[%c0_5, %c0_6, %c0_7, %c0_8] : memref<1x1x1x128xf32, #tpu.memory_space<vmem>>, vector<1x1x1x128xf32>
    tpu.vector_store %arg2[%c0_5, %c0_6, %c0_7, %c0_8], %7 {strides = array<i32>} : memref<1x1x1x128xf32, #tpu.memory_space<vmem>>, vector<1x1x1x128xf32>,
    return
  }
  func.func @transform_0(%arg0: i32) -> (i32, i32, i32, i32) {
    %c0_i32 = arith.constant 0 : i32
    %c0_i32_0 = arith.constant 0 : i32
    %c0_i32_1 = arith.constant 0 : i32
    %c0_i32_2 = arith.constant 0 : i32
    return %arg0, %c0_i32, %c0_i32_0, %c0_i32_1 : i32, i32, i32, i32
  }
  func.func @transform_1(%arg0: i32) -> (i32, i32, i32, i32) {
    %c0_i32 = arith.constant 0 : i32
    %c0_i32_0 = arith.constant 0 : i32
    %c0_i32_1 = arith.constant 0 : i32
    %c0_i32_2 = arith.constant 0 : i32
    return %arg0, %c0_i32, %c0_i32_0, %c0_i32_1 : i32, i32, i32, i32
  }
}

module attributes {stable_mosaic.version = 11 : i64} {
  func.func @_mm_bn_act_kernel(%arg0: i32, %arg1: memref<32x1152xbf16, #tpu.memory_space<vmem>>, %arg2: memref<1152x128xbf16, #tpu.memory_space<vmem>>, %arg3: memref<1x128xf32, #tpu.memory_space<vmem>>, %arg4: memref<1x128xf32, #tpu.memory_space<vmem>>, %arg5: memref<32x128xf32, #tpu.memory_space<vmem>>) attributes {dimension_semantics = [#tpu.dimension_semantics<parallel>], iteration_bounds = array<i64: 1>, scalar_prefetch = 0 : i64, scratch_operands = 0 : i64, tpu.core_type = #tpu.core_type<tc>, window_params = [{transform_indices = @transform_0, window_bounds = array<i64: 32, 1152>}, {pipeline_mode = #tpu.pipeline_mode<synchronous>, transform_indices = @transform_1, window_bounds = array<i64: 1152, 128>}, {pipeline_mode = #tpu.pipeline_mode<synchronous>, transform_indices = @transform_2, window_bounds = array<i64: 1, 128>}, {pipeline_mode = #tpu.pipeline_mode<synchronous>, transform_indices = @transform_3, window_bounds = array<i64: 1, 128>}, {transform_indices = @transform_4, window_bounds = array<i64: 32, 128>}]} {
    %c0 = arith.constant 0 : index
    %c0_0 = arith.constant 0 : index
    %0 = vector.load %arg1[%c0, %c0_0] : memref<32x1152xbf16, #tpu.memory_space<vmem>>, vector<32x1152xbf16>
    %c0_1 = arith.constant 0 : index
    %c0_2 = arith.constant 0 : index
    %1 = vector.load %arg2[%c0_1, %c0_2] : memref<1152x128xbf16, #tpu.memory_space<vmem>>, vector<1152x128xbf16>
    %cst = arith.constant dense<0.000000e+00> : vector<32x128xf32>
    %2 = tpu.matmul %0, %1, %cst {dimension_numbers = #tpu.dot_dimension_numbers<[1], [0], [0], [1], [0, 0, 1, 1], [], []>} : vector<32x1152xbf16>, vector<1152x128xbf16>, vector<32x128xf32> -> vector<32x128xf32>
    %c0_3 = arith.constant 0 : index
    %c0_4 = arith.constant 0 : index
    %3 = vector.load %arg3[%c0_3, %c0_4] : memref<1x128xf32, #tpu.memory_space<vmem>>, vector<1x128xf32>
    %4 = vector.broadcast %3 : vector<1x128xf32> to vector<32x128xf32>
    %5 = arith.mulf %2, %4 : vector<32x128xf32>
    %c0_5 = arith.constant 0 : index
    %c0_6 = arith.constant 0 : index
    %6 = vector.load %arg4[%c0_5, %c0_6] : memref<1x128xf32, #tpu.memory_space<vmem>>, vector<1x128xf32>
    %7 = vector.broadcast %6 : vector<1x128xf32> to vector<32x128xf32>
    %8 = arith.addf %5, %7 : vector<32x128xf32>
    %cst_7 = arith.constant 0.000000e+00 : f32
    %9 = vector.broadcast %cst_7 : f32 to vector<32x128xf32>
    %10 = arith.maximumf %8, %9 : vector<32x128xf32>
    %c0_8 = arith.constant 0 : index
    %c0_9 = arith.constant 0 : index
    %11 = vector.load %arg5[%c0_8, %c0_9] : memref<32x128xf32, #tpu.memory_space<vmem>>, vector<32x128xf32>
    tpu.vector_store %arg5[%c0_8, %c0_9], %10 {strides = array<i32>} : memref<32x128xf32, #tpu.memory_space<vmem>>, vector<32x128xf32>,
    return
  }
  func.func @transform_0(%arg0: i32) -> (i32, i32) {
    %c0_i32 = arith.constant 0 : i32
    %c0_i32_0 = arith.constant 0 : i32
    return %arg0, %c0_i32 : i32, i32
  }
  func.func @transform_1(%arg0: i32) -> (i32, i32) {
    %c0_i32 = arith.constant 0 : i32
    %c0_i32_0 = arith.constant 0 : i32
    %c0_i32_1 = arith.constant 0 : i32
    return %c0_i32, %c0_i32_0 : i32, i32
  }
  func.func @transform_2(%arg0: i32) -> (i32, i32) {
    %c0_i32 = arith.constant 0 : i32
    %c0_i32_0 = arith.constant 0 : i32
    %c0_i32_1 = arith.constant 0 : i32
    return %c0_i32, %c0_i32_0 : i32, i32
  }
  func.func @transform_3(%arg0: i32) -> (i32, i32) {
    %c0_i32 = arith.constant 0 : i32
    %c0_i32_0 = arith.constant 0 : i32
    %c0_i32_1 = arith.constant 0 : i32
    return %c0_i32, %c0_i32_0 : i32, i32
  }
  func.func @transform_4(%arg0: i32) -> (i32, i32) {
    %c0_i32 = arith.constant 0 : i32
    %c0_i32_0 = arith.constant 0 : i32
    return %arg0, %c0_i32 : i32, i32
  }
}

module attributes {stable_mosaic.version = 11 : i64} {
  func.func @_mm_bn_act_kernel(%arg0: i32, %arg1: memref<32x128xbf16, #tpu.memory_space<vmem>>, %arg2: memref<128x128xbf16, #tpu.memory_space<vmem>>, %arg3: memref<1x128xf32, #tpu.memory_space<vmem>>, %arg4: memref<1x128xf32, #tpu.memory_space<vmem>>, %arg5: memref<32x128xf32, #tpu.memory_space<vmem>>) attributes {dimension_semantics = [#tpu.dimension_semantics<parallel>], iteration_bounds = array<i64: 1>, scalar_prefetch = 0 : i64, scratch_operands = 0 : i64, tpu.core_type = #tpu.core_type<tc>, window_params = [{transform_indices = @transform_0, window_bounds = array<i64: 32, 128>}, {pipeline_mode = #tpu.pipeline_mode<synchronous>, transform_indices = @transform_1, window_bounds = array<i64: 128, 128>}, {pipeline_mode = #tpu.pipeline_mode<synchronous>, transform_indices = @transform_2, window_bounds = array<i64: 1, 128>}, {pipeline_mode = #tpu.pipeline_mode<synchronous>, transform_indices = @transform_3, window_bounds = array<i64: 1, 128>}, {transform_indices = @transform_4, window_bounds = array<i64: 32, 128>}]} {
    %c0 = arith.constant 0 : index
    %c0_0 = arith.constant 0 : index
    %0 = vector.load %arg1[%c0, %c0_0] : memref<32x128xbf16, #tpu.memory_space<vmem>>, vector<32x128xbf16>
    %c0_1 = arith.constant 0 : index
    %c0_2 = arith.constant 0 : index
    %1 = vector.load %arg2[%c0_1, %c0_2] : memref<128x128xbf16, #tpu.memory_space<vmem>>, vector<128x128xbf16>
    %cst = arith.constant dense<0.000000e+00> : vector<32x128xf32>
    %2 = tpu.matmul %0, %1, %cst {dimension_numbers = #tpu.dot_dimension_numbers<[1], [0], [0], [1], [0, 0, 1, 1], [], []>} : vector<32x128xbf16>, vector<128x128xbf16>, vector<32x128xf32> -> vector<32x128xf32>
    %c0_3 = arith.constant 0 : index
    %c0_4 = arith.constant 0 : index
    %3 = vector.load %arg3[%c0_3, %c0_4] : memref<1x128xf32, #tpu.memory_space<vmem>>, vector<1x128xf32>
    %4 = vector.broadcast %3 : vector<1x128xf32> to vector<32x128xf32>
    %5 = arith.mulf %2, %4 : vector<32x128xf32>
    %c0_5 = arith.constant 0 : index
    %c0_6 = arith.constant 0 : index
    %6 = vector.load %arg4[%c0_5, %c0_6] : memref<1x128xf32, #tpu.memory_space<vmem>>, vector<1x128xf32>
    %7 = vector.broadcast %6 : vector<1x128xf32> to vector<32x128xf32>
    %8 = arith.addf %5, %7 : vector<32x128xf32>
    %cst_7 = arith.constant 0.000000e+00 : f32
    %9 = vector.broadcast %cst_7 : f32 to vector<32x128xf32>
    %10 = arith.maximumf %8, %9 : vector<32x128xf32>
    %c0_8 = arith.constant 0 : index
    %c0_9 = arith.constant 0 : index
    %11 = vector.load %arg5[%c0_8, %c0_9] : memref<32x128xf32, #tpu.memory_space<vmem>>, vector<32x128xf32>
    tpu.vector_store %arg5[%c0_8, %c0_9], %10 {strides = array<i32>} : memref<32x128xf32, #tpu.memory_space<vmem>>, vector<32x128xf32>,
    return
  }
  func.func @transform_0(%arg0: i32) -> (i32, i32) {
    %c0_i32 = arith.constant 0 : i32
    %c0_i32_0 = arith.constant 0 : i32
    return %arg0, %c0_i32 : i32, i32
  }
  func.func @transform_1(%arg0: i32) -> (i32, i32) {
    %c0_i32 = arith.constant 0 : i32
    %c0_i32_0 = arith.constant 0 : i32
    %c0_i32_1 = arith.constant 0 : i32
    return %c0_i32, %c0_i32_0 : i32, i32
  }
  func.func @transform_2(%arg0: i32) -> (i32, i32) {
    %c0_i32 = arith.constant 0 : i32
    %c0_i32_0 = arith.constant 0 : i32
    %c0_i32_1 = arith.constant 0 : i32
    return %c0_i32, %c0_i32_0 : i32, i32
  }
  func.func @transform_3(%arg0: i32) -> (i32, i32) {
    %c0_i32 = arith.constant 0 : i32
    %c0_i32_0 = arith.constant 0 : i32
    %c0_i32_1 = arith.constant 0 : i32
    return %c0_i32, %c0_i32_0 : i32, i32
  }
  func.func @transform_4(%arg0: i32) -> (i32, i32) {
    %c0_i32 = arith.constant 0 : i32
    %c0_i32_0 = arith.constant 0 : i32
    return %arg0, %c0_i32 : i32, i32
  }
}

module attributes {stable_mosaic.version = 11 : i64} {
  func.func @_mm_bn_act_kernel(%arg0: i32, %arg1: memref<8x128xbf16, #tpu.memory_space<vmem>>, %arg2: memref<128x128xbf16, #tpu.memory_space<vmem>>, %arg3: memref<1x128xf32, #tpu.memory_space<vmem>>, %arg4: memref<1x128xf32, #tpu.memory_space<vmem>>, %arg5: memref<8x128xf32, #tpu.memory_space<vmem>>) attributes {dimension_semantics = [#tpu.dimension_semantics<parallel>], iteration_bounds = array<i64: 1>, scalar_prefetch = 0 : i64, scratch_operands = 0 : i64, tpu.core_type = #tpu.core_type<tc>, window_params = [{transform_indices = @transform_0, window_bounds = array<i64: 8, 128>}, {pipeline_mode = #tpu.pipeline_mode<synchronous>, transform_indices = @transform_1, window_bounds = array<i64: 128, 128>}, {pipeline_mode = #tpu.pipeline_mode<synchronous>, transform_indices = @transform_2, window_bounds = array<i64: 1, 128>}, {pipeline_mode = #tpu.pipeline_mode<synchronous>, transform_indices = @transform_3, window_bounds = array<i64: 1, 128>}, {transform_indices = @transform_4, window_bounds = array<i64: 8, 128>}]} {
    %c0 = arith.constant 0 : index
    %c0_0 = arith.constant 0 : index
    %0 = vector.load %arg1[%c0, %c0_0] : memref<8x128xbf16, #tpu.memory_space<vmem>>, vector<8x128xbf16>
    %c0_1 = arith.constant 0 : index
    %c0_2 = arith.constant 0 : index
    %1 = vector.load %arg2[%c0_1, %c0_2] : memref<128x128xbf16, #tpu.memory_space<vmem>>, vector<128x128xbf16>
    %cst = arith.constant dense<0.000000e+00> : vector<8x128xf32>
    %2 = tpu.matmul %0, %1, %cst {dimension_numbers = #tpu.dot_dimension_numbers<[1], [0], [0], [1], [0, 0, 1, 1], [], []>} : vector<8x128xbf16>, vector<128x128xbf16>, vector<8x128xf32> -> vector<8x128xf32>
    %c0_3 = arith.constant 0 : index
    %c0_4 = arith.constant 0 : index
    %3 = vector.load %arg3[%c0_3, %c0_4] : memref<1x128xf32, #tpu.memory_space<vmem>>, vector<1x128xf32>
    %4 = vector.broadcast %3 : vector<1x128xf32> to vector<8x128xf32>
    %5 = arith.mulf %2, %4 : vector<8x128xf32>
    %c0_5 = arith.constant 0 : index
    %c0_6 = arith.constant 0 : index
    %6 = vector.load %arg4[%c0_5, %c0_6] : memref<1x128xf32, #tpu.memory_space<vmem>>, vector<1x128xf32>
    %7 = vector.broadcast %6 : vector<1x128xf32> to vector<8x128xf32>
    %8 = arith.addf %5, %7 : vector<8x128xf32>
    %cst_7 = arith.constant 0.000000e+00 : f32
    %9 = vector.broadcast %cst_7 : f32 to vector<8x128xf32>
    %10 = arith.maximumf %8, %9 : vector<8x128xf32>
    %c0_8 = arith.constant 0 : index
    %c0_9 = arith.constant 0 : index
    %11 = vector.load %arg5[%c0_8, %c0_9] : memref<8x128xf32, #tpu.memory_space<vmem>>, vector<8x128xf32>
    tpu.vector_store %arg5[%c0_8, %c0_9], %10 {strides = array<i32>} : memref<8x128xf32, #tpu.memory_space<vmem>>, vector<8x128xf32>,
    return
  }
  func.func @transform_0(%arg0: i32) -> (i32, i32) {
    %c0_i32 = arith.constant 0 : i32
    %c0_i32_0 = arith.constant 0 : i32
    return %arg0, %c0_i32 : i32, i32
  }
  func.func @transform_1(%arg0: i32) -> (i32, i32) {
    %c0_i32 = arith.constant 0 : i32
    %c0_i32_0 = arith.constant 0 : i32
    %c0_i32_1 = arith.constant 0 : i32
    return %c0_i32, %c0_i32_0 : i32, i32
  }
  func.func @transform_2(%arg0: i32) -> (i32, i32) {
    %c0_i32 = arith.constant 0 : i32
    %c0_i32_0 = arith.constant 0 : i32
    %c0_i32_1 = arith.constant 0 : i32
    return %c0_i32, %c0_i32_0 : i32, i32
  }
  func.func @transform_3(%arg0: i32) -> (i32, i32) {
    %c0_i32 = arith.constant 0 : i32
    %c0_i32_0 = arith.constant 0 : i32
    %c0_i32_1 = arith.constant 0 : i32
    return %c0_i32, %c0_i32_0 : i32, i32
  }
  func.func @transform_4(%arg0: i32) -> (i32, i32) {
    %c0_i32 = arith.constant 0 : i32
    %c0_i32_0 = arith.constant 0 : i32
    return %arg0, %c0_i32 : i32, i32
  }
}

module attributes {stable_mosaic.version = 11 : i64} {
  func.func @_mm_bn_act_kernel(%arg0: i32, %arg1: memref<32x128xbf16, #tpu.memory_space<vmem>>, %arg2: memref<32x128xbf16, #tpu.memory_space<vmem>>, %arg3: memref<32x128xbf16, #tpu.memory_space<vmem>>, %arg4: memref<32x128xbf16, #tpu.memory_space<vmem>>, %arg5: memref<32x128xbf16, #tpu.memory_space<vmem>>, %arg6: memref<128x128xbf16, #tpu.memory_space<vmem>>, %arg7: memref<128x128xbf16, #tpu.memory_space<vmem>>, %arg8: memref<128x128xbf16, #tpu.memory_space<vmem>>, %arg9: memref<128x128xbf16, #tpu.memory_space<vmem>>, %arg10: memref<128x128xbf16, #tpu.memory_space<vmem>>, %arg11: memref<1x128xf32, #tpu.memory_space<vmem>>, %arg12: memref<1x128xf32, #tpu.memory_space<vmem>>, %arg13: memref<32x128xf32, #tpu.memory_space<vmem>>) attributes {dimension_semantics = [#tpu.dimension_semantics<parallel>], iteration_bounds = array<i64: 1>, scalar_prefetch = 0 : i64, scratch_operands = 0 : i64, tpu.core_type = #tpu.core_type<tc>, window_params = [{transform_indices = @transform_0, window_bounds = array<i64: 32, 128>}, {transform_indices = @transform_1, window_bounds = array<i64: 32, 128>}, {transform_indices = @transform_2, window_bounds = array<i64: 32, 128>}, {transform_indices = @transform_3, window_bounds = array<i64: 32, 128>}, {transform_indices = @transform_4, window_bounds = array<i64: 32, 128>}, {pipeline_mode = #tpu.pipeline_mode<synchronous>, transform_indices = @transform_5, window_bounds = array<i64: 128, 128>}, {pipeline_mode = #tpu.pipeline_mode<synchronous>, transform_indices = @transform_6, window_bounds = array<i64: 128, 128>}, {pipeline_mode = #tpu.pipeline_mode<synchronous>, transform_indices = @transform_7, window_bounds = array<i64: 128, 128>}, {pipeline_mode = #tpu.pipeline_mode<synchronous>, transform_indices = @transform_8, window_bounds = array<i64: 128, 128>}, {pipeline_mode = #tpu.pipeline_mode<synchronous>, transform_indices = @transform_9, window_bounds = array<i64: 128, 128>}, {pipeline_mode = #tpu.pipeline_mode<synchronous>, transform_indices = @transform_10, window_bounds = array<i64: 1, 128>}, {pipeline_mode = #tpu.pipeline_mode<synchronous>, transform_indices = @transform_11, window_bounds = array<i64: 1, 128>}, {transform_indices = @transform_12, window_bounds = array<i64: 32, 128>}]} {
    %c0 = arith.constant 0 : index
    %c0_0 = arith.constant 0 : index
    %0 = vector.load %arg1[%c0, %c0_0] : memref<32x128xbf16, #tpu.memory_space<vmem>>, vector<32x128xbf16>
    %c0_1 = arith.constant 0 : index
    %c0_2 = arith.constant 0 : index
    %1 = vector.load %arg6[%c0_1, %c0_2] : memref<128x128xbf16, #tpu.memory_space<vmem>>, vector<128x128xbf16>
    %cst = arith.constant dense<0.000000e+00> : vector<32x128xf32>
    %2 = tpu.matmul %0, %1, %cst {dimension_numbers = #tpu.dot_dimension_numbers<[1], [0], [0], [1], [0, 0, 1, 1], [], []>} : vector<32x128xbf16>, vector<128x128xbf16>, vector<32x128xf32> -> vector<32x128xf32>
    %c0_3 = arith.constant 0 : index
    %c0_4 = arith.constant 0 : index
    %3 = vector.load %arg2[%c0_3, %c0_4] : memref<32x128xbf16, #tpu.memory_space<vmem>>, vector<32x128xbf16>
    %c0_5 = arith.constant 0 : index
    %c0_6 = arith.constant 0 : index
    %4 = vector.load %arg7[%c0_5, %c0_6] : memref<128x128xbf16, #tpu.memory_space<vmem>>, vector<128x128xbf16>
    %cst_7 = arith.constant dense<0.000000e+00> : vector<32x128xf32>
    %5 = tpu.matmul %3, %4, %cst_7 {dimension_numbers = #tpu.dot_dimension_numbers<[1], [0], [0], [1], [0, 0, 1, 1], [], []>} : vector<32x128xbf16>, vector<128x128xbf16>, vector<32x128xf32> -> vector<32x128xf32>
    %6 = arith.addf %2, %5 : vector<32x128xf32>
    %c0_8 = arith.constant 0 : index
    %c0_9 = arith.constant 0 : index
    %7 = vector.load %arg3[%c0_8, %c0_9] : memref<32x128xbf16, #tpu.memory_space<vmem>>, vector<32x128xbf16>
    %c0_10 = arith.constant 0 : index
    %c0_11 = arith.constant 0 : index
    %8 = vector.load %arg8[%c0_10, %c0_11] : memref<128x128xbf16, #tpu.memory_space<vmem>>, vector<128x128xbf16>
    %cst_12 = arith.constant dense<0.000000e+00> : vector<32x128xf32>
    %9 = tpu.matmul %7, %8, %cst_12 {dimension_numbers = #tpu.dot_dimension_numbers<[1], [0], [0], [1], [0, 0, 1, 1], [], []>} : vector<32x128xbf16>, vector<128x128xbf16>, vector<32x128xf32> -> vector<32x128xf32>
    %10 = arith.addf %6, %9 : vector<32x128xf32>
    %c0_13 = arith.constant 0 : index
    %c0_14 = arith.constant 0 : index
    %11 = vector.load %arg4[%c0_13, %c0_14] : memref<32x128xbf16, #tpu.memory_space<vmem>>, vector<32x128xbf16>
    %c0_15 = arith.constant 0 : index
    %c0_16 = arith.constant 0 : index
    %12 = vector.load %arg9[%c0_15, %c0_16] : memref<128x128xbf16, #tpu.memory_space<vmem>>, vector<128x128xbf16>
    %cst_17 = arith.constant dense<0.000000e+00> : vector<32x128xf32>
    %13 = tpu.matmul %11, %12, %cst_17 {dimension_numbers = #tpu.dot_dimension_numbers<[1], [0], [0], [1], [0, 0, 1, 1], [], []>} : vector<32x128xbf16>, vector<128x128xbf16>, vector<32x128xf32> -> vector<32x128xf32>
    %14 = arith.addf %10, %13 : vector<32x128xf32>
    %c0_18 = arith.constant 0 : index
    %c0_19 = arith.constant 0 : index
    %15 = vector.load %arg5[%c0_18, %c0_19] : memref<32x128xbf16, #tpu.memory_space<vmem>>, vector<32x128xbf16>
    %c0_20 = arith.constant 0 : index
    %c0_21 = arith.constant 0 : index
    %16 = vector.load %arg10[%c0_20, %c0_21] : memref<128x128xbf16, #tpu.memory_space<vmem>>, vector<128x128xbf16>
    %cst_22 = arith.constant dense<0.000000e+00> : vector<32x128xf32>
    %17 = tpu.matmul %15, %16, %cst_22 {dimension_numbers = #tpu.dot_dimension_numbers<[1], [0], [0], [1], [0, 0, 1, 1], [], []>} : vector<32x128xbf16>, vector<128x128xbf16>, vector<32x128xf32> -> vector<32x128xf32>
    %18 = arith.addf %14, %17 : vector<32x128xf32>
    %c0_23 = arith.constant 0 : index
    %c0_24 = arith.constant 0 : index
    %19 = vector.load %arg11[%c0_23, %c0_24] : memref<1x128xf32, #tpu.memory_space<vmem>>, vector<1x128xf32>
    %20 = vector.broadcast %19 : vector<1x128xf32> to vector<32x128xf32>
    %21 = arith.mulf %18, %20 : vector<32x128xf32>
    %c0_25 = arith.constant 0 : index
    %c0_26 = arith.constant 0 : index
    %22 = vector.load %arg12[%c0_25, %c0_26] : memref<1x128xf32, #tpu.memory_space<vmem>>, vector<1x128xf32>
    %23 = vector.broadcast %22 : vector<1x128xf32> to vector<32x128xf32>
    %24 = arith.addf %21, %23 : vector<32x128xf32>
    %cst_27 = arith.constant 0.000000e+00 : f32
    %25 = vector.broadcast %cst_27 : f32 to vector<32x128xf32>
    %26 = arith.maximumf %24, %25 : vector<32x128xf32>
    %c0_28 = arith.constant 0 : index
    %c0_29 = arith.constant 0 : index
    %27 = vector.load %arg13[%c0_28, %c0_29] : memref<32x128xf32, #tpu.memory_space<vmem>>, vector<32x128xf32>
    tpu.vector_store %arg13[%c0_28, %c0_29], %26 {strides = array<i32>} : memref<32x128xf32, #tpu.memory_space<vmem>>, vector<32x128xf32>,
    return
  }
  func.func @transform_0(%arg0: i32) -> (i32, i32) {
    %c0_i32 = arith.constant 0 : i32
    %c0_i32_0 = arith.constant 0 : i32
    return %arg0, %c0_i32 : i32, i32
  }
  func.func @transform_1(%arg0: i32) -> (i32, i32) {
    %c0_i32 = arith.constant 0 : i32
    %c0_i32_0 = arith.constant 0 : i32
    return %arg0, %c0_i32 : i32, i32
  }
  func.func @transform_2(%arg0: i32) -> (i32, i32) {
    %c0_i32 = arith.constant 0 : i32
    %c0_i32_0 = arith.constant 0 : i32
    return %arg0, %c0_i32 : i32, i32
  }
  func.func @transform_3(%arg0: i32) -> (i32, i32) {
    %c0_i32 = arith.constant 0 : i32
    %c0_i32_0 = arith.constant 0 : i32
    return %arg0, %c0_i32 : i32, i32
  }
  func.func @transform_4(%arg0: i32) -> (i32, i32) {
    %c0_i32 = arith.constant 0 : i32
    %c0_i32_0 = arith.constant 0 : i32
    return %arg0, %c0_i32 : i32, i32
  }
  func.func @transform_5(%arg0: i32) -> (i32, i32) {
    %c0_i32 = arith.constant 0 : i32
    %c0_i32_0 = arith.constant 0 : i32
    %c0_i32_1 = arith.constant 0 : i32
    return %c0_i32, %c0_i32_0 : i32, i32
  }
  func.func @transform_6(%arg0: i32) -> (i32, i32) {
    %c0_i32 = arith.constant 0 : i32
    %c0_i32_0 = arith.constant 0 : i32
    %c0_i32_1 = arith.constant 0 : i32
    return %c0_i32, %c0_i32_0 : i32, i32
  }
  func.func @transform_7(%arg0: i32) -> (i32, i32) {
    %c0_i32 = arith.constant 0 : i32
    %c0_i32_0 = arith.constant 0 : i32
    %c0_i32_1 = arith.constant 0 : i32
    return %c0_i32, %c0_i32_0 : i32, i32
  }
  func.func @transform_8(%arg0: i32) -> (i32, i32) {
    %c0_i32 = arith.constant 0 : i32
    %c0_i32_0 = arith.constant 0 : i32
    %c0_i32_1 = arith.constant 0 : i32
    return %c0_i32, %c0_i32_0 : i32, i32
  }
  func.func @transform_9(%arg0: i32) -> (i32, i32) {
    %c0_i32 = arith.constant 0 : i32
    %c0_i32_0 = arith.constant 0 : i32
    %c0_i32_1 = arith.constant 0 : i32
    return %c0_i32, %c0_i32_0 : i32, i32
  }
  func.func @transform_10(%arg0: i32) -> (i32, i32) {
    %c0_i32 = arith.constant 0 : i32
    %c0_i32_0 = arith.constant 0 : i32
    %c0_i32_1 = arith.constant 0 : i32
    return %c0_i32, %c0_i32_0 : i32, i32
  }
  func.func @transform_11(%arg0: i32) -> (i32, i32) {
    %c0_i32 = arith.constant 0 : i32
    %c0_i32_0 = arith.constant 0 : i32
    %c0_i32_1 = arith.constant 0 : i32
    return %c0_i32, %c0_i32_0 : i32, i32
  }
  func.func @transform_12(%arg0: i32) -> (i32, i32) {
    %c0_i32 = arith.constant 0 : i32
    %c0_i32_0 = arith.constant 0 : i32
    return %arg0, %c0_i32 : i32, i32
  }
}

</mosaic_0001>

<llo_original>
// kernel: _lambda_.21
$region0: #{_lambda_.21}
  #allocation0 [shape = 'u32[]', space=smem, size = 0x4, offset = 0x4, fixed_abs, tag = 'smem constant byte address 0x4 - core index']
  #allocation1 [shape = 'u32[144,128]{1,0:T(1,128)}', space=vmem, size = 0x12000, scoped, tag = 'internal scratch']
  %s0 = inlined_call_operand.vmem [shape: bf16[2048,147], index: 0, kind: input, shape index: {}]
  %s1 = inlined_call_operand.vmem [shape: bf16[147,8], index: 1, kind: input, shape index: {}]
  %s2 = inlined_call_operand.vmem [shape: f32[1,8], index: 2, kind: input, shape index: {}]
  %s3 = inlined_call_operand.vmem [shape: f32[1,8], index: 3, kind: input, shape index: {}]
  %s4 = inlined_call_operand.vmem [shape: f32[2048,8], index: 4, kind: output, shape index: {}]
  %s5 = sld [smem:[#allocation0]]
  $region49: #{_lambda_.21} parent=0
    _
  %s7 = ssub.s32 1, %s5
  %s8 = scalar_select 0, %s7, %s5
  loop: start=0, step=1, limit=6
  $region2: #{_lambda_.21} parent=0 // loop_pre_header
    _
  $region3: #{_lambda_.21} parent=0 // loop_header
    %s10 = sphi 0, %s14
    %p11 = scmp.ge.s32.totalorder %s10, 6
    %s20 = sphi 0, %s22
    %s23 = sphi 0, %s20
    %s24 = sphi 0, %s23
    %s40 = sphi 0, %s24
    %s44 = sphi 0, %s44
    %s46 = sphi 0, %s44
    %s47 = sphi 0, %s46
    %s61 = sphi 0, %s47
    %s65 = sphi 0, %s65
    %s67 = sphi 0, %s65
    %s68 = sphi 0, %s67
    %s82 = sphi 0, %s68
    %s86 = sphi 0, %s86
    %s88 = sphi 0, %s86
    %s89 = sphi 0, %s88
    %s103 = sphi 0, %s89
    %s109 = sphi 0, %s111
    %s112 = sphi 0, %s109
    %s113 = sphi 0, %s112
    %s129 = sphi 0, %s113
  $region4: #{_lambda_.21} parent=0 // loop_header_branch
    %13 = sbr.rel (%p11) target = $region8
  $region5: #{_lambda_.21} parent=0 // loop_body
    %s15 = ssub.s32 %s10, 1
    %s16 = ssub.s32 %s10, 2
    %s17 = sadd.s32 %s10, 1
    %s18 = ssub.s32 %s10, %s17
    %p19 = scmp.eq.s32.totalorder %s18, 0
    %s21 = sadd.s32 %s20, 1
    %s22 = scalar_select %p19, %s20, %s21
    %p25 = pneg %p19
    %p26 = scmp.eq.s32.totalorder %s10, 3
    %p27 = por %p25, %p26
    %p28 = scmp.ne.s32.totalorder %s20, %s23
    %p29 = scmp.eq.s32.totalorder %s10, 0
    %p30 = por %p28, %p29
    %p31 = scmp.ne.s32.totalorder %s20, %s23
    %p32 = scmp.eq.s32.totalorder %s15, 3
    %p33 = por %p31, %p32
    %p34 = scmp.ne.s32.totalorder %s23, %s24
    %p35 = scmp.eq.s32.totalorder %s15, 0
    %p36 = por %p34, %p35
    %p37 = scmp.ne.s32.totalorder %s23, %s24
    %p38 = scmp.eq.s32.totalorder %s16, 3
    %p39 = por %p37, %p38
    %p41 = scmp.ne.s32.totalorder %s24, %s40
    %p42 = scmp.eq.s32.totalorder %s16, 0
    %p43 = por %p41, %p42
    %s45 = sadd.s32 %s44, 1
    %p48 = scmp.eq.s32.totalorder %s10, 3
    %p49 = scmp.ne.s32.totalorder %s44, %s46
    %p50 = scmp.eq.s32.totalorder %s10, 0
    %p51 = por %p49, %p50
    %p52 = scmp.ne.s32.totalorder %s44, %s46
    %p53 = scmp.eq.s32.totalorder %s15, 3
    %p54 = por %p52, %p53
    %p55 = scmp.ne.s32.totalorder %s46, %s47
    %p56 = scmp.eq.s32.totalorder %s15, 0
    %p57 = por %p55, %p56
    %p58 = scmp.ne.s32.totalorder %s46, %s47
    %p59 = scmp.eq.s32.totalorder %s16, 3
    %p60 = por %p58, %p59
    %p62 = scmp.ne.s32.totalorder %s47, %s61
    %p63 = scmp.eq.s32.totalorder %s16, 0
    %p64 = por %p62, %p63
    %s66 = sadd.s32 %s65, 1
    %p69 = scmp.eq.s32.totalorder %s10, 3
    %p70 = scmp.ne.s32.totalorder %s65, %s67
    %p71 = scmp.eq.s32.totalorder %s10, 0
    %p72 = por %p70, %p71
    %p73 = scmp.ne.s32.totalorder %s65, %s67
    %p74 = scmp.eq.s32.totalorder %s15, 3
    %p75 = por %p73, %p74
    %p76 = scmp.ne.s32.totalorder %s67, %s68
    %p77 = scmp.eq.s32.totalorder %s15, 0
    %p78 = por %p76, %p77
    %p79 = scmp.ne.s32.totalorder %s67, %s68
    %p80 = scmp.eq.s32.totalorder %s16, 3
    %p81 = por %p79, %p80
    %p83 = scmp.ne.s32.totalorder %s68, %s82
    %p84 = scmp.eq.s32.totalorder %s16, 0
    %p85 = por %p83, %p84
    %s87 = sadd.s32 %s86, 1
    %p90 = scmp.eq.s32.totalorder %s10, 3
    %p91 = scmp.ne.s32.totalorder %s86, %s88
    %p92 = scmp.eq.s32.totalorder %s10, 0
    %p93 = por %p91, %p92
    %p94 = scmp.ne.s32.totalorder %s86, %s88
    %p95 = scmp.eq.s32.totalorder %s15, 3
    %p96 = por %p94, %p95
    %p97 = scmp.ne.s32.totalorder %s88, %s89
    %p98 = scmp.eq.s32.totalorder %s15, 0
    %p99 = por %p97, %p98
    %p100 = scmp.ne.s32.totalorder %s88, %s89
    %p101 = scmp.eq.s32.totalorder %s16, 3
    %p102 = por %p100, %p101
    %p104 = scmp.ne.s32.totalorder %s89, %s103
    %p105 = scmp.eq.s32.totalorder %s16, 0
    %p106 = por %p104, %p105
    %s107 = ssub.s32 %s10, %s17
    %p108 = scmp.eq.s32.totalorder %s107, 0
    %s110 = sadd.s32 %s109, 1
    %s111 = scalar_select %p108, %s109, %s110
    %p114 = pneg %p108
    %p115 = scmp.eq.s32.totalorder %s10, 3
    %p116 = por %p114, %p115
    %p117 = scmp.ne.s32.totalorder %s109, %s112
    %p118 = scmp.eq.s32.totalorder %s10, 0
    %p119 = por %p117, %p118
    %p120 = scmp.ne.s32.totalorder %s109, %s112
    %p121 = scmp.eq.s32.totalorder %s15, 3
    %p122 = por %p120, %p121
    %p123 = scmp.ne.s32.totalorder %s112, %s113
    %p124 = scmp.eq.s32.totalorder %s15, 0
    %p125 = por %p123, %p124
    %p126 = scmp.ne.s32.totalorder %s112, %s113
    %p127 = scmp.eq.s32.totalorder %s16, 3
    %p128 = por %p126, %p127
    %p130 = scmp.ne.s32.totalorder %s113, %s129
    %p131 = scmp.eq.s32.totalorder %s16, 0
    %p132 = por %p130, %p131
    %p133 = scmp.le.s32.totalorder 1, %s10
    %p134 = scmp.lt.s32.totalorder %s10, 5
    %p135 = pnand %p133, %p134
    %p136 = pneg %p135
    // Predicated region
    $region9: #{_lambda_.21} parent=5 // pred_check
      _
    $region10: #{_lambda_.21} parent=5 // pred_check_branch
      %138 = sbr.rel (%p135) target = $region12
    $region11: #{_lambda_.21} parent=5 // pred_region
      %s139 = ssub.s32 %s10, 1
      // Predicated region
      $region13: #{_lambda_.21} parent=11 // pred_check
        %p140 = pneg %p57
      $region14: #{_lambda_.21} parent=11 // pred_check_branch
        %142 = sbr.rel (%p140) target = $region16
      $region15: #{_lambda_.21} parent=11 // pred_region
        _
      $region16: #{_lambda_.21} parent=11 // pred_fallthru
        _
      // Predicated region
      $region17: #{_lambda_.21} parent=11 // pred_check
        %p143 = pneg %p78
      $region18: #{_lambda_.21} parent=11 // pred_check_branch
        %145 = sbr.rel (%p143) target = $region20
      $region19: #{_lambda_.21} parent=11 // pred_region
        _
      $region20: #{_lambda_.21} parent=11 // pred_fallthru
        _
      // Predicated region
      $region21: #{_lambda_.21} parent=11 // pred_check
        %p146 = pneg %p99
      $region22: #{_lambda_.21} parent=11 // pred_check_branch
        %148 = sbr.rel (%p146) target = $region24
      $region23: #{_lambda_.21} parent=11 // pred_region
        _
      $region24: #{_lambda_.21} parent=11 // pred_fallthru
        _
    $region12: #{_lambda_.21} parent=5 // pred_fallthru
      _
    %p149 = scmp.lt.s32.totalorder %s10, 4
    // Predicated region
    $region25: #{_lambda_.21} parent=5 // pred_check
      %p150 = pneg %p149
    $region26: #{_lambda_.21} parent=5 // pred_check_branch
      %152 = sbr.rel (%p150) target = $region28
    $region27: #{_lambda_.21} parent=5 // pred_region
      // Predicated region
      $region29: #{_lambda_.21} parent=27 // pred_check
        %p153 = pneg %p30
      $region30: #{_lambda_.21} parent=27 // pred_check_branch
        %155 = sbr.rel (%p153) target = $region32
      $region31: #{_lambda_.21} parent=27 // pred_region
        %s156 = smul.u32 64, %s10
        %p157 = scmp.lt.s32.totalorder %s156, 255
        %s158 = scalar_select %p157, %s156, 255
        %s159 = smul.addr %s158, 2
        %s160 = smul.addr %s159, 4
        %s161 = scalar_lea.vmem %s0, %s160
        %s162 = smul.u32 64, %s10
      $region32: #{_lambda_.21} parent=27 // pred_fallthru
        _
    $region28: #{_lambda_.21} parent=5 // pred_fallthru
      _
    %p163 = scmp.le.s32.totalorder 1, %s10
    %p164 = scmp.lt.s32.totalorder %s10, 5
    %p165 = pnand %p163, %p164
    %p166 = pneg %p165
    // Predicated region
    $region33: #{_lambda_.21} parent=5 // pred_check
      _
    $region34: #{_lambda_.21} parent=5 // pred_check_branch
      %168 = sbr.rel (%p165) target = $region36
    $region35: #{_lambda_.21} parent=5 // pred_region
      %s169 = ssub.s32 %s10, 1
      %s170 = smul.u32 64, %s15
      %p171 = scmp.lt.s32.totalorder %s170, 255
      %s172 = scalar_select %p171, %s170, 255
      %s173 = smul.addr %s172, 2
      %s174 = smul.addr %s173, 4
      %s175 = scalar_lea.vmem %s0, %s174
      %p176 = pneg %p36
      %p177 = pneg %p33
      %p178 = pneg %p57
      %p179 = pneg %p54
      %p180 = pneg %p78
      %p181 = pneg %p75
      %p182 = pneg %p99
      %p183 = pneg %p96
      %p184 = pneg %p125
      %p185 = pneg %p122
      %s186 = smul.u32 64, %s15
      %p187 = scmp.lt.s32.totalorder %s186, 255
      %s188 = scalar_select %p187, %s186, 255
      %s189 = smul.addr %s188, 8
      %s190 = scalar_lea.vmem %s4, %s189
      %s191 = smul.u32 64, %s15
      %p192 = scmp.lt.s32.totalorder %s191, 255
      %s193 = scalar_select %p192, %s191, 255
      %s194 = smul.addr %s193, 2
      %s195 = smul.addr %s194, 4
      %s196 = scalar_lea.vmem %s0, %s195
      %s197 = smul.u32 64, %s15
      %s198 = smul.u32 64, %s15
      %p199 = scmp.lt.s32.totalorder %s198, 255
      %s200 = scalar_select %p199, %s198, 255
      %s201 = smul.addr %s200, 8
      %s202 = scalar_lea.vmem %s4, %s201
      %s203 = smul.u32 64, %s15
      %v205 = vld [vmem:[%s196] sm:$0xff]
      %v206 = vld [vmem:[%s196 + $0x8] sm:$0xff]
      %v207 = vld [vmem:[%s196 + $0x10] sm:$0xff]
      %v208 = vld [vmem:[%s196 + $0x18] sm:$0xff]
      %v209 = vld [vmem:[%s196 + $0x20] sm:$0xff]
      %v210 = vld [vmem:[%s196 + $0x28] sm:$0xff]
      %v211 = vld [vmem:[%s196 + $0x30] sm:$0xff]
      %v212 = vld [vmem:[%s196 + $0x38] sm:$0xff]
      %v213 = vld [vmem:[%s196 + $0x40] sm:$0xff]
      %v214 = vld [vmem:[%s196 + $0x48] sm:$0xff]
      %v215 = vld [vmem:[%s196 + $0x50] sm:$0xff]
      %v216 = vld [vmem:[%s196 + $0x58] sm:$0xff]
      %v217 = vld [vmem:[%s196 + $0x60] sm:$0xff]
      %v218 = vld [vmem:[%s196 + $0x68] sm:$0xff]
      %v219 = vld [vmem:[%s196 + $0x70] sm:$0xff]
      %v220 = vld [vmem:[%s196 + $0x78] sm:$0xff]
      %v221 = vld [vmem:[%s196 + $0x80] sm:$0xff]
      %v222 = vld [vmem:[%s196 + $0x88] sm:$0xff]
      %v223 = vld [vmem:[%s196 + $0x90] sm:$0xff]
      %v224 = vld [vmem:[%s196 + $0x98] sm:$0xff]
      %v225 = vld [vmem:[%s196 + $0xa0] sm:$0xff]
      %v226 = vld [vmem:[%s196 + $0xa8] sm:$0xff]
      %v227 = vld [vmem:[%s196 + $0xb0] sm:$0xff]
      %v228 = vld [vmem:[%s196 + $0xb8] sm:$0xff]
      %v229 = vld [vmem:[%s196 + $0xc0] sm:$0xff]
      %v230 = vld [vmem:[%s196 + $0xc8] sm:$0xff]
      %v231 = vld [vmem:[%s196 + $0xd0] sm:$0xff]
      %v232 = vld [vmem:[%s196 + $0xd8] sm:$0xff]
      %v233 = vld [vmem:[%s196 + $0xe0] sm:$0xff]
      %v234 = vld [vmem:[%s196 + $0xe8] sm:$0xff]
      %v235 = vld [vmem:[%s196 + $0xf0] sm:$0xff]
      %v236 = vld [vmem:[%s196 + $0xf8] sm:$0xff]
      %v237 = vld [vmem:[%s196 + $0x100] sm:$0xff]
      %v238 = vld [vmem:[%s196 + $0x108] sm:$0xff]
      %v239 = vld [vmem:[%s196 + $0x110] sm:$0xff]
      %v240 = vld [vmem:[%s196 + $0x118] sm:$0xff]
      %v241 = vld [vmem:[%s196 + $0x120] sm:$0xff]
      %v242 = vld [vmem:[%s196 + $0x128] sm:$0xff]
      %v243 = vld [vmem:[%s196 + $0x130] sm:$0xff]
      %v244 = vld [vmem:[%s196 + $0x138] sm:$0xff]
      %v245 = vld [vmem:[%s196 + $0x140] sm:$0xff]
      %v246 = vld [vmem:[%s196 + $0x148] sm:$0xff]
      %v247 = vld [vmem:[%s196 + $0x150] sm:$0xff]
      %v248 = vld [vmem:[%s196 + $0x158] sm:$0xff]
      %v249 = vld [vmem:[%s196 + $0x160] sm:$0xff]
      %v250 = vld [vmem:[%s196 + $0x168] sm:$0xff]
      %v251 = vld [vmem:[%s196 + $0x170] sm:$0xff]
      %v252 = vld [vmem:[%s196 + $0x178] sm:$0xff]
      %v253 = vld [vmem:[%s196 + $0x180] sm:$0xff]
      %v254 = vld [vmem:[%s196 + $0x188] sm:$0xff]
      %v255 = vld [vmem:[%s196 + $0x190] sm:$0xff]
      %v256 = vld [vmem:[%s196 + $0x198] sm:$0xff]
      %v257 = vld [vmem:[%s196 + $0x1a0] sm:$0xff]
      %v258 = vld [vmem:[%s196 + $0x1a8] sm:$0xff]
      %v259 = vld [vmem:[%s196 + $0x1b0] sm:$0xff]
      %v260 = vld [vmem:[%s196 + $0x1b8] sm:$0xff]
      %v261 = vld [vmem:[%s196 + $0x1c0] sm:$0xff]
      %v262 = vld [vmem:[%s196 + $0x1c8] sm:$0xff]
      %v263 = vld [vmem:[%s196 + $0x1d0] sm:$0xff]
      %v264 = vld [vmem:[%s196 + $0x1d8] sm:$0xff]
      %v265 = vld [vmem:[%s196 + $0x1e0] sm:$0xff]
      %v266 = vld [vmem:[%s196 + $0x1e8] sm:$0xff]
      %v267 = vld [vmem:[%s196 + $0x1f0] sm:$0xff]
      %v268 = vld [vmem:[%s196 + $0x1f8] sm:$0xff]
      %v269 = vld [vmem:[%s1] sm:$0xf]
      %v270 = vld [vmem:[%s1 + $0x4] sm:$0xf]
      %v271 = vld [vmem:[%s1 + $0x8] sm:$0xf]
      %v272 = vld [vmem:[%s1 + $0xc] sm:$0xf]
      %v273 = vld [vmem:[%s1 + $0x10] sm:$0xf]
      %v274 = vld [vmem:[%s1 + $0x14] sm:$0xf]
      %v275 = vld [vmem:[%s1 + $0x18] sm:$0xf]
      %v276 = vld [vmem:[%s1 + $0x1c] sm:$0xf]
      %v277 = vld [vmem:[%s1 + $0x20] sm:$0xf]
      %v278 = vld [vmem:[%s1 + $0x24] sm:$0xf]
      %v279 = vld [vmem:[%s1 + $0x28] sm:$0xf]
      %v280 = vld [vmem:[%s1 + $0x2c] sm:$0xf]
      %v281 = vld [vmem:[%s1 + $0x30] sm:$0xf]
      %v282 = vld [vmem:[%s1 + $0x34] sm:$0xf]
      %v283 = vld [vmem:[%s1 + $0x38] sm:$0xf]
      %v284 = vld [vmem:[%s1 + $0x3c] sm:$0xf]
      %v285 = vld [vmem:[%s1 + $0x40] sm:$0xf]
      %v286 = vld [vmem:[%s1 + $0x44] sm:$0xf]
      %v287 = vld [vmem:[%s1 + $0x48] sm:$0x3]
      %v352 = vunpack.c.l.b16 %v205
      %v353 = vunpack.c.h.b16 %v205
      %v354 = vunpack.c.l.b16 %v206
      %v355 = vunpack.c.h.b16 %v206
      %v356 = vunpack.c.l.b16 %v207
      %v357 = vunpack.c.h.b16 %v207
      %v358 = vunpack.c.l.b16 %v208
      %v359 = vunpack.c.h.b16 %v208
      %v360 = vunpack.c.l.b16 %v209
      %v361 = vunpack.c.h.b16 %v209
      %v362 = vunpack.c.l.b16 %v210
      %v363 = vunpack.c.h.b16 %v210
      %v364 = vunpack.c.l.b16 %v211
      %v365 = vunpack.c.h.b16 %v211
      %v366 = vunpack.c.l.b16 %v212
      %v367 = vunpack.c.h.b16 %v212
      %v368 = vunpack.c.l.b16 %v213
      %v369 = vunpack.c.h.b16 %v213
      %v370 = vunpack.c.l.b16 %v214
      %v371 = vunpack.c.h.b16 %v214
      %v372 = vunpack.c.l.b16 %v215
      %v373 = vunpack.c.h.b16 %v215
      %v374 = vunpack.c.l.b16 %v216
      %v375 = vunpack.c.h.b16 %v216
      %v376 = vunpack.c.l.b16 %v217
      %v377 = vunpack.c.h.b16 %v217
      %v378 = vunpack.c.l.b16 %v218
      %v379 = vunpack.c.h.b16 %v218
      %v380 = vunpack.c.l.b16 %v219
      %v381 = vunpack.c.h.b16 %v219
      %v382 = vunpack.c.l.b16 %v220
      %v383 = vunpack.c.h.b16 %v220
      %v384 = vunpack.c.l.b16 %v221
      %v385 = vunpack.c.h.b16 %v221
      %v386 = vunpack.c.l.b16 %v222
      %v387 = vunpack.c.h.b16 %v222
      %v388 = vunpack.c.l.b16 %v223
      %v389 = vunpack.c.h.b16 %v223
      %v390 = vunpack.c.l.b16 %v224
      %v391 = vunpack.c.h.b16 %v224
      %v392 = vunpack.c.l.b16 %v225
      %v393 = vunpack.c.h.b16 %v225
      %v394 = vunpack.c.l.b16 %v226
      %v395 = vunpack.c.h.b16 %v226
      %v396 = vunpack.c.l.b16 %v227
      %v397 = vunpack.c.h.b16 %v227
      %v398 = vunpack.c.l.b16 %v228
      %v399 = vunpack.c.h.b16 %v228
      %v400 = vunpack.c.l.b16 %v229
      %v401 = vunpack.c.h.b16 %v229
      %v402 = vunpack.c.l.b16 %v230
      %v403 = vunpack.c.h.b16 %v230
      %v404 = vunpack.c.l.b16 %v231
      %v405 = vunpack.c.h.b16 %v231
      %v406 = vunpack.c.l.b16 %v232
      %v407 = vunpack.c.h.b16 %v232
      %v408 = vunpack.c.l.b16 %v233
      %v409 = vunpack.c.h.b16 %v233
      %v410 = vunpack.c.l.b16 %v234
      %v411 = vunpack.c.h.b16 %v234
      %v412 = vunpack.c.l.b16 %v235
      %v413 = vunpack.c.h.b16 %v235
      %v414 = vunpack.c.l.b16 %v236
      %v415 = vunpack.c.h.b16 %v236
      %v416 = vunpack.c.l.b16 %v237
      %v417 = vunpack.c.h.b16 %v237
      %v418 = vunpack.c.l.b16 %v238
      %v419 = vunpack.c.h.b16 %v238
      %v420 = vunpack.c.l.b16 %v239
      %v421 = vunpack.c.h.b16 %v239
      %v422 = vunpack.c.l.b16 %v240
      %v423 = vunpack.c.h.b16 %v240
      %v424 = vunpack.c.l.b16 %v241
      %v425 = vunpack.c.h.b16 %v241
      %v426 = vunpack.c.l.b16 %v242
      %v427 = vunpack.c.h.b16 %v242
      %v428 = vunpack.c.l.b16 %v243
      %v429 = vunpack.c.h.b16 %v243
      %v430 = vunpack.c.l.b16 %v244
      %v431 = vunpack.c.h.b16 %v244
      %v432 = vunpack.c.l.b16 %v245
      %v433 = vunpack.c.h.b16 %v245
      %v434 = vunpack.c.l.b16 %v246
      %v435 = vunpack.c.h.b16 %v246
      %v436 = vunpack.c.l.b16 %v247
      %v437 = vunpack.c.h.b16 %v247
      %v438 = vunpack.c.l.b16 %v248
      %v439 = vunpack.c.h.b16 %v248
      %v440 = vunpack.c.l.b16 %v249
      %v441 = vunpack.c.h.b16 %v249
      %v442 = vunpack.c.l.b16 %v250
      %v443 = vunpack.c.h.b16 %v250
      %v444 = vunpack.c.l.b16 %v251
      %v445 = vunpack.c.h.b16 %v251
      %v446 = vunpack.c.l.b16 %v252
      %v447 = vunpack.c.h.b16 %v252
      %v448 = vunpack.c.l.b16 %v253
      %v449 = vunpack.c.h.b16 %v253
      %v450 = vunpack.c.l.b16 %v254
      %v451 = vunpack.c.h.b16 %v254
      %v452 = vunpack.c.l.b16 %v255
      %v453 = vunpack.c.h.b16 %v255
      %v454 = vunpack.c.l.b16 %v256
      %v455 = vunpack.c.h.b16 %v256
      %v456 = vunpack.c.l.b16 %v257
      %v457 = vunpack.c.h.b16 %v257
      %v458 = vunpack.c.l.b16 %v258
      %v459 = vunpack.c.h.b16 %v258
      %v460 = vunpack.c.l.b16 %v259
      %v461 = vunpack.c.h.b16 %v259
      %v462 = vunpack.c.l.b16 %v260
      %v463 = vunpack.c.h.b16 %v260
      %v464 = vunpack.c.l.b16 %v261
      %v465 = vunpack.c.h.b16 %v261
      %v466 = vunpack.c.l.b16 %v262
      %v467 = vunpack.c.h.b16 %v262
      %v468 = vunpack.c.l.b16 %v263
      %v469 = vunpack.c.h.b16 %v263
      %v470 = vunpack.c.l.b16 %v264
      %v471 = vunpack.c.h.b16 %v264
      %v472 = vunpack.c.l.b16 %v265
      %v473 = vunpack.c.h.b16 %v265
      %v474 = vunpack.c.l.b16 %v266
      %v475 = vunpack.c.h.b16 %v266
      %v476 = vunpack.c.l.b16 %v267
      %v477 = vunpack.c.h.b16 %v267
      %v478 = vunpack.c.l.b16 %v268
      %v479 = vunpack.c.h.b16 %v268
      %v480 = vpack.c.b16 %v354, %v352
      %v481 = vpack.c.b16 %v355, %v353
      %v482 = vpack.c.b16 %v358, %v356
      %v483 = vpack.c.b16 %v359, %v357
      %v484 = vpack.c.b16 %v362, %v360
      %v485 = vpack.c.b16 %v363, %v361
      %v486 = vpack.c.b16 %v366, %v364
      %v487 = vpack.c.b16 %v367, %v365
      %v488 = vpack.c.b16 %v370, %v368
      %v489 = vpack.c.b16 %v371, %v369
      %v490 = vpack.c.b16 %v374, %v372
      %v491 = vpack.c.b16 %v375, %v373
      %v492 = vpack.c.b16 %v378, %v376
      %v493 = vpack.c.b16 %v379, %v377
      %v494 = vpack.c.b16 %v382, %v380
      %v495 = vpack.c.b16 %v383, %v381
      %v496 = vpack.c.b16 %v386, %v384
      %v497 = vpack.c.b16 %v387, %v385
      %v498 = vpack.c.b16 %v390, %v388
      %v499 = vpack.c.b16 %v391, %v389
      %v500 = vpack.c.b16 %v394, %v392
      %v501 = vpack.c.b16 %v395, %v393
      %v502 = vpack.c.b16 %v398, %v396
      %v503 = vpack.c.b16 %v399, %v397
      %v504 = vpack.c.b16 %v402, %v400
      %v505 = vpack.c.b16 %v403, %v401
      %v506 = vpack.c.b16 %v406, %v404
      %v507 = vpack.c.b16 %v407, %v405
      %v508 = vpack.c.b16 %v410, %v408
      %v509 = vpack.c.b16 %v411, %v409
      %v510 = vpack.c.b16 %v414, %v412
      %v511 = vpack.c.b16 %v415, %v413
      %v512 = vpack.c.b16 %v418, %v416
      %v513 = vpack.c.b16 %v419, %v417
      %v514 = vpack.c.b16 %v422, %v420
      %v515 = vpack.c.b16 %v423, %v421
      %v516 = vpack.c.b16 %v426, %v424
      %v517 = vpack.c.b16 %v427, %v425
      %v518 = vpack.c.b16 %v430, %v428
      %v519 = vpack.c.b16 %v431, %v429
      %v520 = vpack.c.b16 %v434, %v432
      %v521 = vpack.c.b16 %v435, %v433
      %v522 = vpack.c.b16 %v438, %v436
      %v523 = vpack.c.b16 %v439, %v437
      %v524 = vpack.c.b16 %v442, %v440
      %v525 = vpack.c.b16 %v443, %v441
      %v526 = vpack.c.b16 %v446, %v444
      %v527 = vpack.c.b16 %v447, %v445
      %v528 = vpack.c.b16 %v450, %v448
      %v529 = vpack.c.b16 %v451, %v449
      %v530 = vpack.c.b16 %v454, %v452
      %v531 = vpack.c.b16 %v455, %v453
      %v532 = vpack.c.b16 %v458, %v456
      %v533 = vpack.c.b16 %v459, %v457
      %v534 = vpack.c.b16 %v462, %v460
      %v535 = vpack.c.b16 %v463, %v461
      %v536 = vpack.c.b16 %v466, %v464
      %v537 = vpack.c.b16 %v467, %v465
      %v538 = vpack.c.b16 %v470, %v468
      %v539 = vpack.c.b16 %v471, %v469
      %v540 = vpack.c.b16 %v474, %v472
      %v541 = vpack.c.b16 %v475, %v473
      %v542 = vpack.c.b16 %v478, %v476
      %v543 = vpack.c.b16 %v479, %v477
      %v595 = vunpack.c.l.b16 %v269
      %v596 = vunpack.c.l.b16 %v270
      %v597 = vunpack.c.l.b16 %v271
      %v598 = vunpack.c.l.b16 %v272
      %v599 = vunpack.c.l.b16 %v273
      %v600 = vunpack.c.l.b16 %v274
      %v601 = vunpack.c.l.b16 %v275
      %v602 = vunpack.c.l.b16 %v276
      %v603 = vunpack.c.l.b16 %v277
      %v604 = vunpack.c.l.b16 %v278
      %v605 = vunpack.c.l.b16 %v279
      %v606 = vunpack.c.l.b16 %v280
      %v607 = vunpack.c.l.b16 %v281
      %v608 = vunpack.c.l.b16 %v282
      %v609 = vunpack.c.l.b16 %v283
      %v610 = vunpack.c.l.b16 %v284
      %v611 = vunpack.c.l.b16 %v285
      %v612 = vunpack.c.l.b16 %v286
      %v613 = vunpack.c.l.b16 %v287
      %v614 = vpack.c.b16 %v596, %v595
      %v615 = vpack.c.b16 %v598, %v597
      %v616 = vpack.c.b16 %v600, %v599
      %v617 = vpack.c.b16 %v602, %v601
      %v618 = vpack.c.b16 %v604, %v603
      %v619 = vpack.c.b16 %v606, %v605
      %v620 = vpack.c.b16 %v608, %v607
      %v621 = vpack.c.b16 %v610, %v609
      %v622 = vpack.c.b16 %v612, %v611
      %v623 = vpack.c.b16 %v613, %v613
      %vm633 = vcmask 154624
      %v635 = vsel %vm633, %v481, 0
      %v638 = vsel %vm633, %v483, 0
      %v641 = vsel %vm633, %v485, 0
      %v644 = vsel %vm633, %v487, 0
      %v647 = vsel %vm633, %v489, 0
      %v650 = vsel %vm633, %v491, 0
      %v653 = vsel %vm633, %v493, 0
      %v656 = vsel %vm633, %v495, 0
      %v659 = vsel %vm633, %v497, 0
      %v662 = vsel %vm633, %v499, 0
      %v665 = vsel %vm633, %v501, 0
      %v668 = vsel %vm633, %v503, 0
      %v671 = vsel %vm633, %v505, 0
      %v674 = vsel %vm633, %v507, 0
      %v677 = vsel %vm633, %v509, 0
      %v680 = vsel %vm633, %v511, 0
      %v683 = vsel %vm633, %v513, 0
      %v686 = vsel %vm633, %v515, 0
      %v689 = vsel %vm633, %v517, 0
      %v692 = vsel %vm633, %v519, 0
      %v695 = vsel %vm633, %v521, 0
      %v698 = vsel %vm633, %v523, 0
      %v701 = vsel %vm633, %v525, 0
      %v704 = vsel %vm633, %v527, 0
      %v707 = vsel %vm633, %v529, 0
      %v710 = vsel %vm633, %v531, 0
      %v713 = vsel %vm633, %v533, 0
      %v716 = vsel %vm633, %v535, 0
      %v719 = vsel %vm633, %v537, 0
      %v722 = vsel %vm633, %v539, 0
      %v725 = vsel %vm633, %v541, 0
      %v728 = vsel %vm633, %v543, 0
      %vm730 = vcmask 1040384
      %vm731 = vcmask 1041408
      %v732 = vsel %vm730, 4294967295, 65535
      %v733 = vsel %vm731, %v732, 0
      %v735 = vand.u32 %v623, %v733
      %737 = vmatprep.subr.bf16.mxu0 0
      %738 = vmatpush1.bf16.msra.mxu0 %v614
      %739 = vmatprep.subr.bf16.mxu0 0
      %740 = vmatpush1.bf16.msra.mxu0 %v615
      %741 = vmatprep.subr.bf16.mxu0 0
      %742 = vmatpush1.bf16.msra.mxu0 %v616
      %743 = vmatprep.subr.bf16.mxu0 0
      %744 = vmatpush1.bf16.msra.mxu0 %v617
      %745 = vmatprep.subr.bf16.mxu0 0
      %746 = vmatpush1.bf16.msra.mxu0 %v618
      %747 = vmatprep.subr.bf16.mxu0 0
      %748 = vmatpush1.bf16.msra.mxu0 %v619
      %749 = vmatprep.subr.bf16.mxu0 0
      %750 = vmatpush1.bf16.msra.mxu0 %v620
      %751 = vmatprep.subr.bf16.mxu0 0
      %752 = vmatpush1.bf16.msra.mxu0 %v621
      %753 = vmatprep.subr.bf16.mxu0 0
      %754 = vmatpush1.bf16.msra.mxu0 %v622
      %755 = vmatprep.subr.bf16.mxu0 0
      %756 = vmatpush1.bf16.msra.mxu0 %v735
      %757 = vmatprep.subr.bf16.mxu0 0
      %758 = vmatpush1.bf16.msra.mxu0 0
      %759 = vmatprep.subr.bf16.mxu0 0
      %760 = vmatpush1.bf16.msra.mxu0 0
      %761 = vmatprep.subr.bf16.mxu0 0
      %762 = vmatpush1.bf16.msra.mxu0 0
      %763 = vmatprep.subr.bf16.mxu0 0
      %764 = vmatpush1.bf16.msra.mxu0 0
      %765 = vmatprep.subr.bf16.mxu0 0
      %766 = vmatpush1.bf16.msra.mxu0 0
      %767 = vmatprep.subr.bf16.mxu0 0
      %768 = vmatpush1.bf16.msra.mxu0 0
      %769 = vmatprep.mubr.bf16.mxu0 %v635
      %770 = vmatmul.mubr.bf16.gmra.mrb[0].mxu0 %v480
      %v771 = vpop.f32.mrb[0].mxu0
      %v772 = vadd.f32 0.0, %v771
      %v773 = vpop.f32.mrb[0].mxu0
      %v774 = vpop.f32.mrb[0].mxu0
      %v775 = vadd.f32 0.0, %v774
      %v776 = vpop.f32.mrb[0].mxu0
      %777 = vmatprep.mubr.bf16.mxu0 %v638
      %778 = vmatmul.mubr.bf16.gmra.mrb[0].mxu0 %v482
      %v779 = vpop.f32.mrb[0].mxu0
      %v780 = vadd.f32 0.0, %v779
      %v781 = vpop.f32.mrb[0].mxu0
      %v782 = vpop.f32.mrb[0].mxu0
      %v783 = vadd.f32 0.0, %v782
      %v784 = vpop.f32.mrb[0].mxu0
      %785 = vmatprep.mubr.bf16.mxu0 %v641
      %786 = vmatmul.mubr.bf16.gmra.mrb[0].mxu0 %v484
      %v787 = vpop.f32.mrb[0].mxu0
      %v788 = vadd.f32 0.0, %v787
      %v789 = vpop.f32.mrb[0].mxu0
      %v790 = vpop.f32.mrb[0].mxu0
      %v791 = vadd.f32 0.0, %v790
      %v792 = vpop.f32.mrb[0].mxu0
      %793 = vmatprep.mubr.bf16.mxu0 %v644
      %794 = vmatmul.mubr.bf16.gmra.mrb[0].mxu0 %v486
      %v795 = vpop.f32.mrb[0].mxu0
      %v796 = vadd.f32 0.0, %v795
      %v797 = vpop.f32.mrb[0].mxu0
      %v798 = vpop.f32.mrb[0].mxu0
      %v799 = vadd.f32 0.0, %v798
      %v800 = vpop.f32.mrb[0].mxu0
      %801 = vmatprep.mubr.bf16.mxu0 %v647
      %802 = vmatmul.mubr.bf16.gmra.mrb[0].mxu0 %v488
      %v803 = vpop.f32.mrb[0].mxu0
      %v804 = vadd.f32 0.0, %v803
      %v805 = vpop.f32.mrb[0].mxu0
      %v806 = vpop.f32.mrb[0].mxu0
      %v807 = vadd.f32 0.0, %v806
      %v808 = vpop.f32.mrb[0].mxu0
      %809 = vmatprep.mubr.bf16.mxu0 %v650
      %810 = vmatmul.mubr.bf16.gmra.mrb[0].mxu0 %v490
      %v811 = vpop.f32.mrb[0].mxu0
      %v812 = vadd.f32 0.0, %v811
      %v813 = vpop.f32.mrb[0].mxu0
      %v814 = vpop.f32.mrb[0].mxu0
      %v815 = vadd.f32 0.0, %v814
      %v816 = vpop.f32.mrb[0].mxu0
      %817 = vmatprep.mubr.bf16.mxu0 %v653
      %818 = vmatmul.mubr.bf16.gmra.mrb[0].mxu0 %v492
      %v819 = vpop.f32.mrb[0].mxu0
      %v820 = vadd.f32 0.0, %v819
      %v821 = vpop.f32.mrb[0].mxu0
      %v822 = vpop.f32.mrb[0].mxu0
      %v823 = vadd.f32 0.0, %v822
      %v824 = vpop.f32.mrb[0].mxu0
      %825 = vmatprep.mubr.bf16.mxu0 %v656
      %826 = vmatmul.mubr.bf16.gmra.mrb[0].mxu0 %v494
      %v827 = vpop.f32.mrb[0].mxu0
      %v828 = vadd.f32 0.0, %v827
      %v829 = vpop.f32.mrb[0].mxu0
      %v830 = vpop.f32.mrb[0].mxu0
      %v831 = vadd.f32 0.0, %v830
      %v832 = vpop.f32.mrb[0].mxu0
      %833 = vmatprep.mubr.bf16.mxu0 %v659
      %834 = vmatmul.mubr.bf16.gmra.mrb[0].mxu0 %v496
      %v835 = vpop.f32.mrb[0].mxu0
      %v836 = vadd.f32 0.0, %v835
      %v837 = vpop.f32.mrb[0].mxu0
      %v838 = vpop.f32.mrb[0].mxu0
      %v839 = vadd.f32 0.0, %v838
      %v840 = vpop.f32.mrb[0].mxu0
      %841 = vmatprep.mubr.bf16.mxu0 %v662
      %842 = vmatmul.mubr.bf16.gmra.mrb[0].mxu0 %v498
      %v843 = vpop.f32.mrb[0].mxu0
      %v844 = vadd.f32 0.0, %v843
      %v845 = vpop.f32.mrb[0].mxu0
      %v846 = vpop.f32.mrb[0].mxu0
      %v847 = vadd.f32 0.0, %v846
      %v848 = vpop.f32.mrb[0].mxu0
      %849 = vmatprep.mubr.bf16.mxu0 %v665
      %850 = vmatmul.mubr.bf16.gmra.mrb[0].mxu0 %v500
      %v851 = vpop.f32.mrb[0].mxu0
      %v852 = vadd.f32 0.0, %v851
      %v853 = vpop.f32.mrb[0].mxu0
      %v854 = vpop.f32.mrb[0].mxu0
      %v855 = vadd.f32 0.0, %v854
      %v856 = vpop.f32.mrb[0].mxu0
      %857 = vmatprep.mubr.bf16.mxu0 %v668
      %858 = vmatmul.mubr.bf16.gmra.mrb[0].mxu0 %v502
      %v859 = vpop.f32.mrb[0].mxu0
      %v860 = vadd.f32 0.0, %v859
      %v861 = vpop.f32.mrb[0].mxu0
      %v862 = vpop.f32.mrb[0].mxu0
      %v863 = vadd.f32 0.0, %v862
      %v864 = vpop.f32.mrb[0].mxu0
      %865 = vmatprep.mubr.bf16.mxu0 %v671
      %866 = vmatmul.mubr.bf16.gmra.mrb[0].mxu0 %v504
      %v867 = vpop.f32.mrb[0].mxu0
      %v868 = vadd.f32 0.0, %v867
      %v869 = vpop.f32.mrb[0].mxu0
      %v870 = vpop.f32.mrb[0].mxu0
      %v871 = vadd.f32 0.0, %v870
      %v872 = vpop.f32.mrb[0].mxu0
      %873 = vmatprep.mubr.bf16.mxu0 %v674
      %874 = vmatmul.mubr.bf16.gmra.mrb[0].mxu0 %v506
      %v875 = vpop.f32.mrb[0].mxu0
      %v876 = vadd.f32 0.0, %v875
      %v877 = vpop.f32.mrb[0].mxu0
      %v878 = vpop.f32.mrb[0].mxu0
      %v879 = vadd.f32 0.0, %v878
      %v880 = vpop.f32.mrb[0].mxu0
      %881 = vmatprep.mubr.bf16.mxu0 %v677
      %882 = vmatmul.mubr.bf16.gmra.mrb[0].mxu0 %v508
      %v883 = vpop.f32.mrb[0].mxu0
      %v884 = vadd.f32 0.0, %v883
      %v885 = vpop.f32.mrb[0].mxu0
      %v886 = vpop.f32.mrb[0].mxu0
      %v887 = vadd.f32 0.0, %v886
      %v888 = vpop.f32.mrb[0].mxu0
      %889 = vmatprep.mubr.bf16.mxu0 %v680
      %890 = vmatmul.mubr.bf16.gmra.mrb[0].mxu0 %v510
      %v891 = vpop.f32.mrb[0].mxu0
      %v892 = vadd.f32 0.0, %v891
      %v893 = vpop.f32.mrb[0].mxu0
      %v894 = vpop.f32.mrb[0].mxu0
      %v895 = vadd.f32 0.0, %v894
      %v896 = vpop.f32.mrb[0].mxu0
      %897 = vmatprep.mubr.bf16.mxu0 %v683
      %898 = vmatmul.mubr.bf16.gmra.mrb[0].mxu0 %v512
      %v899 = vpop.f32.mrb[0].mxu0
      %v900 = vadd.f32 0.0, %v899
      %v901 = vpop.f32.mrb[0].mxu0
      %v902 = vpop.f32.mrb[0].mxu0
      %v903 = vadd.f32 0.0, %v902
      %v904 = vpop.f32.mrb[0].mxu0
      %905 = vmatprep.mubr.bf16.mxu0 %v686
      %906 = vmatmul.mubr.bf16.gmra.mrb[0].mxu0 %v514
      %v907 = vpop.f32.mrb[0].mxu0
      %v908 = vadd.f32 0.0, %v907
      %v909 = vpop.f32.mrb[0].mxu0
      %v910 = vpop.f32.mrb[0].mxu0
      %v911 = vadd.f32 0.0, %v910
      %v912 = vpop.f32.mrb[0].mxu0
      %913 = vmatprep.mubr.bf16.mxu0 %v689
      %914 = vmatmul.mubr.bf16.gmra.mrb[0].mxu0 %v516
      %v915 = vpop.f32.mrb[0].mxu0
      %v916 = vadd.f32 0.0, %v915
      %v917 = vpop.f32.mrb[0].mxu0
      %v918 = vpop.f32.mrb[0].mxu0
      %v919 = vadd.f32 0.0, %v918
      %v920 = vpop.f32.mrb[0].mxu0
      %921 = vmatprep.mubr.bf16.mxu0 %v692
      %922 = vmatmul.mubr.bf16.gmra.mrb[0].mxu0 %v518
      %v923 = vpop.f32.mrb[0].mxu0
      %v924 = vadd.f32 0.0, %v923
      %v925 = vpop.f32.mrb[0].mxu0
      %v926 = vpop.f32.mrb[0].mxu0
      %v927 = vadd.f32 0.0, %v926
      %v928 = vpop.f32.mrb[0].mxu0
      %929 = vmatprep.mubr.bf16.mxu0 %v695
      %930 = vmatmul.mubr.bf16.gmra.mrb[0].mxu0 %v520
      %v931 = vpop.f32.mrb[0].mxu0
      %v932 = vadd.f32 0.0, %v931
      %v933 = vpop.f32.mrb[0].mxu0
      %v934 = vpop.f32.mrb[0].mxu0
      %v935 = vadd.f32 0.0, %v934
      %v936 = vpop.f32.mrb[0].mxu0
      %937 = vmatprep.mubr.bf16.mxu0 %v698
      %938 = vmatmul.mubr.bf16.gmra.mrb[0].mxu0 %v522
      %v939 = vpop.f32.mrb[0].mxu0
      %v940 = vadd.f32 0.0, %v939
      %v941 = vpop.f32.mrb[0].mxu0
      %v942 = vpop.f32.mrb[0].mxu0
      %v943 = vadd.f32 0.0, %v942
      %v944 = vpop.f32.mrb[0].mxu0
      %945 = vmatprep.mubr.bf16.mxu0 %v701
      %946 = vmatmul.mubr.bf16.gmra.mrb[0].mxu0 %v524
      %v947 = vpop.f32.mrb[0].mxu0
      %v948 = vadd.f32 0.0, %v947
      %v949 = vpop.f32.mrb[0].mxu0
      %v950 = vpop.f32.mrb[0].mxu0
      %v951 = vadd.f32 0.0, %v950
      %v952 = vpop.f32.mrb[0].mxu0
      %953 = vmatprep.mubr.bf16.mxu0 %v704
      %954 = vmatmul.mubr.bf16.gmra.mrb[0].mxu0 %v526
      %v955 = vpop.f32.mrb[0].mxu0
      %v956 = vadd.f32 0.0, %v955
      %v957 = vpop.f32.mrb[0].mxu0
      %v958 = vpop.f32.mrb[0].mxu0
      %v959 = vadd.f32 0.0, %v958
      %v960 = vpop.f32.mrb[0].mxu0
      %961 = vmatprep.mubr.bf16.mxu0 %v707
      %962 = vmatmul.mubr.bf16.gmra.mrb[0].mxu0 %v528
      %v963 = vpop.f32.mrb[0].mxu0
      %v964 = vadd.f32 0.0, %v963
      %v965 = vpop.f32.mrb[0].mxu0
      %v966 = vpop.f32.mrb[0].mxu0
      %v967 = vadd.f32 0.0, %v966
      %v968 = vpop.f32.mrb[0].mxu0
      %969 = vmatprep.mubr.bf16.mxu0 %v710
      %970 = vmatmul.mubr.bf16.gmra.mrb[0].mxu0 %v530
      %v971 = vpop.f32.mrb[0].mxu0
      %v972 = vadd.f32 0.0, %v971
      %v973 = vpop.f32.mrb[0].mxu0
      %v974 = vpop.f32.mrb[0].mxu0
      %v975 = vadd.f32 0.0, %v974
      %v976 = vpop.f32.mrb[0].mxu0
      %977 = vmatprep.mubr.bf16.mxu0 %v713
      %978 = vmatmul.mubr.bf16.gmra.mrb[0].mxu0 %v532
      %v979 = vpop.f32.mrb[0].mxu0
      %v980 = vadd.f32 0.0, %v979
      %v981 = vpop.f32.mrb[0].mxu0
      %v982 = vpop.f32.mrb[0].mxu0
      %v983 = vadd.f32 0.0, %v982
      %v984 = vpop.f32.mrb[0].mxu0
      %985 = vmatprep.mubr.bf16.mxu0 %v716
      %986 = vmatmul.mubr.bf16.gmra.mrb[0].mxu0 %v534
      %v987 = vpop.f32.mrb[0].mxu0
      %v988 = vadd.f32 0.0, %v987
      %v989 = vpop.f32.mrb[0].mxu0
      %v990 = vpop.f32.mrb[0].mxu0
      %v991 = vadd.f32 0.0, %v990
      %v992 = vpop.f32.mrb[0].mxu0
      %993 = vmatprep.mubr.bf16.mxu0 %v719
      %994 = vmatmul.mubr.bf16.gmra.mrb[0].mxu0 %v536
      %v995 = vpop.f32.mrb[0].mxu0
      %v996 = vadd.f32 0.0, %v995
      %v997 = vpop.f32.mrb[0].mxu0
      %v998 = vpop.f32.mrb[0].mxu0
      %v999 = vadd.f32 0.0, %v998
      %v1000 = vpop.f32.mrb[0].mxu0
      %1001 = vmatprep.mubr.bf16.mxu0 %v722
      %1002 = vmatmul.mubr.bf16.gmra.mrb[0].mxu0 %v538
      %v1003 = vpop.f32.mrb[0].mxu0
      %v1004 = vadd.f32 0.0, %v1003
      %v1005 = vpop.f32.mrb[0].mxu0
      %v1006 = vpop.f32.mrb[0].mxu0
      %v1007 = vadd.f32 0.0, %v1006
      %v1008 = vpop.f32.mrb[0].mxu0
      %1009 = vmatprep.mubr.bf16.mxu0 %v725
      %1010 = vmatmul.mubr.bf16.gmra.mrb[0].mxu0 %v540
      %v1011 = vpop.f32.mrb[0].mxu0
      %v1012 = vadd.f32 0.0, %v1011
      %v1013 = vpop.f32.mrb[0].mxu0
      %v1014 = vpop.f32.mrb[0].mxu0
      %v1015 = vadd.f32 0.0, %v1014
      %v1016 = vpop.f32.mrb[0].mxu0
      %1017 = vmatprep.mubr.bf16.mxu0 %v728
      %1018 = vmatmul.mubr.bf16.gmra.mrb[0].mxu0 %v542
      %v1019 = vpop.f32.mrb[0].mxu0
      %v1020 = vadd.f32 0.0, %v1019
      %v1021 = vpop.f32.mrb[0].mxu0
      %v1022 = vpop.f32.mrb[0].mxu0
      %v1023 = vadd.f32 0.0, %v1022
      %v1024 = vpop.f32.mrb[0].mxu0
      %1025 = vdwg.mxu0
      %v1026 = vld [vmem:[%s2] sm:$0x1]
      %v1028 = vlaneseq
      %v1029 = vshrl.u32 %v1028, 7
      %v1030 = vsub.s32 0, %v1029
      %v1031 = vrot.slane %v1026, %v1030
      %v1033 = vmul.f32 %v772, %v1031
      %v1034 = vmul.f32 %v775, %v1031
      %v1035 = vmul.f32 %v780, %v1031
      %v1036 = vmul.f32 %v783, %v1031
      %v1037 = vmul.f32 %v788, %v1031
      %v1038 = vmul.f32 %v791, %v1031
      %v1039 = vmul.f32 %v796, %v1031
      %v1040 = vmul.f32 %v799, %v1031
      %v1041 = vmul.f32 %v804, %v1031
      %v1042 = vmul.f32 %v807, %v1031
      %v1043 = vmul.f32 %v812, %v1031
      %v1044 = vmul.f32 %v815, %v1031
      %v1045 = vmul.f32 %v820, %v1031
      %v1046 = vmul.f32 %v823, %v1031
      %v1047 = vmul.f32 %v828, %v1031
      %v1048 = vmul.f32 %v831, %v1031
      %v1049 = vmul.f32 %v836, %v1031
      %v1050 = vmul.f32 %v839, %v1031
      %v1051 = vmul.f32 %v844, %v1031
      %v1052 = vmul.f32 %v847, %v1031
      %v1053 = vmul.f32 %v852, %v1031
      %v1054 = vmul.f32 %v855, %v1031
      %v1055 = vmul.f32 %v860, %v1031
      %v1056 = vmul.f32 %v863, %v1031
      %v1057 = vmul.f32 %v868, %v1031
      %v1058 = vmul.f32 %v871, %v1031
      %v1059 = vmul.f32 %v876, %v1031
      %v1060 = vmul.f32 %v879, %v1031
      %v1061 = vmul.f32 %v884, %v1031
      %v1062 = vmul.f32 %v887, %v1031
      %v1063 = vmul.f32 %v892, %v1031
      %v1064 = vmul.f32 %v895, %v1031
      %v1065 = vmul.f32 %v900, %v1031
      %v1066 = vmul.f32 %v903, %v1031
      %v1067 = vmul.f32 %v908, %v1031
      %v1068 = vmul.f32 %v911, %v1031
      %v1069 = vmul.f32 %v916, %v1031
      %v1070 = vmul.f32 %v919, %v1031
      %v1071 = vmul.f32 %v924, %v1031
      %v1072 = vmul.f32 %v927, %v1031
      %v1073 = vmul.f32 %v932, %v1031
      %v1074 = vmul.f32 %v935, %v1031
      %v1075 = vmul.f32 %v940, %v1031
      %v1076 = vmul.f32 %v943, %v1031
      %v1077 = vmul.f32 %v948, %v1031
      %v1078 = vmul.f32 %v951, %v1031
      %v1079 = vmul.f32 %v956, %v1031
      %v1080 = vmul.f32 %v959, %v1031
      %v1081 = vmul.f32 %v964, %v1031
      %v1082 = vmul.f32 %v967, %v1031
      %v1083 = vmul.f32 %v972, %v1031
      %v1084 = vmul.f32 %v975, %v1031
      %v1085 = vmul.f32 %v980, %v1031
      %v1086 = vmul.f32 %v983, %v1031
      %v1087 = vmul.f32 %v988, %v1031
      %v1088 = vmul.f32 %v991, %v1031
      %v1089 = vmul.f32 %v996, %v1031
      %v1090 = vmul.f32 %v999, %v1031
      %v1091 = vmul.f32 %v1004, %v1031
      %v1092 = vmul.f32 %v1007, %v1031
      %v1093 = vmul.f32 %v1012, %v1031
      %v1094 = vmul.f32 %v1015, %v1031
      %v1095 = vmul.f32 %v1020, %v1031
      %v1096 = vmul.f32 %v1023, %v1031
      %v1097 = vld [vmem:[%s3] sm:$0x1]
      %v1099 = vlaneseq
      %v1100 = vshrl.u32 %v1099, 7
      %v1101 = vsub.s32 0, %v1100
      %v1102 = vrot.slane %v1097, %v1101
      %v1104 = vadd.f32 %v1033, %v1102
      %v1105 = vadd.f32 %v1034, %v1102
      %v1106 = vadd.f32 %v1035, %v1102
      %v1107 = vadd.f32 %v1036, %v1102
      %v1108 = vadd.f32 %v1037, %v1102
      %v1109 = vadd.f32 %v1038, %v1102
      %v1110 = vadd.f32 %v1039, %v1102
      %v1111 = vadd.f32 %v1040, %v1102
      %v1112 = vadd.f32 %v1041, %v1102
      %v1113 = vadd.f32 %v1042, %v1102
      %v1114 = vadd.f32 %v1043, %v1102
      %v1115 = vadd.f32 %v1044, %v1102
      %v1116 = vadd.f32 %v1045, %v1102
      %v1117 = vadd.f32 %v1046, %v1102
      %v1118 = vadd.f32 %v1047, %v1102
      %v1119 = vadd.f32 %v1048, %v1102
      %v1120 = vadd.f32 %v1049, %v1102
      %v1121 = vadd.f32 %v1050, %v1102
      %v1122 = vadd.f32 %v1051, %v1102
      %v1123 = vadd.f32 %v1052, %v1102
      %v1124 = vadd.f32 %v1053, %v1102
      %v1125 = vadd.f32 %v1054, %v1102
      %v1126 = vadd.f32 %v1055, %v1102
      %v1127 = vadd.f32 %v1056, %v1102
      %v1128 = vadd.f32 %v1057, %v1102
      %v1129 = vadd.f32 %v1058, %v1102
      %v1130 = vadd.f32 %v1059, %v1102
      %v1131 = vadd.f32 %v1060, %v1102
      %v1132 = vadd.f32 %v1061, %v1102
      %v1133 = vadd.f32 %v1062, %v1102
      %v1134 = vadd.f32 %v1063, %v1102
      %v1135 = vadd.f32 %v1064, %v1102
      %v1136 = vadd.f32 %v1065, %v1102
      %v1137 = vadd.f32 %v1066, %v1102
      %v1138 = vadd.f32 %v1067, %v1102
      %v1139 = vadd.f32 %v1068, %v1102
      %v1140 = vadd.f32 %v1069, %v1102
      %v1141 = vadd.f32 %v1070, %v1102
      %v1142 = vadd.f32 %v1071, %v1102
      %v1143 = vadd.f32 %v1072, %v1102
      %v1144 = vadd.f32 %v1073, %v1102
      %v1145 = vadd.f32 %v1074, %v1102
      %v1146 = vadd.f32 %v1075, %v1102
      %v1147 = vadd.f32 %v1076, %v1102
      %v1148 = vadd.f32 %v1077, %v1102
      %v1149 = vadd.f32 %v1078, %v1102
      %v1150 = vadd.f32 %v1079, %v1102
      %v1151 = vadd.f32 %v1080, %v1102
      %v1152 = vadd.f32 %v1081, %v1102
      %v1153 = vadd.f32 %v1082, %v1102
      %v1154 = vadd.f32 %v1083, %v1102
      %v1155 = vadd.f32 %v1084, %v1102
      %v1156 = vadd.f32 %v1085, %v1102
      %v1157 = vadd.f32 %v1086, %v1102
      %v1158 = vadd.f32 %v1087, %v1102
      %v1159 = vadd.f32 %v1088, %v1102
      %v1160 = vadd.f32 %v1089, %v1102
      %v1161 = vadd.f32 %v1090, %v1102
      %v1162 = vadd.f32 %v1091, %v1102
      %v1163 = vadd.f32 %v1092, %v1102
      %v1164 = vadd.f32 %v1093, %v1102
      %v1165 = vadd.f32 %v1094, %v1102
      %v1166 = vadd.f32 %v1095, %v1102
      %v1167 = vadd.f32 %v1096, %v1102
      %v1168 = vmax.f32 %v1104, 0.0
      %v1169 = vmax.f32 %v1105, 0.0
      %v1170 = vmax.f32 %v1106, 0.0
      %v1171 = vmax.f32 %v1107, 0.0
      %v1172 = vmax.f32 %v1108, 0.0
      %v1173 = vmax.f32 %v1109, 0.0
      %v1174 = vmax.f32 %v1110, 0.0
      %v1175 = vmax.f32 %v1111, 0.0
      %v1176 = vmax.f32 %v1112, 0.0
      %v1177 = vmax.f32 %v1113, 0.0
      %v1178 = vmax.f32 %v1114, 0.0
      %v1179 = vmax.f32 %v1115, 0.0
      %v1180 = vmax.f32 %v1116, 0.0
      %v1181 = vmax.f32 %v1117, 0.0
      %v1182 = vmax.f32 %v1118, 0.0
      %v1183 = vmax.f32 %v1119, 0.0
      %v1184 = vmax.f32 %v1120, 0.0
      %v1185 = vmax.f32 %v1121, 0.0
      %v1186 = vmax.f32 %v1122, 0.0
      %v1187 = vmax.f32 %v1123, 0.0
      %v1188 = vmax.f32 %v1124, 0.0
      %v1189 = vmax.f32 %v1125, 0.0
      %v1190 = vmax.f32 %v1126, 0.0
      %v1191 = vmax.f32 %v1127, 0.0
      %v1192 = vmax.f32 %v1128, 0.0
      %v1193 = vmax.f32 %v1129, 0.0
      %v1194 = vmax.f32 %v1130, 0.0
      %v1195 = vmax.f32 %v1131, 0.0
      %v1196 = vmax.f32 %v1132, 0.0
      %v1197 = vmax.f32 %v1133, 0.0
      %v1198 = vmax.f32 %v1134, 0.0
      %v1199 = vmax.f32 %v1135, 0.0
      %v1200 = vmax.f32 %v1136, 0.0
      %v1201 = vmax.f32 %v1137, 0.0
      %v1202 = vmax.f32 %v1138, 0.0
      %v1203 = vmax.f32 %v1139, 0.0
      %v1204 = vmax.f32 %v1140, 0.0
      %v1205 = vmax.f32 %v1141, 0.0
      %v1206 = vmax.f32 %v1142, 0.0
      %v1207 = vmax.f32 %v1143, 0.0
      %v1208 = vmax.f32 %v1144, 0.0
      %v1209 = vmax.f32 %v1145, 0.0
      %v1210 = vmax.f32 %v1146, 0.0
      %v1211 = vmax.f32 %v1147, 0.0
      %v1212 = vmax.f32 %v1148, 0.0
      %v1213 = vmax.f32 %v1149, 0.0
      %v1214 = vmax.f32 %v1150, 0.0
      %v1215 = vmax.f32 %v1151, 0.0
      %v1216 = vmax.f32 %v1152, 0.0
      %v1217 = vmax.f32 %v1153, 0.0
      %v1218 = vmax.f32 %v1154, 0.0
      %v1219 = vmax.f32 %v1155, 0.0
      %v1220 = vmax.f32 %v1156, 0.0
      %v1221 = vmax.f32 %v1157, 0.0
      %v1222 = vmax.f32 %v1158, 0.0
      %v1223 = vmax.f32 %v1159, 0.0
      %v1224 = vmax.f32 %v1160, 0.0
      %v1225 = vmax.f32 %v1161, 0.0
      %v1226 = vmax.f32 %v1162, 0.0
      %v1227 = vmax.f32 %v1163, 0.0
      %v1228 = vmax.f32 %v1164, 0.0
      %v1229 = vmax.f32 %v1165, 0.0
      %v1230 = vmax.f32 %v1166, 0.0
      %v1231 = vmax.f32 %v1167, 0.0
      %vm1232 = vcmask 64512
      %1233 = vst.msk [vmem:[%s202] sm:$0xff] %vm1232, %v1168
      %1234 = vst.msk [vmem:[%s202 + $0x8] sm:$0xff] %vm1232, %v1169
      %1235 = vst.msk [vmem:[%s202 + $0x10] sm:$0xff] %vm1232, %v1170
      %1236 = vst.msk [vmem:[%s202 + $0x18] sm:$0xff] %vm1232, %v1171
      %1237 = vst.msk [vmem:[%s202 + $0x20] sm:$0xff] %vm1232, %v1172
      %1238 = vst.msk [vmem:[%s202 + $0x28] sm:$0xff] %vm1232, %v1173
      %1239 = vst.msk [vmem:[%s202 + $0x30] sm:$0xff] %vm1232, %v1174
      %1240 = vst.msk [vmem:[%s202 + $0x38] sm:$0xff] %vm1232, %v1175
      %1241 = vst.msk [vmem:[%s202 + $0x40] sm:$0xff] %vm1232, %v1176
      %1242 = vst.msk [vmem:[%s202 + $0x48] sm:$0xff] %vm1232, %v1177
      %1243 = vst.msk [vmem:[%s202 + $0x50] sm:$0xff] %vm1232, %v1178
      %1244 = vst.msk [vmem:[%s202 + $0x58] sm:$0xff] %vm1232, %v1179
      %1245 = vst.msk [vmem:[%s202 + $0x60] sm:$0xff] %vm1232, %v1180
      %1246 = vst.msk [vmem:[%s202 + $0x68] sm:$0xff] %vm1232, %v1181
      %1247 = vst.msk [vmem:[%s202 + $0x70] sm:$0xff] %vm1232, %v1182
      %1248 = vst.msk [vmem:[%s202 + $0x78] sm:$0xff] %vm1232, %v1183
      %1249 = vst.msk [vmem:[%s202 + $0x80] sm:$0xff] %vm1232, %v1184
      %1250 = vst.msk [vmem:[%s202 + $0x88] sm:$0xff] %vm1232, %v1185
      %1251 = vst.msk [vmem:[%s202 + $0x90] sm:$0xff] %vm1232, %v1186
      %1252 = vst.msk [vmem:[%s202 + $0x98] sm:$0xff] %vm1232, %v1187
      %1253 = vst.msk [vmem:[%s202 + $0xa0] sm:$0xff] %vm1232, %v1188
      %1254 = vst.msk [vmem:[%s202 + $0xa8] sm:$0xff] %vm1232, %v1189
      %1255 = vst.msk [vmem:[%s202 + $0xb0] sm:$0xff] %vm1232, %v1190
      %1256 = vst.msk [vmem:[%s202 + $0xb8] sm:$0xff] %vm1232, %v1191
      %1257 = vst.msk [vmem:[%s202 + $0xc0] sm:$0xff] %vm1232, %v1192
      %1258 = vst.msk [vmem:[%s202 + $0xc8] sm:$0xff] %vm1232, %v1193
      %1259 = vst.msk [vmem:[%s202 + $0xd0] sm:$0xff] %vm1232, %v1194
      %1260 = vst.msk [vmem:[%s202 + $0xd8] sm:$0xff] %vm1232, %v1195
      %1261 = vst.msk [vmem:[%s202 + $0xe0] sm:$0xff] %vm1232, %v1196
      %1262 = vst.msk [vmem:[%s202 + $0xe8] sm:$0xff] %vm1232, %v1197
      %1263 = vst.msk [vmem:[%s202 + $0xf0] sm:$0xff] %vm1232, %v1198
      %1264 = vst.msk [vmem:[%s202 + $0xf8] sm:$0xff] %vm1232, %v1199
      %1265 = vst.msk [vmem:[%s202 + $0x100] sm:$0xff] %vm1232, %v1200
      %1266 = vst.msk [vmem:[%s202 + $0x108] sm:$0xff] %vm1232, %v1201
      %1267 = vst.msk [vmem:[%s202 + $0x110] sm:$0xff] %vm1232, %v1202
      %1268 = vst.msk [vmem:[%s202 + $0x118] sm:$0xff] %vm1232, %v1203
      %1269 = vst.msk [vmem:[%s202 + $0x120] sm:$0xff] %vm1232, %v1204
      %1270 = vst.msk [vmem:[%s202 + $0x128] sm:$0xff] %vm1232, %v1205
      %1271 = vst.msk [vmem:[%s202 + $0x130] sm:$0xff] %vm1232, %v1206
      %1272 = vst.msk [vmem:[%s202 + $0x138] sm:$0xff] %vm1232, %v1207
      %1273 = vst.msk [vmem:[%s202 + $0x140] sm:$0xff] %vm1232, %v1208
      %1274 = vst.msk [vmem:[%s202 + $0x148] sm:$0xff] %vm1232, %v1209
      %1275 = vst.msk [vmem:[%s202 + $0x150] sm:$0xff] %vm1232, %v1210
      %1276 = vst.msk [vmem:[%s202 + $0x158] sm:$0xff] %vm1232, %v1211
      %1277 = vst.msk [vmem:[%s202 + $0x160] sm:$0xff] %vm1232, %v1212
      %1278 = vst.msk [vmem:[%s202 + $0x168] sm:$0xff] %vm1232, %v1213
      %1279 = vst.msk [vmem:[%s202 + $0x170] sm:$0xff] %vm1232, %v1214
      %1280 = vst.msk [vmem:[%s202 + $0x178] sm:$0xff] %vm1232, %v1215
      %1281 = vst.msk [vmem:[%s202 + $0x180] sm:$0xff] %vm1232, %v1216
      %1282 = vst.msk [vmem:[%s202 + $0x188] sm:$0xff] %vm1232, %v1217
      %1283 = vst.msk [vmem:[%s202 + $0x190] sm:$0xff] %vm1232, %v1218
      %1284 = vst.msk [vmem:[%s202 + $0x198] sm:$0xff] %vm1232, %v1219
      %1285 = vst.msk [vmem:[%s202 + $0x1a0] sm:$0xff] %vm1232, %v1220
      %1286 = vst.msk [vmem:[%s202 + $0x1a8] sm:$0xff] %vm1232, %v1221
      %1287 = vst.msk [vmem:[%s202 + $0x1b0] sm:$0xff] %vm1232, %v1222
      %1288 = vst.msk [vmem:[%s202 + $0x1b8] sm:$0xff] %vm1232, %v1223
      %1289 = vst.msk [vmem:[%s202 + $0x1c0] sm:$0xff] %vm1232, %v1224
      %1290 = vst.msk [vmem:[%s202 + $0x1c8] sm:$0xff] %vm1232, %v1225
      %1291 = vst.msk [vmem:[%s202 + $0x1d0] sm:$0xff] %vm1232, %v1226
      %1292 = vst.msk [vmem:[%s202 + $0x1d8] sm:$0xff] %vm1232, %v1227
      %1293 = vst.msk [vmem:[%s202 + $0x1e0] sm:$0xff] %vm1232, %v1228
      %1294 = vst.msk [vmem:[%s202 + $0x1e8] sm:$0xff] %vm1232, %v1229
      %1295 = vst.msk [vmem:[%s202 + $0x1f0] sm:$0xff] %vm1232, %v1230
      %1296 = vst.msk [vmem:[%s202 + $0x1f8] sm:$0xff] %vm1232, %v1231
      %s1297 = smul.u32 64, %s15
      %p1298 = scmp.lt.s32.totalorder %s1297, 255
      %s1299 = scalar_select %p1298, %s1297, 255
      %s1300 = smul.addr %s1299, 8
      %s1301 = scalar_lea.vmem %s4, %s1300
      // Predicated region
      $region37: #{_lambda_.21} parent=35 // pred_check
        %p1302 = pneg %p122
      $region38: #{_lambda_.21} parent=35 // pred_check_branch
        %1304 = sbr.rel (%p1302) target = $region40
      $region39: #{_lambda_.21} parent=35 // pred_region
        %s1305 = smul.u32 64, %s15
      $region40: #{_lambda_.21} parent=35 // pred_fallthru
        _
    $region36: #{_lambda_.21} parent=5 // pred_fallthru
      _
    %p1306 = scmp.le.s32.totalorder 2, %s10
    // Predicated region
    $region41: #{_lambda_.21} parent=5 // pred_check
      %p1307 = pneg %p1306
    $region42: #{_lambda_.21} parent=5 // pred_check_branch
      %1309 = sbr.rel (%p1307) target = $region44
    $region43: #{_lambda_.21} parent=5 // pred_region
      %s1310 = ssub.s32 %s10, 2
      // Predicated region
      $region45: #{_lambda_.21} parent=43 // pred_check
        %p1311 = pneg %p128
      $region46: #{_lambda_.21} parent=43 // pred_check_branch
        %1313 = sbr.rel (%p1311) target = $region48
      $region47: #{_lambda_.21} parent=43 // pred_region
        %s1314 = smul.u32 64, %s16
        %p1315 = scmp.lt.s32.totalorder %s1314, 255
        %s1316 = scalar_select %p1315, %s1314, 255
        %s1317 = smul.addr %s1316, 8
        %s1318 = scalar_lea.vmem %s4, %s1317
      $region48: #{_lambda_.21} parent=43 // pred_fallthru
        _
    $region44: #{_lambda_.21} parent=5 // pred_fallthru
      _
  $region6: #{_lambda_.21} parent=0 // loop_footer
    %s14 = sadd.s32 1, %s10
  $region7: #{_lambda_.21} parent=0 // loop_footer_branch
    %9 = sbr.rel target = $region3
  $region8: #{_lambda_.21} parent=0 // loop_exit
    _

// kernel: _lambda_.22
$region0: #{_lambda_.22}
  #allocation0 [shape = 'u32[]', space=smem, size = 0x4, offset = 0x4, fixed_abs, tag = 'smem constant byte address 0x4 - core index']
  #allocation1 [shape = 'u32[144,128]{1,0:T(1,128)}', space=vmem, size = 0x12000, scoped, tag = 'internal scratch']
  %s0 = inlined_call_operand.vmem [shape: f32[9,512,8], index: 0, kind: input, shape index: {}]
  %s1 = inlined_call_operand.vmem [shape: f32[512,8], index: 1, kind: output, shape index: {}]
  %s2 = sld [smem:[#allocation0]]
  $region14: #{_lambda_.22} parent=0
    _
  %s4 = ssub.s32 1, %s2
  %s5 = scalar_select 0, %s4, %s2
  // Predicated region
  $region2: #{_lambda_.22} parent=0 // pred_check
    _
  $region3: #{_lambda_.22} parent=0 // pred_check_branch
    %7 = sbr.rel (0) target = $region5
  $region4: #{_lambda_.22} parent=0 // pred_region
    _
  $region5: #{_lambda_.22} parent=0 // pred_fallthru
    _
  %v8 = vld [vmem:[%s0] sm:$0xff]
  %v9 = vld [vmem:[%s0 + $0x8] sm:$0xff]
  %v10 = vld [vmem:[%s0 + $0x10] sm:$0xff]
  %v11 = vld [vmem:[%s0 + $0x18] sm:$0xff]
  %v12 = vld [vmem:[%s0 + $0x20] sm:$0xff]
  %v13 = vld [vmem:[%s0 + $0x28] sm:$0xff]
  %v14 = vld [vmem:[%s0 + $0x30] sm:$0xff]
  %v15 = vld [vmem:[%s0 + $0x38] sm:$0xff]
  %v16 = vld [vmem:[%s0 + $0x40] sm:$0xff]
  %v17 = vld [vmem:[%s0 + $0x48] sm:$0xff]
  %v18 = vld [vmem:[%s0 + $0x50] sm:$0xff]
  %v19 = vld [vmem:[%s0 + $0x58] sm:$0xff]
  %v20 = vld [vmem:[%s0 + $0x60] sm:$0xff]
  %v21 = vld [vmem:[%s0 + $0x68] sm:$0xff]
  %v22 = vld [vmem:[%s0 + $0x70] sm:$0xff]
  %v23 = vld [vmem:[%s0 + $0x78] sm:$0xff]
  %v24 = vld [vmem:[%s0 + $0x80] sm:$0xff]
  %v25 = vld [vmem:[%s0 + $0x88] sm:$0xff]
  %v26 = vld [vmem:[%s0 + $0x90] sm:$0xff]
  %v27 = vld [vmem:[%s0 + $0x98] sm:$0xff]
  %v28 = vld [vmem:[%s0 + $0xa0] sm:$0xff]
  %v29 = vld [vmem:[%s0 + $0xa8] sm:$0xff]
  %v30 = vld [vmem:[%s0 + $0xb0] sm:$0xff]
  %v31 = vld [vmem:[%s0 + $0xb8] sm:$0xff]
  %v32 = vld [vmem:[%s0 + $0xc0] sm:$0xff]
  %v33 = vld [vmem:[%s0 + $0xc8] sm:$0xff]
  %v34 = vld [vmem:[%s0 + $0xd0] sm:$0xff]
  %v35 = vld [vmem:[%s0 + $0xd8] sm:$0xff]
  %v36 = vld [vmem:[%s0 + $0xe0] sm:$0xff]
  %v37 = vld [vmem:[%s0 + $0xe8] sm:$0xff]
  %v38 = vld [vmem:[%s0 + $0xf0] sm:$0xff]
  %v39 = vld [vmem:[%s0 + $0xf8] sm:$0xff]
  %v40 = vld [vmem:[%s0 + $0x100] sm:$0xff]
  %v41 = vld [vmem:[%s0 + $0x108] sm:$0xff]
  %v42 = vld [vmem:[%s0 + $0x110] sm:$0xff]
  %v43 = vld [vmem:[%s0 + $0x118] sm:$0xff]
  %v44 = vld [vmem:[%s0 + $0x120] sm:$0xff]
  %v45 = vld [vmem:[%s0 + $0x128] sm:$0xff]
  %v46 = vld [vmem:[%s0 + $0x130] sm:$0xff]
  %v47 = vld [vmem:[%s0 + $0x138] sm:$0xff]
  %v48 = vld [vmem:[%s0 + $0x140] sm:$0xff]
  %v49 = vld [vmem:[%s0 + $0x148] sm:$0xff]
  %v50 = vld [vmem:[%s0 + $0x150] sm:$0xff]
  %v51 = vld [vmem:[%s0 + $0x158] sm:$0xff]
  %v52 = vld [vmem:[%s0 + $0x160] sm:$0xff]
  %v53 = vld [vmem:[%s0 + $0x168] sm:$0xff]
  %v54 = vld [vmem:[%s0 + $0x170] sm:$0xff]
  %v55 = vld [vmem:[%s0 + $0x178] sm:$0xff]
  %v56 = vld [vmem:[%s0 + $0x180] sm:$0xff]
  %v57 = vld [vmem:[%s0 + $0x188] sm:$0xff]
  %v58 = vld [vmem:[%s0 + $0x190] sm:$0xff]
  %v59 = vld [vmem:[%s0 + $0x198] sm:$0xff]
  %v60 = vld [vmem:[%s0 + $0x1a0] sm:$0xff]
  %v61 = vld [vmem:[%s0 + $0x1a8] sm:$0xff]
  %v62 = vld [vmem:[%s0 + $0x1b0] sm:$0xff]
  %v63 = vld [vmem:[%s0 + $0x1b8] sm:$0xff]
  %v64 = vld [vmem:[%s0 + $0x1c0] sm:$0xff]
  %v65 = vld [vmem:[%s0 + $0x1c8] sm:$0xff]
  %v66 = vld [vmem:[%s0 + $0x1d0] sm:$0xff]
  %v67 = vld [vmem:[%s0 + $0x1d8] sm:$0xff]
  %v68 = vld [vmem:[%s0 + $0x1e0] sm:$0xff]
  %v69 = vld [vmem:[%s0 + $0x1e8] sm:$0xff]
  %v70 = vld [vmem:[%s0 + $0x1f0] sm:$0xff]
  %v71 = vld [vmem:[%s0 + $0x1f8] sm:$0xff]
  %s72 = scalar_lea.vmem %s0, 512
  %v73 = vld [vmem:[%s72] sm:$0xff]
  %v74 = vld [vmem:[%s72 + $0x8] sm:$0xff]
  %v75 = vld [vmem:[%s72 + $0x10] sm:$0xff]
  %v76 = vld [vmem:[%s72 + $0x18] sm:$0xff]
  %v77 = vld [vmem:[%s72 + $0x20] sm:$0xff]
  %v78 = vld [vmem:[%s72 + $0x28] sm:$0xff]
  %v79 = vld [vmem:[%s72 + $0x30] sm:$0xff]
  %v80 = vld [vmem:[%s72 + $0x38] sm:$0xff]
  %v81 = vld [vmem:[%s72 + $0x40] sm:$0xff]
  %v82 = vld [vmem:[%s72 + $0x48] sm:$0xff]
  %v83 = vld [vmem:[%s72 + $0x50] sm:$0xff]
  %v84 = vld [vmem:[%s72 + $0x58] sm:$0xff]
  %v85 = vld [vmem:[%s72 + $0x60] sm:$0xff]
  %v86 = vld [vmem:[%s72 + $0x68] sm:$0xff]
  %v87 = vld [vmem:[%s72 + $0x70] sm:$0xff]
  %v88 = vld [vmem:[%s72 + $0x78] sm:$0xff]
  %v89 = vld [vmem:[%s72 + $0x80] sm:$0xff]
  %v90 = vld [vmem:[%s72 + $0x88] sm:$0xff]
  %v91 = vld [vmem:[%s72 + $0x90] sm:$0xff]
  %v92 = vld [vmem:[%s72 + $0x98] sm:$0xff]
  %v93 = vld [vmem:[%s72 + $0xa0] sm:$0xff]
  %v94 = vld [vmem:[%s72 + $0xa8] sm:$0xff]
  %v95 = vld [vmem:[%s72 + $0xb0] sm:$0xff]
  %v96 = vld [vmem:[%s72 + $0xb8] sm:$0xff]
  %v97 = vld [vmem:[%s72 + $0xc0] sm:$0xff]
  %v98 = vld [vmem:[%s72 + $0xc8] sm:$0xff]
  %v99 = vld [vmem:[%s72 + $0xd0] sm:$0xff]
  %v100 = vld [vmem:[%s72 + $0xd8] sm:$0xff]
  %v101 = vld [vmem:[%s72 + $0xe0] sm:$0xff]
  %v102 = vld [vmem:[%s72 + $0xe8] sm:$0xff]
  %v103 = vld [vmem:[%s72 + $0xf0] sm:$0xff]
  %v104 = vld [vmem:[%s72 + $0xf8] sm:$0xff]
  %v105 = vld [vmem:[%s72 + $0x100] sm:$0xff]
  %v106 = vld [vmem:[%s72 + $0x108] sm:$0xff]
  %v107 = vld [vmem:[%s72 + $0x110] sm:$0xff]
  %v108 = vld [vmem:[%s72 + $0x118] sm:$0xff]
  %v109 = vld [vmem:[%s72 + $0x120] sm:$0xff]
  %v110 = vld [vmem:[%s72 + $0x128] sm:$0xff]
  %v111 = vld [vmem:[%s72 + $0x130] sm:$0xff]
  %v112 = vld [vmem:[%s72 + $0x138] sm:$0xff]
  %v113 = vld [vmem:[%s72 + $0x140] sm:$0xff]
  %v114 = vld [vmem:[%s72 + $0x148] sm:$0xff]
  %v115 = vld [vmem:[%s72 + $0x150] sm:$0xff]
  %v116 = vld [vmem:[%s72 + $0x158] sm:$0xff]
  %v117 = vld [vmem:[%s72 + $0x160] sm:$0xff]
  %v118 = vld [vmem:[%s72 + $0x168] sm:$0xff]
  %v119 = vld [vmem:[%s72 + $0x170] sm:$0xff]
  %v120 = vld [vmem:[%s72 + $0x178] sm:$0xff]
  %v121 = vld [vmem:[%s72 + $0x180] sm:$0xff]
  %v122 = vld [vmem:[%s72 + $0x188] sm:$0xff]
  %v123 = vld [vmem:[%s72 + $0x190] sm:$0xff]
  %v124 = vld [vmem:[%s72 + $0x198] sm:$0xff]
  %v125 = vld [vmem:[%s72 + $0x1a0] sm:$0xff]
  %v126 = vld [vmem:[%s72 + $0x1a8] sm:$0xff]
  %v127 = vld [vmem:[%s72 + $0x1b0] sm:$0xff]
  %v128 = vld [vmem:[%s72 + $0x1b8] sm:$0xff]
  %v129 = vld [vmem:[%s72 + $0x1c0] sm:$0xff]
  %v130 = vld [vmem:[%s72 + $0x1c8] sm:$0xff]
  %v131 = vld [vmem:[%s72 + $0x1d0] sm:$0xff]
  %v132 = vld [vmem:[%s72 + $0x1d8] sm:$0xff]
  %v133 = vld [vmem:[%s72 + $0x1e0] sm:$0xff]
  %v134 = vld [vmem:[%s72 + $0x1e8] sm:$0xff]
  %v135 = vld [vmem:[%s72 + $0x1f0] sm:$0xff]
  %v136 = vld [vmem:[%s72 + $0x1f8] sm:$0xff]
  %v137 = vmax.f32 %v8, %v73
  %v138 = vmax.f32 %v9, %v74
  %v139 = vmax.f32 %v10, %v75
  %v140 = vmax.f32 %v11, %v76
  %v141 = vmax.f32 %v12, %v77
  %v142 = vmax.f32 %v13, %v78
  %v143 = vmax.f32 %v14, %v79
  %v144 = vmax.f32 %v15, %v80
  %v145 = vmax.f32 %v16, %v81
  %v146 = vmax.f32 %v17, %v82
  %v147 = vmax.f32 %v18, %v83
  %v148 = vmax.f32 %v19, %v84
  %v149 = vmax.f32 %v20, %v85
  %v150 = vmax.f32 %v21, %v86
  %v151 = vmax.f32 %v22, %v87
  %v152 = vmax.f32 %v23, %v88
  %v153 = vmax.f32 %v24, %v89
  %v154 = vmax.f32 %v25, %v90
  %v155 = vmax.f32 %v26, %v91
  %v156 = vmax.f32 %v27, %v92
  %v157 = vmax.f32 %v28, %v93
  %v158 = vmax.f32 %v29, %v94
  %v159 = vmax.f32 %v30, %v95
  %v160 = vmax.f32 %v31, %v96
  %v161 = vmax.f32 %v32, %v97
  %v162 = vmax.f32 %v33, %v98
  %v163 = vmax.f32 %v34, %v99
  %v164 = vmax.f32 %v35, %v100
  %v165 = vmax.f32 %v36, %v101
  %v166 = vmax.f32 %v37, %v102
  %v167 = vmax.f32 %v38, %v103
  %v168 = vmax.f32 %v39, %v104
  %v169 = vmax.f32 %v40, %v105
  %v170 = vmax.f32 %v41, %v106
  %v171 = vmax.f32 %v42, %v107
  %v172 = vmax.f32 %v43, %v108
  %v173 = vmax.f32 %v44, %v109
  %v174 = vmax.f32 %v45, %v110
  %v175 = vmax.f32 %v46, %v111
  %v176 = vmax.f32 %v47, %v112
  %v177 = vmax.f32 %v48, %v113
  %v178 = vmax.f32 %v49, %v114
  %v179 = vmax.f32 %v50, %v115
  %v180 = vmax.f32 %v51, %v116
  %v181 = vmax.f32 %v52, %v117
  %v182 = vmax.f32 %v53, %v118
  %v183 = vmax.f32 %v54, %v119
  %v184 = vmax.f32 %v55, %v120
  %v185 = vmax.f32 %v56, %v121
  %v186 = vmax.f32 %v57, %v122
  %v187 = vmax.f32 %v58, %v123
  %v188 = vmax.f32 %v59, %v124
  %v189 = vmax.f32 %v60, %v125
  %v190 = vmax.f32 %v61, %v126
  %v191 = vmax.f32 %v62, %v127
  %v192 = vmax.f32 %v63, %v128
  %v193 = vmax.f32 %v64, %v129
  %v194 = vmax.f32 %v65, %v130
  %v195 = vmax.f32 %v66, %v131
  %v196 = vmax.f32 %v67, %v132
  %v197 = vmax.f32 %v68, %v133
  %v198 = vmax.f32 %v69, %v134
  %v199 = vmax.f32 %v70, %v135
  %v200 = vmax.f32 %v71, %v136
  %s201 = scalar_lea.vmem %s0, 1024
  %v202 = vld [vmem:[%s201] sm:$0xff]
  %v203 = vld [vmem:[%s201 + $0x8] sm:$0xff]
  %v204 = vld [vmem:[%s201 + $0x10] sm:$0xff]
  %v205 = vld [vmem:[%s201 + $0x18] sm:$0xff]
  %v206 = vld [vmem:[%s201 + $0x20] sm:$0xff]
  %v207 = vld [vmem:[%s201 + $0x28] sm:$0xff]
  %v208 = vld [vmem:[%s201 + $0x30] sm:$0xff]
  %v209 = vld [vmem:[%s201 + $0x38] sm:$0xff]
  %v210 = vld [vmem:[%s201 + $0x40] sm:$0xff]
  %v211 = vld [vmem:[%s201 + $0x48] sm:$0xff]
  %v212 = vld [vmem:[%s201 + $0x50] sm:$0xff]
  %v213 = vld [vmem:[%s201 + $0x58] sm:$0xff]
  %v214 = vld [vmem:[%s201 + $0x60] sm:$0xff]
  %v215 = vld [vmem:[%s201 + $0x68] sm:$0xff]
  %v216 = vld [vmem:[%s201 + $0x70] sm:$0xff]
  %v217 = vld [vmem:[%s201 + $0x78] sm:$0xff]
  %v218 = vld [vmem:[%s201 + $0x80] sm:$0xff]
  %v219 = vld [vmem:[%s201 + $0x88] sm:$0xff]
  %v220 = vld [vmem:[%s201 + $0x90] sm:$0xff]
  %v221 = vld [vmem:[%s201 + $0x98] sm:$0xff]
  %v222 = vld [vmem:[%s201 + $0xa0] sm:$0xff]
  %v223 = vld [vmem:[%s201 + $0xa8] sm:$0xff]
  %v224 = vld [vmem:[%s201 + $0xb0] sm:$0xff]
  %v225 = vld [vmem:[%s201 + $0xb8] sm:$0xff]
  %v226 = vld [vmem:[%s201 + $0xc0] sm:$0xff]
  %v227 = vld [vmem:[%s201 + $0xc8] sm:$0xff]
  %v228 = vld [vmem:[%s201 + $0xd0] sm:$0xff]
  %v229 = vld [vmem:[%s201 + $0xd8] sm:$0xff]
  %v230 = vld [vmem:[%s201 + $0xe0] sm:$0xff]
  %v231 = vld [vmem:[%s201 + $0xe8] sm:$0xff]
  %v232 = vld [vmem:[%s201 + $0xf0] sm:$0xff]
  %v233 = vld [vmem:[%s201 + $0xf8] sm:$0xff]
  %v234 = vld [vmem:[%s201 + $0x100] sm:$0xff]
  %v235 = vld [vmem:[%s201 + $0x108] sm:$0xff]
  %v236 = vld [vmem:[%s201 + $0x110] sm:$0xff]
  %v237 = vld [vmem:[%s201 + $0x118] sm:$0xff]
  %v238 = vld [vmem:[%s201 + $0x120] sm:$0xff]
  %v239 = vld [vmem:[%s201 + $0x128] sm:$0xff]
  %v240 = vld [vmem:[%s201 + $0x130] sm:$0xff]
  %v241 = vld [vmem:[%s201 + $0x138] sm:$0xff]
  %v242 = vld [vmem:[%s201 + $0x140] sm:$0xff]
  %v243 = vld [vmem:[%s201 + $0x148] sm:$0xff]
  %v244 = vld [vmem:[%s201 + $0x150] sm:$0xff]
  %v245 = vld [vmem:[%s201 + $0x158] sm:$0xff]
  %v246 = vld [vmem:[%s201 + $0x160] sm:$0xff]
  %v247 = vld [vmem:[%s201 + $0x168] sm:$0xff]
  %v248 = vld [vmem:[%s201 + $0x170] sm:$0xff]
  %v249 = vld [vmem:[%s201 + $0x178] sm:$0xff]
  %v250 = vld [vmem:[%s201 + $0x180] sm:$0xff]
  %v251 = vld [vmem:[%s201 + $0x188] sm:$0xff]
  %v252 = vld [vmem:[%s201 + $0x190] sm:$0xff]
  %v253 = vld [vmem:[%s201 + $0x198] sm:$0xff]
  %v254 = vld [vmem:[%s201 + $0x1a0] sm:$0xff]
  %v255 = vld [vmem:[%s201 + $0x1a8] sm:$0xff]
  %v256 = vld [vmem:[%s201 + $0x1b0] sm:$0xff]
  %v257 = vld [vmem:[%s201 + $0x1b8] sm:$0xff]
  %v258 = vld [vmem:[%s201 + $0x1c0] sm:$0xff]
  %v259 = vld [vmem:[%s201 + $0x1c8] sm:$0xff]
  %v260 = vld [vmem:[%s201 + $0x1d0] sm:$0xff]
  %v261 = vld [vmem:[%s201 + $0x1d8] sm:$0xff]
  %v262 = vld [vmem:[%s201 + $0x1e0] sm:$0xff]
  %v263 = vld [vmem:[%s201 + $0x1e8] sm:$0xff]
  %v264 = vld [vmem:[%s201 + $0x1f0] sm:$0xff]
  %v265 = vld [vmem:[%s201 + $0x1f8] sm:$0xff]
  %v266 = vmax.f32 %v137, %v202
  %v267 = vmax.f32 %v138, %v203
  %v268 = vmax.f32 %v139, %v204
  %v269 = vmax.f32 %v140, %v205
  %v270 = vmax.f32 %v141, %v206
  %v271 = vmax.f32 %v142, %v207
  %v272 = vmax.f32 %v143, %v208
  %v273 = vmax.f32 %v144, %v209
  %v274 = vmax.f32 %v145, %v210
  %v275 = vmax.f32 %v146, %v211
  %v276 = vmax.f32 %v147, %v212
  %v277 = vmax.f32 %v148, %v213
  %v278 = vmax.f32 %v149, %v214
  %v279 = vmax.f32 %v150, %v215
  %v280 = vmax.f32 %v151, %v216
  %v281 = vmax.f32 %v152, %v217
  %v282 = vmax.f32 %v153, %v218
  %v283 = vmax.f32 %v154, %v219
  %v284 = vmax.f32 %v155, %v220
  %v285 = vmax.f32 %v156, %v221
  %v286 = vmax.f32 %v157, %v222
  %v287 = vmax.f32 %v158, %v223
  %v288 = vmax.f32 %v159, %v224
  %v289 = vmax.f32 %v160, %v225
  %v290 = vmax.f32 %v161, %v226
  %v291 = vmax.f32 %v162, %v227
  %v292 = vmax.f32 %v163, %v228
  %v293 = vmax.f32 %v164, %v229
  %v294 = vmax.f32 %v165, %v230
  %v295 = vmax.f32 %v166, %v231
  %v296 = vmax.f32 %v167, %v232
  %v297 = vmax.f32 %v168, %v233
  %v298 = vmax.f32 %v169, %v234
  %v299 = vmax.f32 %v170, %v235
  %v300 = vmax.f32 %v171, %v236
  %v301 = vmax.f32 %v172, %v237
  %v302 = vmax.f32 %v173, %v238
  %v303 = vmax.f32 %v174, %v239
  %v304 = vmax.f32 %v175, %v240
  %v305 = vmax.f32 %v176, %v241
  %v306 = vmax.f32 %v177, %v242
  %v307 = vmax.f32 %v178, %v243
  %v308 = vmax.f32 %v179, %v244
  %v309 = vmax.f32 %v180, %v245
  %v310 = vmax.f32 %v181, %v246
  %v311 = vmax.f32 %v182, %v247
  %v312 = vmax.f32 %v183, %v248
  %v313 = vmax.f32 %v184, %v249
  %v314 = vmax.f32 %v185, %v250
  %v315 = vmax.f32 %v186, %v251
  %v316 = vmax.f32 %v187, %v252
  %v317 = vmax.f32 %v188, %v253
  %v318 = vmax.f32 %v189, %v254
  %v319 = vmax.f32 %v190, %v255
  %v320 = vmax.f32 %v191, %v256
  %v321 = vmax.f32 %v192, %v257
  %v322 = vmax.f32 %v193, %v258
  %v323 = vmax.f32 %v194, %v259
  %v324 = vmax.f32 %v195, %v260
  %v325 = vmax.f32 %v196, %v261
  %v326 = vmax.f32 %v197, %v262
  %v327 = vmax.f32 %v198, %v263
  %v328 = vmax.f32 %v199, %v264
  %v329 = vmax.f32 %v200, %v265
  %s330 = scalar_lea.vmem %s0, 1536
  %v331 = vld [vmem:[%s330] sm:$0xff]
  %v332 = vld [vmem:[%s330 + $0x8] sm:$0xff]
  %v333 = vld [vmem:[%s330 + $0x10] sm:$0xff]
  %v334 = vld [vmem:[%s330 + $0x18] sm:$0xff]
  %v335 = vld [vmem:[%s330 + $0x20] sm:$0xff]
  %v336 = vld [vmem:[%s330 + $0x28] sm:$0xff]
  %v337 = vld [vmem:[%s330 + $0x30] sm:$0xff]
  %v338 = vld [vmem:[%s330 + $0x38] sm:$0xff]
  %v339 = vld [vmem:[%s330 + $0x40] sm:$0xff]
  %v340 = vld [vmem:[%s330 + $0x48] sm:$0xff]
  %v341 = vld [vmem:[%s330 + $0x50] sm:$0xff]
  %v342 = vld [vmem:[%s330 + $0x58] sm:$0xff]
  %v343 = vld [vmem:[%s330 + $0x60] sm:$0xff]
  %v344 = vld [vmem:[%s330 + $0x68] sm:$0xff]
  %v345 = vld [vmem:[%s330 + $0x70] sm:$0xff]
  %v346 = vld [vmem:[%s330 + $0x78] sm:$0xff]
  %v347 = vld [vmem:[%s330 + $0x80] sm:$0xff]
  %v348 = vld [vmem:[%s330 + $0x88] sm:$0xff]
  %v349 = vld [vmem:[%s330 + $0x90] sm:$0xff]
  %v350 = vld [vmem:[%s330 + $0x98] sm:$0xff]
  %v351 = vld [vmem:[%s330 + $0xa0] sm:$0xff]
  %v352 = vld [vmem:[%s330 + $0xa8] sm:$0xff]
  %v353 = vld [vmem:[%s330 + $0xb0] sm:$0xff]
  %v354 = vld [vmem:[%s330 + $0xb8] sm:$0xff]
  %v355 = vld [vmem:[%s330 + $0xc0] sm:$0xff]
  %v356 = vld [vmem:[%s330 + $0xc8] sm:$0xff]
  %v357 = vld [vmem:[%s330 + $0xd0] sm:$0xff]
  %v358 = vld [vmem:[%s330 + $0xd8] sm:$0xff]
  %v359 = vld [vmem:[%s330 + $0xe0] sm:$0xff]
  %v360 = vld [vmem:[%s330 + $0xe8] sm:$0xff]
  %v361 = vld [vmem:[%s330 + $0xf0] sm:$0xff]
  %v362 = vld [vmem:[%s330 + $0xf8] sm:$0xff]
  %v363 = vld [vmem:[%s330 + $0x100] sm:$0xff]
  %v364 = vld [vmem:[%s330 + $0x108] sm:$0xff]
  %v365 = vld [vmem:[%s330 + $0x110] sm:$0xff]
  %v366 = vld [vmem:[%s330 + $0x118] sm:$0xff]
  %v367 = vld [vmem:[%s330 + $0x120] sm:$0xff]
  %v368 = vld [vmem:[%s330 + $0x128] sm:$0xff]
  %v369 = vld [vmem:[%s330 + $0x130] sm:$0xff]
  %v370 = vld [vmem:[%s330 + $0x138] sm:$0xff]
  %v371 = vld [vmem:[%s330 + $0x140] sm:$0xff]
  %v372 = vld [vmem:[%s330 + $0x148] sm:$0xff]
  %v373 = vld [vmem:[%s330 + $0x150] sm:$0xff]
  %v374 = vld [vmem:[%s330 + $0x158] sm:$0xff]
  %v375 = vld [vmem:[%s330 + $0x160] sm:$0xff]
  %v376 = vld [vmem:[%s330 + $0x168] sm:$0xff]
  %v377 = vld [vmem:[%s330 + $0x170] sm:$0xff]
  %v378 = vld [vmem:[%s330 + $0x178] sm:$0xff]
  %v379 = vld [vmem:[%s330 + $0x180] sm:$0xff]
  %v380 = vld [vmem:[%s330 + $0x188] sm:$0xff]
  %v381 = vld [vmem:[%s330 + $0x190] sm:$0xff]
  %v382 = vld [vmem:[%s330 + $0x198] sm:$0xff]
  %v383 = vld [vmem:[%s330 + $0x1a0] sm:$0xff]
  %v384 = vld [vmem:[%s330 + $0x1a8] sm:$0xff]
  %v385 = vld [vmem:[%s330 + $0x1b0] sm:$0xff]
  %v386 = vld [vmem:[%s330 + $0x1b8] sm:$0xff]
  %v387 = vld [vmem:[%s330 + $0x1c0] sm:$0xff]
  %v388 = vld [vmem:[%s330 + $0x1c8] sm:$0xff]
  %v389 = vld [vmem:[%s330 + $0x1d0] sm:$0xff]
  %v390 = vld [vmem:[%s330 + $0x1d8] sm:$0xff]
  %v391 = vld [vmem:[%s330 + $0x1e0] sm:$0xff]
  %v392 = vld [vmem:[%s330 + $0x1e8] sm:$0xff]
  %v393 = vld [vmem:[%s330 + $0x1f0] sm:$0xff]
  %v394 = vld [vmem:[%s330 + $0x1f8] sm:$0xff]
  %v395 = vmax.f32 %v266, %v331
  %v396 = vmax.f32 %v267, %v332
  %v397 = vmax.f32 %v268, %v333
  %v398 = vmax.f32 %v269, %v334
  %v399 = vmax.f32 %v270, %v335
  %v400 = vmax.f32 %v271, %v336
  %v401 = vmax.f32 %v272, %v337
  %v402 = vmax.f32 %v273, %v338
  %v403 = vmax.f32 %v274, %v339
  %v404 = vmax.f32 %v275, %v340
  %v405 = vmax.f32 %v276, %v341
  %v406 = vmax.f32 %v277, %v342
  %v407 = vmax.f32 %v278, %v343
  %v408 = vmax.f32 %v279, %v344
  %v409 = vmax.f32 %v280, %v345
  %v410 = vmax.f32 %v281, %v346
  %v411 = vmax.f32 %v282, %v347
  %v412 = vmax.f32 %v283, %v348
  %v413 = vmax.f32 %v284, %v349
  %v414 = vmax.f32 %v285, %v350
  %v415 = vmax.f32 %v286, %v351
  %v416 = vmax.f32 %v287, %v352
  %v417 = vmax.f32 %v288, %v353
  %v418 = vmax.f32 %v289, %v354
  %v419 = vmax.f32 %v290, %v355
  %v420 = vmax.f32 %v291, %v356
  %v421 = vmax.f32 %v292, %v357
  %v422 = vmax.f32 %v293, %v358
  %v423 = vmax.f32 %v294, %v359
  %v424 = vmax.f32 %v295, %v360
  %v425 = vmax.f32 %v296, %v361
  %v426 = vmax.f32 %v297, %v362
  %v427 = vmax.f32 %v298, %v363
  %v428 = vmax.f32 %v299, %v364
  %v429 = vmax.f32 %v300, %v365
  %v430 = vmax.f32 %v301, %v366
  %v431 = vmax.f32 %v302, %v367
  %v432 = vmax.f32 %v303, %v368
  %v433 = vmax.f32 %v304, %v369
  %v434 = vmax.f32 %v305, %v370
  %v435 = vmax.f32 %v306, %v371
  %v436 = vmax.f32 %v307, %v372
  %v437 = vmax.f32 %v308, %v373
  %v438 = vmax.f32 %v309, %v374
  %v439 = vmax.f32 %v310, %v375
  %v440 = vmax.f32 %v311, %v376
  %v441 = vmax.f32 %v312, %v377
  %v442 = vmax.f32 %v313, %v378
  %v443 = vmax.f32 %v314, %v379
  %v444 = vmax.f32 %v315, %v380
  %v445 = vmax.f32 %v316, %v381
  %v446 = vmax.f32 %v317, %v382
  %v447 = vmax.f32 %v318, %v383
  %v448 = vmax.f32 %v319, %v384
  %v449 = vmax.f32 %v320, %v385
  %v450 = vmax.f32 %v321, %v386
  %v451 = vmax.f32 %v322, %v387
  %v452 = vmax.f32 %v323, %v388
  %v453 = vmax.f32 %v324, %v389
  %v454 = vmax.f32 %v325, %v390
  %v455 = vmax.f32 %v326, %v391
  %v456 = vmax.f32 %v327, %v392
  %v457 = vmax.f32 %v328, %v393
  %v458 = vmax.f32 %v329, %v394
  %s459 = scalar_lea.vmem %s0, 2048
  %v460 = vld [vmem:[%s459] sm:$0xff]
  %v461 = vld [vmem:[%s459 + $0x8] sm:$0xff]
  %v462 = vld [vmem:[%s459 + $0x10] sm:$0xff]
  %v463 = vld [vmem:[%s459 + $0x18] sm:$0xff]
  %v464 = vld [vmem:[%s459 + $0x20] sm:$0xff]
  %v465 = vld [vmem:[%s459 + $0x28] sm:$0xff]
  %v466 = vld [vmem:[%s459 + $0x30] sm:$0xff]
  %v467 = vld [vmem:[%s459 + $0x38] sm:$0xff]
  %v468 = vld [vmem:[%s459 + $0x40] sm:$0xff]
  %v469 = vld [vmem:[%s459 + $0x48] sm:$0xff]
  %v470 = vld [vmem:[%s459 + $0x50] sm:$0xff]
  %v471 = vld [vmem:[%s459 + $0x58] sm:$0xff]
  %v472 = vld [vmem:[%s459 + $0x60] sm:$0xff]
  %v473 = vld [vmem:[%s459 + $0x68] sm:$0xff]
  %v474 = vld [vmem:[%s459 + $0x70] sm:$0xff]
  %v475 = vld [vmem:[%s459 + $0x78] sm:$0xff]
  %v476 = vld [vmem:[%s459 + $0x80] sm:$0xff]
  %v477 = vld [vmem:[%s459 + $0x88] sm:$0xff]
  %v478 = vld [vmem:[%s459 + $0x90] sm:$0xff]
  %v479 = vld [vmem:[%s459 + $0x98] sm:$0xff]
  %v480 = vld [vmem:[%s459 + $0xa0] sm:$0xff]
  %v481 = vld [vmem:[%s459 + $0xa8] sm:$0xff]
  %v482 = vld [vmem:[%s459 + $0xb0] sm:$0xff]
  %v483 = vld [vmem:[%s459 + $0xb8] sm:$0xff]
  %v484 = vld [vmem:[%s459 + $0xc0] sm:$0xff]
  %v485 = vld [vmem:[%s459 + $0xc8] sm:$0xff]
  %v486 = vld [vmem:[%s459 + $0xd0] sm:$0xff]
  %v487 = vld [vmem:[%s459 + $0xd8] sm:$0xff]
  %v488 = vld [vmem:[%s459 + $0xe0] sm:$0xff]
  %v489 = vld [vmem:[%s459 + $0xe8] sm:$0xff]
  %v490 = vld [vmem:[%s459 + $0xf0] sm:$0xff]
  %v491 = vld [vmem:[%s459 + $0xf8] sm:$0xff]
  %v492 = vld [vmem:[%s459 + $0x100] sm:$0xff]
  %v493 = vld [vmem:[%s459 + $0x108] sm:$0xff]
  %v494 = vld [vmem:[%s459 + $0x110] sm:$0xff]
  %v495 = vld [vmem:[%s459 + $0x118] sm:$0xff]
  %v496 = vld [vmem:[%s459 + $0x120] sm:$0xff]
  %v497 = vld [vmem:[%s459 + $0x128] sm:$0xff]
  %v498 = vld [vmem:[%s459 + $0x130] sm:$0xff]
  %v499 = vld [vmem:[%s459 + $0x138] sm:$0xff]
  %v500 = vld [vmem:[%s459 + $0x140] sm:$0xff]
  %v501 = vld [vmem:[%s459 + $0x148] sm:$0xff]
  %v502 = vld [vmem:[%s459 + $0x150] sm:$0xff]
  %v503 = vld [vmem:[%s459 + $0x158] sm:$0xff]
  %v504 = vld [vmem:[%s459 + $0x160] sm:$0xff]
  %v505 = vld [vmem:[%s459 + $0x168] sm:$0xff]
  %v506 = vld [vmem:[%s459 + $0x170] sm:$0xff]
  %v507 = vld [vmem:[%s459 + $0x178] sm:$0xff]
  %v508 = vld [vmem:[%s459 + $0x180] sm:$0xff]
  %v509 = vld [vmem:[%s459 + $0x188] sm:$0xff]
  %v510 = vld [vmem:[%s459 + $0x190] sm:$0xff]
  %v511 = vld [vmem:[%s459 + $0x198] sm:$0xff]
  %v512 = vld [vmem:[%s459 + $0x1a0] sm:$0xff]
  %v513 = vld [vmem:[%s459 + $0x1a8] sm:$0xff]
  %v514 = vld [vmem:[%s459 + $0x1b0] sm:$0xff]
  %v515 = vld [vmem:[%s459 + $0x1b8] sm:$0xff]
  %v516 = vld [vmem:[%s459 + $0x1c0] sm:$0xff]
  %v517 = vld [vmem:[%s459 + $0x1c8] sm:$0xff]
  %v518 = vld [vmem:[%s459 + $0x1d0] sm:$0xff]
  %v519 = vld [vmem:[%s459 + $0x1d8] sm:$0xff]
  %v520 = vld [vmem:[%s459 + $0x1e0] sm:$0xff]
  %v521 = vld [vmem:[%s459 + $0x1e8] sm:$0xff]
  %v522 = vld [vmem:[%s459 + $0x1f0] sm:$0xff]
  %v523 = vld [vmem:[%s459 + $0x1f8] sm:$0xff]
  %v524 = vmax.f32 %v395, %v460
  %v525 = vmax.f32 %v396, %v461
  %v526 = vmax.f32 %v397, %v462
  %v527 = vmax.f32 %v398, %v463
  %v528 = vmax.f32 %v399, %v464
  %v529 = vmax.f32 %v400, %v465
  %v530 = vmax.f32 %v401, %v466
  %v531 = vmax.f32 %v402, %v467
  %v532 = vmax.f32 %v403, %v468
  %v533 = vmax.f32 %v404, %v469
  %v534 = vmax.f32 %v405, %v470
  %v535 = vmax.f32 %v406, %v471
  %v536 = vmax.f32 %v407, %v472
  %v537 = vmax.f32 %v408, %v473
  %v538 = vmax.f32 %v409, %v474
  %v539 = vmax.f32 %v410, %v475
  %v540 = vmax.f32 %v411, %v476
  %v541 = vmax.f32 %v412, %v477
  %v542 = vmax.f32 %v413, %v478
  %v543 = vmax.f32 %v414, %v479
  %v544 = vmax.f32 %v415, %v480
  %v545 = vmax.f32 %v416, %v481
  %v546 = vmax.f32 %v417, %v482
  %v547 = vmax.f32 %v418, %v483
  %v548 = vmax.f32 %v419, %v484
  %v549 = vmax.f32 %v420, %v485
  %v550 = vmax.f32 %v421, %v486
  %v551 = vmax.f32 %v422, %v487
  %v552 = vmax.f32 %v423, %v488
  %v553 = vmax.f32 %v424, %v489
  %v554 = vmax.f32 %v425, %v490
  %v555 = vmax.f32 %v426, %v491
  %v556 = vmax.f32 %v427, %v492
  %v557 = vmax.f32 %v428, %v493
  %v558 = vmax.f32 %v429, %v494
  %v559 = vmax.f32 %v430, %v495
  %v560 = vmax.f32 %v431, %v496
  %v561 = vmax.f32 %v432, %v497
  %v562 = vmax.f32 %v433, %v498
  %v563 = vmax.f32 %v434, %v499
  %v564 = vmax.f32 %v435, %v500
  %v565 = vmax.f32 %v436, %v501
  %v566 = vmax.f32 %v437, %v502
  %v567 = vmax.f32 %v438, %v503
  %v568 = vmax.f32 %v439, %v504
  %v569 = vmax.f32 %v440, %v505
  %v570 = vmax.f32 %v441, %v506
  %v571 = vmax.f32 %v442, %v507
  %v572 = vmax.f32 %v443, %v508
  %v573 = vmax.f32 %v444, %v509
  %v574 = vmax.f32 %v445, %v510
  %v575 = vmax.f32 %v446, %v511
  %v576 = vmax.f32 %v447, %v512
  %v577 = vmax.f32 %v448, %v513
  %v578 = vmax.f32 %v449, %v514
  %v579 = vmax.f32 %v450, %v515
  %v580 = vmax.f32 %v451, %v516
  %v581 = vmax.f32 %v452, %v517
  %v582 = vmax.f32 %v453, %v518
  %v583 = vmax.f32 %v454, %v519
  %v584 = vmax.f32 %v455, %v520
  %v585 = vmax.f32 %v456, %v521
  %v586 = vmax.f32 %v457, %v522
  %v587 = vmax.f32 %v458, %v523
  %s588 = scalar_lea.vmem %s0, 2560
  %v589 = vld [vmem:[%s588] sm:$0xff]
  %v590 = vld [vmem:[%s588 + $0x8] sm:$0xff]
  %v591 = vld [vmem:[%s588 + $0x10] sm:$0xff]
  %v592 = vld [vmem:[%s588 + $0x18] sm:$0xff]
  %v593 = vld [vmem:[%s588 + $0x20] sm:$0xff]
  %v594 = vld [vmem:[%s588 + $0x28] sm:$0xff]
  %v595 = vld [vmem:[%s588 + $0x30] sm:$0xff]
  %v596 = vld [vmem:[%s588 + $0x38] sm:$0xff]
  %v597 = vld [vmem:[%s588 + $0x40] sm:$0xff]
  %v598 = vld [vmem:[%s588 + $0x48] sm:$0xff]
  %v599 = vld [vmem:[%s588 + $0x50] sm:$0xff]
  %v600 = vld [vmem:[%s588 + $0x58] sm:$0xff]
  %v601 = vld [vmem:[%s588 + $0x60] sm:$0xff]
  %v602 = vld [vmem:[%s588 + $0x68] sm:$0xff]
  %v603 = vld [vmem:[%s588 + $0x70] sm:$0xff]
  %v604 = vld [vmem:[%s588 + $0x78] sm:$0xff]
  %v605 = vld [vmem:[%s588 + $0x80] sm:$0xff]
  %v606 = vld [vmem:[%s588 + $0x88] sm:$0xff]
  %v607 = vld [vmem:[%s588 + $0x90] sm:$0xff]
  %v608 = vld [vmem:[%s588 + $0x98] sm:$0xff]
  %v609 = vld [vmem:[%s588 + $0xa0] sm:$0xff]
  %v610 = vld [vmem:[%s588 + $0xa8] sm:$0xff]
  %v611 = vld [vmem:[%s588 + $0xb0] sm:$0xff]
  %v612 = vld [vmem:[%s588 + $0xb8] sm:$0xff]
  %v613 = vld [vmem:[%s588 + $0xc0] sm:$0xff]
  %v614 = vld [vmem:[%s588 + $0xc8] sm:$0xff]
  %v615 = vld [vmem:[%s588 + $0xd0] sm:$0xff]
  %v616 = vld [vmem:[%s588 + $0xd8] sm:$0xff]
  %v617 = vld [vmem:[%s588 + $0xe0] sm:$0xff]
  %v618 = vld [vmem:[%s588 + $0xe8] sm:$0xff]
  %v619 = vld [vmem:[%s588 + $0xf0] sm:$0xff]
  %v620 = vld [vmem:[%s588 + $0xf8] sm:$0xff]
  %v621 = vld [vmem:[%s588 + $0x100] sm:$0xff]
  %v622 = vld [vmem:[%s588 + $0x108] sm:$0xff]
  %v623 = vld [vmem:[%s588 + $0x110] sm:$0xff]
  %v624 = vld [vmem:[%s588 + $0x118] sm:$0xff]
  %v625 = vld [vmem:[%s588 + $0x120] sm:$0xff]
  %v626 = vld [vmem:[%s588 + $0x128] sm:$0xff]
  %v627 = vld [vmem:[%s588 + $0x130] sm:$0xff]
  %v628 = vld [vmem:[%s588 + $0x138] sm:$0xff]
  %v629 = vld [vmem:[%s588 + $0x140] sm:$0xff]
  %v630 = vld [vmem:[%s588 + $0x148] sm:$0xff]
  %v631 = vld [vmem:[%s588 + $0x150] sm:$0xff]
  %v632 = vld [vmem:[%s588 + $0x158] sm:$0xff]
  %v633 = vld [vmem:[%s588 + $0x160] sm:$0xff]
  %v634 = vld [vmem:[%s588 + $0x168] sm:$0xff]
  %v635 = vld [vmem:[%s588 + $0x170] sm:$0xff]
  %v636 = vld [vmem:[%s588 + $0x178] sm:$0xff]
  %v637 = vld [vmem:[%s588 + $0x180] sm:$0xff]
  %v638 = vld [vmem:[%s588 + $0x188] sm:$0xff]
  %v639 = vld [vmem:[%s588 + $0x190] sm:$0xff]
  %v640 = vld [vmem:[%s588 + $0x198] sm:$0xff]
  %v641 = vld [vmem:[%s588 + $0x1a0] sm:$0xff]
  %v642 = vld [vmem:[%s588 + $0x1a8] sm:$0xff]
  %v643 = vld [vmem:[%s588 + $0x1b0] sm:$0xff]
  %v644 = vld [vmem:[%s588 + $0x1b8] sm:$0xff]
  %v645 = vld [vmem:[%s588 + $0x1c0] sm:$0xff]
  %v646 = vld [vmem:[%s588 + $0x1c8] sm:$0xff]
  %v647 = vld [vmem:[%s588 + $0x1d0] sm:$0xff]
  %v648 = vld [vmem:[%s588 + $0x1d8] sm:$0xff]
  %v649 = vld [vmem:[%s588 + $0x1e0] sm:$0xff]
  %v650 = vld [vmem:[%s588 + $0x1e8] sm:$0xff]
  %v651 = vld [vmem:[%s588 + $0x1f0] sm:$0xff]
  %v652 = vld [vmem:[%s588 + $0x1f8] sm:$0xff]
  %v653 = vmax.f32 %v524, %v589
  %v654 = vmax.f32 %v525, %v590
  %v655 = vmax.f32 %v526, %v591
  %v656 = vmax.f32 %v527, %v592
  %v657 = vmax.f32 %v528, %v593
  %v658 = vmax.f32 %v529, %v594
  %v659 = vmax.f32 %v530, %v595
  %v660 = vmax.f32 %v531, %v596
  %v661 = vmax.f32 %v532, %v597
  %v662 = vmax.f32 %v533, %v598
  %v663 = vmax.f32 %v534, %v599
  %v664 = vmax.f32 %v535, %v600
  %v665 = vmax.f32 %v536, %v601
  %v666 = vmax.f32 %v537, %v602
  %v667 = vmax.f32 %v538, %v603
  %v668 = vmax.f32 %v539, %v604
  %v669 = vmax.f32 %v540, %v605
  %v670 = vmax.f32 %v541, %v606
  %v671 = vmax.f32 %v542, %v607
  %v672 = vmax.f32 %v543, %v608
  %v673 = vmax.f32 %v544, %v609
  %v674 = vmax.f32 %v545, %v610
  %v675 = vmax.f32 %v546, %v611
  %v676 = vmax.f32 %v547, %v612
  %v677 = vmax.f32 %v548, %v613
  %v678 = vmax.f32 %v549, %v614
  %v679 = vmax.f32 %v550, %v615
  %v680 = vmax.f32 %v551, %v616
  %v681 = vmax.f32 %v552, %v617
  %v682 = vmax.f32 %v553, %v618
  %v683 = vmax.f32 %v554, %v619
  %v684 = vmax.f32 %v555, %v620
  %v685 = vmax.f32 %v556, %v621
  %v686 = vmax.f32 %v557, %v622
  %v687 = vmax.f32 %v558, %v623
  %v688 = vmax.f32 %v559, %v624
  %v689 = vmax.f32 %v560, %v625
  %v690 = vmax.f32 %v561, %v626
  %v691 = vmax.f32 %v562, %v627
  %v692 = vmax.f32 %v563, %v628
  %v693 = vmax.f32 %v564, %v629
  %v694 = vmax.f32 %v565, %v630
  %v695 = vmax.f32 %v566, %v631
  %v696 = vmax.f32 %v567, %v632
  %v697 = vmax.f32 %v568, %v633
  %v698 = vmax.f32 %v569, %v634
  %v699 = vmax.f32 %v570, %v635
  %v700 = vmax.f32 %v571, %v636
  %v701 = vmax.f32 %v572, %v637
  %v702 = vmax.f32 %v573, %v638
  %v703 = vmax.f32 %v574, %v639
  %v704 = vmax.f32 %v575, %v640
  %v705 = vmax.f32 %v576, %v641
  %v706 = vmax.f32 %v577, %v642
  %v707 = vmax.f32 %v578, %v643
  %v708 = vmax.f32 %v579, %v644
  %v709 = vmax.f32 %v580, %v645
  %v710 = vmax.f32 %v581, %v646
  %v711 = vmax.f32 %v582, %v647
  %v712 = vmax.f32 %v583, %v648
  %v713 = vmax.f32 %v584, %v649
  %v714 = vmax.f32 %v585, %v650
  %v715 = vmax.f32 %v586, %v651
  %v716 = vmax.f32 %v587, %v652
  %s717 = scalar_lea.vmem %s0, 3072
  %v718 = vld [vmem:[%s717] sm:$0xff]
  %v719 = vld [vmem:[%s717 + $0x8] sm:$0xff]
  %v720 = vld [vmem:[%s717 + $0x10] sm:$0xff]
  %v721 = vld [vmem:[%s717 + $0x18] sm:$0xff]
  %v722 = vld [vmem:[%s717 + $0x20] sm:$0xff]
  %v723 = vld [vmem:[%s717 + $0x28] sm:$0xff]
  %v724 = vld [vmem:[%s717 + $0x30] sm:$0xff]
  %v725 = vld [vmem:[%s717 + $0x38] sm:$0xff]
  %v726 = vld [vmem:[%s717 + $0x40] sm:$0xff]
  %v727 = vld [vmem:[%s717 + $0x48] sm:$0xff]
  %v728 = vld [vmem:[%s717 + $0x50] sm:$0xff]
  %v729 = vld [vmem:[%s717 + $0x58] sm:$0xff]
  %v730 = vld [vmem:[%s717 + $0x60] sm:$0xff]
  %v731 = vld [vmem:[%s717 + $0x68] sm:$0xff]
  %v732 = vld [vmem:[%s717 + $0x70] sm:$0xff]
  %v733 = vld [vmem:[%s717 + $0x78] sm:$0xff]
  %v734 = vld [vmem:[%s717 + $0x80] sm:$0xff]
  %v735 = vld [vmem:[%s717 + $0x88] sm:$0xff]
  %v736 = vld [vmem:[%s717 + $0x90] sm:$0xff]
  %v737 = vld [vmem:[%s717 + $0x98] sm:$0xff]
  %v738 = vld [vmem:[%s717 + $0xa0] sm:$0xff]
  %v739 = vld [vmem:[%s717 + $0xa8] sm:$0xff]
  %v740 = vld [vmem:[%s717 + $0xb0] sm:$0xff]
  %v741 = vld [vmem:[%s717 + $0xb8] sm:$0xff]
  %v742 = vld [vmem:[%s717 + $0xc0] sm:$0xff]
  %v743 = vld [vmem:[%s717 + $0xc8] sm:$0xff]
  %v744 = vld [vmem:[%s717 + $0xd0] sm:$0xff]
  %v745 = vld [vmem:[%s717 + $0xd8] sm:$0xff]
  %v746 = vld [vmem:[%s717 + $0xe0] sm:$0xff]
  %v747 = vld [vmem:[%s717 + $0xe8] sm:$0xff]
  %v748 = vld [vmem:[%s717 + $0xf0] sm:$0xff]
  %v749 = vld [vmem:[%s717 + $0xf8] sm:$0xff]
  %v750 = vld [vmem:[%s717 + $0x100] sm:$0xff]
  %v751 = vld [vmem:[%s717 + $0x108] sm:$0xff]
  %v752 = vld [vmem:[%s717 + $0x110] sm:$0xff]
  %v753 = vld [vmem:[%s717 + $0x118] sm:$0xff]
  %v754 = vld [vmem:[%s717 + $0x120] sm:$0xff]
  %v755 = vld [vmem:[%s717 + $0x128] sm:$0xff]
  %v756 = vld [vmem:[%s717 + $0x130] sm:$0xff]
  %v757 = vld [vmem:[%s717 + $0x138] sm:$0xff]
  %v758 = vld [vmem:[%s717 + $0x140] sm:$0xff]
  %v759 = vld [vmem:[%s717 + $0x148] sm:$0xff]
  %v760 = vld [vmem:[%s717 + $0x150] sm:$0xff]
  %v761 = vld [vmem:[%s717 + $0x158] sm:$0xff]
  %v762 = vld [vmem:[%s717 + $0x160] sm:$0xff]
  %v763 = vld [vmem:[%s717 + $0x168] sm:$0xff]
  %v764 = vld [vmem:[%s717 + $0x170] sm:$0xff]
  %v765 = vld [vmem:[%s717 + $0x178] sm:$0xff]
  %v766 = vld [vmem:[%s717 + $0x180] sm:$0xff]
  %v767 = vld [vmem:[%s717 + $0x188] sm:$0xff]
  %v768 = vld [vmem:[%s717 + $0x190] sm:$0xff]
  %v769 = vld [vmem:[%s717 + $0x198] sm:$0xff]
  %v770 = vld [vmem:[%s717 + $0x1a0] sm:$0xff]
  %v771 = vld [vmem:[%s717 + $0x1a8] sm:$0xff]
  %v772 = vld [vmem:[%s717 + $0x1b0] sm:$0xff]
  %v773 = vld [vmem:[%s717 + $0x1b8] sm:$0xff]
  %v774 = vld [vmem:[%s717 + $0x1c0] sm:$0xff]
  %v775 = vld [vmem:[%s717 + $0x1c8] sm:$0xff]
  %v776 = vld [vmem:[%s717 + $0x1d0] sm:$0xff]
  %v777 = vld [vmem:[%s717 + $0x1d8] sm:$0xff]
  %v778 = vld [vmem:[%s717 + $0x1e0] sm:$0xff]
  %v779 = vld [vmem:[%s717 + $0x1e8] sm:$0xff]
  %v780 = vld [vmem:[%s717 + $0x1f0] sm:$0xff]
  %v781 = vld [vmem:[%s717 + $0x1f8] sm:$0xff]
  %v782 = vmax.f32 %v653, %v718
  %v783 = vmax.f32 %v654, %v719
  %v784 = vmax.f32 %v655, %v720
  %v785 = vmax.f32 %v656, %v721
  %v786 = vmax.f32 %v657, %v722
  %v787 = vmax.f32 %v658, %v723
  %v788 = vmax.f32 %v659, %v724
  %v789 = vmax.f32 %v660, %v725
  %v790 = vmax.f32 %v661, %v726
  %v791 = vmax.f32 %v662, %v727
  %v792 = vmax.f32 %v663, %v728
  %v793 = vmax.f32 %v664, %v729
  %v794 = vmax.f32 %v665, %v730
  %v795 = vmax.f32 %v666, %v731
  %v796 = vmax.f32 %v667, %v732
  %v797 = vmax.f32 %v668, %v733
  %v798 = vmax.f32 %v669, %v734
  %v799 = vmax.f32 %v670, %v735
  %v800 = vmax.f32 %v671, %v736
  %v801 = vmax.f32 %v672, %v737
  %v802 = vmax.f32 %v673, %v738
  %v803 = vmax.f32 %v674, %v739
  %v804 = vmax.f32 %v675, %v740
  %v805 = vmax.f32 %v676, %v741
  %v806 = vmax.f32 %v677, %v742
  %v807 = vmax.f32 %v678, %v743
  %v808 = vmax.f32 %v679, %v744
  %v809 = vmax.f32 %v680, %v745
  %v810 = vmax.f32 %v681, %v746
  %v811 = vmax.f32 %v682, %v747
  %v812 = vmax.f32 %v683, %v748
  %v813 = vmax.f32 %v684, %v749
  %v814 = vmax.f32 %v685, %v750
  %v815 = vmax.f32 %v686, %v751
  %v816 = vmax.f32 %v687, %v752
  %v817 = vmax.f32 %v688, %v753
  %v818 = vmax.f32 %v689, %v754
  %v819 = vmax.f32 %v690, %v755
  %v820 = vmax.f32 %v691, %v756
  %v821 = vmax.f32 %v692, %v757
  %v822 = vmax.f32 %v693, %v758
  %v823 = vmax.f32 %v694, %v759
  %v824 = vmax.f32 %v695, %v760
  %v825 = vmax.f32 %v696, %v761
  %v826 = vmax.f32 %v697, %v762
  %v827 = vmax.f32 %v698, %v763
  %v828 = vmax.f32 %v699, %v764
  %v829 = vmax.f32 %v700, %v765
  %v830 = vmax.f32 %v701, %v766
  %v831 = vmax.f32 %v702, %v767
  %v832 = vmax.f32 %v703, %v768
  %v833 = vmax.f32 %v704, %v769
  %v834 = vmax.f32 %v705, %v770
  %v835 = vmax.f32 %v706, %v771
  %v836 = vmax.f32 %v707, %v772
  %v837 = vmax.f32 %v708, %v773
  %v838 = vmax.f32 %v709, %v774
  %v839 = vmax.f32 %v710, %v775
  %v840 = vmax.f32 %v711, %v776
  %v841 = vmax.f32 %v712, %v777
  %v842 = vmax.f32 %v713, %v778
  %v843 = vmax.f32 %v714, %v779
  %v844 = vmax.f32 %v715, %v780
  %v845 = vmax.f32 %v716, %v781
  %s846 = scalar_lea.vmem %s0, 3584
  %v847 = vld [vmem:[%s846] sm:$0xff]
  %v848 = vld [vmem:[%s846 + $0x8] sm:$0xff]
  %v849 = vld [vmem:[%s846 + $0x10] sm:$0xff]
  %v850 = vld [vmem:[%s846 + $0x18] sm:$0xff]
  %v851 = vld [vmem:[%s846 + $0x20] sm:$0xff]
  %v852 = vld [vmem:[%s846 + $0x28] sm:$0xff]
  %v853 = vld [vmem:[%s846 + $0x30] sm:$0xff]
  %v854 = vld [vmem:[%s846 + $0x38] sm:$0xff]
  %v855 = vld [vmem:[%s846 + $0x40] sm:$0xff]
  %v856 = vld [vmem:[%s846 + $0x48] sm:$0xff]
  %v857 = vld [vmem:[%s846 + $0x50] sm:$0xff]
  %v858 = vld [vmem:[%s846 + $0x58] sm:$0xff]
  %v859 = vld [vmem:[%s846 + $0x60] sm:$0xff]
  %v860 = vld [vmem:[%s846 + $0x68] sm:$0xff]
  %v861 = vld [vmem:[%s846 + $0x70] sm:$0xff]
  %v862 = vld [vmem:[%s846 + $0x78] sm:$0xff]
  %v863 = vld [vmem:[%s846 + $0x80] sm:$0xff]
  %v864 = vld [vmem:[%s846 + $0x88] sm:$0xff]
  %v865 = vld [vmem:[%s846 + $0x90] sm:$0xff]
  %v866 = vld [vmem:[%s846 + $0x98] sm:$0xff]
  %v867 = vld [vmem:[%s846 + $0xa0] sm:$0xff]
  %v868 = vld [vmem:[%s846 + $0xa8] sm:$0xff]
  %v869 = vld [vmem:[%s846 + $0xb0] sm:$0xff]
  %v870 = vld [vmem:[%s846 + $0xb8] sm:$0xff]
  %v871 = vld [vmem:[%s846 + $0xc0] sm:$0xff]
  %v872 = vld [vmem:[%s846 + $0xc8] sm:$0xff]
  %v873 = vld [vmem:[%s846 + $0xd0] sm:$0xff]
  %v874 = vld [vmem:[%s846 + $0xd8] sm:$0xff]
  %v875 = vld [vmem:[%s846 + $0xe0] sm:$0xff]
  %v876 = vld [vmem:[%s846 + $0xe8] sm:$0xff]
  %v877 = vld [vmem:[%s846 + $0xf0] sm:$0xff]
  %v878 = vld [vmem:[%s846 + $0xf8] sm:$0xff]
  %v879 = vld [vmem:[%s846 + $0x100] sm:$0xff]
  %v880 = vld [vmem:[%s846 + $0x108] sm:$0xff]
  %v881 = vld [vmem:[%s846 + $0x110] sm:$0xff]
  %v882 = vld [vmem:[%s846 + $0x118] sm:$0xff]
  %v883 = vld [vmem:[%s846 + $0x120] sm:$0xff]
  %v884 = vld [vmem:[%s846 + $0x128] sm:$0xff]
  %v885 = vld [vmem:[%s846 + $0x130] sm:$0xff]
  %v886 = vld [vmem:[%s846 + $0x138] sm:$0xff]
  %v887 = vld [vmem:[%s846 + $0x140] sm:$0xff]
  %v888 = vld [vmem:[%s846 + $0x148] sm:$0xff]
  %v889 = vld [vmem:[%s846 + $0x150] sm:$0xff]
  %v890 = vld [vmem:[%s846 + $0x158] sm:$0xff]
  %v891 = vld [vmem:[%s846 + $0x160] sm:$0xff]
  %v892 = vld [vmem:[%s846 + $0x168] sm:$0xff]
  %v893 = vld [vmem:[%s846 + $0x170] sm:$0xff]
  %v894 = vld [vmem:[%s846 + $0x178] sm:$0xff]
  %v895 = vld [vmem:[%s846 + $0x180] sm:$0xff]
  %v896 = vld [vmem:[%s846 + $0x188] sm:$0xff]
  %v897 = vld [vmem:[%s846 + $0x190] sm:$0xff]
  %v898 = vld [vmem:[%s846 + $0x198] sm:$0xff]
  %v899 = vld [vmem:[%s846 + $0x1a0] sm:$0xff]
  %v900 = vld [vmem:[%s846 + $0x1a8] sm:$0xff]
  %v901 = vld [vmem:[%s846 + $0x1b0] sm:$0xff]
  %v902 = vld [vmem:[%s846 + $0x1b8] sm:$0xff]
  %v903 = vld [vmem:[%s846 + $0x1c0] sm:$0xff]
  %v904 = vld [vmem:[%s846 + $0x1c8] sm:$0xff]
  %v905 = vld [vmem:[%s846 + $0x1d0] sm:$0xff]
  %v906 = vld [vmem:[%s846 + $0x1d8] sm:$0xff]
  %v907 = vld [vmem:[%s846 + $0x1e0] sm:$0xff]
  %v908 = vld [vmem:[%s846 + $0x1e8] sm:$0xff]
  %v909 = vld [vmem:[%s846 + $0x1f0] sm:$0xff]
  %v910 = vld [vmem:[%s846 + $0x1f8] sm:$0xff]
  %v911 = vmax.f32 %v782, %v847
  %v912 = vmax.f32 %v783, %v848
  %v913 = vmax.f32 %v784, %v849
  %v914 = vmax.f32 %v785, %v850
  %v915 = vmax.f32 %v786, %v851
  %v916 = vmax.f32 %v787, %v852
  %v917 = vmax.f32 %v788, %v853
  %v918 = vmax.f32 %v789, %v854
  %v919 = vmax.f32 %v790, %v855
  %v920 = vmax.f32 %v791, %v856
  %v921 = vmax.f32 %v792, %v857
  %v922 = vmax.f32 %v793, %v858
  %v923 = vmax.f32 %v794, %v859
  %v924 = vmax.f32 %v795, %v860
  %v925 = vmax.f32 %v796, %v861
  %v926 = vmax.f32 %v797, %v862
  %v927 = vmax.f32 %v798, %v863
  %v928 = vmax.f32 %v799, %v864
  %v929 = vmax.f32 %v800, %v865
  %v930 = vmax.f32 %v801, %v866
  %v931 = vmax.f32 %v802, %v867
  %v932 = vmax.f32 %v803, %v868
  %v933 = vmax.f32 %v804, %v869
  %v934 = vmax.f32 %v805, %v870
  %v935 = vmax.f32 %v806, %v871
  %v936 = vmax.f32 %v807, %v872
  %v937 = vmax.f32 %v808, %v873
  %v938 = vmax.f32 %v809, %v874
  %v939 = vmax.f32 %v810, %v875
  %v940 = vmax.f32 %v811, %v876
  %v941 = vmax.f32 %v812, %v877
  %v942 = vmax.f32 %v813, %v878
  %v943 = vmax.f32 %v814, %v879
  %v944 = vmax.f32 %v815, %v880
  %v945 = vmax.f32 %v816, %v881
  %v946 = vmax.f32 %v817, %v882
  %v947 = vmax.f32 %v818, %v883
  %v948 = vmax.f32 %v819, %v884
  %v949 = vmax.f32 %v820, %v885
  %v950 = vmax.f32 %v821, %v886
  %v951 = vmax.f32 %v822, %v887
  %v952 = vmax.f32 %v823, %v888
  %v953 = vmax.f32 %v824, %v889
  %v954 = vmax.f32 %v825, %v890
  %v955 = vmax.f32 %v826, %v891
  %v956 = vmax.f32 %v827, %v892
  %v957 = vmax.f32 %v828, %v893
  %v958 = vmax.f32 %v829, %v894
  %v959 = vmax.f32 %v830, %v895
  %v960 = vmax.f32 %v831, %v896
  %v961 = vmax.f32 %v832, %v897
  %v962 = vmax.f32 %v833, %v898
  %v963 = vmax.f32 %v834, %v899
  %v964 = vmax.f32 %v835, %v900
  %v965 = vmax.f32 %v836, %v901
  %v966 = vmax.f32 %v837, %v902
  %v967 = vmax.f32 %v838, %v903
  %v968 = vmax.f32 %v839, %v904
  %v969 = vmax.f32 %v840, %v905
  %v970 = vmax.f32 %v841, %v906
  %v971 = vmax.f32 %v842, %v907
  %v972 = vmax.f32 %v843, %v908
  %v973 = vmax.f32 %v844, %v909
  %v974 = vmax.f32 %v845, %v910
  %s975 = scalar_lea.vmem %s0, 4096
  %v976 = vld [vmem:[%s975] sm:$0xff]
  %v977 = vld [vmem:[%s975 + $0x8] sm:$0xff]
  %v978 = vld [vmem:[%s975 + $0x10] sm:$0xff]
  %v979 = vld [vmem:[%s975 + $0x18] sm:$0xff]
  %v980 = vld [vmem:[%s975 + $0x20] sm:$0xff]
  %v981 = vld [vmem:[%s975 + $0x28] sm:$0xff]
  %v982 = vld [vmem:[%s975 + $0x30] sm:$0xff]
  %v983 = vld [vmem:[%s975 + $0x38] sm:$0xff]
  %v984 = vld [vmem:[%s975 + $0x40] sm:$0xff]
  %v985 = vld [vmem:[%s975 + $0x48] sm:$0xff]
  %v986 = vld [vmem:[%s975 + $0x50] sm:$0xff]
  %v987 = vld [vmem:[%s975 + $0x58] sm:$0xff]
  %v988 = vld [vmem:[%s975 + $0x60] sm:$0xff]
  %v989 = vld [vmem:[%s975 + $0x68] sm:$0xff]
  %v990 = vld [vmem:[%s975 + $0x70] sm:$0xff]
  %v991 = vld [vmem:[%s975 + $0x78] sm:$0xff]
  %v992 = vld [vmem:[%s975 + $0x80] sm:$0xff]
  %v993 = vld [vmem:[%s975 + $0x88] sm:$0xff]
  %v994 = vld [vmem:[%s975 + $0x90] sm:$0xff]
  %v995 = vld [vmem:[%s975 + $0x98] sm:$0xff]
  %v996 = vld [vmem:[%s975 + $0xa0] sm:$0xff]
  %v997 = vld [vmem:[%s975 + $0xa8] sm:$0xff]
  %v998 = vld [vmem:[%s975 + $0xb0] sm:$0xff]
  %v999 = vld [vmem:[%s975 + $0xb8] sm:$0xff]
  %v1000 = vld [vmem:[%s975 + $0xc0] sm:$0xff]
  %v1001 = vld [vmem:[%s975 + $0xc8] sm:$0xff]
  %v1002 = vld [vmem:[%s975 + $0xd0] sm:$0xff]
  %v1003 = vld [vmem:[%s975 + $0xd8] sm:$0xff]
  %v1004 = vld [vmem:[%s975 + $0xe0] sm:$0xff]
  %v1005 = vld [vmem:[%s975 + $0xe8] sm:$0xff]
  %v1006 = vld [vmem:[%s975 + $0xf0] sm:$0xff]
  %v1007 = vld [vmem:[%s975 + $0xf8] sm:$0xff]
  %v1008 = vld [vmem:[%s975 + $0x100] sm:$0xff]
  %v1009 = vld [vmem:[%s975 + $0x108] sm:$0xff]
  %v1010 = vld [vmem:[%s975 + $0x110] sm:$0xff]
  %v1011 = vld [vmem:[%s975 + $0x118] sm:$0xff]
  %v1012 = vld [vmem:[%s975 + $0x120] sm:$0xff]
  %v1013 = vld [vmem:[%s975 + $0x128] sm:$0xff]
  %v1014 = vld [vmem:[%s975 + $0x130] sm:$0xff]
  %v1015 = vld [vmem:[%s975 + $0x138] sm:$0xff]
  %v1016 = vld [vmem:[%s975 + $0x140] sm:$0xff]
  %v1017 = vld [vmem:[%s975 + $0x148] sm:$0xff]
  %v1018 = vld [vmem:[%s975 + $0x150] sm:$0xff]
  %v1019 = vld [vmem:[%s975 + $0x158] sm:$0xff]
  %v1020 = vld [vmem:[%s975 + $0x160] sm:$0xff]
  %v1021 = vld [vmem:[%s975 + $0x168] sm:$0xff]
  %v1022 = vld [vmem:[%s975 + $0x170] sm:$0xff]
  %v1023 = vld [vmem:[%s975 + $0x178] sm:$0xff]
  %v1024 = vld [vmem:[%s975 + $0x180] sm:$0xff]
  %v1025 = vld [vmem:[%s975 + $0x188] sm:$0xff]
  %v1026 = vld [vmem:[%s975 + $0x190] sm:$0xff]
  %v1027 = vld [vmem:[%s975 + $0x198] sm:$0xff]
  %v1028 = vld [vmem:[%s975 + $0x1a0] sm:$0xff]
  %v1029 = vld [vmem:[%s975 + $0x1a8] sm:$0xff]
  %v1030 = vld [vmem:[%s975 + $0x1b0] sm:$0xff]
  %v1031 = vld [vmem:[%s975 + $0x1b8] sm:$0xff]
  %v1032 = vld [vmem:[%s975 + $0x1c0] sm:$0xff]
  %v1033 = vld [vmem:[%s975 + $0x1c8] sm:$0xff]
  %v1034 = vld [vmem:[%s975 + $0x1d0] sm:$0xff]
  %v1035 = vld [vmem:[%s975 + $0x1d8] sm:$0xff]
  %v1036 = vld [vmem:[%s975 + $0x1e0] sm:$0xff]
  %v1037 = vld [vmem:[%s975 + $0x1e8] sm:$0xff]
  %v1038 = vld [vmem:[%s975 + $0x1f0] sm:$0xff]
  %v1039 = vld [vmem:[%s975 + $0x1f8] sm:$0xff]
  %v1040 = vmax.f32 %v911, %v976
  %v1041 = vmax.f32 %v912, %v977
  %v1042 = vmax.f32 %v913, %v978
  %v1043 = vmax.f32 %v914, %v979
  %v1044 = vmax.f32 %v915, %v980
  %v1045 = vmax.f32 %v916, %v981
  %v1046 = vmax.f32 %v917, %v982
  %v1047 = vmax.f32 %v918, %v983
  %v1048 = vmax.f32 %v919, %v984
  %v1049 = vmax.f32 %v920, %v985
  %v1050 = vmax.f32 %v921, %v986
  %v1051 = vmax.f32 %v922, %v987
  %v1052 = vmax.f32 %v923, %v988
  %v1053 = vmax.f32 %v924, %v989
  %v1054 = vmax.f32 %v925, %v990
  %v1055 = vmax.f32 %v926, %v991
  %v1056 = vmax.f32 %v927, %v992
  %v1057 = vmax.f32 %v928, %v993
  %v1058 = vmax.f32 %v929, %v994
  %v1059 = vmax.f32 %v930, %v995
  %v1060 = vmax.f32 %v931, %v996
  %v1061 = vmax.f32 %v932, %v997
  %v1062 = vmax.f32 %v933, %v998
  %v1063 = vmax.f32 %v934, %v999
  %v1064 = vmax.f32 %v935, %v1000
  %v1065 = vmax.f32 %v936, %v1001
  %v1066 = vmax.f32 %v937, %v1002
  %v1067 = vmax.f32 %v938, %v1003
  %v1068 = vmax.f32 %v939, %v1004
  %v1069 = vmax.f32 %v940, %v1005
  %v1070 = vmax.f32 %v941, %v1006
  %v1071 = vmax.f32 %v942, %v1007
  %v1072 = vmax.f32 %v943, %v1008
  %v1073 = vmax.f32 %v944, %v1009
  %v1074 = vmax.f32 %v945, %v1010
  %v1075 = vmax.f32 %v946, %v1011
  %v1076 = vmax.f32 %v947, %v1012
  %v1077 = vmax.f32 %v948, %v1013
  %v1078 = vmax.f32 %v949, %v1014
  %v1079 = vmax.f32 %v950, %v1015
  %v1080 = vmax.f32 %v951, %v1016
  %v1081 = vmax.f32 %v952, %v1017
  %v1082 = vmax.f32 %v953, %v1018
  %v1083 = vmax.f32 %v954, %v1019
  %v1084 = vmax.f32 %v955, %v1020
  %v1085 = vmax.f32 %v956, %v1021
  %v1086 = vmax.f32 %v957, %v1022
  %v1087 = vmax.f32 %v958, %v1023
  %v1088 = vmax.f32 %v959, %v1024
  %v1089 = vmax.f32 %v960, %v1025
  %v1090 = vmax.f32 %v961, %v1026
  %v1091 = vmax.f32 %v962, %v1027
  %v1092 = vmax.f32 %v963, %v1028
  %v1093 = vmax.f32 %v964, %v1029
  %v1094 = vmax.f32 %v965, %v1030
  %v1095 = vmax.f32 %v966, %v1031
  %v1096 = vmax.f32 %v967, %v1032
  %v1097 = vmax.f32 %v968, %v1033
  %v1098 = vmax.f32 %v969, %v1034
  %v1099 = vmax.f32 %v970, %v1035
  %v1100 = vmax.f32 %v971, %v1036
  %v1101 = vmax.f32 %v972, %v1037
  %v1102 = vmax.f32 %v973, %v1038
  %v1103 = vmax.f32 %v974, %v1039
  %vm1104 = vcmask 64512
  %1105 = vst.msk [vmem:[%s1] sm:$0xff] %vm1104, %v1040
  %1106 = vst.msk [vmem:[%s1 + $0x8] sm:$0xff] %vm1104, %v1041
  %1107 = vst.msk [vmem:[%s1 + $0x10] sm:$0xff] %vm1104, %v1042
  %1108 = vst.msk [vmem:[%s1 + $0x18] sm:$0xff] %vm1104, %v1043
  %1109 = vst.msk [vmem:[%s1 + $0x20] sm:$0xff] %vm1104, %v1044
  %1110 = vst.msk [vmem:[%s1 + $0x28] sm:$0xff] %vm1104, %v1045
  %1111 = vst.msk [vmem:[%s1 + $0x30] sm:$0xff] %vm1104, %v1046
  %1112 = vst.msk [vmem:[%s1 + $0x38] sm:$0xff] %vm1104, %v1047
  %1113 = vst.msk [vmem:[%s1 + $0x40] sm:$0xff] %vm1104, %v1048
  %1114 = vst.msk [vmem:[%s1 + $0x48] sm:$0xff] %vm1104, %v1049
  %1115 = vst.msk [vmem:[%s1 + $0x50] sm:$0xff] %vm1104, %v1050
  %1116 = vst.msk [vmem:[%s1 + $0x58] sm:$0xff] %vm1104, %v1051
  %1117 = vst.msk [vmem:[%s1 + $0x60] sm:$0xff] %vm1104, %v1052
  %1118 = vst.msk [vmem:[%s1 + $0x68] sm:$0xff] %vm1104, %v1053
  %1119 = vst.msk [vmem:[%s1 + $0x70] sm:$0xff] %vm1104, %v1054
  %1120 = vst.msk [vmem:[%s1 + $0x78] sm:$0xff] %vm1104, %v1055
  %1121 = vst.msk [vmem:[%s1 + $0x80] sm:$0xff] %vm1104, %v1056
  %1122 = vst.msk [vmem:[%s1 + $0x88] sm:$0xff] %vm1104, %v1057
  %1123 = vst.msk [vmem:[%s1 + $0x90] sm:$0xff] %vm1104, %v1058
  %1124 = vst.msk [vmem:[%s1 + $0x98] sm:$0xff] %vm1104, %v1059
  %1125 = vst.msk [vmem:[%s1 + $0xa0] sm:$0xff] %vm1104, %v1060
  %1126 = vst.msk [vmem:[%s1 + $0xa8] sm:$0xff] %vm1104, %v1061
  %1127 = vst.msk [vmem:[%s1 + $0xb0] sm:$0xff] %vm1104, %v1062
  %1128 = vst.msk [vmem:[%s1 + $0xb8] sm:$0xff] %vm1104, %v1063
  %1129 = vst.msk [vmem:[%s1 + $0xc0] sm:$0xff] %vm1104, %v1064
  %1130 = vst.msk [vmem:[%s1 + $0xc8] sm:$0xff] %vm1104, %v1065
  %1131 = vst.msk [vmem:[%s1 + $0xd0] sm:$0xff] %vm1104, %v1066
  %1132 = vst.msk [vmem:[%s1 + $0xd8] sm:$0xff] %vm1104, %v1067
  %1133 = vst.msk [vmem:[%s1 + $0xe0] sm:$0xff] %vm1104, %v1068
  %1134 = vst.msk [vmem:[%s1 + $0xe8] sm:$0xff] %vm1104, %v1069
  %1135 = vst.msk [vmem:[%s1 + $0xf0] sm:$0xff] %vm1104, %v1070
  %1136 = vst.msk [vmem:[%s1 + $0xf8] sm:$0xff] %vm1104, %v1071
  %1137 = vst.msk [vmem:[%s1 + $0x100] sm:$0xff] %vm1104, %v1072
  %1138 = vst.msk [vmem:[%s1 + $0x108] sm:$0xff] %vm1104, %v1073
  %1139 = vst.msk [vmem:[%s1 + $0x110] sm:$0xff] %vm1104, %v1074
  %1140 = vst.msk [vmem:[%s1 + $0x118] sm:$0xff] %vm1104, %v1075
  %1141 = vst.msk [vmem:[%s1 + $0x120] sm:$0xff] %vm1104, %v1076
  %1142 = vst.msk [vmem:[%s1 + $0x128] sm:$0xff] %vm1104, %v1077
  %1143 = vst.msk [vmem:[%s1 + $0x130] sm:$0xff] %vm1104, %v1078
  %1144 = vst.msk [vmem:[%s1 + $0x138] sm:$0xff] %vm1104, %v1079
  %1145 = vst.msk [vmem:[%s1 + $0x140] sm:$0xff] %vm1104, %v1080
  %1146 = vst.msk [vmem:[%s1 + $0x148] sm:$0xff] %vm1104, %v1081
  %1147 = vst.msk [vmem:[%s1 + $0x150] sm:$0xff] %vm1104, %v1082
  %1148 = vst.msk [vmem:[%s1 + $0x158] sm:$0xff] %vm1104, %v1083
  %1149 = vst.msk [vmem:[%s1 + $0x160] sm:$0xff] %vm1104, %v1084
  %1150 = vst.msk [vmem:[%s1 + $0x168] sm:$0xff] %vm1104, %v1085
  %1151 = vst.msk [vmem:[%s1 + $0x170] sm:$0xff] %vm1104, %v1086
  %1152 = vst.msk [vmem:[%s1 + $0x178] sm:$0xff] %vm1104, %v1087
  %1153 = vst.msk [vmem:[%s1 + $0x180] sm:$0xff] %vm1104, %v1088
  %1154 = vst.msk [vmem:[%s1 + $0x188] sm:$0xff] %vm1104, %v1089
  %1155 = vst.msk [vmem:[%s1 + $0x190] sm:$0xff] %vm1104, %v1090
  %1156 = vst.msk [vmem:[%s1 + $0x198] sm:$0xff] %vm1104, %v1091
  %1157 = vst.msk [vmem:[%s1 + $0x1a0] sm:$0xff] %vm1104, %v1092
  %1158 = vst.msk [vmem:[%s1 + $0x1a8] sm:$0xff] %vm1104, %v1093
  %1159 = vst.msk [vmem:[%s1 + $0x1b0] sm:$0xff] %vm1104, %v1094
  %1160 = vst.msk [vmem:[%s1 + $0x1b8] sm:$0xff] %vm1104, %v1095
  %1161 = vst.msk [vmem:[%s1 + $0x1c0] sm:$0xff] %vm1104, %v1096
  %1162 = vst.msk [vmem:[%s1 + $0x1c8] sm:$0xff] %vm1104, %v1097
  %1163 = vst.msk [vmem:[%s1 + $0x1d0] sm:$0xff] %vm1104, %v1098
  %1164 = vst.msk [vmem:[%s1 + $0x1d8] sm:$0xff] %vm1104, %v1099
  %1165 = vst.msk [vmem:[%s1 + $0x1e0] sm:$0xff] %vm1104, %v1100
  %1166 = vst.msk [vmem:[%s1 + $0x1e8] sm:$0xff] %vm1104, %v1101
  %1167 = vst.msk [vmem:[%s1 + $0x1f0] sm:$0xff] %vm1104, %v1102
  %1168 = vst.msk [vmem:[%s1 + $0x1f8] sm:$0xff] %vm1104, %v1103
  // Predicated region
  $region6: #{_lambda_.22} parent=0 // pred_check
    _
  $region7: #{_lambda_.22} parent=0 // pred_check_branch
    %1170 = sbr.rel (0) target = $region9
  $region8: #{_lambda_.22} parent=0 // pred_region
    _
  $region9: #{_lambda_.22} parent=0 // pred_fallthru
    _
  // Predicated region
  $region10: #{_lambda_.22} parent=0 // pred_check
    _
  $region11: #{_lambda_.22} parent=0 // pred_check_branch
    %1172 = sbr.rel (0) target = $region13
  $region12: #{_lambda_.22} parent=0 // pred_region
    _
  $region13: #{_lambda_.22} parent=0 // pred_fallthru
    _

// kernel: _lambda_.24
$region0: #{_lambda_.24}
  #allocation0 [shape = 'u32[]', space=smem, size = 0x4, offset = 0x4, fixed_abs, tag = 'smem constant byte address 0x4 - core index']
  #allocation1 [shape = 'u32[144,128]{1,0:T(1,128)}', space=vmem, size = 0x12000, scoped, tag = 'internal scratch']
  %s0 = inlined_call_operand.vmem [shape: bf16[512,8], index: 0, kind: input, shape index: {}]
  %s1 = inlined_call_operand.vmem [shape: bf16[8,8], index: 1, kind: input, shape index: {}]
  %s2 = inlined_call_operand.vmem [shape: f32[1,8], index: 2, kind: input, shape index: {}]
  %s3 = inlined_call_operand.vmem [shape: f32[1,8], index: 3, kind: input, shape index: {}]
  %s4 = inlined_call_operand.vmem [shape: f32[512,8], index: 4, kind: output, shape index: {}]
  %s5 = sld [smem:[#allocation0]]
  $region26: #{_lambda_.24} parent=0
    _
  %s7 = ssub.s32 1, %s5
  %s8 = scalar_select 0, %s7, %s5
  // Predicated region
  $region2: #{_lambda_.24} parent=0 // pred_check
    _
  $region3: #{_lambda_.24} parent=0 // pred_check_branch
    %10 = sbr.rel (0) target = $region5
  $region4: #{_lambda_.24} parent=0 // pred_region
    _
  $region5: #{_lambda_.24} parent=0 // pred_fallthru
    _
  // Predicated region
  $region6: #{_lambda_.24} parent=0 // pred_check
    _
  $region7: #{_lambda_.24} parent=0 // pred_check_branch
    %12 = sbr.rel (0) target = $region9
  $region8: #{_lambda_.24} parent=0 // pred_region
    _
  $region9: #{_lambda_.24} parent=0 // pred_fallthru
    _
  // Predicated region
  $region10: #{_lambda_.24} parent=0 // pred_check
    _
  $region11: #{_lambda_.24} parent=0 // pred_check_branch
    %14 = sbr.rel (0) target = $region13
  $region12: #{_lambda_.24} parent=0 // pred_region
    _
  $region13: #{_lambda_.24} parent=0 // pred_fallthru
    _
  // Predicated region
  $region14: #{_lambda_.24} parent=0 // pred_check
    _
  $region15: #{_lambda_.24} parent=0 // pred_check_branch
    %16 = sbr.rel (0) target = $region17
  $region16: #{_lambda_.24} parent=0 // pred_region
    _
  $region17: #{_lambda_.24} parent=0 // pred_fallthru
    _
  %v18 = vld [vmem:[%s0] sm:$0xf]
  %v19 = vld [vmem:[%s0 + $0x4] sm:$0xf]
  %v20 = vld [vmem:[%s0 + $0x8] sm:$0xf]
  %v21 = vld [vmem:[%s0 + $0xc] sm:$0xf]
  %v22 = vld [vmem:[%s0 + $0x10] sm:$0xf]
  %v23 = vld [vmem:[%s0 + $0x14] sm:$0xf]
  %v24 = vld [vmem:[%s0 + $0x18] sm:$0xf]
  %v25 = vld [vmem:[%s0 + $0x1c] sm:$0xf]
  %v26 = vld [vmem:[%s0 + $0x20] sm:$0xf]
  %v27 = vld [vmem:[%s0 + $0x24] sm:$0xf]
  %v28 = vld [vmem:[%s0 + $0x28] sm:$0xf]
  %v29 = vld [vmem:[%s0 + $0x2c] sm:$0xf]
  %v30 = vld [vmem:[%s0 + $0x30] sm:$0xf]
  %v31 = vld [vmem:[%s0 + $0x34] sm:$0xf]
  %v32 = vld [vmem:[%s0 + $0x38] sm:$0xf]
  %v33 = vld [vmem:[%s0 + $0x3c] sm:$0xf]
  %v34 = vld [vmem:[%s0 + $0x40] sm:$0xf]
  %v35 = vld [vmem:[%s0 + $0x44] sm:$0xf]
  %v36 = vld [vmem:[%s0 + $0x48] sm:$0xf]
  %v37 = vld [vmem:[%s0 + $0x4c] sm:$0xf]
  %v38 = vld [vmem:[%s0 + $0x50] sm:$0xf]
  %v39 = vld [vmem:[%s0 + $0x54] sm:$0xf]
  %v40 = vld [vmem:[%s0 + $0x58] sm:$0xf]
  %v41 = vld [vmem:[%s0 + $0x5c] sm:$0xf]
  %v42 = vld [vmem:[%s0 + $0x60] sm:$0xf]
  %v43 = vld [vmem:[%s0 + $0x64] sm:$0xf]
  %v44 = vld [vmem:[%s0 + $0x68] sm:$0xf]
  %v45 = vld [vmem:[%s0 + $0x6c] sm:$0xf]
  %v46 = vld [vmem:[%s0 + $0x70] sm:$0xf]
  %v47 = vld [vmem:[%s0 + $0x74] sm:$0xf]
  %v48 = vld [vmem:[%s0 + $0x78] sm:$0xf]
  %v49 = vld [vmem:[%s0 + $0x7c] sm:$0xf]
  %v50 = vld [vmem:[%s0 + $0x80] sm:$0xf]
  %v51 = vld [vmem:[%s0 + $0x84] sm:$0xf]
  %v52 = vld [vmem:[%s0 + $0x88] sm:$0xf]
  %v53 = vld [vmem:[%s0 + $0x8c] sm:$0xf]
  %v54 = vld [vmem:[%s0 + $0x90] sm:$0xf]
  %v55 = vld [vmem:[%s0 + $0x94] sm:$0xf]
  %v56 = vld [vmem:[%s0 + $0x98] sm:$0xf]
  %v57 = vld [vmem:[%s0 + $0x9c] sm:$0xf]
  %v58 = vld [vmem:[%s0 + $0xa0] sm:$0xf]
  %v59 = vld [vmem:[%s0 + $0xa4] sm:$0xf]
  %v60 = vld [vmem:[%s0 + $0xa8] sm:$0xf]
  %v61 = vld [vmem:[%s0 + $0xac] sm:$0xf]
  %v62 = vld [vmem:[%s0 + $0xb0] sm:$0xf]
  %v63 = vld [vmem:[%s0 + $0xb4] sm:$0xf]
  %v64 = vld [vmem:[%s0 + $0xb8] sm:$0xf]
  %v65 = vld [vmem:[%s0 + $0xbc] sm:$0xf]
  %v66 = vld [vmem:[%s0 + $0xc0] sm:$0xf]
  %v67 = vld [vmem:[%s0 + $0xc4] sm:$0xf]
  %v68 = vld [vmem:[%s0 + $0xc8] sm:$0xf]
  %v69 = vld [vmem:[%s0 + $0xcc] sm:$0xf]
  %v70 = vld [vmem:[%s0 + $0xd0] sm:$0xf]
  %v71 = vld [vmem:[%s0 + $0xd4] sm:$0xf]
  %v72 = vld [vmem:[%s0 + $0xd8] sm:$0xf]
  %v73 = vld [vmem:[%s0 + $0xdc] sm:$0xf]
  %v74 = vld [vmem:[%s0 + $0xe0] sm:$0xf]
  %v75 = vld [vmem:[%s0 + $0xe4] sm:$0xf]
  %v76 = vld [vmem:[%s0 + $0xe8] sm:$0xf]
  %v77 = vld [vmem:[%s0 + $0xec] sm:$0xf]
  %v78 = vld [vmem:[%s0 + $0xf0] sm:$0xf]
  %v79 = vld [vmem:[%s0 + $0xf4] sm:$0xf]
  %v80 = vld [vmem:[%s0 + $0xf8] sm:$0xf]
  %v81 = vld [vmem:[%s0 + $0xfc] sm:$0xf]
  %v82 = vld [vmem:[%s1] sm:$0xf]
  %v147 = vunpack.c.l.b16 %v18
  %v148 = vunpack.c.l.b16 %v19
  %v149 = vunpack.c.l.b16 %v20
  %v150 = vunpack.c.l.b16 %v21
  %v151 = vunpack.c.l.b16 %v22
  %v152 = vunpack.c.l.b16 %v23
  %v153 = vunpack.c.l.b16 %v24
  %v154 = vunpack.c.l.b16 %v25
  %v155 = vunpack.c.l.b16 %v26
  %v156 = vunpack.c.l.b16 %v27
  %v157 = vunpack.c.l.b16 %v28
  %v158 = vunpack.c.l.b16 %v29
  %v159 = vunpack.c.l.b16 %v30
  %v160 = vunpack.c.l.b16 %v31
  %v161 = vunpack.c.l.b16 %v32
  %v162 = vunpack.c.l.b16 %v33
  %v163 = vunpack.c.l.b16 %v34
  %v164 = vunpack.c.l.b16 %v35
  %v165 = vunpack.c.l.b16 %v36
  %v166 = vunpack.c.l.b16 %v37
  %v167 = vunpack.c.l.b16 %v38
  %v168 = vunpack.c.l.b16 %v39
  %v169 = vunpack.c.l.b16 %v40
  %v170 = vunpack.c.l.b16 %v41
  %v171 = vunpack.c.l.b16 %v42
  %v172 = vunpack.c.l.b16 %v43
  %v173 = vunpack.c.l.b16 %v44
  %v174 = vunpack.c.l.b16 %v45
  %v175 = vunpack.c.l.b16 %v46
  %v176 = vunpack.c.l.b16 %v47
  %v177 = vunpack.c.l.b16 %v48
  %v178 = vunpack.c.l.b16 %v49
  %v179 = vunpack.c.l.b16 %v50
  %v180 = vunpack.c.l.b16 %v51
  %v181 = vunpack.c.l.b16 %v52
  %v182 = vunpack.c.l.b16 %v53
  %v183 = vunpack.c.l.b16 %v54
  %v184 = vunpack.c.l.b16 %v55
  %v185 = vunpack.c.l.b16 %v56
  %v186 = vunpack.c.l.b16 %v57
  %v187 = vunpack.c.l.b16 %v58
  %v188 = vunpack.c.l.b16 %v59
  %v189 = vunpack.c.l.b16 %v60
  %v190 = vunpack.c.l.b16 %v61
  %v191 = vunpack.c.l.b16 %v62
  %v192 = vunpack.c.l.b16 %v63
  %v193 = vunpack.c.l.b16 %v64
  %v194 = vunpack.c.l.b16 %v65
  %v195 = vunpack.c.l.b16 %v66
  %v196 = vunpack.c.l.b16 %v67
  %v197 = vunpack.c.l.b16 %v68
  %v198 = vunpack.c.l.b16 %v69
  %v199 = vunpack.c.l.b16 %v70
  %v200 = vunpack.c.l.b16 %v71
  %v201 = vunpack.c.l.b16 %v72
  %v202 = vunpack.c.l.b16 %v73
  %v203 = vunpack.c.l.b16 %v74
  %v204 = vunpack.c.l.b16 %v75
  %v205 = vunpack.c.l.b16 %v76
  %v206 = vunpack.c.l.b16 %v77
  %v207 = vunpack.c.l.b16 %v78
  %v208 = vunpack.c.l.b16 %v79
  %v209 = vunpack.c.l.b16 %v80
  %v210 = vunpack.c.l.b16 %v81
  %v211 = vpack.c.b16 %v148, %v147
  %v212 = vpack.c.b16 %v150, %v149
  %v213 = vpack.c.b16 %v152, %v151
  %v214 = vpack.c.b16 %v154, %v153
  %v215 = vpack.c.b16 %v156, %v155
  %v216 = vpack.c.b16 %v158, %v157
  %v217 = vpack.c.b16 %v160, %v159
  %v218 = vpack.c.b16 %v162, %v161
  %v219 = vpack.c.b16 %v164, %v163
  %v220 = vpack.c.b16 %v166, %v165
  %v221 = vpack.c.b16 %v168, %v167
  %v222 = vpack.c.b16 %v170, %v169
  %v223 = vpack.c.b16 %v172, %v171
  %v224 = vpack.c.b16 %v174, %v173
  %v225 = vpack.c.b16 %v176, %v175
  %v226 = vpack.c.b16 %v178, %v177
  %v227 = vpack.c.b16 %v180, %v179
  %v228 = vpack.c.b16 %v182, %v181
  %v229 = vpack.c.b16 %v184, %v183
  %v230 = vpack.c.b16 %v186, %v185
  %v231 = vpack.c.b16 %v188, %v187
  %v232 = vpack.c.b16 %v190, %v189
  %v233 = vpack.c.b16 %v192, %v191
  %v234 = vpack.c.b16 %v194, %v193
  %v235 = vpack.c.b16 %v196, %v195
  %v236 = vpack.c.b16 %v198, %v197
  %v237 = vpack.c.b16 %v200, %v199
  %v238 = vpack.c.b16 %v202, %v201
  %v239 = vpack.c.b16 %v204, %v203
  %v240 = vpack.c.b16 %v206, %v205
  %v241 = vpack.c.b16 %v208, %v207
  %v242 = vpack.c.b16 %v210, %v209
  %vm243 = vcmask 64512
  %v245 = vsel %vm243, %v211, 0
  %v248 = vsel %vm243, %v212, 0
  %v251 = vsel %vm243, %v213, 0
  %v254 = vsel %vm243, %v214, 0
  %v257 = vsel %vm243, %v215, 0
  %v260 = vsel %vm243, %v216, 0
  %v263 = vsel %vm243, %v217, 0
  %v266 = vsel %vm243, %v218, 0
  %v269 = vsel %vm243, %v219, 0
  %v272 = vsel %vm243, %v220, 0
  %v275 = vsel %vm243, %v221, 0
  %v278 = vsel %vm243, %v222, 0
  %v281 = vsel %vm243, %v223, 0
  %v284 = vsel %vm243, %v224, 0
  %v287 = vsel %vm243, %v225, 0
  %v290 = vsel %vm243, %v226, 0
  %v293 = vsel %vm243, %v227, 0
  %v296 = vsel %vm243, %v228, 0
  %v299 = vsel %vm243, %v229, 0
  %v302 = vsel %vm243, %v230, 0
  %v305 = vsel %vm243, %v231, 0
  %v308 = vsel %vm243, %v232, 0
  %v311 = vsel %vm243, %v233, 0
  %v314 = vsel %vm243, %v234, 0
  %v317 = vsel %vm243, %v235, 0
  %v320 = vsel %vm243, %v236, 0
  %v323 = vsel %vm243, %v237, 0
  %v326 = vsel %vm243, %v238, 0
  %v329 = vsel %vm243, %v239, 0
  %v332 = vsel %vm243, %v240, 0
  %v335 = vsel %vm243, %v241, 0
  %v338 = vsel %vm243, %v242, 0
  %vm340 = vcmask 1043456
  %v342 = vsel %vm340, %v82, 0
  %344 = vmatprep.subr.bf16.mxu0 0
  %345 = vmatpush1.bf16.msra.mxu0 %v342
  %346 = vmatprep.subr.bf16.mxu0 0
  %347 = vmatpush1.bf16.msra.mxu0 0
  %348 = vmatprep.subr.bf16.mxu0 0
  %349 = vmatpush1.bf16.msra.mxu0 0
  %350 = vmatprep.subr.bf16.mxu0 0
  %351 = vmatpush1.bf16.msra.mxu0 0
  %352 = vmatprep.subr.bf16.mxu0 0
  %353 = vmatpush1.bf16.msra.mxu0 0
  %354 = vmatprep.subr.bf16.mxu0 0
  %355 = vmatpush1.bf16.msra.mxu0 0
  %356 = vmatprep.subr.bf16.mxu0 0
  %357 = vmatpush1.bf16.msra.mxu0 0
  %358 = vmatprep.subr.bf16.mxu0 0
  %359 = vmatpush1.bf16.msra.mxu0 0
  %360 = vmatprep.subr.bf16.mxu0 0
  %361 = vmatpush1.bf16.msra.mxu0 0
  %362 = vmatprep.subr.bf16.mxu0 0
  %363 = vmatpush1.bf16.msra.mxu0 0
  %364 = vmatprep.subr.bf16.mxu0 0
  %365 = vmatpush1.bf16.msra.mxu0 0
  %366 = vmatprep.subr.bf16.mxu0 0
  %367 = vmatpush1.bf16.msra.mxu0 0
  %368 = vmatprep.subr.bf16.mxu0 0
  %369 = vmatpush1.bf16.msra.mxu0 0
  %370 = vmatprep.subr.bf16.mxu0 0
  %371 = vmatpush1.bf16.msra.mxu0 0
  %372 = vmatprep.subr.bf16.mxu0 0
  %373 = vmatpush1.bf16.msra.mxu0 0
  %374 = vmatprep.subr.bf16.mxu0 0
  %375 = vmatpush1.bf16.msra.mxu0 0
  %376 = vmatprep.mubr.bf16.mxu0 0
  %377 = vmatmul.mubr.bf16.gmra.mrb[0].mxu0 %v245
  %v378 = vpop.f32.mrb[0].mxu0
  %v379 = vadd.f32 0.0, %v378
  %v380 = vpop.f32.mrb[0].mxu0
  %v381 = vpop.f32.mrb[0].mxu0
  %v382 = vadd.f32 0.0, %v381
  %v383 = vpop.f32.mrb[0].mxu0
  %384 = vmatprep.mubr.bf16.mxu0 0
  %385 = vmatmul.mubr.bf16.gmra.mrb[0].mxu0 %v248
  %v386 = vpop.f32.mrb[0].mxu0
  %v387 = vadd.f32 0.0, %v386
  %v388 = vpop.f32.mrb[0].mxu0
  %v389 = vpop.f32.mrb[0].mxu0
  %v390 = vadd.f32 0.0, %v389
  %v391 = vpop.f32.mrb[0].mxu0
  %392 = vmatprep.mubr.bf16.mxu0 0
  %393 = vmatmul.mubr.bf16.gmra.mrb[0].mxu0 %v251
  %v394 = vpop.f32.mrb[0].mxu0
  %v395 = vadd.f32 0.0, %v394
  %v396 = vpop.f32.mrb[0].mxu0
  %v397 = vpop.f32.mrb[0].mxu0
  %v398 = vadd.f32 0.0, %v397
  %v399 = vpop.f32.mrb[0].mxu0
  %400 = vmatprep.mubr.bf16.mxu0 0
  %401 = vmatmul.mubr.bf16.gmra.mrb[0].mxu0 %v254
  %v402 = vpop.f32.mrb[0].mxu0
  %v403 = vadd.f32 0.0, %v402
  %v404 = vpop.f32.mrb[0].mxu0
  %v405 = vpop.f32.mrb[0].mxu0
  %v406 = vadd.f32 0.0, %v405
  %v407 = vpop.f32.mrb[0].mxu0
  %408 = vmatprep.mubr.bf16.mxu0 0
  %409 = vmatmul.mubr.bf16.gmra.mrb[0].mxu0 %v257
  %v410 = vpop.f32.mrb[0].mxu0
  %v411 = vadd.f32 0.0, %v410
  %v412 = vpop.f32.mrb[0].mxu0
  %v413 = vpop.f32.mrb[0].mxu0
  %v414 = vadd.f32 0.0, %v413
  %v415 = vpop.f32.mrb[0].mxu0
  %416 = vmatprep.mubr.bf16.mxu0 0
  %417 = vmatmul.mubr.bf16.gmra.mrb[0].mxu0 %v260
  %v418 = vpop.f32.mrb[0].mxu0
  %v419 = vadd.f32 0.0, %v418
  %v420 = vpop.f32.mrb[0].mxu0
  %v421 = vpop.f32.mrb[0].mxu0
  %v422 = vadd.f32 0.0, %v421
  %v423 = vpop.f32.mrb[0].mxu0
  %424 = vmatprep.mubr.bf16.mxu0 0
  %425 = vmatmul.mubr.bf16.gmra.mrb[0].mxu0 %v263
  %v426 = vpop.f32.mrb[0].mxu0
  %v427 = vadd.f32 0.0, %v426
  %v428 = vpop.f32.mrb[0].mxu0
  %v429 = vpop.f32.mrb[0].mxu0
  %v430 = vadd.f32 0.0, %v429
  %v431 = vpop.f32.mrb[0].mxu0
  %432 = vmatprep.mubr.bf16.mxu0 0
  %433 = vmatmul.mubr.bf16.gmra.mrb[0].mxu0 %v266
  %v434 = vpop.f32.mrb[0].mxu0
  %v435 = vadd.f32 0.0, %v434
  %v436 = vpop.f32.mrb[0].mxu0
  %v437 = vpop.f32.mrb[0].mxu0
  %v438 = vadd.f32 0.0, %v437
  %v439 = vpop.f32.mrb[0].mxu0
  %440 = vmatprep.mubr.bf16.mxu0 0
  %441 = vmatmul.mubr.bf16.gmra.mrb[0].mxu0 %v269
  %v442 = vpop.f32.mrb[0].mxu0
  %v443 = vadd.f32 0.0, %v442
  %v444 = vpop.f32.mrb[0].mxu0
  %v445 = vpop.f32.mrb[0].mxu0
  %v446 = vadd.f32 0.0, %v445
  %v447 = vpop.f32.mrb[0].mxu0
  %448 = vmatprep.mubr.bf16.mxu0 0
  %449 = vmatmul.mubr.bf16.gmra.mrb[0].mxu0 %v272
  %v450 = vpop.f32.mrb[0].mxu0
  %v451 = vadd.f32 0.0, %v450
  %v452 = vpop.f32.mrb[0].mxu0
  %v453 = vpop.f32.mrb[0].mxu0
  %v454 = vadd.f32 0.0, %v453
  %v455 = vpop.f32.mrb[0].mxu0
  %456 = vmatprep.mubr.bf16.mxu0 0
  %457 = vmatmul.mubr.bf16.gmra.mrb[0].mxu0 %v275
  %v458 = vpop.f32.mrb[0].mxu0
  %v459 = vadd.f32 0.0, %v458
  %v460 = vpop.f32.mrb[0].mxu0
  %v461 = vpop.f32.mrb[0].mxu0
  %v462 = vadd.f32 0.0, %v461
  %v463 = vpop.f32.mrb[0].mxu0
  %464 = vmatprep.mubr.bf16.mxu0 0
  %465 = vmatmul.mubr.bf16.gmra.mrb[0].mxu0 %v278
  %v466 = vpop.f32.mrb[0].mxu0
  %v467 = vadd.f32 0.0, %v466
  %v468 = vpop.f32.mrb[0].mxu0
  %v469 = vpop.f32.mrb[0].mxu0
  %v470 = vadd.f32 0.0, %v469
  %v471 = vpop.f32.mrb[0].mxu0
  %472 = vmatprep.mubr.bf16.mxu0 0
  %473 = vmatmul.mubr.bf16.gmra.mrb[0].mxu0 %v281
  %v474 = vpop.f32.mrb[0].mxu0
  %v475 = vadd.f32 0.0, %v474
  %v476 = vpop.f32.mrb[0].mxu0
  %v477 = vpop.f32.mrb[0].mxu0
  %v478 = vadd.f32 0.0, %v477
  %v479 = vpop.f32.mrb[0].mxu0
  %480 = vmatprep.mubr.bf16.mxu0 0
  %481 = vmatmul.mubr.bf16.gmra.mrb[0].mxu0 %v284
  %v482 = vpop.f32.mrb[0].mxu0
  %v483 = vadd.f32 0.0, %v482
  %v484 = vpop.f32.mrb[0].mxu0
  %v485 = vpop.f32.mrb[0].mxu0
  %v486 = vadd.f32 0.0, %v485
  %v487 = vpop.f32.mrb[0].mxu0
  %488 = vmatprep.mubr.bf16.mxu0 0
  %489 = vmatmul.mubr.bf16.gmra.mrb[0].mxu0 %v287
  %v490 = vpop.f32.mrb[0].mxu0
  %v491 = vadd.f32 0.0, %v490
  %v492 = vpop.f32.mrb[0].mxu0
  %v493 = vpop.f32.mrb[0].mxu0
  %v494 = vadd.f32 0.0, %v493
  %v495 = vpop.f32.mrb[0].mxu0
  %496 = vmatprep.mubr.bf16.mxu0 0
  %497 = vmatmul.mubr.bf16.gmra.mrb[0].mxu0 %v290
  %v498 = vpop.f32.mrb[0].mxu0
  %v499 = vadd.f32 0.0, %v498
  %v500 = vpop.f32.mrb[0].mxu0
  %v501 = vpop.f32.mrb[0].mxu0
  %v502 = vadd.f32 0.0, %v501
  %v503 = vpop.f32.mrb[0].mxu0
  %504 = vmatprep.mubr.bf16.mxu0 0
  %505 = vmatmul.mubr.bf16.gmra.mrb[0].mxu0 %v293
  %v506 = vpop.f32.mrb[0].mxu0
  %v507 = vadd.f32 0.0, %v506
  %v508 = vpop.f32.mrb[0].mxu0
  %v509 = vpop.f32.mrb[0].mxu0
  %v510 = vadd.f32 0.0, %v509
  %v511 = vpop.f32.mrb[0].mxu0
  %512 = vmatprep.mubr.bf16.mxu0 0
  %513 = vmatmul.mubr.bf16.gmra.mrb[0].mxu0 %v296
  %v514 = vpop.f32.mrb[0].mxu0
  %v515 = vadd.f32 0.0, %v514
  %v516 = vpop.f32.mrb[0].mxu0
  %v517 = vpop.f32.mrb[0].mxu0
  %v518 = vadd.f32 0.0, %v517
  %v519 = vpop.f32.mrb[0].mxu0
  %520 = vmatprep.mubr.bf16.mxu0 0
  %521 = vmatmul.mubr.bf16.gmra.mrb[0].mxu0 %v299
  %v522 = vpop.f32.mrb[0].mxu0
  %v523 = vadd.f32 0.0, %v522
  %v524 = vpop.f32.mrb[0].mxu0
  %v525 = vpop.f32.mrb[0].mxu0
  %v526 = vadd.f32 0.0, %v525
  %v527 = vpop.f32.mrb[0].mxu0
  %528 = vmatprep.mubr.bf16.mxu0 0
  %529 = vmatmul.mubr.bf16.gmra.mrb[0].mxu0 %v302
  %v530 = vpop.f32.mrb[0].mxu0
  %v531 = vadd.f32 0.0, %v530
  %v532 = vpop.f32.mrb[0].mxu0
  %v533 = vpop.f32.mrb[0].mxu0
  %v534 = vadd.f32 0.0, %v533
  %v535 = vpop.f32.mrb[0].mxu0
  %536 = vmatprep.mubr.bf16.mxu0 0
  %537 = vmatmul.mubr.bf16.gmra.mrb[0].mxu0 %v305
  %v538 = vpop.f32.mrb[0].mxu0
  %v539 = vadd.f32 0.0, %v538
  %v540 = vpop.f32.mrb[0].mxu0
  %v541 = vpop.f32.mrb[0].mxu0
  %v542 = vadd.f32 0.0, %v541
  %v543 = vpop.f32.mrb[0].mxu0
  %544 = vmatprep.mubr.bf16.mxu0 0
  %545 = vmatmul.mubr.bf16.gmra.mrb[0].mxu0 %v308
  %v546 = vpop.f32.mrb[0].mxu0
  %v547 = vadd.f32 0.0, %v546
  %v548 = vpop.f32.mrb[0].mxu0
  %v549 = vpop.f32.mrb[0].mxu0
  %v550 = vadd.f32 0.0, %v549
  %v551 = vpop.f32.mrb[0].mxu0
  %552 = vmatprep.mubr.bf16.mxu0 0
  %553 = vmatmul.mubr.bf16.gmra.mrb[0].mxu0 %v311
  %v554 = vpop.f32.mrb[0].mxu0
  %v555 = vadd.f32 0.0, %v554
  %v556 = vpop.f32.mrb[0].mxu0
  %v557 = vpop.f32.mrb[0].mxu0
  %v558 = vadd.f32 0.0, %v557
  %v559 = vpop.f32.mrb[0].mxu0
  %560 = vmatprep.mubr.bf16.mxu0 0
  %561 = vmatmul.mubr.bf16.gmra.mrb[0].mxu0 %v314
  %v562 = vpop.f32.mrb[0].mxu0
  %v563 = vadd.f32 0.0, %v562
  %v564 = vpop.f32.mrb[0].mxu0
  %v565 = vpop.f32.mrb[0].mxu0
  %v566 = vadd.f32 0.0, %v565
  %v567 = vpop.f32.mrb[0].mxu0
  %568 = vmatprep.mubr.bf16.mxu0 0
  %569 = vmatmul.mubr.bf16.gmra.mrb[0].mxu0 %v317
  %v570 = vpop.f32.mrb[0].mxu0
  %v571 = vadd.f32 0.0, %v570
  %v572 = vpop.f32.mrb[0].mxu0
  %v573 = vpop.f32.mrb[0].mxu0
  %v574 = vadd.f32 0.0, %v573
  %v575 = vpop.f32.mrb[0].mxu0
  %576 = vmatprep.mubr.bf16.mxu0 0
  %577 = vmatmul.mubr.bf16.gmra.mrb[0].mxu0 %v320
  %v578 = vpop.f32.mrb[0].mxu0
  %v579 = vadd.f32 0.0, %v578
  %v580 = vpop.f32.mrb[0].mxu0
  %v581 = vpop.f32.mrb[0].mxu0
  %v582 = vadd.f32 0.0, %v581
  %v583 = vpop.f32.mrb[0].mxu0
  %584 = vmatprep.mubr.bf16.mxu0 0
  %585 = vmatmul.mubr.bf16.gmra.mrb[0].mxu0 %v323
  %v586 = vpop.f32.mrb[0].mxu0
  %v587 = vadd.f32 0.0, %v586
  %v588 = vpop.f32.mrb[0].mxu0
  %v589 = vpop.f32.mrb[0].mxu0
  %v590 = vadd.f32 0.0, %v589
  %v591 = vpop.f32.mrb[0].mxu0
  %592 = vmatprep.mubr.bf16.mxu0 0
  %593 = vmatmul.mubr.bf16.gmra.mrb[0].mxu0 %v326
  %v594 = vpop.f32.mrb[0].mxu0
  %v595 = vadd.f32 0.0, %v594
  %v596 = vpop.f32.mrb[0].mxu0
  %v597 = vpop.f32.mrb[0].mxu0
  %v598 = vadd.f32 0.0, %v597
  %v599 = vpop.f32.mrb[0].mxu0
  %600 = vmatprep.mubr.bf16.mxu0 0
  %601 = vmatmul.mubr.bf16.gmra.mrb[0].mxu0 %v329
  %v602 = vpop.f32.mrb[0].mxu0
  %v603 = vadd.f32 0.0, %v602
  %v604 = vpop.f32.mrb[0].mxu0
  %v605 = vpop.f32.mrb[0].mxu0
  %v606 = vadd.f32 0.0, %v605
  %v607 = vpop.f32.mrb[0].mxu0
  %608 = vmatprep.mubr.bf16.mxu0 0
  %609 = vmatmul.mubr.bf16.gmra.mrb[0].mxu0 %v332
  %v610 = vpop.f32.mrb[0].mxu0
  %v611 = vadd.f32 0.0, %v610
  %v612 = vpop.f32.mrb[0].mxu0
  %v613 = vpop.f32.mrb[0].mxu0
  %v614 = vadd.f32 0.0, %v613
  %v615 = vpop.f32.mrb[0].mxu0
  %616 = vmatprep.mubr.bf16.mxu0 0
  %617 = vmatmul.mubr.bf16.gmra.mrb[0].mxu0 %v335
  %v618 = vpop.f32.mrb[0].mxu0
  %v619 = vadd.f32 0.0, %v618
  %v620 = vpop.f32.mrb[0].mxu0
  %v621 = vpop.f32.mrb[0].mxu0
  %v622 = vadd.f32 0.0, %v621
  %v623 = vpop.f32.mrb[0].mxu0
  %624 = vmatprep.mubr.bf16.mxu0 0
  %625 = vmatmul.mubr.bf16.gmra.mrb[0].mxu0 %v338
  %v626 = vpop.f32.mrb[0].mxu0
  %v627 = vadd.f32 0.0, %v626
  %v628 = vpop.f32.mrb[0].mxu0
  %v629 = vpop.f32.mrb[0].mxu0
  %v630 = vadd.f32 0.0, %v629
  %v631 = vpop.f32.mrb[0].mxu0
  %632 = vdwg.mxu0
  %v633 = vld [vmem:[%s2] sm:$0x1]
  %v635 = vlaneseq
  %v636 = vshrl.u32 %v635, 7
  %v637 = vsub.s32 0, %v636
  %v638 = vrot.slane %v633, %v637
  %v640 = vmul.f32 %v379, %v638
  %v641 = vmul.f32 %v382, %v638
  %v642 = vmul.f32 %v387, %v638
  %v643 = vmul.f32 %v390, %v638
  %v644 = vmul.f32 %v395, %v638
  %v645 = vmul.f32 %v398, %v638
  %v646 = vmul.f32 %v403, %v638
  %v647 = vmul.f32 %v406, %v638
  %v648 = vmul.f32 %v411, %v638
  %v649 = vmul.f32 %v414, %v638
  %v650 = vmul.f32 %v419, %v638
  %v651 = vmul.f32 %v422, %v638
  %v652 = vmul.f32 %v427, %v638
  %v653 = vmul.f32 %v430, %v638
  %v654 = vmul.f32 %v435, %v638
  %v655 = vmul.f32 %v438, %v638
  %v656 = vmul.f32 %v443, %v638
  %v657 = vmul.f32 %v446, %v638
  %v658 = vmul.f32 %v451, %v638
  %v659 = vmul.f32 %v454, %v638
  %v660 = vmul.f32 %v459, %v638
  %v661 = vmul.f32 %v462, %v638
  %v662 = vmul.f32 %v467, %v638
  %v663 = vmul.f32 %v470, %v638
  %v664 = vmul.f32 %v475, %v638
  %v665 = vmul.f32 %v478, %v638
  %v666 = vmul.f32 %v483, %v638
  %v667 = vmul.f32 %v486, %v638
  %v668 = vmul.f32 %v491, %v638
  %v669 = vmul.f32 %v494, %v638
  %v670 = vmul.f32 %v499, %v638
  %v671 = vmul.f32 %v502, %v638
  %v672 = vmul.f32 %v507, %v638
  %v673 = vmul.f32 %v510, %v638
  %v674 = vmul.f32 %v515, %v638
  %v675 = vmul.f32 %v518, %v638
  %v676 = vmul.f32 %v523, %v638
  %v677 = vmul.f32 %v526, %v638
  %v678 = vmul.f32 %v531, %v638
  %v679 = vmul.f32 %v534, %v638
  %v680 = vmul.f32 %v539, %v638
  %v681 = vmul.f32 %v542, %v638
  %v682 = vmul.f32 %v547, %v638
  %v683 = vmul.f32 %v550, %v638
  %v684 = vmul.f32 %v555, %v638
  %v685 = vmul.f32 %v558, %v638
  %v686 = vmul.f32 %v563, %v638
  %v687 = vmul.f32 %v566, %v638
  %v688 = vmul.f32 %v571, %v638
  %v689 = vmul.f32 %v574, %v638
  %v690 = vmul.f32 %v579, %v638
  %v691 = vmul.f32 %v582, %v638
  %v692 = vmul.f32 %v587, %v638
  %v693 = vmul.f32 %v590, %v638
  %v694 = vmul.f32 %v595, %v638
  %v695 = vmul.f32 %v598, %v638
  %v696 = vmul.f32 %v603, %v638
  %v697 = vmul.f32 %v606, %v638
  %v698 = vmul.f32 %v611, %v638
  %v699 = vmul.f32 %v614, %v638
  %v700 = vmul.f32 %v619, %v638
  %v701 = vmul.f32 %v622, %v638
  %v702 = vmul.f32 %v627, %v638
  %v703 = vmul.f32 %v630, %v638
  %v704 = vld [vmem:[%s3] sm:$0x1]
  %v706 = vlaneseq
  %v707 = vshrl.u32 %v706, 7
  %v708 = vsub.s32 0, %v707
  %v709 = vrot.slane %v704, %v708
  %v711 = vadd.f32 %v640, %v709
  %v712 = vadd.f32 %v641, %v709
  %v713 = vadd.f32 %v642, %v709
  %v714 = vadd.f32 %v643, %v709
  %v715 = vadd.f32 %v644, %v709
  %v716 = vadd.f32 %v645, %v709
  %v717 = vadd.f32 %v646, %v709
  %v718 = vadd.f32 %v647, %v709
  %v719 = vadd.f32 %v648, %v709
  %v720 = vadd.f32 %v649, %v709
  %v721 = vadd.f32 %v650, %v709
  %v722 = vadd.f32 %v651, %v709
  %v723 = vadd.f32 %v652, %v709
  %v724 = vadd.f32 %v653, %v709
  %v725 = vadd.f32 %v654, %v709
  %v726 = vadd.f32 %v655, %v709
  %v727 = vadd.f32 %v656, %v709
  %v728 = vadd.f32 %v657, %v709
  %v729 = vadd.f32 %v658, %v709
  %v730 = vadd.f32 %v659, %v709
  %v731 = vadd.f32 %v660, %v709
  %v732 = vadd.f32 %v661, %v709
  %v733 = vadd.f32 %v662, %v709
  %v734 = vadd.f32 %v663, %v709
  %v735 = vadd.f32 %v664, %v709
  %v736 = vadd.f32 %v665, %v709
  %v737 = vadd.f32 %v666, %v709
  %v738 = vadd.f32 %v667, %v709
  %v739 = vadd.f32 %v668, %v709
  %v740 = vadd.f32 %v669, %v709
  %v741 = vadd.f32 %v670, %v709
  %v742 = vadd.f32 %v671, %v709
  %v743 = vadd.f32 %v672, %v709
  %v744 = vadd.f32 %v673, %v709
  %v745 = vadd.f32 %v674, %v709
  %v746 = vadd.f32 %v675, %v709
  %v747 = vadd.f32 %v676, %v709
  %v748 = vadd.f32 %v677, %v709
  %v749 = vadd.f32 %v678, %v709
  %v750 = vadd.f32 %v679, %v709
  %v751 = vadd.f32 %v680, %v709
  %v752 = vadd.f32 %v681, %v709
  %v753 = vadd.f32 %v682, %v709
  %v754 = vadd.f32 %v683, %v709
  %v755 = vadd.f32 %v684, %v709
  %v756 = vadd.f32 %v685, %v709
  %v757 = vadd.f32 %v686, %v709
  %v758 = vadd.f32 %v687, %v709
  %v759 = vadd.f32 %v688, %v709
  %v760 = vadd.f32 %v689, %v709
  %v761 = vadd.f32 %v690, %v709
  %v762 = vadd.f32 %v691, %v709
  %v763 = vadd.f32 %v692, %v709
  %v764 = vadd.f32 %v693, %v709
  %v765 = vadd.f32 %v694, %v709
  %v766 = vadd.f32 %v695, %v709
  %v767 = vadd.f32 %v696, %v709
  %v768 = vadd.f32 %v697, %v709
  %v769 = vadd.f32 %v698, %v709
  %v770 = vadd.f32 %v699, %v709
  %v771 = vadd.f32 %v700, %v709
  %v772 = vadd.f32 %v701, %v709
  %v773 = vadd.f32 %v702, %v709
  %v774 = vadd.f32 %v703, %v709
  %v775 = vmax.f32 %v711, 0.0
  %v776 = vmax.f32 %v712, 0.0
  %v777 = vmax.f32 %v713, 0.0
  %v778 = vmax.f32 %v714, 0.0
  %v779 = vmax.f32 %v715, 0.0
  %v780 = vmax.f32 %v716, 0.0
  %v781 = vmax.f32 %v717, 0.0
  %v782 = vmax.f32 %v718, 0.0
  %v783 = vmax.f32 %v719, 0.0
  %v784 = vmax.f32 %v720, 0.0
  %v785 = vmax.f32 %v721, 0.0
  %v786 = vmax.f32 %v722, 0.0
  %v787 = vmax.f32 %v723, 0.0
  %v788 = vmax.f32 %v724, 0.0
  %v789 = vmax.f32 %v725, 0.0
  %v790 = vmax.f32 %v726, 0.0
  %v791 = vmax.f32 %v727, 0.0
  %v792 = vmax.f32 %v728, 0.0
  %v793 = vmax.f32 %v729, 0.0
  %v794 = vmax.f32 %v730, 0.0
  %v795 = vmax.f32 %v731, 0.0
  %v796 = vmax.f32 %v732, 0.0
  %v797 = vmax.f32 %v733, 0.0
  %v798 = vmax.f32 %v734, 0.0
  %v799 = vmax.f32 %v735, 0.0
  %v800 = vmax.f32 %v736, 0.0
  %v801 = vmax.f32 %v737, 0.0
  %v802 = vmax.f32 %v738, 0.0
  %v803 = vmax.f32 %v739, 0.0
  %v804 = vmax.f32 %v740, 0.0
  %v805 = vmax.f32 %v741, 0.0
  %v806 = vmax.f32 %v742, 0.0
  %v807 = vmax.f32 %v743, 0.0
  %v808 = vmax.f32 %v744, 0.0
  %v809 = vmax.f32 %v745, 0.0
  %v810 = vmax.f32 %v746, 0.0
  %v811 = vmax.f32 %v747, 0.0
  %v812 = vmax.f32 %v748, 0.0
  %v813 = vmax.f32 %v749, 0.0
  %v814 = vmax.f32 %v750, 0.0
  %v815 = vmax.f32 %v751, 0.0
  %v816 = vmax.f32 %v752, 0.0
  %v817 = vmax.f32 %v753, 0.0
  %v818 = vmax.f32 %v754, 0.0
  %v819 = vmax.f32 %v755, 0.0
  %v820 = vmax.f32 %v756, 0.0
  %v821 = vmax.f32 %v757, 0.0
  %v822 = vmax.f32 %v758, 0.0
  %v823 = vmax.f32 %v759, 0.0
  %v824 = vmax.f32 %v760, 0.0
  %v825 = vmax.f32 %v761, 0.0
  %v826 = vmax.f32 %v762, 0.0
  %v827 = vmax.f32 %v763, 0.0
  %v828 = vmax.f32 %v764, 0.0
  %v829 = vmax.f32 %v765, 0.0
  %v830 = vmax.f32 %v766, 0.0
  %v831 = vmax.f32 %v767, 0.0
  %v832 = vmax.f32 %v768, 0.0
  %v833 = vmax.f32 %v769, 0.0
  %v834 = vmax.f32 %v770, 0.0
  %v835 = vmax.f32 %v771, 0.0
  %v836 = vmax.f32 %v772, 0.0
  %v837 = vmax.f32 %v773, 0.0
  %v838 = vmax.f32 %v774, 0.0
  %839 = vst.msk [vmem:[%s4] sm:$0xff] %vm243, %v775
  %840 = vst.msk [vmem:[%s4 + $0x8] sm:$0xff] %vm243, %v776
  %841 = vst.msk [vmem:[%s4 + $0x10] sm:$0xff] %vm243, %v777
  %842 = vst.msk [vmem:[%s4 + $0x18] sm:$0xff] %vm243, %v778
  %843 = vst.msk [vmem:[%s4 + $0x20] sm:$0xff] %vm243, %v779
  %844 = vst.msk [vmem:[%s4 + $0x28] sm:$0xff] %vm243, %v780
  %845 = vst.msk [vmem:[%s4 + $0x30] sm:$0xff] %vm243, %v781
  %846 = vst.msk [vmem:[%s4 + $0x38] sm:$0xff] %vm243, %v782
  %847 = vst.msk [vmem:[%s4 + $0x40] sm:$0xff] %vm243, %v783
  %848 = vst.msk [vmem:[%s4 + $0x48] sm:$0xff] %vm243, %v784
  %849 = vst.msk [vmem:[%s4 + $0x50] sm:$0xff] %vm243, %v785
  %850 = vst.msk [vmem:[%s4 + $0x58] sm:$0xff] %vm243, %v786
  %851 = vst.msk [vmem:[%s4 + $0x60] sm:$0xff] %vm243, %v787
  %852 = vst.msk [vmem:[%s4 + $0x68] sm:$0xff] %vm243, %v788
  %853 = vst.msk [vmem:[%s4 + $0x70] sm:$0xff] %vm243, %v789
  %854 = vst.msk [vmem:[%s4 + $0x78] sm:$0xff] %vm243, %v790
  %855 = vst.msk [vmem:[%s4 + $0x80] sm:$0xff] %vm243, %v791
  %856 = vst.msk [vmem:[%s4 + $0x88] sm:$0xff] %vm243, %v792
  %857 = vst.msk [vmem:[%s4 + $0x90] sm:$0xff] %vm243, %v793
  %858 = vst.msk [vmem:[%s4 + $0x98] sm:$0xff] %vm243, %v794
  %859 = vst.msk [vmem:[%s4 + $0xa0] sm:$0xff] %vm243, %v795
  %860 = vst.msk [vmem:[%s4 + $0xa8] sm:$0xff] %vm243, %v796
  %861 = vst.msk [vmem:[%s4 + $0xb0] sm:$0xff] %vm243, %v797
  %862 = vst.msk [vmem:[%s4 + $0xb8] sm:$0xff] %vm243, %v798
  %863 = vst.msk [vmem:[%s4 + $0xc0] sm:$0xff] %vm243, %v799
  %864 = vst.msk [vmem:[%s4 + $0xc8] sm:$0xff] %vm243, %v800
  %865 = vst.msk [vmem:[%s4 + $0xd0] sm:$0xff] %vm243, %v801
  %866 = vst.msk [vmem:[%s4 + $0xd8] sm:$0xff] %vm243, %v802
  %867 = vst.msk [vmem:[%s4 + $0xe0] sm:$0xff] %vm243, %v803
  %868 = vst.msk [vmem:[%s4 + $0xe8] sm:$0xff] %vm243, %v804
  %869 = vst.msk [vmem:[%s4 + $0xf0] sm:$0xff] %vm243, %v805
  %870 = vst.msk [vmem:[%s4 + $0xf8] sm:$0xff] %vm243, %v806
  %871 = vst.msk [vmem:[%s4 + $0x100] sm:$0xff] %vm243, %v807
  %872 = vst.msk [vmem:[%s4 + $0x108] sm:$0xff] %vm243, %v808
  %873 = vst.msk [vmem:[%s4 + $0x110] sm:$0xff] %vm243, %v809
  %874 = vst.msk [vmem:[%s4 + $0x118] sm:$0xff] %vm243, %v810
  %875 = vst.msk [vmem:[%s4 + $0x120] sm:$0xff] %vm243, %v811
  %876 = vst.msk [vmem:[%s4 + $0x128] sm:$0xff] %vm243, %v812
  %877 = vst.msk [vmem:[%s4 + $0x130] sm:$0xff] %vm243, %v813
  %878 = vst.msk [vmem:[%s4 + $0x138] sm:$0xff] %vm243, %v814
  %879 = vst.msk [vmem:[%s4 + $0x140] sm:$0xff] %vm243, %v815
  %880 = vst.msk [vmem:[%s4 + $0x148] sm:$0xff] %vm243, %v816
  %881 = vst.msk [vmem:[%s4 + $0x150] sm:$0xff] %vm243, %v817
  %882 = vst.msk [vmem:[%s4 + $0x158] sm:$0xff] %vm243, %v818
  %883 = vst.msk [vmem:[%s4 + $0x160] sm:$0xff] %vm243, %v819
  %884 = vst.msk [vmem:[%s4 + $0x168] sm:$0xff] %vm243, %v820
  %885 = vst.msk [vmem:[%s4 + $0x170] sm:$0xff] %vm243, %v821
  %886 = vst.msk [vmem:[%s4 + $0x178] sm:$0xff] %vm243, %v822
  %887 = vst.msk [vmem:[%s4 + $0x180] sm:$0xff] %vm243, %v823
  %888 = vst.msk [vmem:[%s4 + $0x188] sm:$0xff] %vm243, %v824
  %889 = vst.msk [vmem:[%s4 + $0x190] sm:$0xff] %vm243, %v825
  %890 = vst.msk [vmem:[%s4 + $0x198] sm:$0xff] %vm243, %v826
  %891 = vst.msk [vmem:[%s4 + $0x1a0] sm:$0xff] %vm243, %v827
  %892 = vst.msk [vmem:[%s4 + $0x1a8] sm:$0xff] %vm243, %v828
  %893 = vst.msk [vmem:[%s4 + $0x1b0] sm:$0xff] %vm243, %v829
  %894 = vst.msk [vmem:[%s4 + $0x1b8] sm:$0xff] %vm243, %v830
  %895 = vst.msk [vmem:[%s4 + $0x1c0] sm:$0xff] %vm243, %v831
  %896 = vst.msk [vmem:[%s4 + $0x1c8] sm:$0xff] %vm243, %v832
  %897 = vst.msk [vmem:[%s4 + $0x1d0] sm:$0xff] %vm243, %v833
  %898 = vst.msk [vmem:[%s4 + $0x1d8] sm:$0xff] %vm243, %v834
  %899 = vst.msk [vmem:[%s4 + $0x1e0] sm:$0xff] %vm243, %v835
  %900 = vst.msk [vmem:[%s4 + $0x1e8] sm:$0xff] %vm243, %v836
  %901 = vst.msk [vmem:[%s4 + $0x1f0] sm:$0xff] %vm243, %v837
  %902 = vst.msk [vmem:[%s4 + $0x1f8] sm:$0xff] %vm243, %v838
  // Predicated region
  $region18: #{_lambda_.24} parent=0 // pred_check
    _
  $region19: #{_lambda_.24} parent=0 // pred_check_branch
    %904 = sbr.rel (0) target = $region21
  $region20: #{_lambda_.24} parent=0 // pred_region
    _
  $region21: #{_lambda_.24} parent=0 // pred_fallthru
    _
  // Predicated region
  $region22: #{_lambda_.24} parent=0 // pred_check
    _
  $region23: #{_lambda_.24} parent=0 // pred_check_branch
    %906 = sbr.rel (0) target = $region25
  $region24: #{_lambda_.24} parent=0 // pred_region
    _
  $region25: #{_lambda_.24} parent=0 // pred_fallthru
    _

// kernel: _lambda_.25
$region0: #{_lambda_.25}
  #allocation0 [shape = 'u32[]', space=smem, size = 0x4, offset = 0x4, fixed_abs, tag = 'smem constant byte address 0x4 - core index']
  #allocation1 [shape = 'u32[144,128]{1,0:T(1,128)}', space=vmem, size = 0x12000, scoped, tag = 'internal scratch']
  %s0 = inlined_call_operand.vmem [shape: bf16[512,72], index: 0, kind: input, shape index: {}]
  %s1 = inlined_call_operand.vmem [shape: bf16[72,8], index: 1, kind: input, shape index: {}]
  %s2 = inlined_call_operand.vmem [shape: f32[1,8], index: 2, kind: input, shape index: {}]
  %s3 = inlined_call_operand.vmem [shape: f32[1,8], index: 3, kind: input, shape index: {}]
  %s4 = inlined_call_operand.vmem [shape: f32[512,8], index: 4, kind: output, shape index: {}]
  %s5 = sld [smem:[#allocation0]]
  $region26: #{_lambda_.25} parent=0
    _
  %s7 = ssub.s32 1, %s5
  %s8 = scalar_select 0, %s7, %s5
  // Predicated region
  $region2: #{_lambda_.25} parent=0 // pred_check
    _
  $region3: #{_lambda_.25} parent=0 // pred_check_branch
    %10 = sbr.rel (0) target = $region5
  $region4: #{_lambda_.25} parent=0 // pred_region
    _
  $region5: #{_lambda_.25} parent=0 // pred_fallthru
    _
  // Predicated region
  $region6: #{_lambda_.25} parent=0 // pred_check
    _
  $region7: #{_lambda_.25} parent=0 // pred_check_branch
    %12 = sbr.rel (0) target = $region9
  $region8: #{_lambda_.25} parent=0 // pred_region
    _
  $region9: #{_lambda_.25} parent=0 // pred_fallthru
    _
  // Predicated region
  $region10: #{_lambda_.25} parent=0 // pred_check
    _
  $region11: #{_lambda_.25} parent=0 // pred_check_branch
    %14 = sbr.rel (0) target = $region13
  $region12: #{_lambda_.25} parent=0 // pred_region
    _
  $region13: #{_lambda_.25} parent=0 // pred_fallthru
    _
  // Predicated region
  $region14: #{_lambda_.25} parent=0 // pred_check
    _
  $region15: #{_lambda_.25} parent=0 // pred_check_branch
    %16 = sbr.rel (0) target = $region17
  $region16: #{_lambda_.25} parent=0 // pred_region
    _
  $region17: #{_lambda_.25} parent=0 // pred_fallthru
    _
  %v18 = vld [vmem:[%s0] sm:$0xf]
  %v19 = vld [vmem:[%s0 + $0x4] sm:$0xf]
  %v20 = vld [vmem:[%s0 + $0x8] sm:$0xf]
  %v21 = vld [vmem:[%s0 + $0xc] sm:$0xf]
  %v22 = vld [vmem:[%s0 + $0x10] sm:$0xf]
  %v23 = vld [vmem:[%s0 + $0x14] sm:$0xf]
  %v24 = vld [vmem:[%s0 + $0x18] sm:$0xf]
  %v25 = vld [vmem:[%s0 + $0x1c] sm:$0xf]
  %v26 = vld [vmem:[%s0 + $0x20] sm:$0xf]
  %v27 = vld [vmem:[%s0 + $0x24] sm:$0xf]
  %v28 = vld [vmem:[%s0 + $0x28] sm:$0xf]
  %v29 = vld [vmem:[%s0 + $0x2c] sm:$0xf]
  %v30 = vld [vmem:[%s0 + $0x30] sm:$0xf]
  %v31 = vld [vmem:[%s0 + $0x34] sm:$0xf]
  %v32 = vld [vmem:[%s0 + $0x38] sm:$0xf]
  %v33 = vld [vmem:[%s0 + $0x3c] sm:$0xf]
  %v34 = vld [vmem:[%s0 + $0x40] sm:$0xf]
  %v35 = vld [vmem:[%s0 + $0x44] sm:$0xf]
  %v36 = vld [vmem:[%s0 + $0x48] sm:$0xf]
  %v37 = vld [vmem:[%s0 + $0x4c] sm:$0xf]
  %v38 = vld [vmem:[%s0 + $0x50] sm:$0xf]
  %v39 = vld [vmem:[%s0 + $0x54] sm:$0xf]
  %v40 = vld [vmem:[%s0 + $0x58] sm:$0xf]
  %v41 = vld [vmem:[%s0 + $0x5c] sm:$0xf]
  %v42 = vld [vmem:[%s0 + $0x60] sm:$0xf]
  %v43 = vld [vmem:[%s0 + $0x64] sm:$0xf]
  %v44 = vld [vmem:[%s0 + $0x68] sm:$0xf]
  %v45 = vld [vmem:[%s0 + $0x6c] sm:$0xf]
  %v46 = vld [vmem:[%s0 + $0x70] sm:$0xf]
  %v47 = vld [vmem:[%s0 + $0x74] sm:$0xf]
  %v48 = vld [vmem:[%s0 + $0x78] sm:$0xf]
  %v49 = vld [vmem:[%s0 + $0x7c] sm:$0xf]
  %v50 = vld [vmem:[%s0 + $0x80] sm:$0xf]
  %v51 = vld [vmem:[%s0 + $0x84] sm:$0xf]
  %v52 = vld [vmem:[%s0 + $0x88] sm:$0xf]
  %v53 = vld [vmem:[%s0 + $0x8c] sm:$0xf]
  %v54 = vld [vmem:[%s0 + $0x90] sm:$0xf]
  %v55 = vld [vmem:[%s0 + $0x94] sm:$0xf]
  %v56 = vld [vmem:[%s0 + $0x98] sm:$0xf]
  %v57 = vld [vmem:[%s0 + $0x9c] sm:$0xf]
  %v58 = vld [vmem:[%s0 + $0xa0] sm:$0xf]
  %v59 = vld [vmem:[%s0 + $0xa4] sm:$0xf]
  %v60 = vld [vmem:[%s0 + $0xa8] sm:$0xf]
  %v61 = vld [vmem:[%s0 + $0xac] sm:$0xf]
  %v62 = vld [vmem:[%s0 + $0xb0] sm:$0xf]
  %v63 = vld [vmem:[%s0 + $0xb4] sm:$0xf]
  %v64 = vld [vmem:[%s0 + $0xb8] sm:$0xf]
  %v65 = vld [vmem:[%s0 + $0xbc] sm:$0xf]
  %v66 = vld [vmem:[%s0 + $0xc0] sm:$0xf]
  %v67 = vld [vmem:[%s0 + $0xc4] sm:$0xf]
  %v68 = vld [vmem:[%s0 + $0xc8] sm:$0xf]
  %v69 = vld [vmem:[%s0 + $0xcc] sm:$0xf]
  %v70 = vld [vmem:[%s0 + $0xd0] sm:$0xf]
  %v71 = vld [vmem:[%s0 + $0xd4] sm:$0xf]
  %v72 = vld [vmem:[%s0 + $0xd8] sm:$0xf]
  %v73 = vld [vmem:[%s0 + $0xdc] sm:$0xf]
  %v74 = vld [vmem:[%s0 + $0xe0] sm:$0xf]
  %v75 = vld [vmem:[%s0 + $0xe4] sm:$0xf]
  %v76 = vld [vmem:[%s0 + $0xe8] sm:$0xf]
  %v77 = vld [vmem:[%s0 + $0xec] sm:$0xf]
  %v78 = vld [vmem:[%s0 + $0xf0] sm:$0xf]
  %v79 = vld [vmem:[%s0 + $0xf4] sm:$0xf]
  %v80 = vld [vmem:[%s0 + $0xf8] sm:$0xf]
  %v81 = vld [vmem:[%s0 + $0xfc] sm:$0xf]
  %v82 = vld [vmem:[%s1] sm:$0xf]
  %v83 = vld [vmem:[%s1 + $0x4] sm:$0xf]
  %v84 = vld [vmem:[%s1 + $0x8] sm:$0xf]
  %v85 = vld [vmem:[%s1 + $0xc] sm:$0xf]
  %v86 = vld [vmem:[%s1 + $0x10] sm:$0xf]
  %v87 = vld [vmem:[%s1 + $0x14] sm:$0xf]
  %v88 = vld [vmem:[%s1 + $0x18] sm:$0xf]
  %v89 = vld [vmem:[%s1 + $0x1c] sm:$0xf]
  %v90 = vld [vmem:[%s1 + $0x20] sm:$0xf]
  %v155 = vunpack.c.l.b16 %v18
  %v156 = vunpack.c.l.b16 %v19
  %v157 = vunpack.c.l.b16 %v20
  %v158 = vunpack.c.l.b16 %v21
  %v159 = vunpack.c.l.b16 %v22
  %v160 = vunpack.c.l.b16 %v23
  %v161 = vunpack.c.l.b16 %v24
  %v162 = vunpack.c.l.b16 %v25
  %v163 = vunpack.c.l.b16 %v26
  %v164 = vunpack.c.l.b16 %v27
  %v165 = vunpack.c.l.b16 %v28
  %v166 = vunpack.c.l.b16 %v29
  %v167 = vunpack.c.l.b16 %v30
  %v168 = vunpack.c.l.b16 %v31
  %v169 = vunpack.c.l.b16 %v32
  %v170 = vunpack.c.l.b16 %v33
  %v171 = vunpack.c.l.b16 %v34
  %v172 = vunpack.c.l.b16 %v35
  %v173 = vunpack.c.l.b16 %v36
  %v174 = vunpack.c.l.b16 %v37
  %v175 = vunpack.c.l.b16 %v38
  %v176 = vunpack.c.l.b16 %v39
  %v177 = vunpack.c.l.b16 %v40
  %v178 = vunpack.c.l.b16 %v41
  %v179 = vunpack.c.l.b16 %v42
  %v180 = vunpack.c.l.b16 %v43
  %v181 = vunpack.c.l.b16 %v44
  %v182 = vunpack.c.l.b16 %v45
  %v183 = vunpack.c.l.b16 %v46
  %v184 = vunpack.c.l.b16 %v47
  %v185 = vunpack.c.l.b16 %v48
  %v186 = vunpack.c.l.b16 %v49
  %v187 = vunpack.c.l.b16 %v50
  %v188 = vunpack.c.l.b16 %v51
  %v189 = vunpack.c.l.b16 %v52
  %v190 = vunpack.c.l.b16 %v53
  %v191 = vunpack.c.l.b16 %v54
  %v192 = vunpack.c.l.b16 %v55
  %v193 = vunpack.c.l.b16 %v56
  %v194 = vunpack.c.l.b16 %v57
  %v195 = vunpack.c.l.b16 %v58
  %v196 = vunpack.c.l.b16 %v59
  %v197 = vunpack.c.l.b16 %v60
  %v198 = vunpack.c.l.b16 %v61
  %v199 = vunpack.c.l.b16 %v62
  %v200 = vunpack.c.l.b16 %v63
  %v201 = vunpack.c.l.b16 %v64
  %v202 = vunpack.c.l.b16 %v65
  %v203 = vunpack.c.l.b16 %v66
  %v204 = vunpack.c.l.b16 %v67
  %v205 = vunpack.c.l.b16 %v68
  %v206 = vunpack.c.l.b16 %v69
  %v207 = vunpack.c.l.b16 %v70
  %v208 = vunpack.c.l.b16 %v71
  %v209 = vunpack.c.l.b16 %v72
  %v210 = vunpack.c.l.b16 %v73
  %v211 = vunpack.c.l.b16 %v74
  %v212 = vunpack.c.l.b16 %v75
  %v213 = vunpack.c.l.b16 %v76
  %v214 = vunpack.c.l.b16 %v77
  %v215 = vunpack.c.l.b16 %v78
  %v216 = vunpack.c.l.b16 %v79
  %v217 = vunpack.c.l.b16 %v80
  %v218 = vunpack.c.l.b16 %v81
  %v219 = vpack.c.b16 %v156, %v155
  %v220 = vpack.c.b16 %v158, %v157
  %v221 = vpack.c.b16 %v160, %v159
  %v222 = vpack.c.b16 %v162, %v161
  %v223 = vpack.c.b16 %v164, %v163
  %v224 = vpack.c.b16 %v166, %v165
  %v225 = vpack.c.b16 %v168, %v167
  %v226 = vpack.c.b16 %v170, %v169
  %v227 = vpack.c.b16 %v172, %v171
  %v228 = vpack.c.b16 %v174, %v173
  %v229 = vpack.c.b16 %v176, %v175
  %v230 = vpack.c.b16 %v178, %v177
  %v231 = vpack.c.b16 %v180, %v179
  %v232 = vpack.c.b16 %v182, %v181
  %v233 = vpack.c.b16 %v184, %v183
  %v234 = vpack.c.b16 %v186, %v185
  %v235 = vpack.c.b16 %v188, %v187
  %v236 = vpack.c.b16 %v190, %v189
  %v237 = vpack.c.b16 %v192, %v191
  %v238 = vpack.c.b16 %v194, %v193
  %v239 = vpack.c.b16 %v196, %v195
  %v240 = vpack.c.b16 %v198, %v197
  %v241 = vpack.c.b16 %v200, %v199
  %v242 = vpack.c.b16 %v202, %v201
  %v243 = vpack.c.b16 %v204, %v203
  %v244 = vpack.c.b16 %v206, %v205
  %v245 = vpack.c.b16 %v208, %v207
  %v246 = vpack.c.b16 %v210, %v209
  %v247 = vpack.c.b16 %v212, %v211
  %v248 = vpack.c.b16 %v214, %v213
  %v249 = vpack.c.b16 %v216, %v215
  %v250 = vpack.c.b16 %v218, %v217
  %v260 = vunpack.c.l.b16 %v82
  %v261 = vunpack.c.l.b16 %v83
  %v262 = vunpack.c.l.b16 %v84
  %v263 = vunpack.c.l.b16 %v85
  %v264 = vunpack.c.l.b16 %v86
  %v265 = vunpack.c.l.b16 %v87
  %v266 = vunpack.c.l.b16 %v88
  %v267 = vunpack.c.l.b16 %v89
  %v268 = vunpack.c.l.b16 %v90
  %v269 = vpack.c.b16 %v261, %v260
  %v270 = vpack.c.b16 %v263, %v262
  %v271 = vpack.c.b16 %v265, %v264
  %v272 = vpack.c.b16 %v267, %v266
  %v273 = vpack.c.b16 %v268, %v268
  %vm278 = vcmask 588800
  %v280 = vsel %vm278, %v219, 0
  %v283 = vsel %vm278, %v220, 0
  %v286 = vsel %vm278, %v221, 0
  %v289 = vsel %vm278, %v222, 0
  %v292 = vsel %vm278, %v223, 0
  %v295 = vsel %vm278, %v224, 0
  %v298 = vsel %vm278, %v225, 0
  %v301 = vsel %vm278, %v226, 0
  %v304 = vsel %vm278, %v227, 0
  %v307 = vsel %vm278, %v228, 0
  %v310 = vsel %vm278, %v229, 0
  %v313 = vsel %vm278, %v230, 0
  %v316 = vsel %vm278, %v231, 0
  %v319 = vsel %vm278, %v232, 0
  %v322 = vsel %vm278, %v233, 0
  %v325 = vsel %vm278, %v234, 0
  %v328 = vsel %vm278, %v235, 0
  %v331 = vsel %vm278, %v236, 0
  %v334 = vsel %vm278, %v237, 0
  %v337 = vsel %vm278, %v238, 0
  %v340 = vsel %vm278, %v239, 0
  %v343 = vsel %vm278, %v240, 0
  %v346 = vsel %vm278, %v241, 0
  %v349 = vsel %vm278, %v242, 0
  %v352 = vsel %vm278, %v243, 0
  %v355 = vsel %vm278, %v244, 0
  %v358 = vsel %vm278, %v245, 0
  %v361 = vsel %vm278, %v246, 0
  %v364 = vsel %vm278, %v247, 0
  %v367 = vsel %vm278, %v248, 0
  %v370 = vsel %vm278, %v249, 0
  %v373 = vsel %vm278, %v250, 0
  %vm375 = vcmask 1043456
  %v377 = vsel %vm375, %v273, 0
  %379 = vmatprep.subr.bf16.mxu0 0
  %380 = vmatpush1.bf16.msra.mxu0 %v269
  %381 = vmatprep.subr.bf16.mxu0 0
  %382 = vmatpush1.bf16.msra.mxu0 %v270
  %383 = vmatprep.subr.bf16.mxu0 0
  %384 = vmatpush1.bf16.msra.mxu0 %v271
  %385 = vmatprep.subr.bf16.mxu0 0
  %386 = vmatpush1.bf16.msra.mxu0 %v272
  %387 = vmatprep.subr.bf16.mxu0 0
  %388 = vmatpush1.bf16.msra.mxu0 %v377
  %389 = vmatprep.subr.bf16.mxu0 0
  %390 = vmatpush1.bf16.msra.mxu0 0
  %391 = vmatprep.subr.bf16.mxu0 0
  %392 = vmatpush1.bf16.msra.mxu0 0
  %393 = vmatprep.subr.bf16.mxu0 0
  %394 = vmatpush1.bf16.msra.mxu0 0
  %395 = vmatprep.subr.bf16.mxu0 0
  %396 = vmatpush1.bf16.msra.mxu0 0
  %397 = vmatprep.subr.bf16.mxu0 0
  %398 = vmatpush1.bf16.msra.mxu0 0
  %399 = vmatprep.subr.bf16.mxu0 0
  %400 = vmatpush1.bf16.msra.mxu0 0
  %401 = vmatprep.subr.bf16.mxu0 0
  %402 = vmatpush1.bf16.msra.mxu0 0
  %403 = vmatprep.subr.bf16.mxu0 0
  %404 = vmatpush1.bf16.msra.mxu0 0
  %405 = vmatprep.subr.bf16.mxu0 0
  %406 = vmatpush1.bf16.msra.mxu0 0
  %407 = vmatprep.subr.bf16.mxu0 0
  %408 = vmatpush1.bf16.msra.mxu0 0
  %409 = vmatprep.subr.bf16.mxu0 0
  %410 = vmatpush1.bf16.msra.mxu0 0
  %411 = vmatprep.mubr.bf16.mxu0 0
  %412 = vmatmul.mubr.bf16.gmra.mrb[0].mxu0 %v280
  %v413 = vpop.f32.mrb[0].mxu0
  %v414 = vadd.f32 0.0, %v413
  %v415 = vpop.f32.mrb[0].mxu0
  %v416 = vpop.f32.mrb[0].mxu0
  %v417 = vadd.f32 0.0, %v416
  %v418 = vpop.f32.mrb[0].mxu0
  %419 = vmatprep.mubr.bf16.mxu0 0
  %420 = vmatmul.mubr.bf16.gmra.mrb[0].mxu0 %v283
  %v421 = vpop.f32.mrb[0].mxu0
  %v422 = vadd.f32 0.0, %v421
  %v423 = vpop.f32.mrb[0].mxu0
  %v424 = vpop.f32.mrb[0].mxu0
  %v425 = vadd.f32 0.0, %v424
  %v426 = vpop.f32.mrb[0].mxu0
  %427 = vmatprep.mubr.bf16.mxu0 0
  %428 = vmatmul.mubr.bf16.gmra.mrb[0].mxu0 %v286
  %v429 = vpop.f32.mrb[0].mxu0
  %v430 = vadd.f32 0.0, %v429
  %v431 = vpop.f32.mrb[0].mxu0
  %v432 = vpop.f32.mrb[0].mxu0
  %v433 = vadd.f32 0.0, %v432
  %v434 = vpop.f32.mrb[0].mxu0
  %435 = vmatprep.mubr.bf16.mxu0 0
  %436 = vmatmul.mubr.bf16.gmra.mrb[0].mxu0 %v289
  %v437 = vpop.f32.mrb[0].mxu0
  %v438 = vadd.f32 0.0, %v437
  %v439 = vpop.f32.mrb[0].mxu0
  %v440 = vpop.f32.mrb[0].mxu0
  %v441 = vadd.f32 0.0, %v440
  %v442 = vpop.f32.mrb[0].mxu0
  %443 = vmatprep.mubr.bf16.mxu0 0
  %444 = vmatmul.mubr.bf16.gmra.mrb[0].mxu0 %v292
  %v445 = vpop.f32.mrb[0].mxu0
  %v446 = vadd.f32 0.0, %v445
  %v447 = vpop.f32.mrb[0].mxu0
  %v448 = vpop.f32.mrb[0].mxu0
  %v449 = vadd.f32 0.0, %v448
  %v450 = vpop.f32.mrb[0].mxu0
  %451 = vmatprep.mubr.bf16.mxu0 0
  %452 = vmatmul.mubr.bf16.gmra.mrb[0].mxu0 %v295
  %v453 = vpop.f32.mrb[0].mxu0
  %v454 = vadd.f32 0.0, %v453
  %v455 = vpop.f32.mrb[0].mxu0
  %v456 = vpop.f32.mrb[0].mxu0
  %v457 = vadd.f32 0.0, %v456
  %v458 = vpop.f32.mrb[0].mxu0
  %459 = vmatprep.mubr.bf16.mxu0 0
  %460 = vmatmul.mubr.bf16.gmra.mrb[0].mxu0 %v298
  %v461 = vpop.f32.mrb[0].mxu0
  %v462 = vadd.f32 0.0, %v461
  %v463 = vpop.f32.mrb[0].mxu0
  %v464 = vpop.f32.mrb[0].mxu0
  %v465 = vadd.f32 0.0, %v464
  %v466 = vpop.f32.mrb[0].mxu0
  %467 = vmatprep.mubr.bf16.mxu0 0
  %468 = vmatmul.mubr.bf16.gmra.mrb[0].mxu0 %v301
  %v469 = vpop.f32.mrb[0].mxu0
  %v470 = vadd.f32 0.0, %v469
  %v471 = vpop.f32.mrb[0].mxu0
  %v472 = vpop.f32.mrb[0].mxu0
  %v473 = vadd.f32 0.0, %v472
  %v474 = vpop.f32.mrb[0].mxu0
  %475 = vmatprep.mubr.bf16.mxu0 0
  %476 = vmatmul.mubr.bf16.gmra.mrb[0].mxu0 %v304
  %v477 = vpop.f32.mrb[0].mxu0
  %v478 = vadd.f32 0.0, %v477
  %v479 = vpop.f32.mrb[0].mxu0
  %v480 = vpop.f32.mrb[0].mxu0
  %v481 = vadd.f32 0.0, %v480
  %v482 = vpop.f32.mrb[0].mxu0
  %483 = vmatprep.mubr.bf16.mxu0 0
  %484 = vmatmul.mubr.bf16.gmra.mrb[0].mxu0 %v307
  %v485 = vpop.f32.mrb[0].mxu0
  %v486 = vadd.f32 0.0, %v485
  %v487 = vpop.f32.mrb[0].mxu0
  %v488 = vpop.f32.mrb[0].mxu0
  %v489 = vadd.f32 0.0, %v488
  %v490 = vpop.f32.mrb[0].mxu0
  %491 = vmatprep.mubr.bf16.mxu0 0
  %492 = vmatmul.mubr.bf16.gmra.mrb[0].mxu0 %v310
  %v493 = vpop.f32.mrb[0].mxu0
  %v494 = vadd.f32 0.0, %v493
  %v495 = vpop.f32.mrb[0].mxu0
  %v496 = vpop.f32.mrb[0].mxu0
  %v497 = vadd.f32 0.0, %v496
  %v498 = vpop.f32.mrb[0].mxu0
  %499 = vmatprep.mubr.bf16.mxu0 0
  %500 = vmatmul.mubr.bf16.gmra.mrb[0].mxu0 %v313
  %v501 = vpop.f32.mrb[0].mxu0
  %v502 = vadd.f32 0.0, %v501
  %v503 = vpop.f32.mrb[0].mxu0
  %v504 = vpop.f32.mrb[0].mxu0
  %v505 = vadd.f32 0.0, %v504
  %v506 = vpop.f32.mrb[0].mxu0
  %507 = vmatprep.mubr.bf16.mxu0 0
  %508 = vmatmul.mubr.bf16.gmra.mrb[0].mxu0 %v316
  %v509 = vpop.f32.mrb[0].mxu0
  %v510 = vadd.f32 0.0, %v509
  %v511 = vpop.f32.mrb[0].mxu0
  %v512 = vpop.f32.mrb[0].mxu0
  %v513 = vadd.f32 0.0, %v512
  %v514 = vpop.f32.mrb[0].mxu0
  %515 = vmatprep.mubr.bf16.mxu0 0
  %516 = vmatmul.mubr.bf16.gmra.mrb[0].mxu0 %v319
  %v517 = vpop.f32.mrb[0].mxu0
  %v518 = vadd.f32 0.0, %v517
  %v519 = vpop.f32.mrb[0].mxu0
  %v520 = vpop.f32.mrb[0].mxu0
  %v521 = vadd.f32 0.0, %v520
  %v522 = vpop.f32.mrb[0].mxu0
  %523 = vmatprep.mubr.bf16.mxu0 0
  %524 = vmatmul.mubr.bf16.gmra.mrb[0].mxu0 %v322
  %v525 = vpop.f32.mrb[0].mxu0
  %v526 = vadd.f32 0.0, %v525
  %v527 = vpop.f32.mrb[0].mxu0
  %v528 = vpop.f32.mrb[0].mxu0
  %v529 = vadd.f32 0.0, %v528
  %v530 = vpop.f32.mrb[0].mxu0
  %531 = vmatprep.mubr.bf16.mxu0 0
  %532 = vmatmul.mubr.bf16.gmra.mrb[0].mxu0 %v325
  %v533 = vpop.f32.mrb[0].mxu0
  %v534 = vadd.f32 0.0, %v533
  %v535 = vpop.f32.mrb[0].mxu0
  %v536 = vpop.f32.mrb[0].mxu0
  %v537 = vadd.f32 0.0, %v536
  %v538 = vpop.f32.mrb[0].mxu0
  %539 = vmatprep.mubr.bf16.mxu0 0
  %540 = vmatmul.mubr.bf16.gmra.mrb[0].mxu0 %v328
  %v541 = vpop.f32.mrb[0].mxu0
  %v542 = vadd.f32 0.0, %v541
  %v543 = vpop.f32.mrb[0].mxu0
  %v544 = vpop.f32.mrb[0].mxu0
  %v545 = vadd.f32 0.0, %v544
  %v546 = vpop.f32.mrb[0].mxu0
  %547 = vmatprep.mubr.bf16.mxu0 0
  %548 = vmatmul.mubr.bf16.gmra.mrb[0].mxu0 %v331
  %v549 = vpop.f32.mrb[0].mxu0
  %v550 = vadd.f32 0.0, %v549
  %v551 = vpop.f32.mrb[0].mxu0
  %v552 = vpop.f32.mrb[0].mxu0
  %v553 = vadd.f32 0.0, %v552
  %v554 = vpop.f32.mrb[0].mxu0
  %555 = vmatprep.mubr.bf16.mxu0 0
  %556 = vmatmul.mubr.bf16.gmra.mrb[0].mxu0 %v334
  %v557 = vpop.f32.mrb[0].mxu0
  %v558 = vadd.f32 0.0, %v557
  %v559 = vpop.f32.mrb[0].mxu0
  %v560 = vpop.f32.mrb[0].mxu0
  %v561 = vadd.f32 0.0, %v560
  %v562 = vpop.f32.mrb[0].mxu0
  %563 = vmatprep.mubr.bf16.mxu0 0
  %564 = vmatmul.mubr.bf16.gmra.mrb[0].mxu0 %v337
  %v565 = vpop.f32.mrb[0].mxu0
  %v566 = vadd.f32 0.0, %v565
  %v567 = vpop.f32.mrb[0].mxu0
  %v568 = vpop.f32.mrb[0].mxu0
  %v569 = vadd.f32 0.0, %v568
  %v570 = vpop.f32.mrb[0].mxu0
  %571 = vmatprep.mubr.bf16.mxu0 0
  %572 = vmatmul.mubr.bf16.gmra.mrb[0].mxu0 %v340
  %v573 = vpop.f32.mrb[0].mxu0
  %v574 = vadd.f32 0.0, %v573
  %v575 = vpop.f32.mrb[0].mxu0
  %v576 = vpop.f32.mrb[0].mxu0
  %v577 = vadd.f32 0.0, %v576
  %v578 = vpop.f32.mrb[0].mxu0
  %579 = vmatprep.mubr.bf16.mxu0 0
  %580 = vmatmul.mubr.bf16.gmra.mrb[0].mxu0 %v343
  %v581 = vpop.f32.mrb[0].mxu0
  %v582 = vadd.f32 0.0, %v581
  %v583 = vpop.f32.mrb[0].mxu0
  %v584 = vpop.f32.mrb[0].mxu0
  %v585 = vadd.f32 0.0, %v584
  %v586 = vpop.f32.mrb[0].mxu0
  %587 = vmatprep.mubr.bf16.mxu0 0
  %588 = vmatmul.mubr.bf16.gmra.mrb[0].mxu0 %v346
  %v589 = vpop.f32.mrb[0].mxu0
  %v590 = vadd.f32 0.0, %v589
  %v591 = vpop.f32.mrb[0].mxu0
  %v592 = vpop.f32.mrb[0].mxu0
  %v593 = vadd.f32 0.0, %v592
  %v594 = vpop.f32.mrb[0].mxu0
  %595 = vmatprep.mubr.bf16.mxu0 0
  %596 = vmatmul.mubr.bf16.gmra.mrb[0].mxu0 %v349
  %v597 = vpop.f32.mrb[0].mxu0
  %v598 = vadd.f32 0.0, %v597
  %v599 = vpop.f32.mrb[0].mxu0
  %v600 = vpop.f32.mrb[0].mxu0
  %v601 = vadd.f32 0.0, %v600
  %v602 = vpop.f32.mrb[0].mxu0
  %603 = vmatprep.mubr.bf16.mxu0 0
  %604 = vmatmul.mubr.bf16.gmra.mrb[0].mxu0 %v352
  %v605 = vpop.f32.mrb[0].mxu0
  %v606 = vadd.f32 0.0, %v605
  %v607 = vpop.f32.mrb[0].mxu0
  %v608 = vpop.f32.mrb[0].mxu0
  %v609 = vadd.f32 0.0, %v608
  %v610 = vpop.f32.mrb[0].mxu0
  %611 = vmatprep.mubr.bf16.mxu0 0
  %612 = vmatmul.mubr.bf16.gmra.mrb[0].mxu0 %v355
  %v613 = vpop.f32.mrb[0].mxu0
  %v614 = vadd.f32 0.0, %v613
  %v615 = vpop.f32.mrb[0].mxu0
  %v616 = vpop.f32.mrb[0].mxu0
  %v617 = vadd.f32 0.0, %v616
  %v618 = vpop.f32.mrb[0].mxu0
  %619 = vmatprep.mubr.bf16.mxu0 0
  %620 = vmatmul.mubr.bf16.gmra.mrb[0].mxu0 %v358
  %v621 = vpop.f32.mrb[0].mxu0
  %v622 = vadd.f32 0.0, %v621
  %v623 = vpop.f32.mrb[0].mxu0
  %v624 = vpop.f32.mrb[0].mxu0
  %v625 = vadd.f32 0.0, %v624
  %v626 = vpop.f32.mrb[0].mxu0
  %627 = vmatprep.mubr.bf16.mxu0 0
  %628 = vmatmul.mubr.bf16.gmra.mrb[0].mxu0 %v361
  %v629 = vpop.f32.mrb[0].mxu0
  %v630 = vadd.f32 0.0, %v629
  %v631 = vpop.f32.mrb[0].mxu0
  %v632 = vpop.f32.mrb[0].mxu0
  %v633 = vadd.f32 0.0, %v632
  %v634 = vpop.f32.mrb[0].mxu0
  %635 = vmatprep.mubr.bf16.mxu0 0
  %636 = vmatmul.mubr.bf16.gmra.mrb[0].mxu0 %v364
  %v637 = vpop.f32.mrb[0].mxu0
  %v638 = vadd.f32 0.0, %v637
  %v639 = vpop.f32.mrb[0].mxu0
  %v640 = vpop.f32.mrb[0].mxu0
  %v641 = vadd.f32 0.0, %v640
  %v642 = vpop.f32.mrb[0].mxu0
  %643 = vmatprep.mubr.bf16.mxu0 0
  %644 = vmatmul.mubr.bf16.gmra.mrb[0].mxu0 %v367
  %v645 = vpop.f32.mrb[0].mxu0
  %v646 = vadd.f32 0.0, %v645
  %v647 = vpop.f32.mrb[0].mxu0
  %v648 = vpop.f32.mrb[0].mxu0
  %v649 = vadd.f32 0.0, %v648
  %v650 = vpop.f32.mrb[0].mxu0
  %651 = vmatprep.mubr.bf16.mxu0 0
  %652 = vmatmul.mubr.bf16.gmra.mrb[0].mxu0 %v370
  %v653 = vpop.f32.mrb[0].mxu0
  %v654 = vadd.f32 0.0, %v653
  %v655 = vpop.f32.mrb[0].mxu0
  %v656 = vpop.f32.mrb[0].mxu0
  %v657 = vadd.f32 0.0, %v656
  %v658 = vpop.f32.mrb[0].mxu0
  %659 = vmatprep.mubr.bf16.mxu0 0
  %660 = vmatmul.mubr.bf16.gmra.mrb[0].mxu0 %v373
  %v661 = vpop.f32.mrb[0].mxu0
  %v662 = vadd.f32 0.0, %v661
  %v663 = vpop.f32.mrb[0].mxu0
  %v664 = vpop.f32.mrb[0].mxu0
  %v665 = vadd.f32 0.0, %v664
  %v666 = vpop.f32.mrb[0].mxu0
  %667 = vdwg.mxu0
  %v668 = vld [vmem:[%s2] sm:$0x1]
  %v670 = vlaneseq
  %v671 = vshrl.u32 %v670, 7
  %v672 = vsub.s32 0, %v671
  %v673 = vrot.slane %v668, %v672
  %v675 = vmul.f32 %v414, %v673
  %v676 = vmul.f32 %v417, %v673
  %v677 = vmul.f32 %v422, %v673
  %v678 = vmul.f32 %v425, %v673
  %v679 = vmul.f32 %v430, %v673
  %v680 = vmul.f32 %v433, %v673
  %v681 = vmul.f32 %v438, %v673
  %v682 = vmul.f32 %v441, %v673
  %v683 = vmul.f32 %v446, %v673
  %v684 = vmul.f32 %v449, %v673
  %v685 = vmul.f32 %v454, %v673
  %v686 = vmul.f32 %v457, %v673
  %v687 = vmul.f32 %v462, %v673
  %v688 = vmul.f32 %v465, %v673
  %v689 = vmul.f32 %v470, %v673
  %v690 = vmul.f32 %v473, %v673
  %v691 = vmul.f32 %v478, %v673
  %v692 = vmul.f32 %v481, %v673
  %v693 = vmul.f32 %v486, %v673
  %v694 = vmul.f32 %v489, %v673
  %v695 = vmul.f32 %v494, %v673
  %v696 = vmul.f32 %v497, %v673
  %v697 = vmul.f32 %v502, %v673
  %v698 = vmul.f32 %v505, %v673
  %v699 = vmul.f32 %v510, %v673
  %v700 = vmul.f32 %v513, %v673
  %v701 = vmul.f32 %v518, %v673
  %v702 = vmul.f32 %v521, %v673
  %v703 = vmul.f32 %v526, %v673
  %v704 = vmul.f32 %v529, %v673
  %v705 = vmul.f32 %v534, %v673
  %v706 = vmul.f32 %v537, %v673
  %v707 = vmul.f32 %v542, %v673
  %v708 = vmul.f32 %v545, %v673
  %v709 = vmul.f32 %v550, %v673
  %v710 = vmul.f32 %v553, %v673
  %v711 = vmul.f32 %v558, %v673
  %v712 = vmul.f32 %v561, %v673
  %v713 = vmul.f32 %v566, %v673
  %v714 = vmul.f32 %v569, %v673
  %v715 = vmul.f32 %v574, %v673
  %v716 = vmul.f32 %v577, %v673
  %v717 = vmul.f32 %v582, %v673
  %v718 = vmul.f32 %v585, %v673
  %v719 = vmul.f32 %v590, %v673
  %v720 = vmul.f32 %v593, %v673
  %v721 = vmul.f32 %v598, %v673
  %v722 = vmul.f32 %v601, %v673
  %v723 = vmul.f32 %v606, %v673
  %v724 = vmul.f32 %v609, %v673
  %v725 = vmul.f32 %v614, %v673
  %v726 = vmul.f32 %v617, %v673
  %v727 = vmul.f32 %v622, %v673
  %v728 = vmul.f32 %v625, %v673
  %v729 = vmul.f32 %v630, %v673
  %v730 = vmul.f32 %v633, %v673
  %v731 = vmul.f32 %v638, %v673
  %v732 = vmul.f32 %v641, %v673
  %v733 = vmul.f32 %v646, %v673
  %v734 = vmul.f32 %v649, %v673
  %v735 = vmul.f32 %v654, %v673
  %v736 = vmul.f32 %v657, %v673
  %v737 = vmul.f32 %v662, %v673
  %v738 = vmul.f32 %v665, %v673
  %v739 = vld [vmem:[%s3] sm:$0x1]
  %v741 = vlaneseq
  %v742 = vshrl.u32 %v741, 7
  %v743 = vsub.s32 0, %v742
  %v744 = vrot.slane %v739, %v743
  %v746 = vadd.f32 %v675, %v744
  %v747 = vadd.f32 %v676, %v744
  %v748 = vadd.f32 %v677, %v744
  %v749 = vadd.f32 %v678, %v744
  %v750 = vadd.f32 %v679, %v744
  %v751 = vadd.f32 %v680, %v744
  %v752 = vadd.f32 %v681, %v744
  %v753 = vadd.f32 %v682, %v744
  %v754 = vadd.f32 %v683, %v744
  %v755 = vadd.f32 %v684, %v744
  %v756 = vadd.f32 %v685, %v744
  %v757 = vadd.f32 %v686, %v744
  %v758 = vadd.f32 %v687, %v744
  %v759 = vadd.f32 %v688, %v744
  %v760 = vadd.f32 %v689, %v744
  %v761 = vadd.f32 %v690, %v744
  %v762 = vadd.f32 %v691, %v744
  %v763 = vadd.f32 %v692, %v744
  %v764 = vadd.f32 %v693, %v744
  %v765 = vadd.f32 %v694, %v744
  %v766 = vadd.f32 %v695, %v744
  %v767 = vadd.f32 %v696, %v744
  %v768 = vadd.f32 %v697, %v744
  %v769 = vadd.f32 %v698, %v744
  %v770 = vadd.f32 %v699, %v744
  %v771 = vadd.f32 %v700, %v744
  %v772 = vadd.f32 %v701, %v744
  %v773 = vadd.f32 %v702, %v744
  %v774 = vadd.f32 %v703, %v744
  %v775 = vadd.f32 %v704, %v744
  %v776 = vadd.f32 %v705, %v744
  %v777 = vadd.f32 %v706, %v744
  %v778 = vadd.f32 %v707, %v744
  %v779 = vadd.f32 %v708, %v744
  %v780 = vadd.f32 %v709, %v744
  %v781 = vadd.f32 %v710, %v744
  %v782 = vadd.f32 %v711, %v744
  %v783 = vadd.f32 %v712, %v744
  %v784 = vadd.f32 %v713, %v744
  %v785 = vadd.f32 %v714, %v744
  %v786 = vadd.f32 %v715, %v744
  %v787 = vadd.f32 %v716, %v744
  %v788 = vadd.f32 %v717, %v744
  %v789 = vadd.f32 %v718, %v744
  %v790 = vadd.f32 %v719, %v744
  %v791 = vadd.f32 %v720, %v744
  %v792 = vadd.f32 %v721, %v744
  %v793 = vadd.f32 %v722, %v744
  %v794 = vadd.f32 %v723, %v744
  %v795 = vadd.f32 %v724, %v744
  %v796 = vadd.f32 %v725, %v744
  %v797 = vadd.f32 %v726, %v744
  %v798 = vadd.f32 %v727, %v744
  %v799 = vadd.f32 %v728, %v744
  %v800 = vadd.f32 %v729, %v744
  %v801 = vadd.f32 %v730, %v744
  %v802 = vadd.f32 %v731, %v744
  %v803 = vadd.f32 %v732, %v744
  %v804 = vadd.f32 %v733, %v744
  %v805 = vadd.f32 %v734, %v744
  %v806 = vadd.f32 %v735, %v744
  %v807 = vadd.f32 %v736, %v744
  %v808 = vadd.f32 %v737, %v744
  %v809 = vadd.f32 %v738, %v744
  %v810 = vmax.f32 %v746, 0.0
  %v811 = vmax.f32 %v747, 0.0
  %v812 = vmax.f32 %v748, 0.0
  %v813 = vmax.f32 %v749, 0.0
  %v814 = vmax.f32 %v750, 0.0
  %v815 = vmax.f32 %v751, 0.0
  %v816 = vmax.f32 %v752, 0.0
  %v817 = vmax.f32 %v753, 0.0
  %v818 = vmax.f32 %v754, 0.0
  %v819 = vmax.f32 %v755, 0.0
  %v820 = vmax.f32 %v756, 0.0
  %v821 = vmax.f32 %v757, 0.0
  %v822 = vmax.f32 %v758, 0.0
  %v823 = vmax.f32 %v759, 0.0
  %v824 = vmax.f32 %v760, 0.0
  %v825 = vmax.f32 %v761, 0.0
  %v826 = vmax.f32 %v762, 0.0
  %v827 = vmax.f32 %v763, 0.0
  %v828 = vmax.f32 %v764, 0.0
  %v829 = vmax.f32 %v765, 0.0
  %v830 = vmax.f32 %v766, 0.0
  %v831 = vmax.f32 %v767, 0.0
  %v832 = vmax.f32 %v768, 0.0
  %v833 = vmax.f32 %v769, 0.0
  %v834 = vmax.f32 %v770, 0.0
  %v835 = vmax.f32 %v771, 0.0
  %v836 = vmax.f32 %v772, 0.0
  %v837 = vmax.f32 %v773, 0.0
  %v838 = vmax.f32 %v774, 0.0
  %v839 = vmax.f32 %v775, 0.0
  %v840 = vmax.f32 %v776, 0.0
  %v841 = vmax.f32 %v777, 0.0
  %v842 = vmax.f32 %v778, 0.0
  %v843 = vmax.f32 %v779, 0.0
  %v844 = vmax.f32 %v780, 0.0
  %v845 = vmax.f32 %v781, 0.0
  %v846 = vmax.f32 %v782, 0.0
  %v847 = vmax.f32 %v783, 0.0
  %v848 = vmax.f32 %v784, 0.0
  %v849 = vmax.f32 %v785, 0.0
  %v850 = vmax.f32 %v786, 0.0
  %v851 = vmax.f32 %v787, 0.0
  %v852 = vmax.f32 %v788, 0.0
  %v853 = vmax.f32 %v789, 0.0
  %v854 = vmax.f32 %v790, 0.0
  %v855 = vmax.f32 %v791, 0.0
  %v856 = vmax.f32 %v792, 0.0
  %v857 = vmax.f32 %v793, 0.0
  %v858 = vmax.f32 %v794, 0.0
  %v859 = vmax.f32 %v795, 0.0
  %v860 = vmax.f32 %v796, 0.0
  %v861 = vmax.f32 %v797, 0.0
  %v862 = vmax.f32 %v798, 0.0
  %v863 = vmax.f32 %v799, 0.0
  %v864 = vmax.f32 %v800, 0.0
  %v865 = vmax.f32 %v801, 0.0
  %v866 = vmax.f32 %v802, 0.0
  %v867 = vmax.f32 %v803, 0.0
  %v868 = vmax.f32 %v804, 0.0
  %v869 = vmax.f32 %v805, 0.0
  %v870 = vmax.f32 %v806, 0.0
  %v871 = vmax.f32 %v807, 0.0
  %v872 = vmax.f32 %v808, 0.0
  %v873 = vmax.f32 %v809, 0.0
  %vm874 = vcmask 64512
  %875 = vst.msk [vmem:[%s4] sm:$0xff] %vm874, %v810
  %876 = vst.msk [vmem:[%s4 + $0x8] sm:$0xff] %vm874, %v811
  %877 = vst.msk [vmem:[%s4 + $0x10] sm:$0xff] %vm874, %v812
  %878 = vst.msk [vmem:[%s4 + $0x18] sm:$0xff] %vm874, %v813
  %879 = vst.msk [vmem:[%s4 + $0x20] sm:$0xff] %vm874, %v814
  %880 = vst.msk [vmem:[%s4 + $0x28] sm:$0xff] %vm874, %v815
  %881 = vst.msk [vmem:[%s4 + $0x30] sm:$0xff] %vm874, %v816
  %882 = vst.msk [vmem:[%s4 + $0x38] sm:$0xff] %vm874, %v817
  %883 = vst.msk [vmem:[%s4 + $0x40] sm:$0xff] %vm874, %v818
  %884 = vst.msk [vmem:[%s4 + $0x48] sm:$0xff] %vm874, %v819
  %885 = vst.msk [vmem:[%s4 + $0x50] sm:$0xff] %vm874, %v820
  %886 = vst.msk [vmem:[%s4 + $0x58] sm:$0xff] %vm874, %v821
  %887 = vst.msk [vmem:[%s4 + $0x60] sm:$0xff] %vm874, %v822
  %888 = vst.msk [vmem:[%s4 + $0x68] sm:$0xff] %vm874, %v823
  %889 = vst.msk [vmem:[%s4 + $0x70] sm:$0xff] %vm874, %v824
  %890 = vst.msk [vmem:[%s4 + $0x78] sm:$0xff] %vm874, %v825
  %891 = vst.msk [vmem:[%s4 + $0x80] sm:$0xff] %vm874, %v826
  %892 = vst.msk [vmem:[%s4 + $0x88] sm:$0xff] %vm874, %v827
  %893 = vst.msk [vmem:[%s4 + $0x90] sm:$0xff] %vm874, %v828
  %894 = vst.msk [vmem:[%s4 + $0x98] sm:$0xff] %vm874, %v829
  %895 = vst.msk [vmem:[%s4 + $0xa0] sm:$0xff] %vm874, %v830
  %896 = vst.msk [vmem:[%s4 + $0xa8] sm:$0xff] %vm874, %v831
  %897 = vst.msk [vmem:[%s4 + $0xb0] sm:$0xff] %vm874, %v832
  %898 = vst.msk [vmem:[%s4 + $0xb8] sm:$0xff] %vm874, %v833
  %899 = vst.msk [vmem:[%s4 + $0xc0] sm:$0xff] %vm874, %v834
  %900 = vst.msk [vmem:[%s4 + $0xc8] sm:$0xff] %vm874, %v835
  %901 = vst.msk [vmem:[%s4 + $0xd0] sm:$0xff] %vm874, %v836
  %902 = vst.msk [vmem:[%s4 + $0xd8] sm:$0xff] %vm874, %v837
  %903 = vst.msk [vmem:[%s4 + $0xe0] sm:$0xff] %vm874, %v838
  %904 = vst.msk [vmem:[%s4 + $0xe8] sm:$0xff] %vm874, %v839
  %905 = vst.msk [vmem:[%s4 + $0xf0] sm:$0xff] %vm874, %v840
  %906 = vst.msk [vmem:[%s4 + $0xf8] sm:$0xff] %vm874, %v841
  %907 = vst.msk [vmem:[%s4 + $0x100] sm:$0xff] %vm874, %v842
  %908 = vst.msk [vmem:[%s4 + $0x108] sm:$0xff] %vm874, %v843
  %909 = vst.msk [vmem:[%s4 + $0x110] sm:$0xff] %vm874, %v844
  %910 = vst.msk [vmem:[%s4 + $0x118] sm:$0xff] %vm874, %v845
  %911 = vst.msk [vmem:[%s4 + $0x120] sm:$0xff] %vm874, %v846
  %912 = vst.msk [vmem:[%s4 + $0x128] sm:$0xff] %vm874, %v847
  %913 = vst.msk [vmem:[%s4 + $0x130] sm:$0xff] %vm874, %v848
  %914 = vst.msk [vmem:[%s4 + $0x138] sm:$0xff] %vm874, %v849
  %915 = vst.msk [vmem:[%s4 + $0x140] sm:$0xff] %vm874, %v850
  %916 = vst.msk [vmem:[%s4 + $0x148] sm:$0xff] %vm874, %v851
  %917 = vst.msk [vmem:[%s4 + $0x150] sm:$0xff] %vm874, %v852
  %918 = vst.msk [vmem:[%s4 + $0x158] sm:$0xff] %vm874, %v853
  %919 = vst.msk [vmem:[%s4 + $0x160] sm:$0xff] %vm874, %v854
  %920 = vst.msk [vmem:[%s4 + $0x168] sm:$0xff] %vm874, %v855
  %921 = vst.msk [vmem:[%s4 + $0x170] sm:$0xff] %vm874, %v856
  %922 = vst.msk [vmem:[%s4 + $0x178] sm:$0xff] %vm874, %v857
  %923 = vst.msk [vmem:[%s4 + $0x180] sm:$0xff] %vm874, %v858
  %924 = vst.msk [vmem:[%s4 + $0x188] sm:$0xff] %vm874, %v859
  %925 = vst.msk [vmem:[%s4 + $0x190] sm:$0xff] %vm874, %v860
  %926 = vst.msk [vmem:[%s4 + $0x198] sm:$0xff] %vm874, %v861
  %927 = vst.msk [vmem:[%s4 + $0x1a0] sm:$0xff] %vm874, %v862
  %928 = vst.msk [vmem:[%s4 + $0x1a8] sm:$0xff] %vm874, %v863
  %929 = vst.msk [vmem:[%s4 + $0x1b0] sm:$0xff] %vm874, %v864
  %930 = vst.msk [vmem:[%s4 + $0x1b8] sm:$0xff] %vm874, %v865
  %931 = vst.msk [vmem:[%s4 + $0x1c0] sm:$0xff] %vm874, %v866
  %932 = vst.msk [vmem:[%s4 + $0x1c8] sm:$0xff] %vm874, %v867
  %933 = vst.msk [vmem:[%s4 + $0x1d0] sm:$0xff] %vm874, %v868
  %934 = vst.msk [vmem:[%s4 + $0x1d8] sm:$0xff] %vm874, %v869
  %935 = vst.msk [vmem:[%s4 + $0x1e0] sm:$0xff] %vm874, %v870
  %936 = vst.msk [vmem:[%s4 + $0x1e8] sm:$0xff] %vm874, %v871
  %937 = vst.msk [vmem:[%s4 + $0x1f0] sm:$0xff] %vm874, %v872
  %938 = vst.msk [vmem:[%s4 + $0x1f8] sm:$0xff] %vm874, %v873
  // Predicated region
  $region18: #{_lambda_.25} parent=0 // pred_check
    _
  $region19: #{_lambda_.25} parent=0 // pred_check_branch
    %940 = sbr.rel (0) target = $region21
  $region20: #{_lambda_.25} parent=0 // pred_region
    _
  $region21: #{_lambda_.25} parent=0 // pred_fallthru
    _
  // Predicated region
  $region22: #{_lambda_.25} parent=0 // pred_check
    _
  $region23: #{_lambda_.25} parent=0 // pred_check_branch
    %942 = sbr.rel (0) target = $region25
  $region24: #{_lambda_.25} parent=0 // pred_region
    _
  $region25: #{_lambda_.25} parent=0 // pred_fallthru
    _

// kernel: _lambda_.23
$region0: #{_lambda_.23}
  #allocation0 [shape = 'u32[]', space=smem, size = 0x4, offset = 0x4, fixed_abs, tag = 'smem constant byte address 0x4 - core index']
  #allocation1 [shape = 'u32[144,128]{1,0:T(1,128)}', space=vmem, size = 0x12000, scoped, tag = 'internal scratch']
  %s0 = inlined_call_operand.vmem [shape: bf16[512,8], index: 0, kind: input, shape index: {}]
  %s1 = inlined_call_operand.vmem [shape: bf16[8,32], index: 1, kind: input, shape index: {}]
  %s2 = inlined_call_operand.vmem [shape: f32[1,32], index: 2, kind: input, shape index: {}]
  %s3 = inlined_call_operand.vmem [shape: f32[1,32], index: 3, kind: input, shape index: {}]
  %s4 = inlined_call_operand.vmem [shape: f32[512,32], index: 4, kind: output, shape index: {}]
  %s5 = sld [smem:[#allocation0]]
  $region26: #{_lambda_.23} parent=0
    _
  %s7 = ssub.s32 1, %s5
  %s8 = scalar_select 0, %s7, %s5
  // Predicated region
  $region2: #{_lambda_.23} parent=0 // pred_check
    _
  $region3: #{_lambda_.23} parent=0 // pred_check_branch
    %10 = sbr.rel (0) target = $region5
  $region4: #{_lambda_.23} parent=0 // pred_region
    _
  $region5: #{_lambda_.23} parent=0 // pred_fallthru
    _
  // Predicated region
  $region6: #{_lambda_.23} parent=0 // pred_check
    _
  $region7: #{_lambda_.23} parent=0 // pred_check_branch
    %12 = sbr.rel (0) target = $region9
  $region8: #{_lambda_.23} parent=0 // pred_region
    _
  $region9: #{_lambda_.23} parent=0 // pred_fallthru
    _
  // Predicated region
  $region10: #{_lambda_.23} parent=0 // pred_check
    _
  $region11: #{_lambda_.23} parent=0 // pred_check_branch
    %14 = sbr.rel (0) target = $region13
  $region12: #{_lambda_.23} parent=0 // pred_region
    _
  $region13: #{_lambda_.23} parent=0 // pred_fallthru
    _
  // Predicated region
  $region14: #{_lambda_.23} parent=0 // pred_check
    _
  $region15: #{_lambda_.23} parent=0 // pred_check_branch
    %16 = sbr.rel (0) target = $region17
  $region16: #{_lambda_.23} parent=0 // pred_region
    _
  $region17: #{_lambda_.23} parent=0 // pred_fallthru
    _
  %v18 = vld [vmem:[%s0] sm:$0xf]
  %v19 = vld [vmem:[%s0 + $0x4] sm:$0xf]
  %v20 = vld [vmem:[%s0 + $0x8] sm:$0xf]
  %v21 = vld [vmem:[%s0 + $0xc] sm:$0xf]
  %v22 = vld [vmem:[%s0 + $0x10] sm:$0xf]
  %v23 = vld [vmem:[%s0 + $0x14] sm:$0xf]
  %v24 = vld [vmem:[%s0 + $0x18] sm:$0xf]
  %v25 = vld [vmem:[%s0 + $0x1c] sm:$0xf]
  %v26 = vld [vmem:[%s0 + $0x20] sm:$0xf]
  %v27 = vld [vmem:[%s0 + $0x24] sm:$0xf]
  %v28 = vld [vmem:[%s0 + $0x28] sm:$0xf]
  %v29 = vld [vmem:[%s0 + $0x2c] sm:$0xf]
  %v30 = vld [vmem:[%s0 + $0x30] sm:$0xf]
  %v31 = vld [vmem:[%s0 + $0x34] sm:$0xf]
  %v32 = vld [vmem:[%s0 + $0x38] sm:$0xf]
  %v33 = vld [vmem:[%s0 + $0x3c] sm:$0xf]
  %v34 = vld [vmem:[%s0 + $0x40] sm:$0xf]
  %v35 = vld [vmem:[%s0 + $0x44] sm:$0xf]
  %v36 = vld [vmem:[%s0 + $0x48] sm:$0xf]
  %v37 = vld [vmem:[%s0 + $0x4c] sm:$0xf]
  %v38 = vld [vmem:[%s0 + $0x50] sm:$0xf]
  %v39 = vld [vmem:[%s0 + $0x54] sm:$0xf]
  %v40 = vld [vmem:[%s0 + $0x58] sm:$0xf]
  %v41 = vld [vmem:[%s0 + $0x5c] sm:$0xf]
  %v42 = vld [vmem:[%s0 + $0x60] sm:$0xf]
  %v43 = vld [vmem:[%s0 + $0x64] sm:$0xf]
  %v44 = vld [vmem:[%s0 + $0x68] sm:$0xf]
  %v45 = vld [vmem:[%s0 + $0x6c] sm:$0xf]
  %v46 = vld [vmem:[%s0 + $0x70] sm:$0xf]
  %v47 = vld [vmem:[%s0 + $0x74] sm:$0xf]
  %v48 = vld [vmem:[%s0 + $0x78] sm:$0xf]
  %v49 = vld [vmem:[%s0 + $0x7c] sm:$0xf]
  %v50 = vld [vmem:[%s0 + $0x80] sm:$0xf]
  %v51 = vld [vmem:[%s0 + $0x84] sm:$0xf]
  %v52 = vld [vmem:[%s0 + $0x88] sm:$0xf]
  %v53 = vld [vmem:[%s0 + $0x8c] sm:$0xf]
  %v54 = vld [vmem:[%s0 + $0x90] sm:$0xf]
  %v55 = vld [vmem:[%s0 + $0x94] sm:$0xf]
  %v56 = vld [vmem:[%s0 + $0x98] sm:$0xf]
  %v57 = vld [vmem:[%s0 + $0x9c] sm:$0xf]
  %v58 = vld [vmem:[%s0 + $0xa0] sm:$0xf]
  %v59 = vld [vmem:[%s0 + $0xa4] sm:$0xf]
  %v60 = vld [vmem:[%s0 + $0xa8] sm:$0xf]
  %v61 = vld [vmem:[%s0 + $0xac] sm:$0xf]
  %v62 = vld [vmem:[%s0 + $0xb0] sm:$0xf]
  %v63 = vld [vmem:[%s0 + $0xb4] sm:$0xf]
  %v64 = vld [vmem:[%s0 + $0xb8] sm:$0xf]
  %v65 = vld [vmem:[%s0 + $0xbc] sm:$0xf]
  %v66 = vld [vmem:[%s0 + $0xc0] sm:$0xf]
  %v67 = vld [vmem:[%s0 + $0xc4] sm:$0xf]
  %v68 = vld [vmem:[%s0 + $0xc8] sm:$0xf]
  %v69 = vld [vmem:[%s0 + $0xcc] sm:$0xf]
  %v70 = vld [vmem:[%s0 + $0xd0] sm:$0xf]
  %v71 = vld [vmem:[%s0 + $0xd4] sm:$0xf]
  %v72 = vld [vmem:[%s0 + $0xd8] sm:$0xf]
  %v73 = vld [vmem:[%s0 + $0xdc] sm:$0xf]
  %v74 = vld [vmem:[%s0 + $0xe0] sm:$0xf]
  %v75 = vld [vmem:[%s0 + $0xe4] sm:$0xf]
  %v76 = vld [vmem:[%s0 + $0xe8] sm:$0xf]
  %v77 = vld [vmem:[%s0 + $0xec] sm:$0xf]
  %v78 = vld [vmem:[%s0 + $0xf0] sm:$0xf]
  %v79 = vld [vmem:[%s0 + $0xf4] sm:$0xf]
  %v80 = vld [vmem:[%s0 + $0xf8] sm:$0xf]
  %v81 = vld [vmem:[%s0 + $0xfc] sm:$0xf]
  %v82 = vld [vmem:[%s1] sm:$0xf]
  %v147 = vunpack.c.l.b16 %v18
  %v148 = vunpack.c.l.b16 %v19
  %v149 = vunpack.c.l.b16 %v20
  %v150 = vunpack.c.l.b16 %v21
  %v151 = vunpack.c.l.b16 %v22
  %v152 = vunpack.c.l.b16 %v23
  %v153 = vunpack.c.l.b16 %v24
  %v154 = vunpack.c.l.b16 %v25
  %v155 = vunpack.c.l.b16 %v26
  %v156 = vunpack.c.l.b16 %v27
  %v157 = vunpack.c.l.b16 %v28
  %v158 = vunpack.c.l.b16 %v29
  %v159 = vunpack.c.l.b16 %v30
  %v160 = vunpack.c.l.b16 %v31
  %v161 = vunpack.c.l.b16 %v32
  %v162 = vunpack.c.l.b16 %v33
  %v163 = vunpack.c.l.b16 %v34
  %v164 = vunpack.c.l.b16 %v35
  %v165 = vunpack.c.l.b16 %v36
  %v166 = vunpack.c.l.b16 %v37
  %v167 = vunpack.c.l.b16 %v38
  %v168 = vunpack.c.l.b16 %v39
  %v169 = vunpack.c.l.b16 %v40
  %v170 = vunpack.c.l.b16 %v41
  %v171 = vunpack.c.l.b16 %v42
  %v172 = vunpack.c.l.b16 %v43
  %v173 = vunpack.c.l.b16 %v44
  %v174 = vunpack.c.l.b16 %v45
  %v175 = vunpack.c.l.b16 %v46
  %v176 = vunpack.c.l.b16 %v47
  %v177 = vunpack.c.l.b16 %v48
  %v178 = vunpack.c.l.b16 %v49
  %v179 = vunpack.c.l.b16 %v50
  %v180 = vunpack.c.l.b16 %v51
  %v181 = vunpack.c.l.b16 %v52
  %v182 = vunpack.c.l.b16 %v53
  %v183 = vunpack.c.l.b16 %v54
  %v184 = vunpack.c.l.b16 %v55
  %v185 = vunpack.c.l.b16 %v56
  %v186 = vunpack.c.l.b16 %v57
  %v187 = vunpack.c.l.b16 %v58
  %v188 = vunpack.c.l.b16 %v59
  %v189 = vunpack.c.l.b16 %v60
  %v190 = vunpack.c.l.b16 %v61
  %v191 = vunpack.c.l.b16 %v62
  %v192 = vunpack.c.l.b16 %v63
  %v193 = vunpack.c.l.b16 %v64
  %v194 = vunpack.c.l.b16 %v65
  %v195 = vunpack.c.l.b16 %v66
  %v196 = vunpack.c.l.b16 %v67
  %v197 = vunpack.c.l.b16 %v68
  %v198 = vunpack.c.l.b16 %v69
  %v199 = vunpack.c.l.b16 %v70
  %v200 = vunpack.c.l.b16 %v71
  %v201 = vunpack.c.l.b16 %v72
  %v202 = vunpack.c.l.b16 %v73
  %v203 = vunpack.c.l.b16 %v74
  %v204 = vunpack.c.l.b16 %v75
  %v205 = vunpack.c.l.b16 %v76
  %v206 = vunpack.c.l.b16 %v77
  %v207 = vunpack.c.l.b16 %v78
  %v208 = vunpack.c.l.b16 %v79
  %v209 = vunpack.c.l.b16 %v80
  %v210 = vunpack.c.l.b16 %v81
  %v211 = vpack.c.b16 %v148, %v147
  %v212 = vpack.c.b16 %v150, %v149
  %v213 = vpack.c.b16 %v152, %v151
  %v214 = vpack.c.b16 %v154, %v153
  %v215 = vpack.c.b16 %v156, %v155
  %v216 = vpack.c.b16 %v158, %v157
  %v217 = vpack.c.b16 %v160, %v159
  %v218 = vpack.c.b16 %v162, %v161
  %v219 = vpack.c.b16 %v164, %v163
  %v220 = vpack.c.b16 %v166, %v165
  %v221 = vpack.c.b16 %v168, %v167
  %v222 = vpack.c.b16 %v170, %v169
  %v223 = vpack.c.b16 %v172, %v171
  %v224 = vpack.c.b16 %v174, %v173
  %v225 = vpack.c.b16 %v176, %v175
  %v226 = vpack.c.b16 %v178, %v177
  %v227 = vpack.c.b16 %v180, %v179
  %v228 = vpack.c.b16 %v182, %v181
  %v229 = vpack.c.b16 %v184, %v183
  %v230 = vpack.c.b16 %v186, %v185
  %v231 = vpack.c.b16 %v188, %v187
  %v232 = vpack.c.b16 %v190, %v189
  %v233 = vpack.c.b16 %v192, %v191
  %v234 = vpack.c.b16 %v194, %v193
  %v235 = vpack.c.b16 %v196, %v195
  %v236 = vpack.c.b16 %v198, %v197
  %v237 = vpack.c.b16 %v200, %v199
  %v238 = vpack.c.b16 %v202, %v201
  %v239 = vpack.c.b16 %v204, %v203
  %v240 = vpack.c.b16 %v206, %v205
  %v241 = vpack.c.b16 %v208, %v207
  %v242 = vpack.c.b16 %v210, %v209
  %vm243 = vcmask 64512
  %v245 = vsel %vm243, %v211, 0
  %v248 = vsel %vm243, %v212, 0
  %v251 = vsel %vm243, %v213, 0
  %v254 = vsel %vm243, %v214, 0
  %v257 = vsel %vm243, %v215, 0
  %v260 = vsel %vm243, %v216, 0
  %v263 = vsel %vm243, %v217, 0
  %v266 = vsel %vm243, %v218, 0
  %v269 = vsel %vm243, %v219, 0
  %v272 = vsel %vm243, %v220, 0
  %v275 = vsel %vm243, %v221, 0
  %v278 = vsel %vm243, %v222, 0
  %v281 = vsel %vm243, %v223, 0
  %v284 = vsel %vm243, %v224, 0
  %v287 = vsel %vm243, %v225, 0
  %v290 = vsel %vm243, %v226, 0
  %v293 = vsel %vm243, %v227, 0
  %v296 = vsel %vm243, %v228, 0
  %v299 = vsel %vm243, %v229, 0
  %v302 = vsel %vm243, %v230, 0
  %v305 = vsel %vm243, %v231, 0
  %v308 = vsel %vm243, %v232, 0
  %v311 = vsel %vm243, %v233, 0
  %v314 = vsel %vm243, %v234, 0
  %v317 = vsel %vm243, %v235, 0
  %v320 = vsel %vm243, %v236, 0
  %v323 = vsel %vm243, %v237, 0
  %v326 = vsel %vm243, %v238, 0
  %v329 = vsel %vm243, %v239, 0
  %v332 = vsel %vm243, %v240, 0
  %v335 = vsel %vm243, %v241, 0
  %v338 = vsel %vm243, %v242, 0
  %vm340 = vcmask 1043456
  %v342 = vsel %vm340, %v82, 0
  %344 = vmatprep.subr.bf16.mxu0 0
  %345 = vmatpush1.bf16.msra.mxu0 %v342
  %346 = vmatprep.subr.bf16.mxu0 0
  %347 = vmatpush1.bf16.msra.mxu0 0
  %348 = vmatprep.subr.bf16.mxu0 0
  %349 = vmatpush1.bf16.msra.mxu0 0
  %350 = vmatprep.subr.bf16.mxu0 0
  %351 = vmatpush1.bf16.msra.mxu0 0
  %352 = vmatprep.subr.bf16.mxu0 0
  %353 = vmatpush1.bf16.msra.mxu0 0
  %354 = vmatprep.subr.bf16.mxu0 0
  %355 = vmatpush1.bf16.msra.mxu0 0
  %356 = vmatprep.subr.bf16.mxu0 0
  %357 = vmatpush1.bf16.msra.mxu0 0
  %358 = vmatprep.subr.bf16.mxu0 0
  %359 = vmatpush1.bf16.msra.mxu0 0
  %360 = vmatprep.subr.bf16.mxu0 0
  %361 = vmatpush1.bf16.msra.mxu0 0
  %362 = vmatprep.subr.bf16.mxu0 0
  %363 = vmatpush1.bf16.msra.mxu0 0
  %364 = vmatprep.subr.bf16.mxu0 0
  %365 = vmatpush1.bf16.msra.mxu0 0
  %366 = vmatprep.subr.bf16.mxu0 0
  %367 = vmatpush1.bf16.msra.mxu0 0
  %368 = vmatprep.subr.bf16.mxu0 0
  %369 = vmatpush1.bf16.msra.mxu0 0
  %370 = vmatprep.subr.bf16.mxu0 0
  %371 = vmatpush1.bf16.msra.mxu0 0
  %372 = vmatprep.subr.bf16.mxu0 0
  %373 = vmatpush1.bf16.msra.mxu0 0
  %374 = vmatprep.subr.bf16.mxu0 0
  %375 = vmatpush1.bf16.msra.mxu0 0
  %376 = vmatprep.mubr.bf16.mxu0 0
  %377 = vmatmul.mubr.bf16.gmra.mrb[0].mxu0 %v245
  %v378 = vpop.f32.mrb[0].mxu0
  %v379 = vadd.f32 0.0, %v378
  %v380 = vpop.f32.mrb[0].mxu0
  %v381 = vpop.f32.mrb[0].mxu0
  %v382 = vadd.f32 0.0, %v381
  %v383 = vpop.f32.mrb[0].mxu0
  %384 = vmatprep.mubr.bf16.mxu0 0
  %385 = vmatmul.mubr.bf16.gmra.mrb[0].mxu0 %v248
  %v386 = vpop.f32.mrb[0].mxu0
  %v387 = vadd.f32 0.0, %v386
  %v388 = vpop.f32.mrb[0].mxu0
  %v389 = vpop.f32.mrb[0].mxu0
  %v390 = vadd.f32 0.0, %v389
  %v391 = vpop.f32.mrb[0].mxu0
  %392 = vmatprep.mubr.bf16.mxu0 0
  %393 = vmatmul.mubr.bf16.gmra.mrb[0].mxu0 %v251
  %v394 = vpop.f32.mrb[0].mxu0
  %v395 = vadd.f32 0.0, %v394
  %v396 = vpop.f32.mrb[0].mxu0
  %v397 = vpop.f32.mrb[0].mxu0
  %v398 = vadd.f32 0.0, %v397
  %v399 = vpop.f32.mrb[0].mxu0
  %400 = vmatprep.mubr.bf16.mxu0 0
  %401 = vmatmul.mubr.bf16.gmra.mrb[0].mxu0 %v254
  %v402 = vpop.f32.mrb[0].mxu0
  %v403 = vadd.f32 0.0, %v402
  %v404 = vpop.f32.mrb[0].mxu0
  %v405 = vpop.f32.mrb[0].mxu0
  %v406 = vadd.f32 0.0, %v405
  %v407 = vpop.f32.mrb[0].mxu0
  %408 = vmatprep.mubr.bf16.mxu0 0
  %409 = vmatmul.mubr.bf16.gmra.mrb[0].mxu0 %v257
  %v410 = vpop.f32.mrb[0].mxu0
  %v411 = vadd.f32 0.0, %v410
  %v412 = vpop.f32.mrb[0].mxu0
  %v413 = vpop.f32.mrb[0].mxu0
  %v414 = vadd.f32 0.0, %v413
  %v415 = vpop.f32.mrb[0].mxu0
  %416 = vmatprep.mubr.bf16.mxu0 0
  %417 = vmatmul.mubr.bf16.gmra.mrb[0].mxu0 %v260
  %v418 = vpop.f32.mrb[0].mxu0
  %v419 = vadd.f32 0.0, %v418
  %v420 = vpop.f32.mrb[0].mxu0
  %v421 = vpop.f32.mrb[0].mxu0
  %v422 = vadd.f32 0.0, %v421
  %v423 = vpop.f32.mrb[0].mxu0
  %424 = vmatprep.mubr.bf16.mxu0 0
  %425 = vmatmul.mubr.bf16.gmra.mrb[0].mxu0 %v263
  %v426 = vpop.f32.mrb[0].mxu0
  %v427 = vadd.f32 0.0, %v426
  %v428 = vpop.f32.mrb[0].mxu0
  %v429 = vpop.f32.mrb[0].mxu0
  %v430 = vadd.f32 0.0, %v429
  %v431 = vpop.f32.mrb[0].mxu0
  %432 = vmatprep.mubr.bf16.mxu0 0
  %433 = vmatmul.mubr.bf16.gmra.mrb[0].mxu0 %v266
  %v434 = vpop.f32.mrb[0].mxu0
  %v435 = vadd.f32 0.0, %v434
  %v436 = vpop.f32.mrb[0].mxu0
  %v437 = vpop.f32.mrb[0].mxu0
  %v438 = vadd.f32 0.0, %v437
  %v439 = vpop.f32.mrb[0].mxu0
  %440 = vmatprep.mubr.bf16.mxu0 0
  %441 = vmatmul.mubr.bf16.gmra.mrb[0].mxu0 %v269
  %v442 = vpop.f32.mrb[0].mxu0
  %v443 = vadd.f32 0.0, %v442
  %v444 = vpop.f32.mrb[0].mxu0
  %v445 = vpop.f32.mrb[0].mxu0
  %v446 = vadd.f32 0.0, %v445
  %v447 = vpop.f32.mrb[0].mxu0
  %448 = vmatprep.mubr.bf16.mxu0 0
  %449 = vmatmul.mubr.bf16.gmra.mrb[0].mxu0 %v272
  %v450 = vpop.f32.mrb[0].mxu0
  %v451 = vadd.f32 0.0, %v450
  %v452 = vpop.f32.mrb[0].mxu0
  %v453 = vpop.f32.mrb[0].mxu0
  %v454 = vadd.f32 0.0, %v453
  %v455 = vpop.f32.mrb[0].mxu0
  %456 = vmatprep.mubr.bf16.mxu0 0
  %457 = vmatmul.mubr.bf16.gmra.mrb[0].mxu0 %v275
  %v458 = vpop.f32.mrb[0].mxu0
  %v459 = vadd.f32 0.0, %v458
  %v460 = vpop.f32.mrb[0].mxu0
  %v461 = vpop.f32.mrb[0].mxu0
  %v462 = vadd.f32 0.0, %v461
  %v463 = vpop.f32.mrb[0].mxu0
  %464 = vmatprep.mubr.bf16.mxu0 0
  %465 = vmatmul.mubr.bf16.gmra.mrb[0].mxu0 %v278
  %v466 = vpop.f32.mrb[0].mxu0
  %v467 = vadd.f32 0.0, %v466
  %v468 = vpop.f32.mrb[0].mxu0
  %v469 = vpop.f32.mrb[0].mxu0
  %v470 = vadd.f32 0.0, %v469
  %v471 = vpop.f32.mrb[0].mxu0
  %472 = vmatprep.mubr.bf16.mxu0 0
  %473 = vmatmul.mubr.bf16.gmra.mrb[0].mxu0 %v281
  %v474 = vpop.f32.mrb[0].mxu0
  %v475 = vadd.f32 0.0, %v474
  %v476 = vpop.f32.mrb[0].mxu0
  %v477 = vpop.f32.mrb[0].mxu0
  %v478 = vadd.f32 0.0, %v477
  %v479 = vpop.f32.mrb[0].mxu0
  %480 = vmatprep.mubr.bf16.mxu0 0
  %481 = vmatmul.mubr.bf16.gmra.mrb[0].mxu0 %v284
  %v482 = vpop.f32.mrb[0].mxu0
  %v483 = vadd.f32 0.0, %v482
  %v484 = vpop.f32.mrb[0].mxu0
  %v485 = vpop.f32.mrb[0].mxu0
  %v486 = vadd.f32 0.0, %v485
  %v487 = vpop.f32.mrb[0].mxu0
  %488 = vmatprep.mubr.bf16.mxu0 0
  %489 = vmatmul.mubr.bf16.gmra.mrb[0].mxu0 %v287
  %v490 = vpop.f32.mrb[0].mxu0
  %v491 = vadd.f32 0.0, %v490
  %v492 = vpop.f32.mrb[0].mxu0
  %v493 = vpop.f32.mrb[0].mxu0
  %v494 = vadd.f32 0.0, %v493
  %v495 = vpop.f32.mrb[0].mxu0
  %496 = vmatprep.mubr.bf16.mxu0 0
  %497 = vmatmul.mubr.bf16.gmra.mrb[0].mxu0 %v290
  %v498 = vpop.f32.mrb[0].mxu0
  %v499 = vadd.f32 0.0, %v498
  %v500 = vpop.f32.mrb[0].mxu0
  %v501 = vpop.f32.mrb[0].mxu0
  %v502 = vadd.f32 0.0, %v501
  %v503 = vpop.f32.mrb[0].mxu0
  %504 = vmatprep.mubr.bf16.mxu0 0
  %505 = vmatmul.mubr.bf16.gmra.mrb[0].mxu0 %v293
  %v506 = vpop.f32.mrb[0].mxu0
  %v507 = vadd.f32 0.0, %v506
  %v508 = vpop.f32.mrb[0].mxu0
  %v509 = vpop.f32.mrb[0].mxu0
  %v510 = vadd.f32 0.0, %v509
  %v511 = vpop.f32.mrb[0].mxu0
  %512 = vmatprep.mubr.bf16.mxu0 0
  %513 = vmatmul.mubr.bf16.gmra.mrb[0].mxu0 %v296
  %v514 = vpop.f32.mrb[0].mxu0
  %v515 = vadd.f32 0.0, %v514
  %v516 = vpop.f32.mrb[0].mxu0
  %v517 = vpop.f32.mrb[0].mxu0
  %v518 = vadd.f32 0.0, %v517
  %v519 = vpop.f32.mrb[0].mxu0
  %520 = vmatprep.mubr.bf16.mxu0 0
  %521 = vmatmul.mubr.bf16.gmra.mrb[0].mxu0 %v299
  %v522 = vpop.f32.mrb[0].mxu0
  %v523 = vadd.f32 0.0, %v522
  %v524 = vpop.f32.mrb[0].mxu0
  %v525 = vpop.f32.mrb[0].mxu0
  %v526 = vadd.f32 0.0, %v525
  %v527 = vpop.f32.mrb[0].mxu0
  %528 = vmatprep.mubr.bf16.mxu0 0
  %529 = vmatmul.mubr.bf16.gmra.mrb[0].mxu0 %v302
  %v530 = vpop.f32.mrb[0].mxu0
  %v531 = vadd.f32 0.0, %v530
  %v532 = vpop.f32.mrb[0].mxu0
  %v533 = vpop.f32.mrb[0].mxu0
  %v534 = vadd.f32 0.0, %v533
  %v535 = vpop.f32.mrb[0].mxu0
  %536 = vmatprep.mubr.bf16.mxu0 0
  %537 = vmatmul.mubr.bf16.gmra.mrb[0].mxu0 %v305
  %v538 = vpop.f32.mrb[0].mxu0
  %v539 = vadd.f32 0.0, %v538
  %v540 = vpop.f32.mrb[0].mxu0
  %v541 = vpop.f32.mrb[0].mxu0
  %v542 = vadd.f32 0.0, %v541
  %v543 = vpop.f32.mrb[0].mxu0
  %544 = vmatprep.mubr.bf16.mxu0 0
  %545 = vmatmul.mubr.bf16.gmra.mrb[0].mxu0 %v308
  %v546 = vpop.f32.mrb[0].mxu0
  %v547 = vadd.f32 0.0, %v546
  %v548 = vpop.f32.mrb[0].mxu0
  %v549 = vpop.f32.mrb[0].mxu0
  %v550 = vadd.f32 0.0, %v549
  %v551 = vpop.f32.mrb[0].mxu0
  %552 = vmatprep.mubr.bf16.mxu0 0
  %553 = vmatmul.mubr.bf16.gmra.mrb[0].mxu0 %v311
  %v554 = vpop.f32.mrb[0].mxu0
  %v555 = vadd.f32 0.0, %v554
  %v556 = vpop.f32.mrb[0].mxu0
  %v557 = vpop.f32.mrb[0].mxu0
  %v558 = vadd.f32 0.0, %v557
  %v559 = vpop.f32.mrb[0].mxu0
  %560 = vmatprep.mubr.bf16.mxu0 0
  %561 = vmatmul.mubr.bf16.gmra.mrb[0].mxu0 %v314
  %v562 = vpop.f32.mrb[0].mxu0
  %v563 = vadd.f32 0.0, %v562
  %v564 = vpop.f32.mrb[0].mxu0
  %v565 = vpop.f32.mrb[0].mxu0
  %v566 = vadd.f32 0.0, %v565
  %v567 = vpop.f32.mrb[0].mxu0
  %568 = vmatprep.mubr.bf16.mxu0 0
  %569 = vmatmul.mubr.bf16.gmra.mrb[0].mxu0 %v317
  %v570 = vpop.f32.mrb[0].mxu0
  %v571 = vadd.f32 0.0, %v570
  %v572 = vpop.f32.mrb[0].mxu0
  %v573 = vpop.f32.mrb[0].mxu0
  %v574 = vadd.f32 0.0, %v573
  %v575 = vpop.f32.mrb[0].mxu0
  %576 = vmatprep.mubr.bf16.mxu0 0
  %577 = vmatmul.mubr.bf16.gmra.mrb[0].mxu0 %v320
  %v578 = vpop.f32.mrb[0].mxu0
  %v579 = vadd.f32 0.0, %v578
  %v580 = vpop.f32.mrb[0].mxu0
  %v581 = vpop.f32.mrb[0].mxu0
  %v582 = vadd.f32 0.0, %v581
  %v583 = vpop.f32.mrb[0].mxu0
  %584 = vmatprep.mubr.bf16.mxu0 0
  %585 = vmatmul.mubr.bf16.gmra.mrb[0].mxu0 %v323
  %v586 = vpop.f32.mrb[0].mxu0
  %v587 = vadd.f32 0.0, %v586
  %v588 = vpop.f32.mrb[0].mxu0
  %v589 = vpop.f32.mrb[0].mxu0
  %v590 = vadd.f32 0.0, %v589
  %v591 = vpop.f32.mrb[0].mxu0
  %592 = vmatprep.mubr.bf16.mxu0 0
  %593 = vmatmul.mubr.bf16.gmra.mrb[0].mxu0 %v326
  %v594 = vpop.f32.mrb[0].mxu0
  %v595 = vadd.f32 0.0, %v594
  %v596 = vpop.f32.mrb[0].mxu0
  %v597 = vpop.f32.mrb[0].mxu0
  %v598 = vadd.f32 0.0, %v597
  %v599 = vpop.f32.mrb[0].mxu0
  %600 = vmatprep.mubr.bf16.mxu0 0
  %601 = vmatmul.mubr.bf16.gmra.mrb[0].mxu0 %v329
  %v602 = vpop.f32.mrb[0].mxu0
  %v603 = vadd.f32 0.0, %v602
  %v604 = vpop.f32.mrb[0].mxu0
  %v605 = vpop.f32.mrb[0].mxu0
  %v606 = vadd.f32 0.0, %v605
  %v607 = vpop.f32.mrb[0].mxu0
  %608 = vmatprep.mubr.bf16.mxu0 0
  %609 = vmatmul.mubr.bf16.gmra.mrb[0].mxu0 %v332
  %v610 = vpop.f32.mrb[0].mxu0
  %v611 = vadd.f32 0.0, %v610
  %v612 = vpop.f32.mrb[0].mxu0
  %v613 = vpop.f32.mrb[0].mxu0
  %v614 = vadd.f32 0.0, %v613
  %v615 = vpop.f32.mrb[0].mxu0
  %616 = vmatprep.mubr.bf16.mxu0 0
  %617 = vmatmul.mubr.bf16.gmra.mrb[0].mxu0 %v335
  %v618 = vpop.f32.mrb[0].mxu0
  %v619 = vadd.f32 0.0, %v618
  %v620 = vpop.f32.mrb[0].mxu0
  %v621 = vpop.f32.mrb[0].mxu0
  %v622 = vadd.f32 0.0, %v621
  %v623 = vpop.f32.mrb[0].mxu0
  %624 = vmatprep.mubr.bf16.mxu0 0
  %625 = vmatmul.mubr.bf16.gmra.mrb[0].mxu0 %v338
  %v626 = vpop.f32.mrb[0].mxu0
  %v627 = vadd.f32 0.0, %v626
  %v628 = vpop.f32.mrb[0].mxu0
  %v629 = vpop.f32.mrb[0].mxu0
  %v630 = vadd.f32 0.0, %v629
  %v631 = vpop.f32.mrb[0].mxu0
  %632 = vdwg.mxu0
  %v633 = vld [vmem:[%s2] sm:$0x1]
  %v635 = vlaneseq
  %v636 = vshrl.u32 %v635, 7
  %v637 = vsub.s32 0, %v636
  %v638 = vrot.slane %v633, %v637
  %v640 = vmul.f32 %v379, %v638
  %v641 = vmul.f32 %v382, %v638
  %v642 = vmul.f32 %v387, %v638
  %v643 = vmul.f32 %v390, %v638
  %v644 = vmul.f32 %v395, %v638
  %v645 = vmul.f32 %v398, %v638
  %v646 = vmul.f32 %v403, %v638
  %v647 = vmul.f32 %v406, %v638
  %v648 = vmul.f32 %v411, %v638
  %v649 = vmul.f32 %v414, %v638
  %v650 = vmul.f32 %v419, %v638
  %v651 = vmul.f32 %v422, %v638
  %v652 = vmul.f32 %v427, %v638
  %v653 = vmul.f32 %v430, %v638
  %v654 = vmul.f32 %v435, %v638
  %v655 = vmul.f32 %v438, %v638
  %v656 = vmul.f32 %v443, %v638
  %v657 = vmul.f32 %v446, %v638
  %v658 = vmul.f32 %v451, %v638
  %v659 = vmul.f32 %v454, %v638
  %v660 = vmul.f32 %v459, %v638
  %v661 = vmul.f32 %v462, %v638
  %v662 = vmul.f32 %v467, %v638
  %v663 = vmul.f32 %v470, %v638
  %v664 = vmul.f32 %v475, %v638
  %v665 = vmul.f32 %v478, %v638
  %v666 = vmul.f32 %v483, %v638
  %v667 = vmul.f32 %v486, %v638
  %v668 = vmul.f32 %v491, %v638
  %v669 = vmul.f32 %v494, %v638
  %v670 = vmul.f32 %v499, %v638
  %v671 = vmul.f32 %v502, %v638
  %v672 = vmul.f32 %v507, %v638
  %v673 = vmul.f32 %v510, %v638
  %v674 = vmul.f32 %v515, %v638
  %v675 = vmul.f32 %v518, %v638
  %v676 = vmul.f32 %v523, %v638
  %v677 = vmul.f32 %v526, %v638
  %v678 = vmul.f32 %v531, %v638
  %v679 = vmul.f32 %v534, %v638
  %v680 = vmul.f32 %v539, %v638
  %v681 = vmul.f32 %v542, %v638
  %v682 = vmul.f32 %v547, %v638
  %v683 = vmul.f32 %v550, %v638
  %v684 = vmul.f32 %v555, %v638
  %v685 = vmul.f32 %v558, %v638
  %v686 = vmul.f32 %v563, %v638
  %v687 = vmul.f32 %v566, %v638
  %v688 = vmul.f32 %v571, %v638
  %v689 = vmul.f32 %v574, %v638
  %v690 = vmul.f32 %v579, %v638
  %v691 = vmul.f32 %v582, %v638
  %v692 = vmul.f32 %v587, %v638
  %v693 = vmul.f32 %v590, %v638
  %v694 = vmul.f32 %v595, %v638
  %v695 = vmul.f32 %v598, %v638
  %v696 = vmul.f32 %v603, %v638
  %v697 = vmul.f32 %v606, %v638
  %v698 = vmul.f32 %v611, %v638
  %v699 = vmul.f32 %v614, %v638
  %v700 = vmul.f32 %v619, %v638
  %v701 = vmul.f32 %v622, %v638
  %v702 = vmul.f32 %v627, %v638
  %v703 = vmul.f32 %v630, %v638
  %v704 = vld [vmem:[%s3] sm:$0x1]
  %v706 = vlaneseq
  %v707 = vshrl.u32 %v706, 7
  %v708 = vsub.s32 0, %v707
  %v709 = vrot.slane %v704, %v708
  %v711 = vadd.f32 %v640, %v709
  %v712 = vadd.f32 %v641, %v709
  %v713 = vadd.f32 %v642, %v709
  %v714 = vadd.f32 %v643, %v709
  %v715 = vadd.f32 %v644, %v709
  %v716 = vadd.f32 %v645, %v709
  %v717 = vadd.f32 %v646, %v709
  %v718 = vadd.f32 %v647, %v709
  %v719 = vadd.f32 %v648, %v709
  %v720 = vadd.f32 %v649, %v709
  %v721 = vadd.f32 %v650, %v709
  %v722 = vadd.f32 %v651, %v709
  %v723 = vadd.f32 %v652, %v709
  %v724 = vadd.f32 %v653, %v709
  %v725 = vadd.f32 %v654, %v709
  %v726 = vadd.f32 %v655, %v709
  %v727 = vadd.f32 %v656, %v709
  %v728 = vadd.f32 %v657, %v709
  %v729 = vadd.f32 %v658, %v709
  %v730 = vadd.f32 %v659, %v709
  %v731 = vadd.f32 %v660, %v709
  %v732 = vadd.f32 %v661, %v709
  %v733 = vadd.f32 %v662, %v709
  %v734 = vadd.f32 %v663, %v709
  %v735 = vadd.f32 %v664, %v709
  %v736 = vadd.f32 %v665, %v709
  %v737 = vadd.f32 %v666, %v709
  %v738 = vadd.f32 %v667, %v709
  %v739 = vadd.f32 %v668, %v709
  %v740 = vadd.f32 %v669, %v709
  %v741 = vadd.f32 %v670, %v709
  %v742 = vadd.f32 %v671, %v709
  %v743 = vadd.f32 %v672, %v709
  %v744 = vadd.f32 %v673, %v709
  %v745 = vadd.f32 %v674, %v709
  %v746 = vadd.f32 %v675, %v709
  %v747 = vadd.f32 %v676, %v709
  %v748 = vadd.f32 %v677, %v709
  %v749 = vadd.f32 %v678, %v709
  %v750 = vadd.f32 %v679, %v709
  %v751 = vadd.f32 %v680, %v709
  %v752 = vadd.f32 %v681, %v709
  %v753 = vadd.f32 %v682, %v709
  %v754 = vadd.f32 %v683, %v709
  %v755 = vadd.f32 %v684, %v709
  %v756 = vadd.f32 %v685, %v709
  %v757 = vadd.f32 %v686, %v709
  %v758 = vadd.f32 %v687, %v709
  %v759 = vadd.f32 %v688, %v709
  %v760 = vadd.f32 %v689, %v709
  %v761 = vadd.f32 %v690, %v709
  %v762 = vadd.f32 %v691, %v709
  %v763 = vadd.f32 %v692, %v709
  %v764 = vadd.f32 %v693, %v709
  %v765 = vadd.f32 %v694, %v709
  %v766 = vadd.f32 %v695, %v709
  %v767 = vadd.f32 %v696, %v709
  %v768 = vadd.f32 %v697, %v709
  %v769 = vadd.f32 %v698, %v709
  %v770 = vadd.f32 %v699, %v709
  %v771 = vadd.f32 %v700, %v709
  %v772 = vadd.f32 %v701, %v709
  %v773 = vadd.f32 %v702, %v709
  %v774 = vadd.f32 %v703, %v709
  %vm775 = vcmask 261120
  %776 = vst.msk [vmem:[%s4] sm:$0xff] %vm775, %v711
  %777 = vst.msk [vmem:[%s4 + $0x8] sm:$0xff] %vm775, %v712
  %778 = vst.msk [vmem:[%s4 + $0x10] sm:$0xff] %vm775, %v713
  %779 = vst.msk [vmem:[%s4 + $0x18] sm:$0xff] %vm775, %v714
  %780 = vst.msk [vmem:[%s4 + $0x20] sm:$0xff] %vm775, %v715
  %781 = vst.msk [vmem:[%s4 + $0x28] sm:$0xff] %vm775, %v716
  %782 = vst.msk [vmem:[%s4 + $0x30] sm:$0xff] %vm775, %v717
  %783 = vst.msk [vmem:[%s4 + $0x38] sm:$0xff] %vm775, %v718
  %784 = vst.msk [vmem:[%s4 + $0x40] sm:$0xff] %vm775, %v719
  %785 = vst.msk [vmem:[%s4 + $0x48] sm:$0xff] %vm775, %v720
  %786 = vst.msk [vmem:[%s4 + $0x50] sm:$0xff] %vm775, %v721
  %787 = vst.msk [vmem:[%s4 + $0x58] sm:$0xff] %vm775, %v722
  %788 = vst.msk [vmem:[%s4 + $0x60] sm:$0xff] %vm775, %v723
  %789 = vst.msk [vmem:[%s4 + $0x68] sm:$0xff] %vm775, %v724
  %790 = vst.msk [vmem:[%s4 + $0x70] sm:$0xff] %vm775, %v725
  %791 = vst.msk [vmem:[%s4 + $0x78] sm:$0xff] %vm775, %v726
  %792 = vst.msk [vmem:[%s4 + $0x80] sm:$0xff] %vm775, %v727
  %793 = vst.msk [vmem:[%s4 + $0x88] sm:$0xff] %vm775, %v728
  %794 = vst.msk [vmem:[%s4 + $0x90] sm:$0xff] %vm775, %v729
  %795 = vst.msk [vmem:[%s4 + $0x98] sm:$0xff] %vm775, %v730
  %796 = vst.msk [vmem:[%s4 + $0xa0] sm:$0xff] %vm775, %v731
  %797 = vst.msk [vmem:[%s4 + $0xa8] sm:$0xff] %vm775, %v732
  %798 = vst.msk [vmem:[%s4 + $0xb0] sm:$0xff] %vm775, %v733
  %799 = vst.msk [vmem:[%s4 + $0xb8] sm:$0xff] %vm775, %v734
  %800 = vst.msk [vmem:[%s4 + $0xc0] sm:$0xff] %vm775, %v735
  %801 = vst.msk [vmem:[%s4 + $0xc8] sm:$0xff] %vm775, %v736
  %802 = vst.msk [vmem:[%s4 + $0xd0] sm:$0xff] %vm775, %v737
  %803 = vst.msk [vmem:[%s4 + $0xd8] sm:$0xff] %vm775, %v738
  %804 = vst.msk [vmem:[%s4 + $0xe0] sm:$0xff] %vm775, %v739
  %805 = vst.msk [vmem:[%s4 + $0xe8] sm:$0xff] %vm775, %v740
  %806 = vst.msk [vmem:[%s4 + $0xf0] sm:$0xff] %vm775, %v741
  %807 = vst.msk [vmem:[%s4 + $0xf8] sm:$0xff] %vm775, %v742
  %808 = vst.msk [vmem:[%s4 + $0x100] sm:$0xff] %vm775, %v743
  %809 = vst.msk [vmem:[%s4 + $0x108] sm:$0xff] %vm775, %v744
  %810 = vst.msk [vmem:[%s4 + $0x110] sm:$0xff] %vm775, %v745
  %811 = vst.msk [vmem:[%s4 + $0x118] sm:$0xff] %vm775, %v746
  %812 = vst.msk [vmem:[%s4 + $0x120] sm:$0xff] %vm775, %v747
  %813 = vst.msk [vmem:[%s4 + $0x128] sm:$0xff] %vm775, %v748
  %814 = vst.msk [vmem:[%s4 + $0x130] sm:$0xff] %vm775, %v749
  %815 = vst.msk [vmem:[%s4 + $0x138] sm:$0xff] %vm775, %v750
  %816 = vst.msk [vmem:[%s4 + $0x140] sm:$0xff] %vm775, %v751
  %817 = vst.msk [vmem:[%s4 + $0x148] sm:$0xff] %vm775, %v752
  %818 = vst.msk [vmem:[%s4 + $0x150] sm:$0xff] %vm775, %v753
  %819 = vst.msk [vmem:[%s4 + $0x158] sm:$0xff] %vm775, %v754
  %820 = vst.msk [vmem:[%s4 + $0x160] sm:$0xff] %vm775, %v755
  %821 = vst.msk [vmem:[%s4 + $0x168] sm:$0xff] %vm775, %v756
  %822 = vst.msk [vmem:[%s4 + $0x170] sm:$0xff] %vm775, %v757
  %823 = vst.msk [vmem:[%s4 + $0x178] sm:$0xff] %vm775, %v758
  %824 = vst.msk [vmem:[%s4 + $0x180] sm:$0xff] %vm775, %v759
  %825 = vst.msk [vmem:[%s4 + $0x188] sm:$0xff] %vm775, %v760
  %826 = vst.msk [vmem:[%s4 + $0x190] sm:$0xff] %vm775, %v761
  %827 = vst.msk [vmem:[%s4 + $0x198] sm:$0xff] %vm775, %v762
  %828 = vst.msk [vmem:[%s4 + $0x1a0] sm:$0xff] %vm775, %v763
  %829 = vst.msk [vmem:[%s4 + $0x1a8] sm:$0xff] %vm775, %v764
  %830 = vst.msk [vmem:[%s4 + $0x1b0] sm:$0xff] %vm775, %v765
  %831 = vst.msk [vmem:[%s4 + $0x1b8] sm:$0xff] %vm775, %v766
  %832 = vst.msk [vmem:[%s4 + $0x1c0] sm:$0xff] %vm775, %v767
  %833 = vst.msk [vmem:[%s4 + $0x1c8] sm:$0xff] %vm775, %v768
  %834 = vst.msk [vmem:[%s4 + $0x1d0] sm:$0xff] %vm775, %v769
  %835 = vst.msk [vmem:[%s4 + $0x1d8] sm:$0xff] %vm775, %v770
  %836 = vst.msk [vmem:[%s4 + $0x1e0] sm:$0xff] %vm775, %v771
  %837 = vst.msk [vmem:[%s4 + $0x1e8] sm:$0xff] %vm775, %v772
  %838 = vst.msk [vmem:[%s4 + $0x1f0] sm:$0xff] %vm775, %v773
  %839 = vst.msk [vmem:[%s4 + $0x1f8] sm:$0xff] %vm775, %v774
  // Predicated region
  $region18: #{_lambda_.23} parent=0 // pred_check
    _
  $region19: #{_lambda_.23} parent=0 // pred_check_branch
    %841 = sbr.rel (0) target = $region21
  $region20: #{_lambda_.23} parent=0 // pred_region
    _
  $region21: #{_lambda_.23} parent=0 // pred_fallthru
    _
  // Predicated region
  $region22: #{_lambda_.23} parent=0 // pred_check
    _
  $region23: #{_lambda_.23} parent=0 // pred_check_branch
    %843 = sbr.rel (0) target = $region25
  $region24: #{_lambda_.23} parent=0 // pred_region
    _
  $region25: #{_lambda_.23} parent=0 // pred_fallthru
    _

// kernel: _lambda_.26
$region0: #{_lambda_.26}
  #allocation0 [shape = 'u32[]', space=smem, size = 0x4, offset = 0x4, fixed_abs, tag = 'smem constant byte address 0x4 - core index']
  #allocation1 [shape = 'u32[144,128]{1,0:T(1,128)}', space=vmem, size = 0x12000, scoped, tag = 'internal scratch']
  %s0 = inlined_call_operand.vmem [shape: bf16[512,8], index: 0, kind: input, shape index: {}]
  %s1 = inlined_call_operand.vmem [shape: bf16[8,32], index: 1, kind: input, shape index: {}]
  %s2 = inlined_call_operand.vmem [shape: f32[1,32], index: 2, kind: input, shape index: {}]
  %s3 = inlined_call_operand.vmem [shape: f32[1,32], index: 3, kind: input, shape index: {}]
  %s4 = inlined_call_operand.vmem [shape: f32[512,32], index: 4, kind: input, shape index: {}]
  %s5 = inlined_call_operand.vmem [shape: f32[512,32], index: 5, kind: output, shape index: {}]
  %s6 = sld [smem:[#allocation0]]
  $region30: #{_lambda_.26} parent=0
    _
  %s8 = ssub.s32 1, %s6
  %s9 = scalar_select 0, %s8, %s6
  // Predicated region
  $region2: #{_lambda_.26} parent=0 // pred_check
    _
  $region3: #{_lambda_.26} parent=0 // pred_check_branch
    %11 = sbr.rel (0) target = $region5
  $region4: #{_lambda_.26} parent=0 // pred_region
    _
  $region5: #{_lambda_.26} parent=0 // pred_fallthru
    _
  // Predicated region
  $region6: #{_lambda_.26} parent=0 // pred_check
    _
  $region7: #{_lambda_.26} parent=0 // pred_check_branch
    %13 = sbr.rel (0) target = $region9
  $region8: #{_lambda_.26} parent=0 // pred_region
    _
  $region9: #{_lambda_.26} parent=0 // pred_fallthru
    _
  // Predicated region
  $region10: #{_lambda_.26} parent=0 // pred_check
    _
  $region11: #{_lambda_.26} parent=0 // pred_check_branch
    %15 = sbr.rel (0) target = $region13
  $region12: #{_lambda_.26} parent=0 // pred_region
    _
  $region13: #{_lambda_.26} parent=0 // pred_fallthru
    _
  // Predicated region
  $region14: #{_lambda_.26} parent=0 // pred_check
    _
  $region15: #{_lambda_.26} parent=0 // pred_check_branch
    %17 = sbr.rel (0) target = $region17
  $region16: #{_lambda_.26} parent=0 // pred_region
    _
  $region17: #{_lambda_.26} parent=0 // pred_fallthru
    _
  // Predicated region
  $region18: #{_lambda_.26} parent=0 // pred_check
    _
  $region19: #{_lambda_.26} parent=0 // pred_check_branch
    %19 = sbr.rel (0) target = $region21
  $region20: #{_lambda_.26} parent=0 // pred_region
    _
  $region21: #{_lambda_.26} parent=0 // pred_fallthru
    _
  %v21 = vld [vmem:[%s0] sm:$0xf]
  %v22 = vld [vmem:[%s0 + $0x4] sm:$0xf]
  %v23 = vld [vmem:[%s0 + $0x8] sm:$0xf]
  %v24 = vld [vmem:[%s0 + $0xc] sm:$0xf]
  %v25 = vld [vmem:[%s0 + $0x10] sm:$0xf]
  %v26 = vld [vmem:[%s0 + $0x14] sm:$0xf]
  %v27 = vld [vmem:[%s0 + $0x18] sm:$0xf]
  %v28 = vld [vmem:[%s0 + $0x1c] sm:$0xf]
  %v29 = vld [vmem:[%s0 + $0x20] sm:$0xf]
  %v30 = vld [vmem:[%s0 + $0x24] sm:$0xf]
  %v31 = vld [vmem:[%s0 + $0x28] sm:$0xf]
  %v32 = vld [vmem:[%s0 + $0x2c] sm:$0xf]
  %v33 = vld [vmem:[%s0 + $0x30] sm:$0xf]
  %v34 = vld [vmem:[%s0 + $0x34] sm:$0xf]
  %v35 = vld [vmem:[%s0 + $0x38] sm:$0xf]
  %v36 = vld [vmem:[%s0 + $0x3c] sm:$0xf]
  %v37 = vld [vmem:[%s0 + $0x40] sm:$0xf]
  %v38 = vld [vmem:[%s0 + $0x44] sm:$0xf]
  %v39 = vld [vmem:[%s0 + $0x48] sm:$0xf]
  %v40 = vld [vmem:[%s0 + $0x4c] sm:$0xf]
  %v41 = vld [vmem:[%s0 + $0x50] sm:$0xf]
  %v42 = vld [vmem:[%s0 + $0x54] sm:$0xf]
  %v43 = vld [vmem:[%s0 + $0x58] sm:$0xf]
  %v44 = vld [vmem:[%s0 + $0x5c] sm:$0xf]
  %v45 = vld [vmem:[%s0 + $0x60] sm:$0xf]
  %v46 = vld [vmem:[%s0 + $0x64] sm:$0xf]
  %v47 = vld [vmem:[%s0 + $0x68] sm:$0xf]
  %v48 = vld [vmem:[%s0 + $0x6c] sm:$0xf]
  %v49 = vld [vmem:[%s0 + $0x70] sm:$0xf]
  %v50 = vld [vmem:[%s0 + $0x74] sm:$0xf]
  %v51 = vld [vmem:[%s0 + $0x78] sm:$0xf]
  %v52 = vld [vmem:[%s0 + $0x7c] sm:$0xf]
  %v53 = vld [vmem:[%s0 + $0x80] sm:$0xf]
  %v54 = vld [vmem:[%s0 + $0x84] sm:$0xf]
  %v55 = vld [vmem:[%s0 + $0x88] sm:$0xf]
  %v56 = vld [vmem:[%s0 + $0x8c] sm:$0xf]
  %v57 = vld [vmem:[%s0 + $0x90] sm:$0xf]
  %v58 = vld [vmem:[%s0 + $0x94] sm:$0xf]
  %v59 = vld [vmem:[%s0 + $0x98] sm:$0xf]
  %v60 = vld [vmem:[%s0 + $0x9c] sm:$0xf]
  %v61 = vld [vmem:[%s0 + $0xa0] sm:$0xf]
  %v62 = vld [vmem:[%s0 + $0xa4] sm:$0xf]
  %v63 = vld [vmem:[%s0 + $0xa8] sm:$0xf]
  %v64 = vld [vmem:[%s0 + $0xac] sm:$0xf]
  %v65 = vld [vmem:[%s0 + $0xb0] sm:$0xf]
  %v66 = vld [vmem:[%s0 + $0xb4] sm:$0xf]
  %v67 = vld [vmem:[%s0 + $0xb8] sm:$0xf]
  %v68 = vld [vmem:[%s0 + $0xbc] sm:$0xf]
  %v69 = vld [vmem:[%s0 + $0xc0] sm:$0xf]
  %v70 = vld [vmem:[%s0 + $0xc4] sm:$0xf]
  %v71 = vld [vmem:[%s0 + $0xc8] sm:$0xf]
  %v72 = vld [vmem:[%s0 + $0xcc] sm:$0xf]
  %v73 = vld [vmem:[%s0 + $0xd0] sm:$0xf]
  %v74 = vld [vmem:[%s0 + $0xd4] sm:$0xf]
  %v75 = vld [vmem:[%s0 + $0xd8] sm:$0xf]
  %v76 = vld [vmem:[%s0 + $0xdc] sm:$0xf]
  %v77 = vld [vmem:[%s0 + $0xe0] sm:$0xf]
  %v78 = vld [vmem:[%s0 + $0xe4] sm:$0xf]
  %v79 = vld [vmem:[%s0 + $0xe8] sm:$0xf]
  %v80 = vld [vmem:[%s0 + $0xec] sm:$0xf]
  %v81 = vld [vmem:[%s0 + $0xf0] sm:$0xf]
  %v82 = vld [vmem:[%s0 + $0xf4] sm:$0xf]
  %v83 = vld [vmem:[%s0 + $0xf8] sm:$0xf]
  %v84 = vld [vmem:[%s0 + $0xfc] sm:$0xf]
  %v85 = vld [vmem:[%s1] sm:$0xf]
  %v150 = vunpack.c.l.b16 %v21
  %v151 = vunpack.c.l.b16 %v22
  %v152 = vunpack.c.l.b16 %v23
  %v153 = vunpack.c.l.b16 %v24
  %v154 = vunpack.c.l.b16 %v25
  %v155 = vunpack.c.l.b16 %v26
  %v156 = vunpack.c.l.b16 %v27
  %v157 = vunpack.c.l.b16 %v28
  %v158 = vunpack.c.l.b16 %v29
  %v159 = vunpack.c.l.b16 %v30
  %v160 = vunpack.c.l.b16 %v31
  %v161 = vunpack.c.l.b16 %v32
  %v162 = vunpack.c.l.b16 %v33
  %v163 = vunpack.c.l.b16 %v34
  %v164 = vunpack.c.l.b16 %v35
  %v165 = vunpack.c.l.b16 %v36
  %v166 = vunpack.c.l.b16 %v37
  %v167 = vunpack.c.l.b16 %v38
  %v168 = vunpack.c.l.b16 %v39
  %v169 = vunpack.c.l.b16 %v40
  %v170 = vunpack.c.l.b16 %v41
  %v171 = vunpack.c.l.b16 %v42
  %v172 = vunpack.c.l.b16 %v43
  %v173 = vunpack.c.l.b16 %v44
  %v174 = vunpack.c.l.b16 %v45
  %v175 = vunpack.c.l.b16 %v46
  %v176 = vunpack.c.l.b16 %v47
  %v177 = vunpack.c.l.b16 %v48
  %v178 = vunpack.c.l.b16 %v49
  %v179 = vunpack.c.l.b16 %v50
  %v180 = vunpack.c.l.b16 %v51
  %v181 = vunpack.c.l.b16 %v52
  %v182 = vunpack.c.l.b16 %v53
  %v183 = vunpack.c.l.b16 %v54
  %v184 = vunpack.c.l.b16 %v55
  %v185 = vunpack.c.l.b16 %v56
  %v186 = vunpack.c.l.b16 %v57
  %v187 = vunpack.c.l.b16 %v58
  %v188 = vunpack.c.l.b16 %v59
  %v189 = vunpack.c.l.b16 %v60
  %v190 = vunpack.c.l.b16 %v61
  %v191 = vunpack.c.l.b16 %v62
  %v192 = vunpack.c.l.b16 %v63
  %v193 = vunpack.c.l.b16 %v64
  %v194 = vunpack.c.l.b16 %v65
  %v195 = vunpack.c.l.b16 %v66
  %v196 = vunpack.c.l.b16 %v67
  %v197 = vunpack.c.l.b16 %v68
  %v198 = vunpack.c.l.b16 %v69
  %v199 = vunpack.c.l.b16 %v70
  %v200 = vunpack.c.l.b16 %v71
  %v201 = vunpack.c.l.b16 %v72
  %v202 = vunpack.c.l.b16 %v73
  %v203 = vunpack.c.l.b16 %v74
  %v204 = vunpack.c.l.b16 %v75
  %v205 = vunpack.c.l.b16 %v76
  %v206 = vunpack.c.l.b16 %v77
  %v207 = vunpack.c.l.b16 %v78
  %v208 = vunpack.c.l.b16 %v79
  %v209 = vunpack.c.l.b16 %v80
  %v210 = vunpack.c.l.b16 %v81
  %v211 = vunpack.c.l.b16 %v82
  %v212 = vunpack.c.l.b16 %v83
  %v213 = vunpack.c.l.b16 %v84
  %v214 = vpack.c.b16 %v151, %v150
  %v215 = vpack.c.b16 %v153, %v152
  %v216 = vpack.c.b16 %v155, %v154
  %v217 = vpack.c.b16 %v157, %v156
  %v218 = vpack.c.b16 %v159, %v158
  %v219 = vpack.c.b16 %v161, %v160
  %v220 = vpack.c.b16 %v163, %v162
  %v221 = vpack.c.b16 %v165, %v164
  %v222 = vpack.c.b16 %v167, %v166
  %v223 = vpack.c.b16 %v169, %v168
  %v224 = vpack.c.b16 %v171, %v170
  %v225 = vpack.c.b16 %v173, %v172
  %v226 = vpack.c.b16 %v175, %v174
  %v227 = vpack.c.b16 %v177, %v176
  %v228 = vpack.c.b16 %v179, %v178
  %v229 = vpack.c.b16 %v181, %v180
  %v230 = vpack.c.b16 %v183, %v182
  %v231 = vpack.c.b16 %v185, %v184
  %v232 = vpack.c.b16 %v187, %v186
  %v233 = vpack.c.b16 %v189, %v188
  %v234 = vpack.c.b16 %v191, %v190
  %v235 = vpack.c.b16 %v193, %v192
  %v236 = vpack.c.b16 %v195, %v194
  %v237 = vpack.c.b16 %v197, %v196
  %v238 = vpack.c.b16 %v199, %v198
  %v239 = vpack.c.b16 %v201, %v200
  %v240 = vpack.c.b16 %v203, %v202
  %v241 = vpack.c.b16 %v205, %v204
  %v242 = vpack.c.b16 %v207, %v206
  %v243 = vpack.c.b16 %v209, %v208
  %v244 = vpack.c.b16 %v211, %v210
  %v245 = vpack.c.b16 %v213, %v212
  %vm246 = vcmask 64512
  %v248 = vsel %vm246, %v214, 0
  %v251 = vsel %vm246, %v215, 0
  %v254 = vsel %vm246, %v216, 0
  %v257 = vsel %vm246, %v217, 0
  %v260 = vsel %vm246, %v218, 0
  %v263 = vsel %vm246, %v219, 0
  %v266 = vsel %vm246, %v220, 0
  %v269 = vsel %vm246, %v221, 0
  %v272 = vsel %vm246, %v222, 0
  %v275 = vsel %vm246, %v223, 0
  %v278 = vsel %vm246, %v224, 0
  %v281 = vsel %vm246, %v225, 0
  %v284 = vsel %vm246, %v226, 0
  %v287 = vsel %vm246, %v227, 0
  %v290 = vsel %vm246, %v228, 0
  %v293 = vsel %vm246, %v229, 0
  %v296 = vsel %vm246, %v230, 0
  %v299 = vsel %vm246, %v231, 0
  %v302 = vsel %vm246, %v232, 0
  %v305 = vsel %vm246, %v233, 0
  %v308 = vsel %vm246, %v234, 0
  %v311 = vsel %vm246, %v235, 0
  %v314 = vsel %vm246, %v236, 0
  %v317 = vsel %vm246, %v237, 0
  %v320 = vsel %vm246, %v238, 0
  %v323 = vsel %vm246, %v239, 0
  %v326 = vsel %vm246, %v240, 0
  %v329 = vsel %vm246, %v241, 0
  %v332 = vsel %vm246, %v242, 0
  %v335 = vsel %vm246, %v243, 0
  %v338 = vsel %vm246, %v244, 0
  %v341 = vsel %vm246, %v245, 0
  %vm343 = vcmask 1043456
  %v345 = vsel %vm343, %v85, 0
  %347 = vmatprep.subr.bf16.mxu0 0
  %348 = vmatpush1.bf16.msra.mxu0 %v345
  %349 = vmatprep.subr.bf16.mxu0 0
  %350 = vmatpush1.bf16.msra.mxu0 0
  %351 = vmatprep.subr.bf16.mxu0 0
  %352 = vmatpush1.bf16.msra.mxu0 0
  %353 = vmatprep.subr.bf16.mxu0 0
  %354 = vmatpush1.bf16.msra.mxu0 0
  %355 = vmatprep.subr.bf16.mxu0 0
  %356 = vmatpush1.bf16.msra.mxu0 0
  %357 = vmatprep.subr.bf16.mxu0 0
  %358 = vmatpush1.bf16.msra.mxu0 0
  %359 = vmatprep.subr.bf16.mxu0 0
  %360 = vmatpush1.bf16.msra.mxu0 0
  %361 = vmatprep.subr.bf16.mxu0 0
  %362 = vmatpush1.bf16.msra.mxu0 0
  %363 = vmatprep.subr.bf16.mxu0 0
  %364 = vmatpush1.bf16.msra.mxu0 0
  %365 = vmatprep.subr.bf16.mxu0 0
  %366 = vmatpush1.bf16.msra.mxu0 0
  %367 = vmatprep.subr.bf16.mxu0 0
  %368 = vmatpush1.bf16.msra.mxu0 0
  %369 = vmatprep.subr.bf16.mxu0 0
  %370 = vmatpush1.bf16.msra.mxu0 0
  %371 = vmatprep.subr.bf16.mxu0 0
  %372 = vmatpush1.bf16.msra.mxu0 0
  %373 = vmatprep.subr.bf16.mxu0 0
  %374 = vmatpush1.bf16.msra.mxu0 0
  %375 = vmatprep.subr.bf16.mxu0 0
  %376 = vmatpush1.bf16.msra.mxu0 0
  %377 = vmatprep.subr.bf16.mxu0 0
  %378 = vmatpush1.bf16.msra.mxu0 0
  %379 = vmatprep.mubr.bf16.mxu0 0
  %380 = vmatmul.mubr.bf16.gmra.mrb[0].mxu0 %v248
  %v381 = vpop.f32.mrb[0].mxu0
  %v382 = vadd.f32 0.0, %v381
  %v383 = vpop.f32.mrb[0].mxu0
  %v384 = vpop.f32.mrb[0].mxu0
  %v385 = vadd.f32 0.0, %v384
  %v386 = vpop.f32.mrb[0].mxu0
  %387 = vmatprep.mubr.bf16.mxu0 0
  %388 = vmatmul.mubr.bf16.gmra.mrb[0].mxu0 %v251
  %v389 = vpop.f32.mrb[0].mxu0
  %v390 = vadd.f32 0.0, %v389
  %v391 = vpop.f32.mrb[0].mxu0
  %v392 = vpop.f32.mrb[0].mxu0
  %v393 = vadd.f32 0.0, %v392
  %v394 = vpop.f32.mrb[0].mxu0
  %395 = vmatprep.mubr.bf16.mxu0 0
  %396 = vmatmul.mubr.bf16.gmra.mrb[0].mxu0 %v254
  %v397 = vpop.f32.mrb[0].mxu0
  %v398 = vadd.f32 0.0, %v397
  %v399 = vpop.f32.mrb[0].mxu0
  %v400 = vpop.f32.mrb[0].mxu0
  %v401 = vadd.f32 0.0, %v400
  %v402 = vpop.f32.mrb[0].mxu0
  %403 = vmatprep.mubr.bf16.mxu0 0
  %404 = vmatmul.mubr.bf16.gmra.mrb[0].mxu0 %v257
  %v405 = vpop.f32.mrb[0].mxu0
  %v406 = vadd.f32 0.0, %v405
  %v407 = vpop.f32.mrb[0].mxu0
  %v408 = vpop.f32.mrb[0].mxu0
  %v409 = vadd.f32 0.0, %v408
  %v410 = vpop.f32.mrb[0].mxu0
  %411 = vmatprep.mubr.bf16.mxu0 0
  %412 = vmatmul.mubr.bf16.gmra.mrb[0].mxu0 %v260
  %v413 = vpop.f32.mrb[0].mxu0
  %v414 = vadd.f32 0.0, %v413
  %v415 = vpop.f32.mrb[0].mxu0
  %v416 = vpop.f32.mrb[0].mxu0
  %v417 = vadd.f32 0.0, %v416
  %v418 = vpop.f32.mrb[0].mxu0
  %419 = vmatprep.mubr.bf16.mxu0 0
  %420 = vmatmul.mubr.bf16.gmra.mrb[0].mxu0 %v263
  %v421 = vpop.f32.mrb[0].mxu0
  %v422 = vadd.f32 0.0, %v421
  %v423 = vpop.f32.mrb[0].mxu0
  %v424 = vpop.f32.mrb[0].mxu0
  %v425 = vadd.f32 0.0, %v424
  %v426 = vpop.f32.mrb[0].mxu0
  %427 = vmatprep.mubr.bf16.mxu0 0
  %428 = vmatmul.mubr.bf16.gmra.mrb[0].mxu0 %v266
  %v429 = vpop.f32.mrb[0].mxu0
  %v430 = vadd.f32 0.0, %v429
  %v431 = vpop.f32.mrb[0].mxu0
  %v432 = vpop.f32.mrb[0].mxu0
  %v433 = vadd.f32 0.0, %v432
  %v434 = vpop.f32.mrb[0].mxu0
  %435 = vmatprep.mubr.bf16.mxu0 0
  %436 = vmatmul.mubr.bf16.gmra.mrb[0].mxu0 %v269
  %v437 = vpop.f32.mrb[0].mxu0
  %v438 = vadd.f32 0.0, %v437
  %v439 = vpop.f32.mrb[0].mxu0
  %v440 = vpop.f32.mrb[0].mxu0
  %v441 = vadd.f32 0.0, %v440
  %v442 = vpop.f32.mrb[0].mxu0
  %443 = vmatprep.mubr.bf16.mxu0 0
  %444 = vmatmul.mubr.bf16.gmra.mrb[0].mxu0 %v272
  %v445 = vpop.f32.mrb[0].mxu0
  %v446 = vadd.f32 0.0, %v445
  %v447 = vpop.f32.mrb[0].mxu0
  %v448 = vpop.f32.mrb[0].mxu0
  %v449 = vadd.f32 0.0, %v448
  %v450 = vpop.f32.mrb[0].mxu0
  %451 = vmatprep.mubr.bf16.mxu0 0
  %452 = vmatmul.mubr.bf16.gmra.mrb[0].mxu0 %v275
  %v453 = vpop.f32.mrb[0].mxu0
  %v454 = vadd.f32 0.0, %v453
  %v455 = vpop.f32.mrb[0].mxu0
  %v456 = vpop.f32.mrb[0].mxu0
  %v457 = vadd.f32 0.0, %v456
  %v458 = vpop.f32.mrb[0].mxu0
  %459 = vmatprep.mubr.bf16.mxu0 0
  %460 = vmatmul.mubr.bf16.gmra.mrb[0].mxu0 %v278
  %v461 = vpop.f32.mrb[0].mxu0
  %v462 = vadd.f32 0.0, %v461
  %v463 = vpop.f32.mrb[0].mxu0
  %v464 = vpop.f32.mrb[0].mxu0
  %v465 = vadd.f32 0.0, %v464
  %v466 = vpop.f32.mrb[0].mxu0
  %467 = vmatprep.mubr.bf16.mxu0 0
  %468 = vmatmul.mubr.bf16.gmra.mrb[0].mxu0 %v281
  %v469 = vpop.f32.mrb[0].mxu0
  %v470 = vadd.f32 0.0, %v469
  %v471 = vpop.f32.mrb[0].mxu0
  %v472 = vpop.f32.mrb[0].mxu0
  %v473 = vadd.f32 0.0, %v472
  %v474 = vpop.f32.mrb[0].mxu0
  %475 = vmatprep.mubr.bf16.mxu0 0
  %476 = vmatmul.mubr.bf16.gmra.mrb[0].mxu0 %v284
  %v477 = vpop.f32.mrb[0].mxu0
  %v478 = vadd.f32 0.0, %v477
  %v479 = vpop.f32.mrb[0].mxu0
  %v480 = vpop.f32.mrb[0].mxu0
  %v481 = vadd.f32 0.0, %v480
  %v482 = vpop.f32.mrb[0].mxu0
  %483 = vmatprep.mubr.bf16.mxu0 0
  %484 = vmatmul.mubr.bf16.gmra.mrb[0].mxu0 %v287
  %v485 = vpop.f32.mrb[0].mxu0
  %v486 = vadd.f32 0.0, %v485
  %v487 = vpop.f32.mrb[0].mxu0
  %v488 = vpop.f32.mrb[0].mxu0
  %v489 = vadd.f32 0.0, %v488
  %v490 = vpop.f32.mrb[0].mxu0
  %491 = vmatprep.mubr.bf16.mxu0 0
  %492 = vmatmul.mubr.bf16.gmra.mrb[0].mxu0 %v290
  %v493 = vpop.f32.mrb[0].mxu0
  %v494 = vadd.f32 0.0, %v493
  %v495 = vpop.f32.mrb[0].mxu0
  %v496 = vpop.f32.mrb[0].mxu0
  %v497 = vadd.f32 0.0, %v496
  %v498 = vpop.f32.mrb[0].mxu0
  %499 = vmatprep.mubr.bf16.mxu0 0
  %500 = vmatmul.mubr.bf16.gmra.mrb[0].mxu0 %v293
  %v501 = vpop.f32.mrb[0].mxu0
  %v502 = vadd.f32 0.0, %v501
  %v503 = vpop.f32.mrb[0].mxu0
  %v504 = vpop.f32.mrb[0].mxu0
  %v505 = vadd.f32 0.0, %v504
  %v506 = vpop.f32.mrb[0].mxu0
  %507 = vmatprep.mubr.bf16.mxu0 0
  %508 = vmatmul.mubr.bf16.gmra.mrb[0].mxu0 %v296
  %v509 = vpop.f32.mrb[0].mxu0
  %v510 = vadd.f32 0.0, %v509
  %v511 = vpop.f32.mrb[0].mxu0
  %v512 = vpop.f32.mrb[0].mxu0
  %v513 = vadd.f32 0.0, %v512
  %v514 = vpop.f32.mrb[0].mxu0
  %515 = vmatprep.mubr.bf16.mxu0 0
  %516 = vmatmul.mubr.bf16.gmra.mrb[0].mxu0 %v299
  %v517 = vpop.f32.mrb[0].mxu0
  %v518 = vadd.f32 0.0, %v517
  %v519 = vpop.f32.mrb[0].mxu0
  %v520 = vpop.f32.mrb[0].mxu0
  %v521 = vadd.f32 0.0, %v520
  %v522 = vpop.f32.mrb[0].mxu0
  %523 = vmatprep.mubr.bf16.mxu0 0
  %524 = vmatmul.mubr.bf16.gmra.mrb[0].mxu0 %v302
  %v525 = vpop.f32.mrb[0].mxu0
  %v526 = vadd.f32 0.0, %v525
  %v527 = vpop.f32.mrb[0].mxu0
  %v528 = vpop.f32.mrb[0].mxu0
  %v529 = vadd.f32 0.0, %v528
  %v530 = vpop.f32.mrb[0].mxu0
  %531 = vmatprep.mubr.bf16.mxu0 0
  %532 = vmatmul.mubr.bf16.gmra.mrb[0].mxu0 %v305
  %v533 = vpop.f32.mrb[0].mxu0
  %v534 = vadd.f32 0.0, %v533
  %v535 = vpop.f32.mrb[0].mxu0
  %v536 = vpop.f32.mrb[0].mxu0
  %v537 = vadd.f32 0.0, %v536
  %v538 = vpop.f32.mrb[0].mxu0
  %539 = vmatprep.mubr.bf16.mxu0 0
  %540 = vmatmul.mubr.bf16.gmra.mrb[0].mxu0 %v308
  %v541 = vpop.f32.mrb[0].mxu0
  %v542 = vadd.f32 0.0, %v541
  %v543 = vpop.f32.mrb[0].mxu0
  %v544 = vpop.f32.mrb[0].mxu0
  %v545 = vadd.f32 0.0, %v544
  %v546 = vpop.f32.mrb[0].mxu0
  %547 = vmatprep.mubr.bf16.mxu0 0
  %548 = vmatmul.mubr.bf16.gmra.mrb[0].mxu0 %v311
  %v549 = vpop.f32.mrb[0].mxu0
  %v550 = vadd.f32 0.0, %v549
  %v551 = vpop.f32.mrb[0].mxu0
  %v552 = vpop.f32.mrb[0].mxu0
  %v553 = vadd.f32 0.0, %v552
  %v554 = vpop.f32.mrb[0].mxu0
  %555 = vmatprep.mubr.bf16.mxu0 0
  %556 = vmatmul.mubr.bf16.gmra.mrb[0].mxu0 %v314
  %v557 = vpop.f32.mrb[0].mxu0
  %v558 = vadd.f32 0.0, %v557
  %v559 = vpop.f32.mrb[0].mxu0
  %v560 = vpop.f32.mrb[0].mxu0
  %v561 = vadd.f32 0.0, %v560
  %v562 = vpop.f32.mrb[0].mxu0
  %563 = vmatprep.mubr.bf16.mxu0 0
  %564 = vmatmul.mubr.bf16.gmra.mrb[0].mxu0 %v317
  %v565 = vpop.f32.mrb[0].mxu0
  %v566 = vadd.f32 0.0, %v565
  %v567 = vpop.f32.mrb[0].mxu0
  %v568 = vpop.f32.mrb[0].mxu0
  %v569 = vadd.f32 0.0, %v568
  %v570 = vpop.f32.mrb[0].mxu0
  %571 = vmatprep.mubr.bf16.mxu0 0
  %572 = vmatmul.mubr.bf16.gmra.mrb[0].mxu0 %v320
  %v573 = vpop.f32.mrb[0].mxu0
  %v574 = vadd.f32 0.0, %v573
  %v575 = vpop.f32.mrb[0].mxu0
  %v576 = vpop.f32.mrb[0].mxu0
  %v577 = vadd.f32 0.0, %v576
  %v578 = vpop.f32.mrb[0].mxu0
  %579 = vmatprep.mubr.bf16.mxu0 0
  %580 = vmatmul.mubr.bf16.gmra.mrb[0].mxu0 %v323
  %v581 = vpop.f32.mrb[0].mxu0
  %v582 = vadd.f32 0.0, %v581
  %v583 = vpop.f32.mrb[0].mxu0
  %v584 = vpop.f32.mrb[0].mxu0
  %v585 = vadd.f32 0.0, %v584
  %v586 = vpop.f32.mrb[0].mxu0
  %587 = vmatprep.mubr.bf16.mxu0 0
  %588 = vmatmul.mubr.bf16.gmra.mrb[0].mxu0 %v326
  %v589 = vpop.f32.mrb[0].mxu0
  %v590 = vadd.f32 0.0, %v589
  %v591 = vpop.f32.mrb[0].mxu0
  %v592 = vpop.f32.mrb[0].mxu0
  %v593 = vadd.f32 0.0, %v592
  %v594 = vpop.f32.mrb[0].mxu0
  %595 = vmatprep.mubr.bf16.mxu0 0
  %596 = vmatmul.mubr.bf16.gmra.mrb[0].mxu0 %v329
  %v597 = vpop.f32.mrb[0].mxu0
  %v598 = vadd.f32 0.0, %v597
  %v599 = vpop.f32.mrb[0].mxu0
  %v600 = vpop.f32.mrb[0].mxu0
  %v601 = vadd.f32 0.0, %v600
  %v602 = vpop.f32.mrb[0].mxu0
  %603 = vmatprep.mubr.bf16.mxu0 0
  %604 = vmatmul.mubr.bf16.gmra.mrb[0].mxu0 %v332
  %v605 = vpop.f32.mrb[0].mxu0
  %v606 = vadd.f32 0.0, %v605
  %v607 = vpop.f32.mrb[0].mxu0
  %v608 = vpop.f32.mrb[0].mxu0
  %v609 = vadd.f32 0.0, %v608
  %v610 = vpop.f32.mrb[0].mxu0
  %611 = vmatprep.mubr.bf16.mxu0 0
  %612 = vmatmul.mubr.bf16.gmra.mrb[0].mxu0 %v335
  %v613 = vpop.f32.mrb[0].mxu0
  %v614 = vadd.f32 0.0, %v613
  %v615 = vpop.f32.mrb[0].mxu0
  %v616 = vpop.f32.mrb[0].mxu0
  %v617 = vadd.f32 0.0, %v616
  %v618 = vpop.f32.mrb[0].mxu0
  %619 = vmatprep.mubr.bf16.mxu0 0
  %620 = vmatmul.mubr.bf16.gmra.mrb[0].mxu0 %v338
  %v621 = vpop.f32.mrb[0].mxu0
  %v622 = vadd.f32 0.0, %v621
  %v623 = vpop.f32.mrb[0].mxu0
  %v624 = vpop.f32.mrb[0].mxu0
  %v625 = vadd.f32 0.0, %v624
  %v626 = vpop.f32.mrb[0].mxu0
  %627 = vmatprep.mubr.bf16.mxu0 0
  %628 = vmatmul.mubr.bf16.gmra.mrb[0].mxu0 %v341
  %v629 = vpop.f32.mrb[0].mxu0
  %v630 = vadd.f32 0.0, %v629
  %v631 = vpop.f32.mrb[0].mxu0
  %v632 = vpop.f32.mrb[0].mxu0
  %v633 = vadd.f32 0.0, %v632
  %v634 = vpop.f32.mrb[0].mxu0
  %635 = vdwg.mxu0
  %v636 = vld [vmem:[%s2] sm:$0x1]
  %v638 = vlaneseq
  %v639 = vshrl.u32 %v638, 7
  %v640 = vsub.s32 0, %v639
  %v641 = vrot.slane %v636, %v640
  %v643 = vmul.f32 %v382, %v641
  %v644 = vmul.f32 %v385, %v641
  %v645 = vmul.f32 %v390, %v641
  %v646 = vmul.f32 %v393, %v641
  %v647 = vmul.f32 %v398, %v641
  %v648 = vmul.f32 %v401, %v641
  %v649 = vmul.f32 %v406, %v641
  %v650 = vmul.f32 %v409, %v641
  %v651 = vmul.f32 %v414, %v641
  %v652 = vmul.f32 %v417, %v641
  %v653 = vmul.f32 %v422, %v641
  %v654 = vmul.f32 %v425, %v641
  %v655 = vmul.f32 %v430, %v641
  %v656 = vmul.f32 %v433, %v641
  %v657 = vmul.f32 %v438, %v641
  %v658 = vmul.f32 %v441, %v641
  %v659 = vmul.f32 %v446, %v641
  %v660 = vmul.f32 %v449, %v641
  %v661 = vmul.f32 %v454, %v641
  %v662 = vmul.f32 %v457, %v641
  %v663 = vmul.f32 %v462, %v641
  %v664 = vmul.f32 %v465, %v641
  %v665 = vmul.f32 %v470, %v641
  %v666 = vmul.f32 %v473, %v641
  %v667 = vmul.f32 %v478, %v641
  %v668 = vmul.f32 %v481, %v641
  %v669 = vmul.f32 %v486, %v641
  %v670 = vmul.f32 %v489, %v641
  %v671 = vmul.f32 %v494, %v641
  %v672 = vmul.f32 %v497, %v641
  %v673 = vmul.f32 %v502, %v641
  %v674 = vmul.f32 %v505, %v641
  %v675 = vmul.f32 %v510, %v641
  %v676 = vmul.f32 %v513, %v641
  %v677 = vmul.f32 %v518, %v641
  %v678 = vmul.f32 %v521, %v641
  %v679 = vmul.f32 %v526, %v641
  %v680 = vmul.f32 %v529, %v641
  %v681 = vmul.f32 %v534, %v641
  %v682 = vmul.f32 %v537, %v641
  %v683 = vmul.f32 %v542, %v641
  %v684 = vmul.f32 %v545, %v641
  %v685 = vmul.f32 %v550, %v641
  %v686 = vmul.f32 %v553, %v641
  %v687 = vmul.f32 %v558, %v641
  %v688 = vmul.f32 %v561, %v641
  %v689 = vmul.f32 %v566, %v641
  %v690 = vmul.f32 %v569, %v641
  %v691 = vmul.f32 %v574, %v641
  %v692 = vmul.f32 %v577, %v641
  %v693 = vmul.f32 %v582, %v641
  %v694 = vmul.f32 %v585, %v641
  %v695 = vmul.f32 %v590, %v641
  %v696 = vmul.f32 %v593, %v641
  %v697 = vmul.f32 %v598, %v641
  %v698 = vmul.f32 %v601, %v641
  %v699 = vmul.f32 %v606, %v641
  %v700 = vmul.f32 %v609, %v641
  %v701 = vmul.f32 %v614, %v641
  %v702 = vmul.f32 %v617, %v641
  %v703 = vmul.f32 %v622, %v641
  %v704 = vmul.f32 %v625, %v641
  %v705 = vmul.f32 %v630, %v641
  %v706 = vmul.f32 %v633, %v641
  %v707 = vld [vmem:[%s3] sm:$0x1]
  %v709 = vlaneseq
  %v710 = vshrl.u32 %v709, 7
  %v711 = vsub.s32 0, %v710
  %v712 = vrot.slane %v707, %v711
  %v714 = vadd.f32 %v643, %v712
  %v715 = vadd.f32 %v644, %v712
  %v716 = vadd.f32 %v645, %v712
  %v717 = vadd.f32 %v646, %v712
  %v718 = vadd.f32 %v647, %v712
  %v719 = vadd.f32 %v648, %v712
  %v720 = vadd.f32 %v649, %v712
  %v721 = vadd.f32 %v650, %v712
  %v722 = vadd.f32 %v651, %v712
  %v723 = vadd.f32 %v652, %v712
  %v724 = vadd.f32 %v653, %v712
  %v725 = vadd.f32 %v654, %v712
  %v726 = vadd.f32 %v655, %v712
  %v727 = vadd.f32 %v656, %v712
  %v728 = vadd.f32 %v657, %v712
  %v729 = vadd.f32 %v658, %v712
  %v730 = vadd.f32 %v659, %v712
  %v731 = vadd.f32 %v660, %v712
  %v732 = vadd.f32 %v661, %v712
  %v733 = vadd.f32 %v662, %v712
  %v734 = vadd.f32 %v663, %v712
  %v735 = vadd.f32 %v664, %v712
  %v736 = vadd.f32 %v665, %v712
  %v737 = vadd.f32 %v666, %v712
  %v738 = vadd.f32 %v667, %v712
  %v739 = vadd.f32 %v668, %v712
  %v740 = vadd.f32 %v669, %v712
  %v741 = vadd.f32 %v670, %v712
  %v742 = vadd.f32 %v671, %v712
  %v743 = vadd.f32 %v672, %v712
  %v744 = vadd.f32 %v673, %v712
  %v745 = vadd.f32 %v674, %v712
  %v746 = vadd.f32 %v675, %v712
  %v747 = vadd.f32 %v676, %v712
  %v748 = vadd.f32 %v677, %v712
  %v749 = vadd.f32 %v678, %v712
  %v750 = vadd.f32 %v679, %v712
  %v751 = vadd.f32 %v680, %v712
  %v752 = vadd.f32 %v681, %v712
  %v753 = vadd.f32 %v682, %v712
  %v754 = vadd.f32 %v683, %v712
  %v755 = vadd.f32 %v684, %v712
  %v756 = vadd.f32 %v685, %v712
  %v757 = vadd.f32 %v686, %v712
  %v758 = vadd.f32 %v687, %v712
  %v759 = vadd.f32 %v688, %v712
  %v760 = vadd.f32 %v689, %v712
  %v761 = vadd.f32 %v690, %v712
  %v762 = vadd.f32 %v691, %v712
  %v763 = vadd.f32 %v692, %v712
  %v764 = vadd.f32 %v693, %v712
  %v765 = vadd.f32 %v694, %v712
  %v766 = vadd.f32 %v695, %v712
  %v767 = vadd.f32 %v696, %v712
  %v768 = vadd.f32 %v697, %v712
  %v769 = vadd.f32 %v698, %v712
  %v770 = vadd.f32 %v699, %v712
  %v771 = vadd.f32 %v700, %v712
  %v772 = vadd.f32 %v701, %v712
  %v773 = vadd.f32 %v702, %v712
  %v774 = vadd.f32 %v703, %v712
  %v775 = vadd.f32 %v704, %v712
  %v776 = vadd.f32 %v705, %v712
  %v777 = vadd.f32 %v706, %v712
  %v778 = vld [vmem:[%s4] sm:$0xff]
  %v779 = vld [vmem:[%s4 + $0x8] sm:$0xff]
  %v780 = vld [vmem:[%s4 + $0x10] sm:$0xff]
  %v781 = vld [vmem:[%s4 + $0x18] sm:$0xff]
  %v782 = vld [vmem:[%s4 + $0x20] sm:$0xff]
  %v783 = vld [vmem:[%s4 + $0x28] sm:$0xff]
  %v784 = vld [vmem:[%s4 + $0x30] sm:$0xff]
  %v785 = vld [vmem:[%s4 + $0x38] sm:$0xff]
  %v786 = vld [vmem:[%s4 + $0x40] sm:$0xff]
  %v787 = vld [vmem:[%s4 + $0x48] sm:$0xff]
  %v788 = vld [vmem:[%s4 + $0x50] sm:$0xff]
  %v789 = vld [vmem:[%s4 + $0x58] sm:$0xff]
  %v790 = vld [vmem:[%s4 + $0x60] sm:$0xff]
  %v791 = vld [vmem:[%s4 + $0x68] sm:$0xff]
  %v792 = vld [vmem:[%s4 + $0x70] sm:$0xff]
  %v793 = vld [vmem:[%s4 + $0x78] sm:$0xff]
  %v794 = vld [vmem:[%s4 + $0x80] sm:$0xff]
  %v795 = vld [vmem:[%s4 + $0x88] sm:$0xff]
  %v796 = vld [vmem:[%s4 + $0x90] sm:$0xff]
  %v797 = vld [vmem:[%s4 + $0x98] sm:$0xff]
  %v798 = vld [vmem:[%s4 + $0xa0] sm:$0xff]
  %v799 = vld [vmem:[%s4 + $0xa8] sm:$0xff]
  %v800 = vld [vmem:[%s4 + $0xb0] sm:$0xff]
  %v801 = vld [vmem:[%s4 + $0xb8] sm:$0xff]
  %v802 = vld [vmem:[%s4 + $0xc0] sm:$0xff]
  %v803 = vld [vmem:[%s4 + $0xc8] sm:$0xff]
  %v804 = vld [vmem:[%s4 + $0xd0] sm:$0xff]
  %v805 = vld [vmem:[%s4 + $0xd8] sm:$0xff]
  %v806 = vld [vmem:[%s4 + $0xe0] sm:$0xff]
  %v807 = vld [vmem:[%s4 + $0xe8] sm:$0xff]
  %v808 = vld [vmem:[%s4 + $0xf0] sm:$0xff]
  %v809 = vld [vmem:[%s4 + $0xf8] sm:$0xff]
  %v810 = vld [vmem:[%s4 + $0x100] sm:$0xff]
  %v811 = vld [vmem:[%s4 + $0x108] sm:$0xff]
  %v812 = vld [vmem:[%s4 + $0x110] sm:$0xff]
  %v813 = vld [vmem:[%s4 + $0x118] sm:$0xff]
  %v814 = vld [vmem:[%s4 + $0x120] sm:$0xff]
  %v815 = vld [vmem:[%s4 + $0x128] sm:$0xff]
  %v816 = vld [vmem:[%s4 + $0x130] sm:$0xff]
  %v817 = vld [vmem:[%s4 + $0x138] sm:$0xff]
  %v818 = vld [vmem:[%s4 + $0x140] sm:$0xff]
  %v819 = vld [vmem:[%s4 + $0x148] sm:$0xff]
  %v820 = vld [vmem:[%s4 + $0x150] sm:$0xff]
  %v821 = vld [vmem:[%s4 + $0x158] sm:$0xff]
  %v822 = vld [vmem:[%s4 + $0x160] sm:$0xff]
  %v823 = vld [vmem:[%s4 + $0x168] sm:$0xff]
  %v824 = vld [vmem:[%s4 + $0x170] sm:$0xff]
  %v825 = vld [vmem:[%s4 + $0x178] sm:$0xff]
  %v826 = vld [vmem:[%s4 + $0x180] sm:$0xff]
  %v827 = vld [vmem:[%s4 + $0x188] sm:$0xff]
  %v828 = vld [vmem:[%s4 + $0x190] sm:$0xff]
  %v829 = vld [vmem:[%s4 + $0x198] sm:$0xff]
  %v830 = vld [vmem:[%s4 + $0x1a0] sm:$0xff]
  %v831 = vld [vmem:[%s4 + $0x1a8] sm:$0xff]
  %v832 = vld [vmem:[%s4 + $0x1b0] sm:$0xff]
  %v833 = vld [vmem:[%s4 + $0x1b8] sm:$0xff]
  %v834 = vld [vmem:[%s4 + $0x1c0] sm:$0xff]
  %v835 = vld [vmem:[%s4 + $0x1c8] sm:$0xff]
  %v836 = vld [vmem:[%s4 + $0x1d0] sm:$0xff]
  %v837 = vld [vmem:[%s4 + $0x1d8] sm:$0xff]
  %v838 = vld [vmem:[%s4 + $0x1e0] sm:$0xff]
  %v839 = vld [vmem:[%s4 + $0x1e8] sm:$0xff]
  %v840 = vld [vmem:[%s4 + $0x1f0] sm:$0xff]
  %v841 = vld [vmem:[%s4 + $0x1f8] sm:$0xff]
  %v842 = vadd.f32 %v714, %v778
  %v843 = vadd.f32 %v715, %v779
  %v844 = vadd.f32 %v716, %v780
  %v845 = vadd.f32 %v717, %v781
  %v846 = vadd.f32 %v718, %v782
  %v847 = vadd.f32 %v719, %v783
  %v848 = vadd.f32 %v720, %v784
  %v849 = vadd.f32 %v721, %v785
  %v850 = vadd.f32 %v722, %v786
  %v851 = vadd.f32 %v723, %v787
  %v852 = vadd.f32 %v724, %v788
  %v853 = vadd.f32 %v725, %v789
  %v854 = vadd.f32 %v726, %v790
  %v855 = vadd.f32 %v727, %v791
  %v856 = vadd.f32 %v728, %v792
  %v857 = vadd.f32 %v729, %v793
  %v858 = vadd.f32 %v730, %v794
  %v859 = vadd.f32 %v731, %v795
  %v860 = vadd.f32 %v732, %v796
  %v861 = vadd.f32 %v733, %v797
  %v862 = vadd.f32 %v734, %v798
  %v863 = vadd.f32 %v735, %v799
  %v864 = vadd.f32 %v736, %v800
  %v865 = vadd.f32 %v737, %v801
  %v866 = vadd.f32 %v738, %v802
  %v867 = vadd.f32 %v739, %v803
  %v868 = vadd.f32 %v740, %v804
  %v869 = vadd.f32 %v741, %v805
  %v870 = vadd.f32 %v742, %v806
  %v871 = vadd.f32 %v743, %v807
  %v872 = vadd.f32 %v744, %v808
  %v873 = vadd.f32 %v745, %v809
  %v874 = vadd.f32 %v746, %v810
  %v875 = vadd.f32 %v747, %v811
  %v876 = vadd.f32 %v748, %v812
  %v877 = vadd.f32 %v749, %v813
  %v878 = vadd.f32 %v750, %v814
  %v879 = vadd.f32 %v751, %v815
  %v880 = vadd.f32 %v752, %v816
  %v881 = vadd.f32 %v753, %v817
  %v882 = vadd.f32 %v754, %v818
  %v883 = vadd.f32 %v755, %v819
  %v884 = vadd.f32 %v756, %v820
  %v885 = vadd.f32 %v757, %v821
  %v886 = vadd.f32 %v758, %v822
  %v887 = vadd.f32 %v759, %v823
  %v888 = vadd.f32 %v760, %v824
  %v889 = vadd.f32 %v761, %v825
  %v890 = vadd.f32 %v762, %v826
  %v891 = vadd.f32 %v763, %v827
  %v892 = vadd.f32 %v764, %v828
  %v893 = vadd.f32 %v765, %v829
  %v894 = vadd.f32 %v766, %v830
  %v895 = vadd.f32 %v767, %v831
  %v896 = vadd.f32 %v768, %v832
  %v897 = vadd.f32 %v769, %v833
  %v898 = vadd.f32 %v770, %v834
  %v899 = vadd.f32 %v771, %v835
  %v900 = vadd.f32 %v772, %v836
  %v901 = vadd.f32 %v773, %v837
  %v902 = vadd.f32 %v774, %v838
  %v903 = vadd.f32 %v775, %v839
  %v904 = vadd.f32 %v776, %v840
  %v905 = vadd.f32 %v777, %v841
  %v906 = vmax.f32 %v842, 0.0
  %v907 = vmax.f32 %v843, 0.0
  %v908 = vmax.f32 %v844, 0.0
  %v909 = vmax.f32 %v845, 0.0
  %v910 = vmax.f32 %v846, 0.0
  %v911 = vmax.f32 %v847, 0.0
  %v912 = vmax.f32 %v848, 0.0
  %v913 = vmax.f32 %v849, 0.0
  %v914 = vmax.f32 %v850, 0.0
  %v915 = vmax.f32 %v851, 0.0
  %v916 = vmax.f32 %v852, 0.0
  %v917 = vmax.f32 %v853, 0.0
  %v918 = vmax.f32 %v854, 0.0
  %v919 = vmax.f32 %v855, 0.0
  %v920 = vmax.f32 %v856, 0.0
  %v921 = vmax.f32 %v857, 0.0
  %v922 = vmax.f32 %v858, 0.0
  %v923 = vmax.f32 %v859, 0.0
  %v924 = vmax.f32 %v860, 0.0
  %v925 = vmax.f32 %v861, 0.0
  %v926 = vmax.f32 %v862, 0.0
  %v927 = vmax.f32 %v863, 0.0
  %v928 = vmax.f32 %v864, 0.0
  %v929 = vmax.f32 %v865, 0.0
  %v930 = vmax.f32 %v866, 0.0
  %v931 = vmax.f32 %v867, 0.0
  %v932 = vmax.f32 %v868, 0.0
  %v933 = vmax.f32 %v869, 0.0
  %v934 = vmax.f32 %v870, 0.0
  %v935 = vmax.f32 %v871, 0.0
  %v936 = vmax.f32 %v872, 0.0
  %v937 = vmax.f32 %v873, 0.0
  %v938 = vmax.f32 %v874, 0.0
  %v939 = vmax.f32 %v875, 0.0
  %v940 = vmax.f32 %v876, 0.0
  %v941 = vmax.f32 %v877, 0.0
  %v942 = vmax.f32 %v878, 0.0
  %v943 = vmax.f32 %v879, 0.0
  %v944 = vmax.f32 %v880, 0.0
  %v945 = vmax.f32 %v881, 0.0
  %v946 = vmax.f32 %v882, 0.0
  %v947 = vmax.f32 %v883, 0.0
  %v948 = vmax.f32 %v884, 0.0
  %v949 = vmax.f32 %v885, 0.0
  %v950 = vmax.f32 %v886, 0.0
  %v951 = vmax.f32 %v887, 0.0
  %v952 = vmax.f32 %v888, 0.0
  %v953 = vmax.f32 %v889, 0.0
  %v954 = vmax.f32 %v890, 0.0
  %v955 = vmax.f32 %v891, 0.0
  %v956 = vmax.f32 %v892, 0.0
  %v957 = vmax.f32 %v893, 0.0
  %v958 = vmax.f32 %v894, 0.0
  %v959 = vmax.f32 %v895, 0.0
  %v960 = vmax.f32 %v896, 0.0
  %v961 = vmax.f32 %v897, 0.0
  %v962 = vmax.f32 %v898, 0.0
  %v963 = vmax.f32 %v899, 0.0
  %v964 = vmax.f32 %v900, 0.0
  %v965 = vmax.f32 %v901, 0.0
  %v966 = vmax.f32 %v902, 0.0
  %v967 = vmax.f32 %v903, 0.0
  %v968 = vmax.f32 %v904, 0.0
  %v969 = vmax.f32 %v905, 0.0
  %vm970 = vcmask 261120
  %971 = vst.msk [vmem:[%s5] sm:$0xff] %vm970, %v906
  %972 = vst.msk [vmem:[%s5 + $0x8] sm:$0xff] %vm970, %v907
  %973 = vst.msk [vmem:[%s5 + $0x10] sm:$0xff] %vm970, %v908
  %974 = vst.msk [vmem:[%s5 + $0x18] sm:$0xff] %vm970, %v909
  %975 = vst.msk [vmem:[%s5 + $0x20] sm:$0xff] %vm970, %v910
  %976 = vst.msk [vmem:[%s5 + $0x28] sm:$0xff] %vm970, %v911
  %977 = vst.msk [vmem:[%s5 + $0x30] sm:$0xff] %vm970, %v912
  %978 = vst.msk [vmem:[%s5 + $0x38] sm:$0xff] %vm970, %v913
  %979 = vst.msk [vmem:[%s5 + $0x40] sm:$0xff] %vm970, %v914
  %980 = vst.msk [vmem:[%s5 + $0x48] sm:$0xff] %vm970, %v915
  %981 = vst.msk [vmem:[%s5 + $0x50] sm:$0xff] %vm970, %v916
  %982 = vst.msk [vmem:[%s5 + $0x58] sm:$0xff] %vm970, %v917
  %983 = vst.msk [vmem:[%s5 + $0x60] sm:$0xff] %vm970, %v918
  %984 = vst.msk [vmem:[%s5 + $0x68] sm:$0xff] %vm970, %v919
  %985 = vst.msk [vmem:[%s5 + $0x70] sm:$0xff] %vm970, %v920
  %986 = vst.msk [vmem:[%s5 + $0x78] sm:$0xff] %vm970, %v921
  %987 = vst.msk [vmem:[%s5 + $0x80] sm:$0xff] %vm970, %v922
  %988 = vst.msk [vmem:[%s5 + $0x88] sm:$0xff] %vm970, %v923
  %989 = vst.msk [vmem:[%s5 + $0x90] sm:$0xff] %vm970, %v924
  %990 = vst.msk [vmem:[%s5 + $0x98] sm:$0xff] %vm970, %v925
  %991 = vst.msk [vmem:[%s5 + $0xa0] sm:$0xff] %vm970, %v926
  %992 = vst.msk [vmem:[%s5 + $0xa8] sm:$0xff] %vm970, %v927
  %993 = vst.msk [vmem:[%s5 + $0xb0] sm:$0xff] %vm970, %v928
  %994 = vst.msk [vmem:[%s5 + $0xb8] sm:$0xff] %vm970, %v929
  %995 = vst.msk [vmem:[%s5 + $0xc0] sm:$0xff] %vm970, %v930
  %996 = vst.msk [vmem:[%s5 + $0xc8] sm:$0xff] %vm970, %v931
  %997 = vst.msk [vmem:[%s5 + $0xd0] sm:$0xff] %vm970, %v932
  %998 = vst.msk [vmem:[%s5 + $0xd8] sm:$0xff] %vm970, %v933
  %999 = vst.msk [vmem:[%s5 + $0xe0] sm:$0xff] %vm970, %v934
  %1000 = vst.msk [vmem:[%s5 + $0xe8] sm:$0xff] %vm970, %v935
  %1001 = vst.msk [vmem:[%s5 + $0xf0] sm:$0xff] %vm970, %v936
  %1002 = vst.msk [vmem:[%s5 + $0xf8] sm:$0xff] %vm970, %v937
  %1003 = vst.msk [vmem:[%s5 + $0x100] sm:$0xff] %vm970, %v938
  %1004 = vst.msk [vmem:[%s5 + $0x108] sm:$0xff] %vm970, %v939
  %1005 = vst.msk [vmem:[%s5 + $0x110] sm:$0xff] %vm970, %v940
  %1006 = vst.msk [vmem:[%s5 + $0x118] sm:$0xff] %vm970, %v941
  %1007 = vst.msk [vmem:[%s5 + $0x120] sm:$0xff] %vm970, %v942
  %1008 = vst.msk [vmem:[%s5 + $0x128] sm:$0xff] %vm970, %v943
  %1009 = vst.msk [vmem:[%s5 + $0x130] sm:$0xff] %vm970, %v944
  %1010 = vst.msk [vmem:[%s5 + $0x138] sm:$0xff] %vm970, %v945
  %1011 = vst.msk [vmem:[%s5 + $0x140] sm:$0xff] %vm970, %v946
  %1012 = vst.msk [vmem:[%s5 + $0x148] sm:$0xff] %vm970, %v947
  %1013 = vst.msk [vmem:[%s5 + $0x150] sm:$0xff] %vm970, %v948
  %1014 = vst.msk [vmem:[%s5 + $0x158] sm:$0xff] %vm970, %v949
  %1015 = vst.msk [vmem:[%s5 + $0x160] sm:$0xff] %vm970, %v950
  %1016 = vst.msk [vmem:[%s5 + $0x168] sm:$0xff] %vm970, %v951
  %1017 = vst.msk [vmem:[%s5 + $0x170] sm:$0xff] %vm970, %v952
  %1018 = vst.msk [vmem:[%s5 + $0x178] sm:$0xff] %vm970, %v953
  %1019 = vst.msk [vmem:[%s5 + $0x180] sm:$0xff] %vm970, %v954
  %1020 = vst.msk [vmem:[%s5 + $0x188] sm:$0xff] %vm970, %v955
  %1021 = vst.msk [vmem:[%s5 + $0x190] sm:$0xff] %vm970, %v956
  %1022 = vst.msk [vmem:[%s5 + $0x198] sm:$0xff] %vm970, %v957
  %1023 = vst.msk [vmem:[%s5 + $0x1a0] sm:$0xff] %vm970, %v958
  %1024 = vst.msk [vmem:[%s5 + $0x1a8] sm:$0xff] %vm970, %v959
  %1025 = vst.msk [vmem:[%s5 + $0x1b0] sm:$0xff] %vm970, %v960
  %1026 = vst.msk [vmem:[%s5 + $0x1b8] sm:$0xff] %vm970, %v961
  %1027 = vst.msk [vmem:[%s5 + $0x1c0] sm:$0xff] %vm970, %v962
  %1028 = vst.msk [vmem:[%s5 + $0x1c8] sm:$0xff] %vm970, %v963
  %1029 = vst.msk [vmem:[%s5 + $0x1d0] sm:$0xff] %vm970, %v964
  %1030 = vst.msk [vmem:[%s5 + $0x1d8] sm:$0xff] %vm970, %v965
  %1031 = vst.msk [vmem:[%s5 + $0x1e0] sm:$0xff] %vm970, %v966
  %1032 = vst.msk [vmem:[%s5 + $0x1e8] sm:$0xff] %vm970, %v967
  %1033 = vst.msk [vmem:[%s5 + $0x1f0] sm:$0xff] %vm970, %v968
  %1034 = vst.msk [vmem:[%s5 + $0x1f8] sm:$0xff] %vm970, %v969
  // Predicated region
  $region22: #{_lambda_.26} parent=0 // pred_check
    _
  $region23: #{_lambda_.26} parent=0 // pred_check_branch
    %1036 = sbr.rel (0) target = $region25
  $region24: #{_lambda_.26} parent=0 // pred_region
    _
  $region25: #{_lambda_.26} parent=0 // pred_fallthru
    _
  // Predicated region
  $region26: #{_lambda_.26} parent=0 // pred_check
    _
  $region27: #{_lambda_.26} parent=0 // pred_check_branch
    %1038 = sbr.rel (0) target = $region29
  $region28: #{_lambda_.26} parent=0 // pred_region
    _
  $region29: #{_lambda_.26} parent=0 // pred_fallthru
    _

// kernel: _lambda_.28
$region0: #{_lambda_.28}
  #allocation0 [shape = 'u32[]', space=smem, size = 0x4, offset = 0x4, fixed_abs, tag = 'smem constant byte address 0x4 - core index']
  #allocation1 [shape = 'u32[144,128]{1,0:T(1,128)}', space=vmem, size = 0x12000, scoped, tag = 'internal scratch']
  %s0 = inlined_call_operand.vmem [shape: bf16[512,32], index: 0, kind: input, shape index: {}]
  %s1 = inlined_call_operand.vmem [shape: bf16[32,16], index: 1, kind: input, shape index: {}]
  %s2 = inlined_call_operand.vmem [shape: f32[1,16], index: 2, kind: input, shape index: {}]
  %s3 = inlined_call_operand.vmem [shape: f32[1,16], index: 3, kind: input, shape index: {}]
  %s4 = inlined_call_operand.vmem [shape: f32[512,16], index: 4, kind: output, shape index: {}]
  %s5 = sld [smem:[#allocation0]]
  $region26: #{_lambda_.28} parent=0
    _
  %s7 = ssub.s32 1, %s5
  %s8 = scalar_select 0, %s7, %s5
  // Predicated region
  $region2: #{_lambda_.28} parent=0 // pred_check
    _
  $region3: #{_lambda_.28} parent=0 // pred_check_branch
    %10 = sbr.rel (0) target = $region5
  $region4: #{_lambda_.28} parent=0 // pred_region
    _
  $region5: #{_lambda_.28} parent=0 // pred_fallthru
    _
  // Predicated region
  $region6: #{_lambda_.28} parent=0 // pred_check
    _
  $region7: #{_lambda_.28} parent=0 // pred_check_branch
    %12 = sbr.rel (0) target = $region9
  $region8: #{_lambda_.28} parent=0 // pred_region
    _
  $region9: #{_lambda_.28} parent=0 // pred_fallthru
    _
  // Predicated region
  $region10: #{_lambda_.28} parent=0 // pred_check
    _
  $region11: #{_lambda_.28} parent=0 // pred_check_branch
    %14 = sbr.rel (0) target = $region13
  $region12: #{_lambda_.28} parent=0 // pred_region
    _
  $region13: #{_lambda_.28} parent=0 // pred_fallthru
    _
  // Predicated region
  $region14: #{_lambda_.28} parent=0 // pred_check
    _
  $region15: #{_lambda_.28} parent=0 // pred_check_branch
    %16 = sbr.rel (0) target = $region17
  $region16: #{_lambda_.28} parent=0 // pred_region
    _
  $region17: #{_lambda_.28} parent=0 // pred_fallthru
    _
  %v18 = vld [vmem:[%s0] sm:$0xf]
  %v19 = vld [vmem:[%s0 + $0x4] sm:$0xf]
  %v20 = vld [vmem:[%s0 + $0x8] sm:$0xf]
  %v21 = vld [vmem:[%s0 + $0xc] sm:$0xf]
  %v22 = vld [vmem:[%s0 + $0x10] sm:$0xf]
  %v23 = vld [vmem:[%s0 + $0x14] sm:$0xf]
  %v24 = vld [vmem:[%s0 + $0x18] sm:$0xf]
  %v25 = vld [vmem:[%s0 + $0x1c] sm:$0xf]
  %v26 = vld [vmem:[%s0 + $0x20] sm:$0xf]
  %v27 = vld [vmem:[%s0 + $0x24] sm:$0xf]
  %v28 = vld [vmem:[%s0 + $0x28] sm:$0xf]
  %v29 = vld [vmem:[%s0 + $0x2c] sm:$0xf]
  %v30 = vld [vmem:[%s0 + $0x30] sm:$0xf]
  %v31 = vld [vmem:[%s0 + $0x34] sm:$0xf]
  %v32 = vld [vmem:[%s0 + $0x38] sm:$0xf]
  %v33 = vld [vmem:[%s0 + $0x3c] sm:$0xf]
  %v34 = vld [vmem:[%s0 + $0x40] sm:$0xf]
  %v35 = vld [vmem:[%s0 + $0x44] sm:$0xf]
  %v36 = vld [vmem:[%s0 + $0x48] sm:$0xf]
  %v37 = vld [vmem:[%s0 + $0x4c] sm:$0xf]
  %v38 = vld [vmem:[%s0 + $0x50] sm:$0xf]
  %v39 = vld [vmem:[%s0 + $0x54] sm:$0xf]
  %v40 = vld [vmem:[%s0 + $0x58] sm:$0xf]
  %v41 = vld [vmem:[%s0 + $0x5c] sm:$0xf]
  %v42 = vld [vmem:[%s0 + $0x60] sm:$0xf]
  %v43 = vld [vmem:[%s0 + $0x64] sm:$0xf]
  %v44 = vld [vmem:[%s0 + $0x68] sm:$0xf]
  %v45 = vld [vmem:[%s0 + $0x6c] sm:$0xf]
  %v46 = vld [vmem:[%s0 + $0x70] sm:$0xf]
  %v47 = vld [vmem:[%s0 + $0x74] sm:$0xf]
  %v48 = vld [vmem:[%s0 + $0x78] sm:$0xf]
  %v49 = vld [vmem:[%s0 + $0x7c] sm:$0xf]
  %v50 = vld [vmem:[%s0 + $0x80] sm:$0xf]
  %v51 = vld [vmem:[%s0 + $0x84] sm:$0xf]
  %v52 = vld [vmem:[%s0 + $0x88] sm:$0xf]
  %v53 = vld [vmem:[%s0 + $0x8c] sm:$0xf]
  %v54 = vld [vmem:[%s0 + $0x90] sm:$0xf]
  %v55 = vld [vmem:[%s0 + $0x94] sm:$0xf]
  %v56 = vld [vmem:[%s0 + $0x98] sm:$0xf]
  %v57 = vld [vmem:[%s0 + $0x9c] sm:$0xf]
  %v58 = vld [vmem:[%s0 + $0xa0] sm:$0xf]
  %v59 = vld [vmem:[%s0 + $0xa4] sm:$0xf]
  %v60 = vld [vmem:[%s0 + $0xa8] sm:$0xf]
  %v61 = vld [vmem:[%s0 + $0xac] sm:$0xf]
  %v62 = vld [vmem:[%s0 + $0xb0] sm:$0xf]
  %v63 = vld [vmem:[%s0 + $0xb4] sm:$0xf]
  %v64 = vld [vmem:[%s0 + $0xb8] sm:$0xf]
  %v65 = vld [vmem:[%s0 + $0xbc] sm:$0xf]
  %v66 = vld [vmem:[%s0 + $0xc0] sm:$0xf]
  %v67 = vld [vmem:[%s0 + $0xc4] sm:$0xf]
  %v68 = vld [vmem:[%s0 + $0xc8] sm:$0xf]
  %v69 = vld [vmem:[%s0 + $0xcc] sm:$0xf]
  %v70 = vld [vmem:[%s0 + $0xd0] sm:$0xf]
  %v71 = vld [vmem:[%s0 + $0xd4] sm:$0xf]
  %v72 = vld [vmem:[%s0 + $0xd8] sm:$0xf]
  %v73 = vld [vmem:[%s0 + $0xdc] sm:$0xf]
  %v74 = vld [vmem:[%s0 + $0xe0] sm:$0xf]
  %v75 = vld [vmem:[%s0 + $0xe4] sm:$0xf]
  %v76 = vld [vmem:[%s0 + $0xe8] sm:$0xf]
  %v77 = vld [vmem:[%s0 + $0xec] sm:$0xf]
  %v78 = vld [vmem:[%s0 + $0xf0] sm:$0xf]
  %v79 = vld [vmem:[%s0 + $0xf4] sm:$0xf]
  %v80 = vld [vmem:[%s0 + $0xf8] sm:$0xf]
  %v81 = vld [vmem:[%s0 + $0xfc] sm:$0xf]
  %v82 = vld [vmem:[%s1] sm:$0xf]
  %v83 = vld [vmem:[%s1 + $0x4] sm:$0xf]
  %v84 = vld [vmem:[%s1 + $0x8] sm:$0xf]
  %v85 = vld [vmem:[%s1 + $0xc] sm:$0xf]
  %v150 = vunpack.c.l.b16 %v18
  %v151 = vunpack.c.l.b16 %v19
  %v152 = vunpack.c.l.b16 %v20
  %v153 = vunpack.c.l.b16 %v21
  %v154 = vunpack.c.l.b16 %v22
  %v155 = vunpack.c.l.b16 %v23
  %v156 = vunpack.c.l.b16 %v24
  %v157 = vunpack.c.l.b16 %v25
  %v158 = vunpack.c.l.b16 %v26
  %v159 = vunpack.c.l.b16 %v27
  %v160 = vunpack.c.l.b16 %v28
  %v161 = vunpack.c.l.b16 %v29
  %v162 = vunpack.c.l.b16 %v30
  %v163 = vunpack.c.l.b16 %v31
  %v164 = vunpack.c.l.b16 %v32
  %v165 = vunpack.c.l.b16 %v33
  %v166 = vunpack.c.l.b16 %v34
  %v167 = vunpack.c.l.b16 %v35
  %v168 = vunpack.c.l.b16 %v36
  %v169 = vunpack.c.l.b16 %v37
  %v170 = vunpack.c.l.b16 %v38
  %v171 = vunpack.c.l.b16 %v39
  %v172 = vunpack.c.l.b16 %v40
  %v173 = vunpack.c.l.b16 %v41
  %v174 = vunpack.c.l.b16 %v42
  %v175 = vunpack.c.l.b16 %v43
  %v176 = vunpack.c.l.b16 %v44
  %v177 = vunpack.c.l.b16 %v45
  %v178 = vunpack.c.l.b16 %v46
  %v179 = vunpack.c.l.b16 %v47
  %v180 = vunpack.c.l.b16 %v48
  %v181 = vunpack.c.l.b16 %v49
  %v182 = vunpack.c.l.b16 %v50
  %v183 = vunpack.c.l.b16 %v51
  %v184 = vunpack.c.l.b16 %v52
  %v185 = vunpack.c.l.b16 %v53
  %v186 = vunpack.c.l.b16 %v54
  %v187 = vunpack.c.l.b16 %v55
  %v188 = vunpack.c.l.b16 %v56
  %v189 = vunpack.c.l.b16 %v57
  %v190 = vunpack.c.l.b16 %v58
  %v191 = vunpack.c.l.b16 %v59
  %v192 = vunpack.c.l.b16 %v60
  %v193 = vunpack.c.l.b16 %v61
  %v194 = vunpack.c.l.b16 %v62
  %v195 = vunpack.c.l.b16 %v63
  %v196 = vunpack.c.l.b16 %v64
  %v197 = vunpack.c.l.b16 %v65
  %v198 = vunpack.c.l.b16 %v66
  %v199 = vunpack.c.l.b16 %v67
  %v200 = vunpack.c.l.b16 %v68
  %v201 = vunpack.c.l.b16 %v69
  %v202 = vunpack.c.l.b16 %v70
  %v203 = vunpack.c.l.b16 %v71
  %v204 = vunpack.c.l.b16 %v72
  %v205 = vunpack.c.l.b16 %v73
  %v206 = vunpack.c.l.b16 %v74
  %v207 = vunpack.c.l.b16 %v75
  %v208 = vunpack.c.l.b16 %v76
  %v209 = vunpack.c.l.b16 %v77
  %v210 = vunpack.c.l.b16 %v78
  %v211 = vunpack.c.l.b16 %v79
  %v212 = vunpack.c.l.b16 %v80
  %v213 = vunpack.c.l.b16 %v81
  %v214 = vpack.c.b16 %v151, %v150
  %v215 = vpack.c.b16 %v153, %v152
  %v216 = vpack.c.b16 %v155, %v154
  %v217 = vpack.c.b16 %v157, %v156
  %v218 = vpack.c.b16 %v159, %v158
  %v219 = vpack.c.b16 %v161, %v160
  %v220 = vpack.c.b16 %v163, %v162
  %v221 = vpack.c.b16 %v165, %v164
  %v222 = vpack.c.b16 %v167, %v166
  %v223 = vpack.c.b16 %v169, %v168
  %v224 = vpack.c.b16 %v171, %v170
  %v225 = vpack.c.b16 %v173, %v172
  %v226 = vpack.c.b16 %v175, %v174
  %v227 = vpack.c.b16 %v177, %v176
  %v228 = vpack.c.b16 %v179, %v178
  %v229 = vpack.c.b16 %v181, %v180
  %v230 = vpack.c.b16 %v183, %v182
  %v231 = vpack.c.b16 %v185, %v184
  %v232 = vpack.c.b16 %v187, %v186
  %v233 = vpack.c.b16 %v189, %v188
  %v234 = vpack.c.b16 %v191, %v190
  %v235 = vpack.c.b16 %v193, %v192
  %v236 = vpack.c.b16 %v195, %v194
  %v237 = vpack.c.b16 %v197, %v196
  %v238 = vpack.c.b16 %v199, %v198
  %v239 = vpack.c.b16 %v201, %v200
  %v240 = vpack.c.b16 %v203, %v202
  %v241 = vpack.c.b16 %v205, %v204
  %v242 = vpack.c.b16 %v207, %v206
  %v243 = vpack.c.b16 %v209, %v208
  %v244 = vpack.c.b16 %v211, %v210
  %v245 = vpack.c.b16 %v213, %v212
  %v250 = vunpack.c.l.b16 %v82
  %v251 = vunpack.c.l.b16 %v83
  %v252 = vunpack.c.l.b16 %v84
  %v253 = vunpack.c.l.b16 %v85
  %v254 = vpack.c.b16 %v251, %v250
  %v255 = vpack.c.b16 %v253, %v252
  %vm258 = vcmask 261120
  %v260 = vsel %vm258, %v214, 0
  %v263 = vsel %vm258, %v215, 0
  %v266 = vsel %vm258, %v216, 0
  %v269 = vsel %vm258, %v217, 0
  %v272 = vsel %vm258, %v218, 0
  %v275 = vsel %vm258, %v219, 0
  %v278 = vsel %vm258, %v220, 0
  %v281 = vsel %vm258, %v221, 0
  %v284 = vsel %vm258, %v222, 0
  %v287 = vsel %vm258, %v223, 0
  %v290 = vsel %vm258, %v224, 0
  %v293 = vsel %vm258, %v225, 0
  %v296 = vsel %vm258, %v226, 0
  %v299 = vsel %vm258, %v227, 0
  %v302 = vsel %vm258, %v228, 0
  %v305 = vsel %vm258, %v229, 0
  %v308 = vsel %vm258, %v230, 0
  %v311 = vsel %vm258, %v231, 0
  %v314 = vsel %vm258, %v232, 0
  %v317 = vsel %vm258, %v233, 0
  %v320 = vsel %vm258, %v234, 0
  %v323 = vsel %vm258, %v235, 0
  %v326 = vsel %vm258, %v236, 0
  %v329 = vsel %vm258, %v237, 0
  %v332 = vsel %vm258, %v238, 0
  %v335 = vsel %vm258, %v239, 0
  %v338 = vsel %vm258, %v240, 0
  %v341 = vsel %vm258, %v241, 0
  %v344 = vsel %vm258, %v242, 0
  %v347 = vsel %vm258, %v243, 0
  %v350 = vsel %vm258, %v244, 0
  %v353 = vsel %vm258, %v245, 0
  %355 = vmatprep.subr.bf16.mxu0 0
  %356 = vmatpush1.bf16.msra.mxu0 %v254
  %357 = vmatprep.subr.bf16.mxu0 0
  %358 = vmatpush1.bf16.msra.mxu0 %v255
  %359 = vmatprep.subr.bf16.mxu0 0
  %360 = vmatpush1.bf16.msra.mxu0 0
  %361 = vmatprep.subr.bf16.mxu0 0
  %362 = vmatpush1.bf16.msra.mxu0 0
  %363 = vmatprep.subr.bf16.mxu0 0
  %364 = vmatpush1.bf16.msra.mxu0 0
  %365 = vmatprep.subr.bf16.mxu0 0
  %366 = vmatpush1.bf16.msra.mxu0 0
  %367 = vmatprep.subr.bf16.mxu0 0
  %368 = vmatpush1.bf16.msra.mxu0 0
  %369 = vmatprep.subr.bf16.mxu0 0
  %370 = vmatpush1.bf16.msra.mxu0 0
  %371 = vmatprep.subr.bf16.mxu0 0
  %372 = vmatpush1.bf16.msra.mxu0 0
  %373 = vmatprep.subr.bf16.mxu0 0
  %374 = vmatpush1.bf16.msra.mxu0 0
  %375 = vmatprep.subr.bf16.mxu0 0
  %376 = vmatpush1.bf16.msra.mxu0 0
  %377 = vmatprep.subr.bf16.mxu0 0
  %378 = vmatpush1.bf16.msra.mxu0 0
  %379 = vmatprep.subr.bf16.mxu0 0
  %380 = vmatpush1.bf16.msra.mxu0 0
  %381 = vmatprep.subr.bf16.mxu0 0
  %382 = vmatpush1.bf16.msra.mxu0 0
  %383 = vmatprep.subr.bf16.mxu0 0
  %384 = vmatpush1.bf16.msra.mxu0 0
  %385 = vmatprep.subr.bf16.mxu0 0
  %386 = vmatpush1.bf16.msra.mxu0 0
  %387 = vmatprep.mubr.bf16.mxu0 0
  %388 = vmatmul.mubr.bf16.gmra.mrb[0].mxu0 %v260
  %v389 = vpop.f32.mrb[0].mxu0
  %v390 = vadd.f32 0.0, %v389
  %v391 = vpop.f32.mrb[0].mxu0
  %v392 = vpop.f32.mrb[0].mxu0
  %v393 = vadd.f32 0.0, %v392
  %v394 = vpop.f32.mrb[0].mxu0
  %395 = vmatprep.mubr.bf16.mxu0 0
  %396 = vmatmul.mubr.bf16.gmra.mrb[0].mxu0 %v263
  %v397 = vpop.f32.mrb[0].mxu0
  %v398 = vadd.f32 0.0, %v397
  %v399 = vpop.f32.mrb[0].mxu0
  %v400 = vpop.f32.mrb[0].mxu0
  %v401 = vadd.f32 0.0, %v400
  %v402 = vpop.f32.mrb[0].mxu0
  %403 = vmatprep.mubr.bf16.mxu0 0
  %404 = vmatmul.mubr.bf16.gmra.mrb[0].mxu0 %v266
  %v405 = vpop.f32.mrb[0].mxu0
  %v406 = vadd.f32 0.0, %v405
  %v407 = vpop.f32.mrb[0].mxu0
  %v408 = vpop.f32.mrb[0].mxu0
  %v409 = vadd.f32 0.0, %v408
  %v410 = vpop.f32.mrb[0].mxu0
  %411 = vmatprep.mubr.bf16.mxu0 0
  %412 = vmatmul.mubr.bf16.gmra.mrb[0].mxu0 %v269
  %v413 = vpop.f32.mrb[0].mxu0
  %v414 = vadd.f32 0.0, %v413
  %v415 = vpop.f32.mrb[0].mxu0
  %v416 = vpop.f32.mrb[0].mxu0
  %v417 = vadd.f32 0.0, %v416
  %v418 = vpop.f32.mrb[0].mxu0
  %419 = vmatprep.mubr.bf16.mxu0 0
  %420 = vmatmul.mubr.bf16.gmra.mrb[0].mxu0 %v272
  %v421 = vpop.f32.mrb[0].mxu0
  %v422 = vadd.f32 0.0, %v421
  %v423 = vpop.f32.mrb[0].mxu0
  %v424 = vpop.f32.mrb[0].mxu0
  %v425 = vadd.f32 0.0, %v424
  %v426 = vpop.f32.mrb[0].mxu0
  %427 = vmatprep.mubr.bf16.mxu0 0
  %428 = vmatmul.mubr.bf16.gmra.mrb[0].mxu0 %v275
  %v429 = vpop.f32.mrb[0].mxu0
  %v430 = vadd.f32 0.0, %v429
  %v431 = vpop.f32.mrb[0].mxu0
  %v432 = vpop.f32.mrb[0].mxu0
  %v433 = vadd.f32 0.0, %v432
  %v434 = vpop.f32.mrb[0].mxu0
  %435 = vmatprep.mubr.bf16.mxu0 0
  %436 = vmatmul.mubr.bf16.gmra.mrb[0].mxu0 %v278
  %v437 = vpop.f32.mrb[0].mxu0
  %v438 = vadd.f32 0.0, %v437
  %v439 = vpop.f32.mrb[0].mxu0
  %v440 = vpop.f32.mrb[0].mxu0
  %v441 = vadd.f32 0.0, %v440
  %v442 = vpop.f32.mrb[0].mxu0
  %443 = vmatprep.mubr.bf16.mxu0 0
  %444 = vmatmul.mubr.bf16.gmra.mrb[0].mxu0 %v281
  %v445 = vpop.f32.mrb[0].mxu0
  %v446 = vadd.f32 0.0, %v445
  %v447 = vpop.f32.mrb[0].mxu0
  %v448 = vpop.f32.mrb[0].mxu0
  %v449 = vadd.f32 0.0, %v448
  %v450 = vpop.f32.mrb[0].mxu0
  %451 = vmatprep.mubr.bf16.mxu0 0
  %452 = vmatmul.mubr.bf16.gmra.mrb[0].mxu0 %v284
  %v453 = vpop.f32.mrb[0].mxu0
  %v454 = vadd.f32 0.0, %v453
  %v455 = vpop.f32.mrb[0].mxu0
  %v456 = vpop.f32.mrb[0].mxu0
  %v457 = vadd.f32 0.0, %v456
  %v458 = vpop.f32.mrb[0].mxu0
  %459 = vmatprep.mubr.bf16.mxu0 0
  %460 = vmatmul.mubr.bf16.gmra.mrb[0].mxu0 %v287
  %v461 = vpop.f32.mrb[0].mxu0
  %v462 = vadd.f32 0.0, %v461
  %v463 = vpop.f32.mrb[0].mxu0
  %v464 = vpop.f32.mrb[0].mxu0
  %v465 = vadd.f32 0.0, %v464
  %v466 = vpop.f32.mrb[0].mxu0
  %467 = vmatprep.mubr.bf16.mxu0 0
  %468 = vmatmul.mubr.bf16.gmra.mrb[0].mxu0 %v290
  %v469 = vpop.f32.mrb[0].mxu0
  %v470 = vadd.f32 0.0, %v469
  %v471 = vpop.f32.mrb[0].mxu0
  %v472 = vpop.f32.mrb[0].mxu0
  %v473 = vadd.f32 0.0, %v472
  %v474 = vpop.f32.mrb[0].mxu0
  %475 = vmatprep.mubr.bf16.mxu0 0
  %476 = vmatmul.mubr.bf16.gmra.mrb[0].mxu0 %v293
  %v477 = vpop.f32.mrb[0].mxu0
  %v478 = vadd.f32 0.0, %v477
  %v479 = vpop.f32.mrb[0].mxu0
  %v480 = vpop.f32.mrb[0].mxu0
  %v481 = vadd.f32 0.0, %v480
  %v482 = vpop.f32.mrb[0].mxu0
  %483 = vmatprep.mubr.bf16.mxu0 0
  %484 = vmatmul.mubr.bf16.gmra.mrb[0].mxu0 %v296
  %v485 = vpop.f32.mrb[0].mxu0
  %v486 = vadd.f32 0.0, %v485
  %v487 = vpop.f32.mrb[0].mxu0
  %v488 = vpop.f32.mrb[0].mxu0
  %v489 = vadd.f32 0.0, %v488
  %v490 = vpop.f32.mrb[0].mxu0
  %491 = vmatprep.mubr.bf16.mxu0 0
  %492 = vmatmul.mubr.bf16.gmra.mrb[0].mxu0 %v299
  %v493 = vpop.f32.mrb[0].mxu0
  %v494 = vadd.f32 0.0, %v493
  %v495 = vpop.f32.mrb[0].mxu0
  %v496 = vpop.f32.mrb[0].mxu0
  %v497 = vadd.f32 0.0, %v496
  %v498 = vpop.f32.mrb[0].mxu0
  %499 = vmatprep.mubr.bf16.mxu0 0
  %500 = vmatmul.mubr.bf16.gmra.mrb[0].mxu0 %v302
  %v501 = vpop.f32.mrb[0].mxu0
  %v502 = vadd.f32 0.0, %v501
  %v503 = vpop.f32.mrb[0].mxu0
  %v504 = vpop.f32.mrb[0].mxu0
  %v505 = vadd.f32 0.0, %v504
  %v506 = vpop.f32.mrb[0].mxu0
  %507 = vmatprep.mubr.bf16.mxu0 0
  %508 = vmatmul.mubr.bf16.gmra.mrb[0].mxu0 %v305
  %v509 = vpop.f32.mrb[0].mxu0
  %v510 = vadd.f32 0.0, %v509
  %v511 = vpop.f32.mrb[0].mxu0
  %v512 = vpop.f32.mrb[0].mxu0
  %v513 = vadd.f32 0.0, %v512
  %v514 = vpop.f32.mrb[0].mxu0
  %515 = vmatprep.mubr.bf16.mxu0 0
  %516 = vmatmul.mubr.bf16.gmra.mrb[0].mxu0 %v308
  %v517 = vpop.f32.mrb[0].mxu0
  %v518 = vadd.f32 0.0, %v517
  %v519 = vpop.f32.mrb[0].mxu0
  %v520 = vpop.f32.mrb[0].mxu0
  %v521 = vadd.f32 0.0, %v520
  %v522 = vpop.f32.mrb[0].mxu0
  %523 = vmatprep.mubr.bf16.mxu0 0
  %524 = vmatmul.mubr.bf16.gmra.mrb[0].mxu0 %v311
  %v525 = vpop.f32.mrb[0].mxu0
  %v526 = vadd.f32 0.0, %v525
  %v527 = vpop.f32.mrb[0].mxu0
  %v528 = vpop.f32.mrb[0].mxu0
  %v529 = vadd.f32 0.0, %v528
  %v530 = vpop.f32.mrb[0].mxu0
  %531 = vmatprep.mubr.bf16.mxu0 0
  %532 = vmatmul.mubr.bf16.gmra.mrb[0].mxu0 %v314
  %v533 = vpop.f32.mrb[0].mxu0
  %v534 = vadd.f32 0.0, %v533
  %v535 = vpop.f32.mrb[0].mxu0
  %v536 = vpop.f32.mrb[0].mxu0
  %v537 = vadd.f32 0.0, %v536
  %v538 = vpop.f32.mrb[0].mxu0
  %539 = vmatprep.mubr.bf16.mxu0 0
  %540 = vmatmul.mubr.bf16.gmra.mrb[0].mxu0 %v317
  %v541 = vpop.f32.mrb[0].mxu0
  %v542 = vadd.f32 0.0, %v541
  %v543 = vpop.f32.mrb[0].mxu0
  %v544 = vpop.f32.mrb[0].mxu0
  %v545 = vadd.f32 0.0, %v544
  %v546 = vpop.f32.mrb[0].mxu0
  %547 = vmatprep.mubr.bf16.mxu0 0
  %548 = vmatmul.mubr.bf16.gmra.mrb[0].mxu0 %v320
  %v549 = vpop.f32.mrb[0].mxu0
  %v550 = vadd.f32 0.0, %v549
  %v551 = vpop.f32.mrb[0].mxu0
  %v552 = vpop.f32.mrb[0].mxu0
  %v553 = vadd.f32 0.0, %v552
  %v554 = vpop.f32.mrb[0].mxu0
  %555 = vmatprep.mubr.bf16.mxu0 0
  %556 = vmatmul.mubr.bf16.gmra.mrb[0].mxu0 %v323
  %v557 = vpop.f32.mrb[0].mxu0
  %v558 = vadd.f32 0.0, %v557
  %v559 = vpop.f32.mrb[0].mxu0
  %v560 = vpop.f32.mrb[0].mxu0
  %v561 = vadd.f32 0.0, %v560
  %v562 = vpop.f32.mrb[0].mxu0
  %563 = vmatprep.mubr.bf16.mxu0 0
  %564 = vmatmul.mubr.bf16.gmra.mrb[0].mxu0 %v326
  %v565 = vpop.f32.mrb[0].mxu0
  %v566 = vadd.f32 0.0, %v565
  %v567 = vpop.f32.mrb[0].mxu0
  %v568 = vpop.f32.mrb[0].mxu0
  %v569 = vadd.f32 0.0, %v568
  %v570 = vpop.f32.mrb[0].mxu0
  %571 = vmatprep.mubr.bf16.mxu0 0
  %572 = vmatmul.mubr.bf16.gmra.mrb[0].mxu0 %v329
  %v573 = vpop.f32.mrb[0].mxu0
  %v574 = vadd.f32 0.0, %v573
  %v575 = vpop.f32.mrb[0].mxu0
  %v576 = vpop.f32.mrb[0].mxu0
  %v577 = vadd.f32 0.0, %v576
  %v578 = vpop.f32.mrb[0].mxu0
  %579 = vmatprep.mubr.bf16.mxu0 0
  %580 = vmatmul.mubr.bf16.gmra.mrb[0].mxu0 %v332
  %v581 = vpop.f32.mrb[0].mxu0
  %v582 = vadd.f32 0.0, %v581
  %v583 = vpop.f32.mrb[0].mxu0
  %v584 = vpop.f32.mrb[0].mxu0
  %v585 = vadd.f32 0.0, %v584
  %v586 = vpop.f32.mrb[0].mxu0
  %587 = vmatprep.mubr.bf16.mxu0 0
  %588 = vmatmul.mubr.bf16.gmra.mrb[0].mxu0 %v335
  %v589 = vpop.f32.mrb[0].mxu0
  %v590 = vadd.f32 0.0, %v589
  %v591 = vpop.f32.mrb[0].mxu0
  %v592 = vpop.f32.mrb[0].mxu0
  %v593 = vadd.f32 0.0, %v592
  %v594 = vpop.f32.mrb[0].mxu0
  %595 = vmatprep.mubr.bf16.mxu0 0
  %596 = vmatmul.mubr.bf16.gmra.mrb[0].mxu0 %v338
  %v597 = vpop.f32.mrb[0].mxu0
  %v598 = vadd.f32 0.0, %v597
  %v599 = vpop.f32.mrb[0].mxu0
  %v600 = vpop.f32.mrb[0].mxu0
  %v601 = vadd.f32 0.0, %v600
  %v602 = vpop.f32.mrb[0].mxu0
  %603 = vmatprep.mubr.bf16.mxu0 0
  %604 = vmatmul.mubr.bf16.gmra.mrb[0].mxu0 %v341
  %v605 = vpop.f32.mrb[0].mxu0
  %v606 = vadd.f32 0.0, %v605
  %v607 = vpop.f32.mrb[0].mxu0
  %v608 = vpop.f32.mrb[0].mxu0
  %v609 = vadd.f32 0.0, %v608
  %v610 = vpop.f32.mrb[0].mxu0
  %611 = vmatprep.mubr.bf16.mxu0 0
  %612 = vmatmul.mubr.bf16.gmra.mrb[0].mxu0 %v344
  %v613 = vpop.f32.mrb[0].mxu0
  %v614 = vadd.f32 0.0, %v613
  %v615 = vpop.f32.mrb[0].mxu0
  %v616 = vpop.f32.mrb[0].mxu0
  %v617 = vadd.f32 0.0, %v616
  %v618 = vpop.f32.mrb[0].mxu0
  %619 = vmatprep.mubr.bf16.mxu0 0
  %620 = vmatmul.mubr.bf16.gmra.mrb[0].mxu0 %v347
  %v621 = vpop.f32.mrb[0].mxu0
  %v622 = vadd.f32 0.0, %v621
  %v623 = vpop.f32.mrb[0].mxu0
  %v624 = vpop.f32.mrb[0].mxu0
  %v625 = vadd.f32 0.0, %v624
  %v626 = vpop.f32.mrb[0].mxu0
  %627 = vmatprep.mubr.bf16.mxu0 0
  %628 = vmatmul.mubr.bf16.gmra.mrb[0].mxu0 %v350
  %v629 = vpop.f32.mrb[0].mxu0
  %v630 = vadd.f32 0.0, %v629
  %v631 = vpop.f32.mrb[0].mxu0
  %v632 = vpop.f32.mrb[0].mxu0
  %v633 = vadd.f32 0.0, %v632
  %v634 = vpop.f32.mrb[0].mxu0
  %635 = vmatprep.mubr.bf16.mxu0 0
  %636 = vmatmul.mubr.bf16.gmra.mrb[0].mxu0 %v353
  %v637 = vpop.f32.mrb[0].mxu0
  %v638 = vadd.f32 0.0, %v637
  %v639 = vpop.f32.mrb[0].mxu0
  %v640 = vpop.f32.mrb[0].mxu0
  %v641 = vadd.f32 0.0, %v640
  %v642 = vpop.f32.mrb[0].mxu0
  %643 = vdwg.mxu0
  %v644 = vld [vmem:[%s2] sm:$0x1]
  %v646 = vlaneseq
  %v647 = vshrl.u32 %v646, 7
  %v648 = vsub.s32 0, %v647
  %v649 = vrot.slane %v644, %v648
  %v651 = vmul.f32 %v390, %v649
  %v652 = vmul.f32 %v393, %v649
  %v653 = vmul.f32 %v398, %v649
  %v654 = vmul.f32 %v401, %v649
  %v655 = vmul.f32 %v406, %v649
  %v656 = vmul.f32 %v409, %v649
  %v657 = vmul.f32 %v414, %v649
  %v658 = vmul.f32 %v417, %v649
  %v659 = vmul.f32 %v422, %v649
  %v660 = vmul.f32 %v425, %v649
  %v661 = vmul.f32 %v430, %v649
  %v662 = vmul.f32 %v433, %v649
  %v663 = vmul.f32 %v438, %v649
  %v664 = vmul.f32 %v441, %v649
  %v665 = vmul.f32 %v446, %v649
  %v666 = vmul.f32 %v449, %v649
  %v667 = vmul.f32 %v454, %v649
  %v668 = vmul.f32 %v457, %v649
  %v669 = vmul.f32 %v462, %v649
  %v670 = vmul.f32 %v465, %v649
  %v671 = vmul.f32 %v470, %v649
  %v672 = vmul.f32 %v473, %v649
  %v673 = vmul.f32 %v478, %v649
  %v674 = vmul.f32 %v481, %v649
  %v675 = vmul.f32 %v486, %v649
  %v676 = vmul.f32 %v489, %v649
  %v677 = vmul.f32 %v494, %v649
  %v678 = vmul.f32 %v497, %v649
  %v679 = vmul.f32 %v502, %v649
  %v680 = vmul.f32 %v505, %v649
  %v681 = vmul.f32 %v510, %v649
  %v682 = vmul.f32 %v513, %v649
  %v683 = vmul.f32 %v518, %v649
  %v684 = vmul.f32 %v521, %v649
  %v685 = vmul.f32 %v526, %v649
  %v686 = vmul.f32 %v529, %v649
  %v687 = vmul.f32 %v534, %v649
  %v688 = vmul.f32 %v537, %v649
  %v689 = vmul.f32 %v542, %v649
  %v690 = vmul.f32 %v545, %v649
  %v691 = vmul.f32 %v550, %v649
  %v692 = vmul.f32 %v553, %v649
  %v693 = vmul.f32 %v558, %v649
  %v694 = vmul.f32 %v561, %v649
  %v695 = vmul.f32 %v566, %v649
  %v696 = vmul.f32 %v569, %v649
  %v697 = vmul.f32 %v574, %v649
  %v698 = vmul.f32 %v577, %v649
  %v699 = vmul.f32 %v582, %v649
  %v700 = vmul.f32 %v585, %v649
  %v701 = vmul.f32 %v590, %v649
  %v702 = vmul.f32 %v593, %v649
  %v703 = vmul.f32 %v598, %v649
  %v704 = vmul.f32 %v601, %v649
  %v705 = vmul.f32 %v606, %v649
  %v706 = vmul.f32 %v609, %v649
  %v707 = vmul.f32 %v614, %v649
  %v708 = vmul.f32 %v617, %v649
  %v709 = vmul.f32 %v622, %v649
  %v710 = vmul.f32 %v625, %v649
  %v711 = vmul.f32 %v630, %v649
  %v712 = vmul.f32 %v633, %v649
  %v713 = vmul.f32 %v638, %v649
  %v714 = vmul.f32 %v641, %v649
  %v715 = vld [vmem:[%s3] sm:$0x1]
  %v717 = vlaneseq
  %v718 = vshrl.u32 %v717, 7
  %v719 = vsub.s32 0, %v718
  %v720 = vrot.slane %v715, %v719
  %v722 = vadd.f32 %v651, %v720
  %v723 = vadd.f32 %v652, %v720
  %v724 = vadd.f32 %v653, %v720
  %v725 = vadd.f32 %v654, %v720
  %v726 = vadd.f32 %v655, %v720
  %v727 = vadd.f32 %v656, %v720
  %v728 = vadd.f32 %v657, %v720
  %v729 = vadd.f32 %v658, %v720
  %v730 = vadd.f32 %v659, %v720
  %v731 = vadd.f32 %v660, %v720
  %v732 = vadd.f32 %v661, %v720
  %v733 = vadd.f32 %v662, %v720
  %v734 = vadd.f32 %v663, %v720
  %v735 = vadd.f32 %v664, %v720
  %v736 = vadd.f32 %v665, %v720
  %v737 = vadd.f32 %v666, %v720
  %v738 = vadd.f32 %v667, %v720
  %v739 = vadd.f32 %v668, %v720
  %v740 = vadd.f32 %v669, %v720
  %v741 = vadd.f32 %v670, %v720
  %v742 = vadd.f32 %v671, %v720
  %v743 = vadd.f32 %v672, %v720
  %v744 = vadd.f32 %v673, %v720
  %v745 = vadd.f32 %v674, %v720
  %v746 = vadd.f32 %v675, %v720
  %v747 = vadd.f32 %v676, %v720
  %v748 = vadd.f32 %v677, %v720
  %v749 = vadd.f32 %v678, %v720
  %v750 = vadd.f32 %v679, %v720
  %v751 = vadd.f32 %v680, %v720
  %v752 = vadd.f32 %v681, %v720
  %v753 = vadd.f32 %v682, %v720
  %v754 = vadd.f32 %v683, %v720
  %v755 = vadd.f32 %v684, %v720
  %v756 = vadd.f32 %v685, %v720
  %v757 = vadd.f32 %v686, %v720
  %v758 = vadd.f32 %v687, %v720
  %v759 = vadd.f32 %v688, %v720
  %v760 = vadd.f32 %v689, %v720
  %v761 = vadd.f32 %v690, %v720
  %v762 = vadd.f32 %v691, %v720
  %v763 = vadd.f32 %v692, %v720
  %v764 = vadd.f32 %v693, %v720
  %v765 = vadd.f32 %v694, %v720
  %v766 = vadd.f32 %v695, %v720
  %v767 = vadd.f32 %v696, %v720
  %v768 = vadd.f32 %v697, %v720
  %v769 = vadd.f32 %v698, %v720
  %v770 = vadd.f32 %v699, %v720
  %v771 = vadd.f32 %v700, %v720
  %v772 = vadd.f32 %v701, %v720
  %v773 = vadd.f32 %v702, %v720
  %v774 = vadd.f32 %v703, %v720
  %v775 = vadd.f32 %v704, %v720
  %v776 = vadd.f32 %v705, %v720
  %v777 = vadd.f32 %v706, %v720
  %v778 = vadd.f32 %v707, %v720
  %v779 = vadd.f32 %v708, %v720
  %v780 = vadd.f32 %v709, %v720
  %v781 = vadd.f32 %v710, %v720
  %v782 = vadd.f32 %v711, %v720
  %v783 = vadd.f32 %v712, %v720
  %v784 = vadd.f32 %v713, %v720
  %v785 = vadd.f32 %v714, %v720
  %v786 = vmax.f32 %v722, 0.0
  %v787 = vmax.f32 %v723, 0.0
  %v788 = vmax.f32 %v724, 0.0
  %v789 = vmax.f32 %v725, 0.0
  %v790 = vmax.f32 %v726, 0.0
  %v791 = vmax.f32 %v727, 0.0
  %v792 = vmax.f32 %v728, 0.0
  %v793 = vmax.f32 %v729, 0.0
  %v794 = vmax.f32 %v730, 0.0
  %v795 = vmax.f32 %v731, 0.0
  %v796 = vmax.f32 %v732, 0.0
  %v797 = vmax.f32 %v733, 0.0
  %v798 = vmax.f32 %v734, 0.0
  %v799 = vmax.f32 %v735, 0.0
  %v800 = vmax.f32 %v736, 0.0
  %v801 = vmax.f32 %v737, 0.0
  %v802 = vmax.f32 %v738, 0.0
  %v803 = vmax.f32 %v739, 0.0
  %v804 = vmax.f32 %v740, 0.0
  %v805 = vmax.f32 %v741, 0.0
  %v806 = vmax.f32 %v742, 0.0
  %v807 = vmax.f32 %v743, 0.0
  %v808 = vmax.f32 %v744, 0.0
  %v809 = vmax.f32 %v745, 0.0
  %v810 = vmax.f32 %v746, 0.0
  %v811 = vmax.f32 %v747, 0.0
  %v812 = vmax.f32 %v748, 0.0
  %v813 = vmax.f32 %v749, 0.0
  %v814 = vmax.f32 %v750, 0.0
  %v815 = vmax.f32 %v751, 0.0
  %v816 = vmax.f32 %v752, 0.0
  %v817 = vmax.f32 %v753, 0.0
  %v818 = vmax.f32 %v754, 0.0
  %v819 = vmax.f32 %v755, 0.0
  %v820 = vmax.f32 %v756, 0.0
  %v821 = vmax.f32 %v757, 0.0
  %v822 = vmax.f32 %v758, 0.0
  %v823 = vmax.f32 %v759, 0.0
  %v824 = vmax.f32 %v760, 0.0
  %v825 = vmax.f32 %v761, 0.0
  %v826 = vmax.f32 %v762, 0.0
  %v827 = vmax.f32 %v763, 0.0
  %v828 = vmax.f32 %v764, 0.0
  %v829 = vmax.f32 %v765, 0.0
  %v830 = vmax.f32 %v766, 0.0
  %v831 = vmax.f32 %v767, 0.0
  %v832 = vmax.f32 %v768, 0.0
  %v833 = vmax.f32 %v769, 0.0
  %v834 = vmax.f32 %v770, 0.0
  %v835 = vmax.f32 %v771, 0.0
  %v836 = vmax.f32 %v772, 0.0
  %v837 = vmax.f32 %v773, 0.0
  %v838 = vmax.f32 %v774, 0.0
  %v839 = vmax.f32 %v775, 0.0
  %v840 = vmax.f32 %v776, 0.0
  %v841 = vmax.f32 %v777, 0.0
  %v842 = vmax.f32 %v778, 0.0
  %v843 = vmax.f32 %v779, 0.0
  %v844 = vmax.f32 %v780, 0.0
  %v845 = vmax.f32 %v781, 0.0
  %v846 = vmax.f32 %v782, 0.0
  %v847 = vmax.f32 %v783, 0.0
  %v848 = vmax.f32 %v784, 0.0
  %v849 = vmax.f32 %v785, 0.0
  %vm850 = vcmask 130048
  %851 = vst.msk [vmem:[%s4] sm:$0xff] %vm850, %v786
  %852 = vst.msk [vmem:[%s4 + $0x8] sm:$0xff] %vm850, %v787
  %853 = vst.msk [vmem:[%s4 + $0x10] sm:$0xff] %vm850, %v788
  %854 = vst.msk [vmem:[%s4 + $0x18] sm:$0xff] %vm850, %v789
  %855 = vst.msk [vmem:[%s4 + $0x20] sm:$0xff] %vm850, %v790
  %856 = vst.msk [vmem:[%s4 + $0x28] sm:$0xff] %vm850, %v791
  %857 = vst.msk [vmem:[%s4 + $0x30] sm:$0xff] %vm850, %v792
  %858 = vst.msk [vmem:[%s4 + $0x38] sm:$0xff] %vm850, %v793
  %859 = vst.msk [vmem:[%s4 + $0x40] sm:$0xff] %vm850, %v794
  %860 = vst.msk [vmem:[%s4 + $0x48] sm:$0xff] %vm850, %v795
  %861 = vst.msk [vmem:[%s4 + $0x50] sm:$0xff] %vm850, %v796
  %862 = vst.msk [vmem:[%s4 + $0x58] sm:$0xff] %vm850, %v797
  %863 = vst.msk [vmem:[%s4 + $0x60] sm:$0xff] %vm850, %v798
  %864 = vst.msk [vmem:[%s4 + $0x68] sm:$0xff] %vm850, %v799
  %865 = vst.msk [vmem:[%s4 + $0x70] sm:$0xff] %vm850, %v800
  %866 = vst.msk [vmem:[%s4 + $0x78] sm:$0xff] %vm850, %v801
  %867 = vst.msk [vmem:[%s4 + $0x80] sm:$0xff] %vm850, %v802
  %868 = vst.msk [vmem:[%s4 + $0x88] sm:$0xff] %vm850, %v803
  %869 = vst.msk [vmem:[%s4 + $0x90] sm:$0xff] %vm850, %v804
  %870 = vst.msk [vmem:[%s4 + $0x98] sm:$0xff] %vm850, %v805
  %871 = vst.msk [vmem:[%s4 + $0xa0] sm:$0xff] %vm850, %v806
  %872 = vst.msk [vmem:[%s4 + $0xa8] sm:$0xff] %vm850, %v807
  %873 = vst.msk [vmem:[%s4 + $0xb0] sm:$0xff] %vm850, %v808
  %874 = vst.msk [vmem:[%s4 + $0xb8] sm:$0xff] %vm850, %v809
  %875 = vst.msk [vmem:[%s4 + $0xc0] sm:$0xff] %vm850, %v810
  %876 = vst.msk [vmem:[%s4 + $0xc8] sm:$0xff] %vm850, %v811
  %877 = vst.msk [vmem:[%s4 + $0xd0] sm:$0xff] %vm850, %v812
  %878 = vst.msk [vmem:[%s4 + $0xd8] sm:$0xff] %vm850, %v813
  %879 = vst.msk [vmem:[%s4 + $0xe0] sm:$0xff] %vm850, %v814
  %880 = vst.msk [vmem:[%s4 + $0xe8] sm:$0xff] %vm850, %v815
  %881 = vst.msk [vmem:[%s4 + $0xf0] sm:$0xff] %vm850, %v816
  %882 = vst.msk [vmem:[%s4 + $0xf8] sm:$0xff] %vm850, %v817
  %883 = vst.msk [vmem:[%s4 + $0x100] sm:$0xff] %vm850, %v818
  %884 = vst.msk [vmem:[%s4 + $0x108] sm:$0xff] %vm850, %v819
  %885 = vst.msk [vmem:[%s4 + $0x110] sm:$0xff] %vm850, %v820
  %886 = vst.msk [vmem:[%s4 + $0x118] sm:$0xff] %vm850, %v821
  %887 = vst.msk [vmem:[%s4 + $0x120] sm:$0xff] %vm850, %v822
  %888 = vst.msk [vmem:[%s4 + $0x128] sm:$0xff] %vm850, %v823
  %889 = vst.msk [vmem:[%s4 + $0x130] sm:$0xff] %vm850, %v824
  %890 = vst.msk [vmem:[%s4 + $0x138] sm:$0xff] %vm850, %v825
  %891 = vst.msk [vmem:[%s4 + $0x140] sm:$0xff] %vm850, %v826
  %892 = vst.msk [vmem:[%s4 + $0x148] sm:$0xff] %vm850, %v827
  %893 = vst.msk [vmem:[%s4 + $0x150] sm:$0xff] %vm850, %v828
  %894 = vst.msk [vmem:[%s4 + $0x158] sm:$0xff] %vm850, %v829
  %895 = vst.msk [vmem:[%s4 + $0x160] sm:$0xff] %vm850, %v830
  %896 = vst.msk [vmem:[%s4 + $0x168] sm:$0xff] %vm850, %v831
  %897 = vst.msk [vmem:[%s4 + $0x170] sm:$0xff] %vm850, %v832
  %898 = vst.msk [vmem:[%s4 + $0x178] sm:$0xff] %vm850, %v833
  %899 = vst.msk [vmem:[%s4 + $0x180] sm:$0xff] %vm850, %v834
  %900 = vst.msk [vmem:[%s4 + $0x188] sm:$0xff] %vm850, %v835
  %901 = vst.msk [vmem:[%s4 + $0x190] sm:$0xff] %vm850, %v836
  %902 = vst.msk [vmem:[%s4 + $0x198] sm:$0xff] %vm850, %v837
  %903 = vst.msk [vmem:[%s4 + $0x1a0] sm:$0xff] %vm850, %v838
  %904 = vst.msk [vmem:[%s4 + $0x1a8] sm:$0xff] %vm850, %v839
  %905 = vst.msk [vmem:[%s4 + $0x1b0] sm:$0xff] %vm850, %v840
  %906 = vst.msk [vmem:[%s4 + $0x1b8] sm:$0xff] %vm850, %v841
  %907 = vst.msk [vmem:[%s4 + $0x1c0] sm:$0xff] %vm850, %v842
  %908 = vst.msk [vmem:[%s4 + $0x1c8] sm:$0xff] %vm850, %v843
  %909 = vst.msk [vmem:[%s4 + $0x1d0] sm:$0xff] %vm850, %v844
  %910 = vst.msk [vmem:[%s4 + $0x1d8] sm:$0xff] %vm850, %v845
  %911 = vst.msk [vmem:[%s4 + $0x1e0] sm:$0xff] %vm850, %v846
  %912 = vst.msk [vmem:[%s4 + $0x1e8] sm:$0xff] %vm850, %v847
  %913 = vst.msk [vmem:[%s4 + $0x1f0] sm:$0xff] %vm850, %v848
  %914 = vst.msk [vmem:[%s4 + $0x1f8] sm:$0xff] %vm850, %v849
  // Predicated region
  $region18: #{_lambda_.28} parent=0 // pred_check
    _
  $region19: #{_lambda_.28} parent=0 // pred_check_branch
    %916 = sbr.rel (0) target = $region21
  $region20: #{_lambda_.28} parent=0 // pred_region
    _
  $region21: #{_lambda_.28} parent=0 // pred_fallthru
    _
  // Predicated region
  $region22: #{_lambda_.28} parent=0 // pred_check
    _
  $region23: #{_lambda_.28} parent=0 // pred_check_branch
    %918 = sbr.rel (0) target = $region25
  $region24: #{_lambda_.28} parent=0 // pred_region
    _
  $region25: #{_lambda_.28} parent=0 // pred_fallthru
    _

// kernel: _lambda_.29
$region0: #{_lambda_.29}
  #allocation0 [shape = 'u32[]', space=smem, size = 0x4, offset = 0x4, fixed_abs, tag = 'smem constant byte address 0x4 - core index']
  #allocation1 [shape = 'u32[144,128]{1,0:T(1,128)}', space=vmem, size = 0x12000, scoped, tag = 'internal scratch']
  %s0 = inlined_call_operand.vmem [shape: bf16[128,144], index: 0, kind: input, shape index: {}]
  %s1 = inlined_call_operand.vmem [shape: bf16[144,16], index: 1, kind: input, shape index: {}]
  %s2 = inlined_call_operand.hbm [shape: f32[1,16], index: 2, kind: input, shape index: {}]
  %s3 = inlined_call_operand.hbm [shape: f32[1,16], index: 3, kind: input, shape index: {}]
  %s4 = inlined_call_operand.vmem [shape: f32[128,16], index: 4, kind: output, shape index: {}]
  %s5 = sld [smem:[#allocation0]]
  $region34: #{_lambda_.29} parent=0
    _
  %s7 = ssub.s32 1, %s5
  %s8 = scalar_select 0, %s7, %s5
  $region1: #{_lambda_.29} parent=0
    #allocation2 [shape = 'u8[512]{0}', space=vmem, size = 0x400, scoped, tag = 'input window, operand 2, single buffered']
    #allocation3 [shape = 's32[1]{0}', space=sflag, size = 0x4, scoped, tag = 'scoped memory for _lambda_.29']
    #allocation4 [shape = 'u8[512]{0}', space=vmem, size = 0x400, scoped, tag = 'input window, operand 3, single buffered']
    #allocation5 [shape = 's32[1]{0}', space=sflag, size = 0x4, scoped, tag = 'scoped memory for _lambda_.29']
    %9 = vsyncpa [#allocation3], 0
    %10 = vsyncpa [#allocation5], 0
    // Predicated region
    $region2: #{_lambda_.29} parent=1 // pred_check
      _
    $region3: #{_lambda_.29} parent=1 // pred_check_branch
      %12 = sbr.rel (0) target = $region5
    $region4: #{_lambda_.29} parent=1 // pred_region
      _
    $region5: #{_lambda_.29} parent=1 // pred_fallthru
      _
    // Predicated region
    $region6: #{_lambda_.29} parent=1 // pred_check
      _
    $region7: #{_lambda_.29} parent=1 // pred_check_branch
      %14 = sbr.rel (0) target = $region9
    $region8: #{_lambda_.29} parent=1 // pred_region
      _
    $region9: #{_lambda_.29} parent=1 // pred_fallthru
      _
    // Predicated region
    $region10: #{_lambda_.29} parent=1 // pred_check
      _
    $region11: #{_lambda_.29} parent=1 // pred_check_branch
      %16 = sbr.rel (0) target = $region13
    $region12: #{_lambda_.29} parent=1 // pred_region
      %s18 = ssub.s32 16, 16
      %19 = vsyncadd [#allocation3], %s18
      %s21 = sshll.u32 [#allocation2], 4
      %s22 = int_to_ptr.vmem [resolvable:$true] %s21
      %24 = dma.hbm_to_vmem [thread:$0]  %s2, 16, %s22, [#allocation3]
    $region13: #{_lambda_.29} parent=1 // pred_fallthru
      _
    // Predicated region
    $region14: #{_lambda_.29} parent=1 // pred_check
      _
    $region15: #{_lambda_.29} parent=1 // pred_check_branch
      %26 = sbr.rel (0) target = $region17
    $region16: #{_lambda_.29} parent=1 // pred_region
      %s28 = ssub.s32 16, 16
      %29 = vsyncadd [#allocation5], %s28
      %s31 = sshll.u32 [#allocation4], 4
      %s32 = int_to_ptr.vmem [resolvable:$true] %s31
      %34 = dma.hbm_to_vmem [thread:$0]  %s3, 16, %s32, [#allocation5]
    $region17: #{_lambda_.29} parent=1 // pred_fallthru
      _
    // Predicated region
    $region18: #{_lambda_.29} parent=1 // pred_check
      _
    $region19: #{_lambda_.29} parent=1 // pred_check_branch
      %36 = sbr.rel (0) target = $region21
    $region20: #{_lambda_.29} parent=1 // pred_region
      %37 = dma.done [#allocation3], 16
    $region21: #{_lambda_.29} parent=1 // pred_fallthru
      _
    // Predicated region
    $region22: #{_lambda_.29} parent=1 // pred_check
      _
    $region23: #{_lambda_.29} parent=1 // pred_check_branch
      %39 = sbr.rel (0) target = $region25
    $region24: #{_lambda_.29} parent=1 // pred_region
      %40 = dma.done [#allocation5], 16
    $region25: #{_lambda_.29} parent=1 // pred_fallthru
      _
    %v42 = vld [vmem:[%s0] sm:$0xff]
    %v43 = vld [vmem:[%s0 + $0x8] sm:$0xff]
    %v44 = vld [vmem:[%s0 + $0x10] sm:$0xff]
    %v45 = vld [vmem:[%s0 + $0x18] sm:$0xff]
    %v46 = vld [vmem:[%s0 + $0x20] sm:$0xff]
    %v47 = vld [vmem:[%s0 + $0x28] sm:$0xff]
    %v48 = vld [vmem:[%s0 + $0x30] sm:$0xff]
    %v49 = vld [vmem:[%s0 + $0x38] sm:$0xff]
    %v50 = vld [vmem:[%s0 + $0x40] sm:$0xff]
    %v51 = vld [vmem:[%s0 + $0x48] sm:$0xff]
    %v52 = vld [vmem:[%s0 + $0x50] sm:$0xff]
    %v53 = vld [vmem:[%s0 + $0x58] sm:$0xff]
    %v54 = vld [vmem:[%s0 + $0x60] sm:$0xff]
    %v55 = vld [vmem:[%s0 + $0x68] sm:$0xff]
    %v56 = vld [vmem:[%s0 + $0x70] sm:$0xff]
    %v57 = vld [vmem:[%s0 + $0x78] sm:$0xff]
    %v58 = vld [vmem:[%s1] sm:$0xf]
    %v59 = vld [vmem:[%s1 + $0x4] sm:$0xf]
    %v60 = vld [vmem:[%s1 + $0x8] sm:$0xf]
    %v61 = vld [vmem:[%s1 + $0xc] sm:$0xf]
    %v62 = vld [vmem:[%s1 + $0x10] sm:$0xf]
    %v63 = vld [vmem:[%s1 + $0x14] sm:$0xf]
    %v64 = vld [vmem:[%s1 + $0x18] sm:$0xf]
    %v65 = vld [vmem:[%s1 + $0x1c] sm:$0xf]
    %v66 = vld [vmem:[%s1 + $0x20] sm:$0xf]
    %v67 = vld [vmem:[%s1 + $0x24] sm:$0xf]
    %v68 = vld [vmem:[%s1 + $0x28] sm:$0xf]
    %v69 = vld [vmem:[%s1 + $0x2c] sm:$0xf]
    %v70 = vld [vmem:[%s1 + $0x30] sm:$0xf]
    %v71 = vld [vmem:[%s1 + $0x34] sm:$0xf]
    %v72 = vld [vmem:[%s1 + $0x38] sm:$0xf]
    %v73 = vld [vmem:[%s1 + $0x3c] sm:$0xf]
    %v74 = vld [vmem:[%s1 + $0x40] sm:$0xf]
    %v75 = vld [vmem:[%s1 + $0x44] sm:$0xf]
    %v92 = vunpack.c.l.b16 %v42
    %v93 = vunpack.c.h.b16 %v42
    %v94 = vunpack.c.l.b16 %v43
    %v95 = vunpack.c.h.b16 %v43
    %v96 = vunpack.c.l.b16 %v44
    %v97 = vunpack.c.h.b16 %v44
    %v98 = vunpack.c.l.b16 %v45
    %v99 = vunpack.c.h.b16 %v45
    %v100 = vunpack.c.l.b16 %v46
    %v101 = vunpack.c.h.b16 %v46
    %v102 = vunpack.c.l.b16 %v47
    %v103 = vunpack.c.h.b16 %v47
    %v104 = vunpack.c.l.b16 %v48
    %v105 = vunpack.c.h.b16 %v48
    %v106 = vunpack.c.l.b16 %v49
    %v107 = vunpack.c.h.b16 %v49
    %v108 = vunpack.c.l.b16 %v50
    %v109 = vunpack.c.h.b16 %v50
    %v110 = vunpack.c.l.b16 %v51
    %v111 = vunpack.c.h.b16 %v51
    %v112 = vunpack.c.l.b16 %v52
    %v113 = vunpack.c.h.b16 %v52
    %v114 = vunpack.c.l.b16 %v53
    %v115 = vunpack.c.h.b16 %v53
    %v116 = vunpack.c.l.b16 %v54
    %v117 = vunpack.c.h.b16 %v54
    %v118 = vunpack.c.l.b16 %v55
    %v119 = vunpack.c.h.b16 %v55
    %v120 = vunpack.c.l.b16 %v56
    %v121 = vunpack.c.h.b16 %v56
    %v122 = vunpack.c.l.b16 %v57
    %v123 = vunpack.c.h.b16 %v57
    %v124 = vpack.c.b16 %v94, %v92
    %v125 = vpack.c.b16 %v95, %v93
    %v126 = vpack.c.b16 %v98, %v96
    %v127 = vpack.c.b16 %v99, %v97
    %v128 = vpack.c.b16 %v102, %v100
    %v129 = vpack.c.b16 %v103, %v101
    %v130 = vpack.c.b16 %v106, %v104
    %v131 = vpack.c.b16 %v107, %v105
    %v132 = vpack.c.b16 %v110, %v108
    %v133 = vpack.c.b16 %v111, %v109
    %v134 = vpack.c.b16 %v114, %v112
    %v135 = vpack.c.b16 %v115, %v113
    %v136 = vpack.c.b16 %v118, %v116
    %v137 = vpack.c.b16 %v119, %v117
    %v138 = vpack.c.b16 %v122, %v120
    %v139 = vpack.c.b16 %v123, %v121
    %v166 = vunpack.c.l.b16 %v58
    %v167 = vunpack.c.l.b16 %v59
    %v168 = vunpack.c.l.b16 %v60
    %v169 = vunpack.c.l.b16 %v61
    %v170 = vunpack.c.l.b16 %v62
    %v171 = vunpack.c.l.b16 %v63
    %v172 = vunpack.c.l.b16 %v64
    %v173 = vunpack.c.l.b16 %v65
    %v174 = vunpack.c.l.b16 %v66
    %v175 = vunpack.c.l.b16 %v67
    %v176 = vunpack.c.l.b16 %v68
    %v177 = vunpack.c.l.b16 %v69
    %v178 = vunpack.c.l.b16 %v70
    %v179 = vunpack.c.l.b16 %v71
    %v180 = vunpack.c.l.b16 %v72
    %v181 = vunpack.c.l.b16 %v73
    %v182 = vunpack.c.l.b16 %v74
    %v183 = vunpack.c.l.b16 %v75
    %v184 = vpack.c.b16 %v167, %v166
    %v185 = vpack.c.b16 %v169, %v168
    %v186 = vpack.c.b16 %v171, %v170
    %v187 = vpack.c.b16 %v173, %v172
    %v188 = vpack.c.b16 %v175, %v174
    %v189 = vpack.c.b16 %v177, %v176
    %v190 = vpack.c.b16 %v179, %v178
    %v191 = vpack.c.b16 %v181, %v180
    %v192 = vpack.c.b16 %v183, %v182
    %vm202 = vcmask 130048
    %v204 = vsel %vm202, %v125, 0
    %v207 = vsel %vm202, %v127, 0
    %v210 = vsel %vm202, %v129, 0
    %v213 = vsel %vm202, %v131, 0
    %v216 = vsel %vm202, %v133, 0
    %v219 = vsel %vm202, %v135, 0
    %v222 = vsel %vm202, %v137, 0
    %v225 = vsel %vm202, %v139, 0
    %227 = vmatprep.subr.bf16.mxu0 0
    %228 = vmatpush1.bf16.msra.mxu0 %v184
    %229 = vmatprep.subr.bf16.mxu0 0
    %230 = vmatpush1.bf16.msra.mxu0 %v185
    %231 = vmatprep.subr.bf16.mxu0 0
    %232 = vmatpush1.bf16.msra.mxu0 %v186
    %233 = vmatprep.subr.bf16.mxu0 0
    %234 = vmatpush1.bf16.msra.mxu0 %v187
    %235 = vmatprep.subr.bf16.mxu0 0
    %236 = vmatpush1.bf16.msra.mxu0 %v188
    %237 = vmatprep.subr.bf16.mxu0 0
    %238 = vmatpush1.bf16.msra.mxu0 %v189
    %239 = vmatprep.subr.bf16.mxu0 0
    %240 = vmatpush1.bf16.msra.mxu0 %v190
    %241 = vmatprep.subr.bf16.mxu0 0
    %242 = vmatpush1.bf16.msra.mxu0 %v191
    %243 = vmatprep.subr.bf16.mxu0 0
    %244 = vmatpush1.bf16.msra.mxu0 %v192
    %245 = vmatprep.subr.bf16.mxu0 0
    %246 = vmatpush1.bf16.msra.mxu0 0
    %247 = vmatprep.subr.bf16.mxu0 0
    %248 = vmatpush1.bf16.msra.mxu0 0
    %249 = vmatprep.subr.bf16.mxu0 0
    %250 = vmatpush1.bf16.msra.mxu0 0
    %251 = vmatprep.subr.bf16.mxu0 0
    %252 = vmatpush1.bf16.msra.mxu0 0
    %253 = vmatprep.subr.bf16.mxu0 0
    %254 = vmatpush1.bf16.msra.mxu0 0
    %255 = vmatprep.subr.bf16.mxu0 0
    %256 = vmatpush1.bf16.msra.mxu0 0
    %257 = vmatprep.subr.bf16.mxu0 0
    %258 = vmatpush1.bf16.msra.mxu0 0
    %259 = vmatprep.mubr.bf16.mxu0 %v204
    %260 = vmatmul.mubr.bf16.gmra.mrb[0].mxu0 %v124
    %v261 = vpop.f32.mrb[0].mxu0
    %v262 = vadd.f32 0.0, %v261
    %v263 = vpop.f32.mrb[0].mxu0
    %v264 = vpop.f32.mrb[0].mxu0
    %v265 = vadd.f32 0.0, %v264
    %v266 = vpop.f32.mrb[0].mxu0
    %267 = vmatprep.mubr.bf16.mxu0 %v207
    %268 = vmatmul.mubr.bf16.gmra.mrb[0].mxu0 %v126
    %v269 = vpop.f32.mrb[0].mxu0
    %v270 = vadd.f32 0.0, %v269
    %v271 = vpop.f32.mrb[0].mxu0
    %v272 = vpop.f32.mrb[0].mxu0
    %v273 = vadd.f32 0.0, %v272
    %v274 = vpop.f32.mrb[0].mxu0
    %275 = vmatprep.mubr.bf16.mxu0 %v210
    %276 = vmatmul.mubr.bf16.gmra.mrb[0].mxu0 %v128
    %v277 = vpop.f32.mrb[0].mxu0
    %v278 = vadd.f32 0.0, %v277
    %v279 = vpop.f32.mrb[0].mxu0
    %v280 = vpop.f32.mrb[0].mxu0
    %v281 = vadd.f32 0.0, %v280
    %v282 = vpop.f32.mrb[0].mxu0
    %283 = vmatprep.mubr.bf16.mxu0 %v213
    %284 = vmatmul.mubr.bf16.gmra.mrb[0].mxu0 %v130
    %v285 = vpop.f32.mrb[0].mxu0
    %v286 = vadd.f32 0.0, %v285
    %v287 = vpop.f32.mrb[0].mxu0
    %v288 = vpop.f32.mrb[0].mxu0
    %v289 = vadd.f32 0.0, %v288
    %v290 = vpop.f32.mrb[0].mxu0
    %291 = vmatprep.mubr.bf16.mxu0 %v216
    %292 = vmatmul.mubr.bf16.gmra.mrb[0].mxu0 %v132
    %v293 = vpop.f32.mrb[0].mxu0
    %v294 = vadd.f32 0.0, %v293
    %v295 = vpop.f32.mrb[0].mxu0
    %v296 = vpop.f32.mrb[0].mxu0
    %v297 = vadd.f32 0.0, %v296
    %v298 = vpop.f32.mrb[0].mxu0
    %299 = vmatprep.mubr.bf16.mxu0 %v219
    %300 = vmatmul.mubr.bf16.gmra.mrb[0].mxu0 %v134
    %v301 = vpop.f32.mrb[0].mxu0
    %v302 = vadd.f32 0.0, %v301
    %v303 = vpop.f32.mrb[0].mxu0
    %v304 = vpop.f32.mrb[0].mxu0
    %v305 = vadd.f32 0.0, %v304
    %v306 = vpop.f32.mrb[0].mxu0
    %307 = vmatprep.mubr.bf16.mxu0 %v222
    %308 = vmatmul.mubr.bf16.gmra.mrb[0].mxu0 %v136
    %v309 = vpop.f32.mrb[0].mxu0
    %v310 = vadd.f32 0.0, %v309
    %v311 = vpop.f32.mrb[0].mxu0
    %v312 = vpop.f32.mrb[0].mxu0
    %v313 = vadd.f32 0.0, %v312
    %v314 = vpop.f32.mrb[0].mxu0
    %315 = vmatprep.mubr.bf16.mxu0 %v225
    %316 = vmatmul.mubr.bf16.gmra.mrb[0].mxu0 %v138
    %v317 = vpop.f32.mrb[0].mxu0
    %v318 = vadd.f32 0.0, %v317
    %v319 = vpop.f32.mrb[0].mxu0
    %v320 = vpop.f32.mrb[0].mxu0
    %v321 = vadd.f32 0.0, %v320
    %v322 = vpop.f32.mrb[0].mxu0
    %323 = vdwg.mxu0
    %v324 = vld [vmem:[#allocation2] sm:$0x1]
    %v326 = vlaneseq
    %v327 = vshrl.u32 %v326, 7
    %v328 = vsub.s32 0, %v327
    %v329 = vrot.slane %v324, %v328
    %v331 = vmul.f32 %v262, %v329
    %v332 = vmul.f32 %v265, %v329
    %v333 = vmul.f32 %v270, %v329
    %v334 = vmul.f32 %v273, %v329
    %v335 = vmul.f32 %v278, %v329
    %v336 = vmul.f32 %v281, %v329
    %v337 = vmul.f32 %v286, %v329
    %v338 = vmul.f32 %v289, %v329
    %v339 = vmul.f32 %v294, %v329
    %v340 = vmul.f32 %v297, %v329
    %v341 = vmul.f32 %v302, %v329
    %v342 = vmul.f32 %v305, %v329
    %v343 = vmul.f32 %v310, %v329
    %v344 = vmul.f32 %v313, %v329
    %v345 = vmul.f32 %v318, %v329
    %v346 = vmul.f32 %v321, %v329
    %v347 = vld [vmem:[#allocation4] sm:$0x1]
    %v349 = vlaneseq
    %v350 = vshrl.u32 %v349, 7
    %v351 = vsub.s32 0, %v350
    %v352 = vrot.slane %v347, %v351
    %v354 = vadd.f32 %v331, %v352
    %v355 = vadd.f32 %v332, %v352
    %v356 = vadd.f32 %v333, %v352
    %v357 = vadd.f32 %v334, %v352
    %v358 = vadd.f32 %v335, %v352
    %v359 = vadd.f32 %v336, %v352
    %v360 = vadd.f32 %v337, %v352
    %v361 = vadd.f32 %v338, %v352
    %v362 = vadd.f32 %v339, %v352
    %v363 = vadd.f32 %v340, %v352
    %v364 = vadd.f32 %v341, %v352
    %v365 = vadd.f32 %v342, %v352
    %v366 = vadd.f32 %v343, %v352
    %v367 = vadd.f32 %v344, %v352
    %v368 = vadd.f32 %v345, %v352
    %v369 = vadd.f32 %v346, %v352
    %v370 = vmax.f32 %v354, 0.0
    %v371 = vmax.f32 %v355, 0.0
    %v372 = vmax.f32 %v356, 0.0
    %v373 = vmax.f32 %v357, 0.0
    %v374 = vmax.f32 %v358, 0.0
    %v375 = vmax.f32 %v359, 0.0
    %v376 = vmax.f32 %v360, 0.0
    %v377 = vmax.f32 %v361, 0.0
    %v378 = vmax.f32 %v362, 0.0
    %v379 = vmax.f32 %v363, 0.0
    %v380 = vmax.f32 %v364, 0.0
    %v381 = vmax.f32 %v365, 0.0
    %v382 = vmax.f32 %v366, 0.0
    %v383 = vmax.f32 %v367, 0.0
    %v384 = vmax.f32 %v368, 0.0
    %v385 = vmax.f32 %v369, 0.0
    %386 = vst.msk [vmem:[%s4] sm:$0xff] %vm202, %v370
    %387 = vst.msk [vmem:[%s4 + $0x8] sm:$0xff] %vm202, %v371
    %388 = vst.msk [vmem:[%s4 + $0x10] sm:$0xff] %vm202, %v372
    %389 = vst.msk [vmem:[%s4 + $0x18] sm:$0xff] %vm202, %v373
    %390 = vst.msk [vmem:[%s4 + $0x20] sm:$0xff] %vm202, %v374
    %391 = vst.msk [vmem:[%s4 + $0x28] sm:$0xff] %vm202, %v375
    %392 = vst.msk [vmem:[%s4 + $0x30] sm:$0xff] %vm202, %v376
    %393 = vst.msk [vmem:[%s4 + $0x38] sm:$0xff] %vm202, %v377
    %394 = vst.msk [vmem:[%s4 + $0x40] sm:$0xff] %vm202, %v378
    %395 = vst.msk [vmem:[%s4 + $0x48] sm:$0xff] %vm202, %v379
    %396 = vst.msk [vmem:[%s4 + $0x50] sm:$0xff] %vm202, %v380
    %397 = vst.msk [vmem:[%s4 + $0x58] sm:$0xff] %vm202, %v381
    %398 = vst.msk [vmem:[%s4 + $0x60] sm:$0xff] %vm202, %v382
    %399 = vst.msk [vmem:[%s4 + $0x68] sm:$0xff] %vm202, %v383
    %400 = vst.msk [vmem:[%s4 + $0x70] sm:$0xff] %vm202, %v384
    %401 = vst.msk [vmem:[%s4 + $0x78] sm:$0xff] %vm202, %v385
    // Predicated region
    $region26: #{_lambda_.29} parent=1 // pred_check
      _
    $region27: #{_lambda_.29} parent=1 // pred_check_branch
      %403 = sbr.rel (0) target = $region29
    $region28: #{_lambda_.29} parent=1 // pred_region
      _
    $region29: #{_lambda_.29} parent=1 // pred_fallthru
      _
    // Predicated region
    $region30: #{_lambda_.29} parent=1 // pred_check
      _
    $region31: #{_lambda_.29} parent=1 // pred_check_branch
      %405 = sbr.rel (0) target = $region33
    $region32: #{_lambda_.29} parent=1 // pred_region
      _
    $region33: #{_lambda_.29} parent=1 // pred_fallthru
      _
    %406 = vsyncpa [#allocation3], 1
    %407 = vsyncpa [#allocation5], 1

// kernel: _lambda_.27
$region0: #{_lambda_.27}
  #allocation0 [shape = 'u32[]', space=smem, size = 0x4, offset = 0x4, fixed_abs, tag = 'smem constant byte address 0x4 - core index']
  #allocation1 [shape = 'u32[144,128]{1,0:T(1,128)}', space=vmem, size = 0x12000, scoped, tag = 'internal scratch']
  %s0 = inlined_call_operand.vmem [shape: bf16[128,32], index: 0, kind: input, shape index: {}]
  %s1 = inlined_call_operand.vmem [shape: bf16[32,64], index: 1, kind: input, shape index: {}]
  %s2 = inlined_call_operand.hbm [shape: f32[1,64], index: 2, kind: input, shape index: {}]
  %s3 = inlined_call_operand.hbm [shape: f32[1,64], index: 3, kind: input, shape index: {}]
  %s4 = inlined_call_operand.vmem [shape: f32[128,64], index: 4, kind: output, shape index: {}]
  %s5 = sld [smem:[#allocation0]]
  $region34: #{_lambda_.27} parent=0
    _
  %s7 = ssub.s32 1, %s5
  %s8 = scalar_select 0, %s7, %s5
  $region1: #{_lambda_.27} parent=0
    #allocation2 [shape = 'u8[512]{0}', space=vmem, size = 0x400, scoped, tag = 'input window, operand 2, single buffered']
    #allocation3 [shape = 's32[1]{0}', space=sflag, size = 0x4, scoped, tag = 'scoped memory for _lambda_.27']
    #allocation4 [shape = 'u8[512]{0}', space=vmem, size = 0x400, scoped, tag = 'input window, operand 3, single buffered']
    #allocation5 [shape = 's32[1]{0}', space=sflag, size = 0x4, scoped, tag = 'scoped memory for _lambda_.27']
    %9 = vsyncpa [#allocation3], 0
    %10 = vsyncpa [#allocation5], 0
    // Predicated region
    $region2: #{_lambda_.27} parent=1 // pred_check
      _
    $region3: #{_lambda_.27} parent=1 // pred_check_branch
      %12 = sbr.rel (0) target = $region5
    $region4: #{_lambda_.27} parent=1 // pred_region
      _
    $region5: #{_lambda_.27} parent=1 // pred_fallthru
      _
    // Predicated region
    $region6: #{_lambda_.27} parent=1 // pred_check
      _
    $region7: #{_lambda_.27} parent=1 // pred_check_branch
      %14 = sbr.rel (0) target = $region9
    $region8: #{_lambda_.27} parent=1 // pred_region
      _
    $region9: #{_lambda_.27} parent=1 // pred_fallthru
      _
    // Predicated region
    $region10: #{_lambda_.27} parent=1 // pred_check
      _
    $region11: #{_lambda_.27} parent=1 // pred_check_branch
      %16 = sbr.rel (0) target = $region13
    $region12: #{_lambda_.27} parent=1 // pred_region
      %s18 = ssub.s32 16, 16
      %19 = vsyncadd [#allocation3], %s18
      %s21 = sshll.u32 [#allocation2], 4
      %s22 = int_to_ptr.vmem [resolvable:$true] %s21
      %24 = dma.hbm_to_vmem [thread:$0]  %s2, 16, %s22, [#allocation3]
    $region13: #{_lambda_.27} parent=1 // pred_fallthru
      _
    // Predicated region
    $region14: #{_lambda_.27} parent=1 // pred_check
      _
    $region15: #{_lambda_.27} parent=1 // pred_check_branch
      %26 = sbr.rel (0) target = $region17
    $region16: #{_lambda_.27} parent=1 // pred_region
      %s28 = ssub.s32 16, 16
      %29 = vsyncadd [#allocation5], %s28
      %s31 = sshll.u32 [#allocation4], 4
      %s32 = int_to_ptr.vmem [resolvable:$true] %s31
      %34 = dma.hbm_to_vmem [thread:$0]  %s3, 16, %s32, [#allocation5]
    $region17: #{_lambda_.27} parent=1 // pred_fallthru
      _
    // Predicated region
    $region18: #{_lambda_.27} parent=1 // pred_check
      _
    $region19: #{_lambda_.27} parent=1 // pred_check_branch
      %36 = sbr.rel (0) target = $region21
    $region20: #{_lambda_.27} parent=1 // pred_region
      %37 = dma.done [#allocation3], 16
    $region21: #{_lambda_.27} parent=1 // pred_fallthru
      _
    // Predicated region
    $region22: #{_lambda_.27} parent=1 // pred_check
      _
    $region23: #{_lambda_.27} parent=1 // pred_check_branch
      %39 = sbr.rel (0) target = $region25
    $region24: #{_lambda_.27} parent=1 // pred_region
      %40 = dma.done [#allocation5], 16
    $region25: #{_lambda_.27} parent=1 // pred_fallthru
      _
    %v42 = vld [vmem:[%s0] sm:$0xf]
    %v43 = vld [vmem:[%s0 + $0x4] sm:$0xf]
    %v44 = vld [vmem:[%s0 + $0x8] sm:$0xf]
    %v45 = vld [vmem:[%s0 + $0xc] sm:$0xf]
    %v46 = vld [vmem:[%s0 + $0x10] sm:$0xf]
    %v47 = vld [vmem:[%s0 + $0x14] sm:$0xf]
    %v48 = vld [vmem:[%s0 + $0x18] sm:$0xf]
    %v49 = vld [vmem:[%s0 + $0x1c] sm:$0xf]
    %v50 = vld [vmem:[%s0 + $0x20] sm:$0xf]
    %v51 = vld [vmem:[%s0 + $0x24] sm:$0xf]
    %v52 = vld [vmem:[%s0 + $0x28] sm:$0xf]
    %v53 = vld [vmem:[%s0 + $0x2c] sm:$0xf]
    %v54 = vld [vmem:[%s0 + $0x30] sm:$0xf]
    %v55 = vld [vmem:[%s0 + $0x34] sm:$0xf]
    %v56 = vld [vmem:[%s0 + $0x38] sm:$0xf]
    %v57 = vld [vmem:[%s0 + $0x3c] sm:$0xf]
    %v58 = vld [vmem:[%s1] sm:$0xf]
    %v59 = vld [vmem:[%s1 + $0x4] sm:$0xf]
    %v60 = vld [vmem:[%s1 + $0x8] sm:$0xf]
    %v61 = vld [vmem:[%s1 + $0xc] sm:$0xf]
    %v78 = vunpack.c.l.b16 %v42
    %v79 = vunpack.c.l.b16 %v43
    %v80 = vunpack.c.l.b16 %v44
    %v81 = vunpack.c.l.b16 %v45
    %v82 = vunpack.c.l.b16 %v46
    %v83 = vunpack.c.l.b16 %v47
    %v84 = vunpack.c.l.b16 %v48
    %v85 = vunpack.c.l.b16 %v49
    %v86 = vunpack.c.l.b16 %v50
    %v87 = vunpack.c.l.b16 %v51
    %v88 = vunpack.c.l.b16 %v52
    %v89 = vunpack.c.l.b16 %v53
    %v90 = vunpack.c.l.b16 %v54
    %v91 = vunpack.c.l.b16 %v55
    %v92 = vunpack.c.l.b16 %v56
    %v93 = vunpack.c.l.b16 %v57
    %v94 = vpack.c.b16 %v79, %v78
    %v95 = vpack.c.b16 %v81, %v80
    %v96 = vpack.c.b16 %v83, %v82
    %v97 = vpack.c.b16 %v85, %v84
    %v98 = vpack.c.b16 %v87, %v86
    %v99 = vpack.c.b16 %v89, %v88
    %v100 = vpack.c.b16 %v91, %v90
    %v101 = vpack.c.b16 %v93, %v92
    %v106 = vunpack.c.l.b16 %v58
    %v107 = vunpack.c.l.b16 %v59
    %v108 = vunpack.c.l.b16 %v60
    %v109 = vunpack.c.l.b16 %v61
    %v110 = vpack.c.b16 %v107, %v106
    %v111 = vpack.c.b16 %v109, %v108
    %vm114 = vcmask 261120
    %v116 = vsel %vm114, %v94, 0
    %v119 = vsel %vm114, %v95, 0
    %v122 = vsel %vm114, %v96, 0
    %v125 = vsel %vm114, %v97, 0
    %v128 = vsel %vm114, %v98, 0
    %v131 = vsel %vm114, %v99, 0
    %v134 = vsel %vm114, %v100, 0
    %v137 = vsel %vm114, %v101, 0
    %139 = vmatprep.subr.bf16.mxu0 0
    %140 = vmatpush1.bf16.msra.mxu0 %v110
    %141 = vmatprep.subr.bf16.mxu0 0
    %142 = vmatpush1.bf16.msra.mxu0 %v111
    %143 = vmatprep.subr.bf16.mxu0 0
    %144 = vmatpush1.bf16.msra.mxu0 0
    %145 = vmatprep.subr.bf16.mxu0 0
    %146 = vmatpush1.bf16.msra.mxu0 0
    %147 = vmatprep.subr.bf16.mxu0 0
    %148 = vmatpush1.bf16.msra.mxu0 0
    %149 = vmatprep.subr.bf16.mxu0 0
    %150 = vmatpush1.bf16.msra.mxu0 0
    %151 = vmatprep.subr.bf16.mxu0 0
    %152 = vmatpush1.bf16.msra.mxu0 0
    %153 = vmatprep.subr.bf16.mxu0 0
    %154 = vmatpush1.bf16.msra.mxu0 0
    %155 = vmatprep.subr.bf16.mxu0 0
    %156 = vmatpush1.bf16.msra.mxu0 0
    %157 = vmatprep.subr.bf16.mxu0 0
    %158 = vmatpush1.bf16.msra.mxu0 0
    %159 = vmatprep.subr.bf16.mxu0 0
    %160 = vmatpush1.bf16.msra.mxu0 0
    %161 = vmatprep.subr.bf16.mxu0 0
    %162 = vmatpush1.bf16.msra.mxu0 0
    %163 = vmatprep.subr.bf16.mxu0 0
    %164 = vmatpush1.bf16.msra.mxu0 0
    %165 = vmatprep.subr.bf16.mxu0 0
    %166 = vmatpush1.bf16.msra.mxu0 0
    %167 = vmatprep.subr.bf16.mxu0 0
    %168 = vmatpush1.bf16.msra.mxu0 0
    %169 = vmatprep.subr.bf16.mxu0 0
    %170 = vmatpush1.bf16.msra.mxu0 0
    %171 = vmatprep.mubr.bf16.mxu0 0
    %172 = vmatmul.mubr.bf16.gmra.mrb[0].mxu0 %v116
    %v173 = vpop.f32.mrb[0].mxu0
    %v174 = vadd.f32 0.0, %v173
    %v175 = vpop.f32.mrb[0].mxu0
    %v176 = vpop.f32.mrb[0].mxu0
    %v177 = vadd.f32 0.0, %v176
    %v178 = vpop.f32.mrb[0].mxu0
    %179 = vmatprep.mubr.bf16.mxu0 0
    %180 = vmatmul.mubr.bf16.gmra.mrb[0].mxu0 %v119
    %v181 = vpop.f32.mrb[0].mxu0
    %v182 = vadd.f32 0.0, %v181
    %v183 = vpop.f32.mrb[0].mxu0
    %v184 = vpop.f32.mrb[0].mxu0
    %v185 = vadd.f32 0.0, %v184
    %v186 = vpop.f32.mrb[0].mxu0
    %187 = vmatprep.mubr.bf16.mxu0 0
    %188 = vmatmul.mubr.bf16.gmra.mrb[0].mxu0 %v122
    %v189 = vpop.f32.mrb[0].mxu0
    %v190 = vadd.f32 0.0, %v189
    %v191 = vpop.f32.mrb[0].mxu0
    %v192 = vpop.f32.mrb[0].mxu0
    %v193 = vadd.f32 0.0, %v192
    %v194 = vpop.f32.mrb[0].mxu0
    %195 = vmatprep.mubr.bf16.mxu0 0
    %196 = vmatmul.mubr.bf16.gmra.mrb[0].mxu0 %v125
    %v197 = vpop.f32.mrb[0].mxu0
    %v198 = vadd.f32 0.0, %v197
    %v199 = vpop.f32.mrb[0].mxu0
    %v200 = vpop.f32.mrb[0].mxu0
    %v201 = vadd.f32 0.0, %v200
    %v202 = vpop.f32.mrb[0].mxu0
    %203 = vmatprep.mubr.bf16.mxu0 0
    %204 = vmatmul.mubr.bf16.gmra.mrb[0].mxu0 %v128
    %v205 = vpop.f32.mrb[0].mxu0
    %v206 = vadd.f32 0.0, %v205
    %v207 = vpop.f32.mrb[0].mxu0
    %v208 = vpop.f32.mrb[0].mxu0
    %v209 = vadd.f32 0.0, %v208
    %v210 = vpop.f32.mrb[0].mxu0
    %211 = vmatprep.mubr.bf16.mxu0 0
    %212 = vmatmul.mubr.bf16.gmra.mrb[0].mxu0 %v131
    %v213 = vpop.f32.mrb[0].mxu0
    %v214 = vadd.f32 0.0, %v213
    %v215 = vpop.f32.mrb[0].mxu0
    %v216 = vpop.f32.mrb[0].mxu0
    %v217 = vadd.f32 0.0, %v216
    %v218 = vpop.f32.mrb[0].mxu0
    %219 = vmatprep.mubr.bf16.mxu0 0
    %220 = vmatmul.mubr.bf16.gmra.mrb[0].mxu0 %v134
    %v221 = vpop.f32.mrb[0].mxu0
    %v222 = vadd.f32 0.0, %v221
    %v223 = vpop.f32.mrb[0].mxu0
    %v224 = vpop.f32.mrb[0].mxu0
    %v225 = vadd.f32 0.0, %v224
    %v226 = vpop.f32.mrb[0].mxu0
    %227 = vmatprep.mubr.bf16.mxu0 0
    %228 = vmatmul.mubr.bf16.gmra.mrb[0].mxu0 %v137
    %v229 = vpop.f32.mrb[0].mxu0
    %v230 = vadd.f32 0.0, %v229
    %v231 = vpop.f32.mrb[0].mxu0
    %v232 = vpop.f32.mrb[0].mxu0
    %v233 = vadd.f32 0.0, %v232
    %v234 = vpop.f32.mrb[0].mxu0
    %235 = vdwg.mxu0
    %v236 = vld [vmem:[#allocation2] sm:$0x1]
    %v238 = vlaneseq
    %v239 = vshrl.u32 %v238, 7
    %v240 = vsub.s32 0, %v239
    %v241 = vrot.slane %v236, %v240
    %v243 = vmul.f32 %v174, %v241
    %v244 = vmul.f32 %v177, %v241
    %v245 = vmul.f32 %v182, %v241
    %v246 = vmul.f32 %v185, %v241
    %v247 = vmul.f32 %v190, %v241
    %v248 = vmul.f32 %v193, %v241
    %v249 = vmul.f32 %v198, %v241
    %v250 = vmul.f32 %v201, %v241
    %v251 = vmul.f32 %v206, %v241
    %v252 = vmul.f32 %v209, %v241
    %v253 = vmul.f32 %v214, %v241
    %v254 = vmul.f32 %v217, %v241
    %v255 = vmul.f32 %v222, %v241
    %v256 = vmul.f32 %v225, %v241
    %v257 = vmul.f32 %v230, %v241
    %v258 = vmul.f32 %v233, %v241
    %v259 = vld [vmem:[#allocation4] sm:$0x1]
    %v261 = vlaneseq
    %v262 = vshrl.u32 %v261, 7
    %v263 = vsub.s32 0, %v262
    %v264 = vrot.slane %v259, %v263
    %v266 = vadd.f32 %v243, %v264
    %v267 = vadd.f32 %v244, %v264
    %v268 = vadd.f32 %v245, %v264
    %v269 = vadd.f32 %v246, %v264
    %v270 = vadd.f32 %v247, %v264
    %v271 = vadd.f32 %v248, %v264
    %v272 = vadd.f32 %v249, %v264
    %v273 = vadd.f32 %v250, %v264
    %v274 = vadd.f32 %v251, %v264
    %v275 = vadd.f32 %v252, %v264
    %v276 = vadd.f32 %v253, %v264
    %v277 = vadd.f32 %v254, %v264
    %v278 = vadd.f32 %v255, %v264
    %v279 = vadd.f32 %v256, %v264
    %v280 = vadd.f32 %v257, %v264
    %v281 = vadd.f32 %v258, %v264
    %vm282 = vcmask 523264
    %283 = vst.msk [vmem:[%s4] sm:$0xff] %vm282, %v266
    %284 = vst.msk [vmem:[%s4 + $0x8] sm:$0xff] %vm282, %v267
    %285 = vst.msk [vmem:[%s4 + $0x10] sm:$0xff] %vm282, %v268
    %286 = vst.msk [vmem:[%s4 + $0x18] sm:$0xff] %vm282, %v269
    %287 = vst.msk [vmem:[%s4 + $0x20] sm:$0xff] %vm282, %v270
    %288 = vst.msk [vmem:[%s4 + $0x28] sm:$0xff] %vm282, %v271
    %289 = vst.msk [vmem:[%s4 + $0x30] sm:$0xff] %vm282, %v272
    %290 = vst.msk [vmem:[%s4 + $0x38] sm:$0xff] %vm282, %v273
    %291 = vst.msk [vmem:[%s4 + $0x40] sm:$0xff] %vm282, %v274
    %292 = vst.msk [vmem:[%s4 + $0x48] sm:$0xff] %vm282, %v275
    %293 = vst.msk [vmem:[%s4 + $0x50] sm:$0xff] %vm282, %v276
    %294 = vst.msk [vmem:[%s4 + $0x58] sm:$0xff] %vm282, %v277
    %295 = vst.msk [vmem:[%s4 + $0x60] sm:$0xff] %vm282, %v278
    %296 = vst.msk [vmem:[%s4 + $0x68] sm:$0xff] %vm282, %v279
    %297 = vst.msk [vmem:[%s4 + $0x70] sm:$0xff] %vm282, %v280
    %298 = vst.msk [vmem:[%s4 + $0x78] sm:$0xff] %vm282, %v281
    // Predicated region
    $region26: #{_lambda_.27} parent=1 // pred_check
      _
    $region27: #{_lambda_.27} parent=1 // pred_check_branch
      %300 = sbr.rel (0) target = $region29
    $region28: #{_lambda_.27} parent=1 // pred_region
      _
    $region29: #{_lambda_.27} parent=1 // pred_fallthru
      _
    // Predicated region
    $region30: #{_lambda_.27} parent=1 // pred_check
      _
    $region31: #{_lambda_.27} parent=1 // pred_check_branch
      %302 = sbr.rel (0) target = $region33
    $region32: #{_lambda_.27} parent=1 // pred_region
      _
    $region33: #{_lambda_.27} parent=1 // pred_fallthru
      _
    %303 = vsyncpa [#allocation3], 1
    %304 = vsyncpa [#allocation5], 1

// kernel: _lambda_.30
$region0: #{_lambda_.30}
  #allocation0 [shape = 'u32[]', space=smem, size = 0x4, offset = 0x4, fixed_abs, tag = 'smem constant byte address 0x4 - core index']
  #allocation1 [shape = 'u32[144,128]{1,0:T(1,128)}', space=vmem, size = 0x12000, scoped, tag = 'internal scratch']
  %s0 = inlined_call_operand.vmem [shape: bf16[128,16], index: 0, kind: input, shape index: {}]
  %s1 = inlined_call_operand.vmem [shape: bf16[16,64], index: 1, kind: input, shape index: {}]
  %s2 = inlined_call_operand.vmem [shape: f32[1,64], index: 2, kind: input, shape index: {}]
  %s3 = inlined_call_operand.vmem [shape: f32[1,64], index: 3, kind: input, shape index: {}]
  %s4 = inlined_call_operand.vmem [shape: f32[128,64], index: 4, kind: input, shape index: {}]
  %s5 = inlined_call_operand.vmem [shape: f32[128,64], index: 5, kind: output, shape index: {}]
  %s6 = sld [smem:[#allocation0]]
  $region30: #{_lambda_.30} parent=0
    _
  %s8 = ssub.s32 1, %s6
  %s9 = scalar_select 0, %s8, %s6
  // Predicated region
  $region2: #{_lambda_.30} parent=0 // pred_check
    _
  $region3: #{_lambda_.30} parent=0 // pred_check_branch
    %11 = sbr.rel (0) target = $region5
  $region4: #{_lambda_.30} parent=0 // pred_region
    _
  $region5: #{_lambda_.30} parent=0 // pred_fallthru
    _
  // Predicated region
  $region6: #{_lambda_.30} parent=0 // pred_check
    _
  $region7: #{_lambda_.30} parent=0 // pred_check_branch
    %13 = sbr.rel (0) target = $region9
  $region8: #{_lambda_.30} parent=0 // pred_region
    _
  $region9: #{_lambda_.30} parent=0 // pred_fallthru
    _
  // Predicated region
  $region10: #{_lambda_.30} parent=0 // pred_check
    _
  $region11: #{_lambda_.30} parent=0 // pred_check_branch
    %15 = sbr.rel (0) target = $region13
  $region12: #{_lambda_.30} parent=0 // pred_region
    _
  $region13: #{_lambda_.30} parent=0 // pred_fallthru
    _
  // Predicated region
  $region14: #{_lambda_.30} parent=0 // pred_check
    _
  $region15: #{_lambda_.30} parent=0 // pred_check_branch
    %17 = sbr.rel (0) target = $region17
  $region16: #{_lambda_.30} parent=0 // pred_region
    _
  $region17: #{_lambda_.30} parent=0 // pred_fallthru
    _
  // Predicated region
  $region18: #{_lambda_.30} parent=0 // pred_check
    _
  $region19: #{_lambda_.30} parent=0 // pred_check_branch
    %19 = sbr.rel (0) target = $region21
  $region20: #{_lambda_.30} parent=0 // pred_region
    _
  $region21: #{_lambda_.30} parent=0 // pred_fallthru
    _
  %v21 = vld [vmem:[%s0] sm:$0xf]
  %v22 = vld [vmem:[%s0 + $0x4] sm:$0xf]
  %v23 = vld [vmem:[%s0 + $0x8] sm:$0xf]
  %v24 = vld [vmem:[%s0 + $0xc] sm:$0xf]
  %v25 = vld [vmem:[%s0 + $0x10] sm:$0xf]
  %v26 = vld [vmem:[%s0 + $0x14] sm:$0xf]
  %v27 = vld [vmem:[%s0 + $0x18] sm:$0xf]
  %v28 = vld [vmem:[%s0 + $0x1c] sm:$0xf]
  %v29 = vld [vmem:[%s0 + $0x20] sm:$0xf]
  %v30 = vld [vmem:[%s0 + $0x24] sm:$0xf]
  %v31 = vld [vmem:[%s0 + $0x28] sm:$0xf]
  %v32 = vld [vmem:[%s0 + $0x2c] sm:$0xf]
  %v33 = vld [vmem:[%s0 + $0x30] sm:$0xf]
  %v34 = vld [vmem:[%s0 + $0x34] sm:$0xf]
  %v35 = vld [vmem:[%s0 + $0x38] sm:$0xf]
  %v36 = vld [vmem:[%s0 + $0x3c] sm:$0xf]
  %v37 = vld [vmem:[%s1] sm:$0xf]
  %v38 = vld [vmem:[%s1 + $0x4] sm:$0xf]
  %v55 = vunpack.c.l.b16 %v21
  %v56 = vunpack.c.l.b16 %v22
  %v57 = vunpack.c.l.b16 %v23
  %v58 = vunpack.c.l.b16 %v24
  %v59 = vunpack.c.l.b16 %v25
  %v60 = vunpack.c.l.b16 %v26
  %v61 = vunpack.c.l.b16 %v27
  %v62 = vunpack.c.l.b16 %v28
  %v63 = vunpack.c.l.b16 %v29
  %v64 = vunpack.c.l.b16 %v30
  %v65 = vunpack.c.l.b16 %v31
  %v66 = vunpack.c.l.b16 %v32
  %v67 = vunpack.c.l.b16 %v33
  %v68 = vunpack.c.l.b16 %v34
  %v69 = vunpack.c.l.b16 %v35
  %v70 = vunpack.c.l.b16 %v36
  %v71 = vpack.c.b16 %v56, %v55
  %v72 = vpack.c.b16 %v58, %v57
  %v73 = vpack.c.b16 %v60, %v59
  %v74 = vpack.c.b16 %v62, %v61
  %v75 = vpack.c.b16 %v64, %v63
  %v76 = vpack.c.b16 %v66, %v65
  %v77 = vpack.c.b16 %v68, %v67
  %v78 = vpack.c.b16 %v70, %v69
  %v81 = vunpack.c.l.b16 %v37
  %v82 = vunpack.c.l.b16 %v38
  %v83 = vpack.c.b16 %v82, %v81
  %vm85 = vcmask 130048
  %v87 = vsel %vm85, %v71, 0
  %v90 = vsel %vm85, %v72, 0
  %v93 = vsel %vm85, %v73, 0
  %v96 = vsel %vm85, %v74, 0
  %v99 = vsel %vm85, %v75, 0
  %v102 = vsel %vm85, %v76, 0
  %v105 = vsel %vm85, %v77, 0
  %v108 = vsel %vm85, %v78, 0
  %110 = vmatprep.subr.bf16.mxu0 0
  %111 = vmatpush1.bf16.msra.mxu0 %v83
  %112 = vmatprep.subr.bf16.mxu0 0
  %113 = vmatpush1.bf16.msra.mxu0 0
  %114 = vmatprep.subr.bf16.mxu0 0
  %115 = vmatpush1.bf16.msra.mxu0 0
  %116 = vmatprep.subr.bf16.mxu0 0
  %117 = vmatpush1.bf16.msra.mxu0 0
  %118 = vmatprep.subr.bf16.mxu0 0
  %119 = vmatpush1.bf16.msra.mxu0 0
  %120 = vmatprep.subr.bf16.mxu0 0
  %121 = vmatpush1.bf16.msra.mxu0 0
  %122 = vmatprep.subr.bf16.mxu0 0
  %123 = vmatpush1.bf16.msra.mxu0 0
  %124 = vmatprep.subr.bf16.mxu0 0
  %125 = vmatpush1.bf16.msra.mxu0 0
  %126 = vmatprep.subr.bf16.mxu0 0
  %127 = vmatpush1.bf16.msra.mxu0 0
  %128 = vmatprep.subr.bf16.mxu0 0
  %129 = vmatpush1.bf16.msra.mxu0 0
  %130 = vmatprep.subr.bf16.mxu0 0
  %131 = vmatpush1.bf16.msra.mxu0 0
  %132 = vmatprep.subr.bf16.mxu0 0
  %133 = vmatpush1.bf16.msra.mxu0 0
  %134 = vmatprep.subr.bf16.mxu0 0
  %135 = vmatpush1.bf16.msra.mxu0 0
  %136 = vmatprep.subr.bf16.mxu0 0
  %137 = vmatpush1.bf16.msra.mxu0 0
  %138 = vmatprep.subr.bf16.mxu0 0
  %139 = vmatpush1.bf16.msra.mxu0 0
  %140 = vmatprep.subr.bf16.mxu0 0
  %141 = vmatpush1.bf16.msra.mxu0 0
  %142 = vmatprep.mubr.bf16.mxu0 0
  %143 = vmatmul.mubr.bf16.gmra.mrb[0].mxu0 %v87
  %v144 = vpop.f32.mrb[0].mxu0
  %v145 = vadd.f32 0.0, %v144
  %v146 = vpop.f32.mrb[0].mxu0
  %v147 = vpop.f32.mrb[0].mxu0
  %v148 = vadd.f32 0.0, %v147
  %v149 = vpop.f32.mrb[0].mxu0
  %150 = vmatprep.mubr.bf16.mxu0 0
  %151 = vmatmul.mubr.bf16.gmra.mrb[0].mxu0 %v90
  %v152 = vpop.f32.mrb[0].mxu0
  %v153 = vadd.f32 0.0, %v152
  %v154 = vpop.f32.mrb[0].mxu0
  %v155 = vpop.f32.mrb[0].mxu0
  %v156 = vadd.f32 0.0, %v155
  %v157 = vpop.f32.mrb[0].mxu0
  %158 = vmatprep.mubr.bf16.mxu0 0
  %159 = vmatmul.mubr.bf16.gmra.mrb[0].mxu0 %v93
  %v160 = vpop.f32.mrb[0].mxu0
  %v161 = vadd.f32 0.0, %v160
  %v162 = vpop.f32.mrb[0].mxu0
  %v163 = vpop.f32.mrb[0].mxu0
  %v164 = vadd.f32 0.0, %v163
  %v165 = vpop.f32.mrb[0].mxu0
  %166 = vmatprep.mubr.bf16.mxu0 0
  %167 = vmatmul.mubr.bf16.gmra.mrb[0].mxu0 %v96
  %v168 = vpop.f32.mrb[0].mxu0
  %v169 = vadd.f32 0.0, %v168
  %v170 = vpop.f32.mrb[0].mxu0
  %v171 = vpop.f32.mrb[0].mxu0
  %v172 = vadd.f32 0.0, %v171
  %v173 = vpop.f32.mrb[0].mxu0
  %174 = vmatprep.mubr.bf16.mxu0 0
  %175 = vmatmul.mubr.bf16.gmra.mrb[0].mxu0 %v99
  %v176 = vpop.f32.mrb[0].mxu0
  %v177 = vadd.f32 0.0, %v176
  %v178 = vpop.f32.mrb[0].mxu0
  %v179 = vpop.f32.mrb[0].mxu0
  %v180 = vadd.f32 0.0, %v179
  %v181 = vpop.f32.mrb[0].mxu0
  %182 = vmatprep.mubr.bf16.mxu0 0
  %183 = vmatmul.mubr.bf16.gmra.mrb[0].mxu0 %v102
  %v184 = vpop.f32.mrb[0].mxu0
  %v185 = vadd.f32 0.0, %v184
  %v186 = vpop.f32.mrb[0].mxu0
  %v187 = vpop.f32.mrb[0].mxu0
  %v188 = vadd.f32 0.0, %v187
  %v189 = vpop.f32.mrb[0].mxu0
  %190 = vmatprep.mubr.bf16.mxu0 0
  %191 = vmatmul.mubr.bf16.gmra.mrb[0].mxu0 %v105
  %v192 = vpop.f32.mrb[0].mxu0
  %v193 = vadd.f32 0.0, %v192
  %v194 = vpop.f32.mrb[0].mxu0
  %v195 = vpop.f32.mrb[0].mxu0
  %v196 = vadd.f32 0.0, %v195
  %v197 = vpop.f32.mrb[0].mxu0
  %198 = vmatprep.mubr.bf16.mxu0 0
  %199 = vmatmul.mubr.bf16.gmra.mrb[0].mxu0 %v108
  %v200 = vpop.f32.mrb[0].mxu0
  %v201 = vadd.f32 0.0, %v200
  %v202 = vpop.f32.mrb[0].mxu0
  %v203 = vpop.f32.mrb[0].mxu0
  %v204 = vadd.f32 0.0, %v203
  %v205 = vpop.f32.mrb[0].mxu0
  %206 = vdwg.mxu0
  %v207 = vld [vmem:[%s2] sm:$0x1]
  %v209 = vlaneseq
  %v210 = vshrl.u32 %v209, 7
  %v211 = vsub.s32 0, %v210
  %v212 = vrot.slane %v207, %v211
  %v214 = vmul.f32 %v145, %v212
  %v215 = vmul.f32 %v148, %v212
  %v216 = vmul.f32 %v153, %v212
  %v217 = vmul.f32 %v156, %v212
  %v218 = vmul.f32 %v161, %v212
  %v219 = vmul.f32 %v164, %v212
  %v220 = vmul.f32 %v169, %v212
  %v221 = vmul.f32 %v172, %v212
  %v222 = vmul.f32 %v177, %v212
  %v223 = vmul.f32 %v180, %v212
  %v224 = vmul.f32 %v185, %v212
  %v225 = vmul.f32 %v188, %v212
  %v226 = vmul.f32 %v193, %v212
  %v227 = vmul.f32 %v196, %v212
  %v228 = vmul.f32 %v201, %v212
  %v229 = vmul.f32 %v204, %v212
  %v230 = vld [vmem:[%s3] sm:$0x1]
  %v232 = vlaneseq
  %v233 = vshrl.u32 %v232, 7
  %v234 = vsub.s32 0, %v233
  %v235 = vrot.slane %v230, %v234
  %v237 = vadd.f32 %v214, %v235
  %v238 = vadd.f32 %v215, %v235
  %v239 = vadd.f32 %v216, %v235
  %v240 = vadd.f32 %v217, %v235
  %v241 = vadd.f32 %v218, %v235
  %v242 = vadd.f32 %v219, %v235
  %v243 = vadd.f32 %v220, %v235
  %v244 = vadd.f32 %v221, %v235
  %v245 = vadd.f32 %v222, %v235
  %v246 = vadd.f32 %v223, %v235
  %v247 = vadd.f32 %v224, %v235
  %v248 = vadd.f32 %v225, %v235
  %v249 = vadd.f32 %v226, %v235
  %v250 = vadd.f32 %v227, %v235
  %v251 = vadd.f32 %v228, %v235
  %v252 = vadd.f32 %v229, %v235
  %v253 = vld [vmem:[%s4] sm:$0xff]
  %v254 = vld [vmem:[%s4 + $0x8] sm:$0xff]
  %v255 = vld [vmem:[%s4 + $0x10] sm:$0xff]
  %v256 = vld [vmem:[%s4 + $0x18] sm:$0xff]
  %v257 = vld [vmem:[%s4 + $0x20] sm:$0xff]
  %v258 = vld [vmem:[%s4 + $0x28] sm:$0xff]
  %v259 = vld [vmem:[%s4 + $0x30] sm:$0xff]
  %v260 = vld [vmem:[%s4 + $0x38] sm:$0xff]
  %v261 = vld [vmem:[%s4 + $0x40] sm:$0xff]
  %v262 = vld [vmem:[%s4 + $0x48] sm:$0xff]
  %v263 = vld [vmem:[%s4 + $0x50] sm:$0xff]
  %v264 = vld [vmem:[%s4 + $0x58] sm:$0xff]
  %v265 = vld [vmem:[%s4 + $0x60] sm:$0xff]
  %v266 = vld [vmem:[%s4 + $0x68] sm:$0xff]
  %v267 = vld [vmem:[%s4 + $0x70] sm:$0xff]
  %v268 = vld [vmem:[%s4 + $0x78] sm:$0xff]
  %v269 = vadd.f32 %v237, %v253
  %v270 = vadd.f32 %v238, %v254
  %v271 = vadd.f32 %v239, %v255
  %v272 = vadd.f32 %v240, %v256
  %v273 = vadd.f32 %v241, %v257
  %v274 = vadd.f32 %v242, %v258
  %v275 = vadd.f32 %v243, %v259
  %v276 = vadd.f32 %v244, %v260
  %v277 = vadd.f32 %v245, %v261
  %v278 = vadd.f32 %v246, %v262
  %v279 = vadd.f32 %v247, %v263
  %v280 = vadd.f32 %v248, %v264
  %v281 = vadd.f32 %v249, %v265
  %v282 = vadd.f32 %v250, %v266
  %v283 = vadd.f32 %v251, %v267
  %v284 = vadd.f32 %v252, %v268
  %v285 = vmax.f32 %v269, 0.0
  %v286 = vmax.f32 %v270, 0.0
  %v287 = vmax.f32 %v271, 0.0
  %v288 = vmax.f32 %v272, 0.0
  %v289 = vmax.f32 %v273, 0.0
  %v290 = vmax.f32 %v274, 0.0
  %v291 = vmax.f32 %v275, 0.0
  %v292 = vmax.f32 %v276, 0.0
  %v293 = vmax.f32 %v277, 0.0
  %v294 = vmax.f32 %v278, 0.0
  %v295 = vmax.f32 %v279, 0.0
  %v296 = vmax.f32 %v280, 0.0
  %v297 = vmax.f32 %v281, 0.0
  %v298 = vmax.f32 %v282, 0.0
  %v299 = vmax.f32 %v283, 0.0
  %v300 = vmax.f32 %v284, 0.0
  %vm301 = vcmask 523264
  %302 = vst.msk [vmem:[%s5] sm:$0xff] %vm301, %v285
  %303 = vst.msk [vmem:[%s5 + $0x8] sm:$0xff] %vm301, %v286
  %304 = vst.msk [vmem:[%s5 + $0x10] sm:$0xff] %vm301, %v287
  %305 = vst.msk [vmem:[%s5 + $0x18] sm:$0xff] %vm301, %v288
  %306 = vst.msk [vmem:[%s5 + $0x20] sm:$0xff] %vm301, %v289
  %307 = vst.msk [vmem:[%s5 + $0x28] sm:$0xff] %vm301, %v290
  %308 = vst.msk [vmem:[%s5 + $0x30] sm:$0xff] %vm301, %v291
  %309 = vst.msk [vmem:[%s5 + $0x38] sm:$0xff] %vm301, %v292
  %310 = vst.msk [vmem:[%s5 + $0x40] sm:$0xff] %vm301, %v293
  %311 = vst.msk [vmem:[%s5 + $0x48] sm:$0xff] %vm301, %v294
  %312 = vst.msk [vmem:[%s5 + $0x50] sm:$0xff] %vm301, %v295
  %313 = vst.msk [vmem:[%s5 + $0x58] sm:$0xff] %vm301, %v296
  %314 = vst.msk [vmem:[%s5 + $0x60] sm:$0xff] %vm301, %v297
  %315 = vst.msk [vmem:[%s5 + $0x68] sm:$0xff] %vm301, %v298
  %316 = vst.msk [vmem:[%s5 + $0x70] sm:$0xff] %vm301, %v299
  %317 = vst.msk [vmem:[%s5 + $0x78] sm:$0xff] %vm301, %v300
  // Predicated region
  $region22: #{_lambda_.30} parent=0 // pred_check
    _
  $region23: #{_lambda_.30} parent=0 // pred_check_branch
    %319 = sbr.rel (0) target = $region25
  $region24: #{_lambda_.30} parent=0 // pred_region
    _
  $region25: #{_lambda_.30} parent=0 // pred_fallthru
    _
  // Predicated region
  $region26: #{_lambda_.30} parent=0 // pred_check
    _
  $region27: #{_lambda_.30} parent=0 // pred_check_branch
    %321 = sbr.rel (0) target = $region29
  $region28: #{_lambda_.30} parent=0 // pred_region
    _
  $region29: #{_lambda_.30} parent=0 // pred_fallthru
    _

// kernel: _lambda_.32
$region0: #{_lambda_.32}
  #allocation0 [shape = 'u32[]', space=smem, size = 0x4, offset = 0x4, fixed_abs, tag = 'smem constant byte address 0x4 - core index']
  #allocation1 [shape = 'u32[144,128]{1,0:T(1,128)}', space=vmem, size = 0x12000, scoped, tag = 'internal scratch']
  %s0 = inlined_call_operand.vmem [shape: bf16[128,64], index: 0, kind: input, shape index: {}]
  %s1 = inlined_call_operand.vmem [shape: bf16[64,32], index: 1, kind: input, shape index: {}]
  %s2 = inlined_call_operand.vmem [shape: f32[1,32], index: 2, kind: input, shape index: {}]
  %s3 = inlined_call_operand.vmem [shape: f32[1,32], index: 3, kind: input, shape index: {}]
  %s4 = inlined_call_operand.vmem [shape: f32[128,32], index: 4, kind: output, shape index: {}]
  %s5 = sld [smem:[#allocation0]]
  $region26: #{_lambda_.32} parent=0
    _
  %s7 = ssub.s32 1, %s5
  %s8 = scalar_select 0, %s7, %s5
  // Predicated region
  $region2: #{_lambda_.32} parent=0 // pred_check
    _
  $region3: #{_lambda_.32} parent=0 // pred_check_branch
    %10 = sbr.rel (0) target = $region5
  $region4: #{_lambda_.32} parent=0 // pred_region
    _
  $region5: #{_lambda_.32} parent=0 // pred_fallthru
    _
  // Predicated region
  $region6: #{_lambda_.32} parent=0 // pred_check
    _
  $region7: #{_lambda_.32} parent=0 // pred_check_branch
    %12 = sbr.rel (0) target = $region9
  $region8: #{_lambda_.32} parent=0 // pred_region
    _
  $region9: #{_lambda_.32} parent=0 // pred_fallthru
    _
  // Predicated region
  $region10: #{_lambda_.32} parent=0 // pred_check
    _
  $region11: #{_lambda_.32} parent=0 // pred_check_branch
    %14 = sbr.rel (0) target = $region13
  $region12: #{_lambda_.32} parent=0 // pred_region
    _
  $region13: #{_lambda_.32} parent=0 // pred_fallthru
    _
  // Predicated region
  $region14: #{_lambda_.32} parent=0 // pred_check
    _
  $region15: #{_lambda_.32} parent=0 // pred_check_branch
    %16 = sbr.rel (0) target = $region17
  $region16: #{_lambda_.32} parent=0 // pred_region
    _
  $region17: #{_lambda_.32} parent=0 // pred_fallthru
    _
  %v18 = vld [vmem:[%s0] sm:$0xf]
  %v19 = vld [vmem:[%s0 + $0x4] sm:$0xf]
  %v20 = vld [vmem:[%s0 + $0x8] sm:$0xf]
  %v21 = vld [vmem:[%s0 + $0xc] sm:$0xf]
  %v22 = vld [vmem:[%s0 + $0x10] sm:$0xf]
  %v23 = vld [vmem:[%s0 + $0x14] sm:$0xf]
  %v24 = vld [vmem:[%s0 + $0x18] sm:$0xf]
  %v25 = vld [vmem:[%s0 + $0x1c] sm:$0xf]
  %v26 = vld [vmem:[%s0 + $0x20] sm:$0xf]
  %v27 = vld [vmem:[%s0 + $0x24] sm:$0xf]
  %v28 = vld [vmem:[%s0 + $0x28] sm:$0xf]
  %v29 = vld [vmem:[%s0 + $0x2c] sm:$0xf]
  %v30 = vld [vmem:[%s0 + $0x30] sm:$0xf]
  %v31 = vld [vmem:[%s0 + $0x34] sm:$0xf]
  %v32 = vld [vmem:[%s0 + $0x38] sm:$0xf]
  %v33 = vld [vmem:[%s0 + $0x3c] sm:$0xf]
  %v34 = vld [vmem:[%s1] sm:$0xf]
  %v35 = vld [vmem:[%s1 + $0x4] sm:$0xf]
  %v36 = vld [vmem:[%s1 + $0x8] sm:$0xf]
  %v37 = vld [vmem:[%s1 + $0xc] sm:$0xf]
  %v38 = vld [vmem:[%s1 + $0x10] sm:$0xf]
  %v39 = vld [vmem:[%s1 + $0x14] sm:$0xf]
  %v40 = vld [vmem:[%s1 + $0x18] sm:$0xf]
  %v41 = vld [vmem:[%s1 + $0x1c] sm:$0xf]
  %v58 = vunpack.c.l.b16 %v18
  %v59 = vunpack.c.l.b16 %v19
  %v60 = vunpack.c.l.b16 %v20
  %v61 = vunpack.c.l.b16 %v21
  %v62 = vunpack.c.l.b16 %v22
  %v63 = vunpack.c.l.b16 %v23
  %v64 = vunpack.c.l.b16 %v24
  %v65 = vunpack.c.l.b16 %v25
  %v66 = vunpack.c.l.b16 %v26
  %v67 = vunpack.c.l.b16 %v27
  %v68 = vunpack.c.l.b16 %v28
  %v69 = vunpack.c.l.b16 %v29
  %v70 = vunpack.c.l.b16 %v30
  %v71 = vunpack.c.l.b16 %v31
  %v72 = vunpack.c.l.b16 %v32
  %v73 = vunpack.c.l.b16 %v33
  %v74 = vpack.c.b16 %v59, %v58
  %v75 = vpack.c.b16 %v61, %v60
  %v76 = vpack.c.b16 %v63, %v62
  %v77 = vpack.c.b16 %v65, %v64
  %v78 = vpack.c.b16 %v67, %v66
  %v79 = vpack.c.b16 %v69, %v68
  %v80 = vpack.c.b16 %v71, %v70
  %v81 = vpack.c.b16 %v73, %v72
  %v90 = vunpack.c.l.b16 %v34
  %v91 = vunpack.c.l.b16 %v35
  %v92 = vunpack.c.l.b16 %v36
  %v93 = vunpack.c.l.b16 %v37
  %v94 = vunpack.c.l.b16 %v38
  %v95 = vunpack.c.l.b16 %v39
  %v96 = vunpack.c.l.b16 %v40
  %v97 = vunpack.c.l.b16 %v41
  %v98 = vpack.c.b16 %v91, %v90
  %v99 = vpack.c.b16 %v93, %v92
  %v100 = vpack.c.b16 %v95, %v94
  %v101 = vpack.c.b16 %v97, %v96
  %vm106 = vcmask 523264
  %v108 = vsel %vm106, %v74, 0
  %v111 = vsel %vm106, %v75, 0
  %v114 = vsel %vm106, %v76, 0
  %v117 = vsel %vm106, %v77, 0
  %v120 = vsel %vm106, %v78, 0
  %v123 = vsel %vm106, %v79, 0
  %v126 = vsel %vm106, %v80, 0
  %v129 = vsel %vm106, %v81, 0
  %131 = vmatprep.subr.bf16.mxu0 0
  %132 = vmatpush1.bf16.msra.mxu0 %v98
  %133 = vmatprep.subr.bf16.mxu0 0
  %134 = vmatpush1.bf16.msra.mxu0 %v99
  %135 = vmatprep.subr.bf16.mxu0 0
  %136 = vmatpush1.bf16.msra.mxu0 %v100
  %137 = vmatprep.subr.bf16.mxu0 0
  %138 = vmatpush1.bf16.msra.mxu0 %v101
  %139 = vmatprep.subr.bf16.mxu0 0
  %140 = vmatpush1.bf16.msra.mxu0 0
  %141 = vmatprep.subr.bf16.mxu0 0
  %142 = vmatpush1.bf16.msra.mxu0 0
  %143 = vmatprep.subr.bf16.mxu0 0
  %144 = vmatpush1.bf16.msra.mxu0 0
  %145 = vmatprep.subr.bf16.mxu0 0
  %146 = vmatpush1.bf16.msra.mxu0 0
  %147 = vmatprep.subr.bf16.mxu0 0
  %148 = vmatpush1.bf16.msra.mxu0 0
  %149 = vmatprep.subr.bf16.mxu0 0
  %150 = vmatpush1.bf16.msra.mxu0 0
  %151 = vmatprep.subr.bf16.mxu0 0
  %152 = vmatpush1.bf16.msra.mxu0 0
  %153 = vmatprep.subr.bf16.mxu0 0
  %154 = vmatpush1.bf16.msra.mxu0 0
  %155 = vmatprep.subr.bf16.mxu0 0
  %156 = vmatpush1.bf16.msra.mxu0 0
  %157 = vmatprep.subr.bf16.mxu0 0
  %158 = vmatpush1.bf16.msra.mxu0 0
  %159 = vmatprep.subr.bf16.mxu0 0
  %160 = vmatpush1.bf16.msra.mxu0 0
  %161 = vmatprep.subr.bf16.mxu0 0
  %162 = vmatpush1.bf16.msra.mxu0 0
  %163 = vmatprep.mubr.bf16.mxu0 0
  %164 = vmatmul.mubr.bf16.gmra.mrb[0].mxu0 %v108
  %v165 = vpop.f32.mrb[0].mxu0
  %v166 = vadd.f32 0.0, %v165
  %v167 = vpop.f32.mrb[0].mxu0
  %v168 = vpop.f32.mrb[0].mxu0
  %v169 = vadd.f32 0.0, %v168
  %v170 = vpop.f32.mrb[0].mxu0
  %171 = vmatprep.mubr.bf16.mxu0 0
  %172 = vmatmul.mubr.bf16.gmra.mrb[0].mxu0 %v111
  %v173 = vpop.f32.mrb[0].mxu0
  %v174 = vadd.f32 0.0, %v173
  %v175 = vpop.f32.mrb[0].mxu0
  %v176 = vpop.f32.mrb[0].mxu0
  %v177 = vadd.f32 0.0, %v176
  %v178 = vpop.f32.mrb[0].mxu0
  %179 = vmatprep.mubr.bf16.mxu0 0
  %180 = vmatmul.mubr.bf16.gmra.mrb[0].mxu0 %v114
  %v181 = vpop.f32.mrb[0].mxu0
  %v182 = vadd.f32 0.0, %v181
  %v183 = vpop.f32.mrb[0].mxu0
  %v184 = vpop.f32.mrb[0].mxu0
  %v185 = vadd.f32 0.0, %v184
  %v186 = vpop.f32.mrb[0].mxu0
  %187 = vmatprep.mubr.bf16.mxu0 0
  %188 = vmatmul.mubr.bf16.gmra.mrb[0].mxu0 %v117
  %v189 = vpop.f32.mrb[0].mxu0
  %v190 = vadd.f32 0.0, %v189
  %v191 = vpop.f32.mrb[0].mxu0
  %v192 = vpop.f32.mrb[0].mxu0
  %v193 = vadd.f32 0.0, %v192
  %v194 = vpop.f32.mrb[0].mxu0
  %195 = vmatprep.mubr.bf16.mxu0 0
  %196 = vmatmul.mubr.bf16.gmra.mrb[0].mxu0 %v120
  %v197 = vpop.f32.mrb[0].mxu0
  %v198 = vadd.f32 0.0, %v197
  %v199 = vpop.f32.mrb[0].mxu0
  %v200 = vpop.f32.mrb[0].mxu0
  %v201 = vadd.f32 0.0, %v200
  %v202 = vpop.f32.mrb[0].mxu0
  %203 = vmatprep.mubr.bf16.mxu0 0
  %204 = vmatmul.mubr.bf16.gmra.mrb[0].mxu0 %v123
  %v205 = vpop.f32.mrb[0].mxu0
  %v206 = vadd.f32 0.0, %v205
  %v207 = vpop.f32.mrb[0].mxu0
  %v208 = vpop.f32.mrb[0].mxu0
  %v209 = vadd.f32 0.0, %v208
  %v210 = vpop.f32.mrb[0].mxu0
  %211 = vmatprep.mubr.bf16.mxu0 0
  %212 = vmatmul.mubr.bf16.gmra.mrb[0].mxu0 %v126
  %v213 = vpop.f32.mrb[0].mxu0
  %v214 = vadd.f32 0.0, %v213
  %v215 = vpop.f32.mrb[0].mxu0
  %v216 = vpop.f32.mrb[0].mxu0
  %v217 = vadd.f32 0.0, %v216
  %v218 = vpop.f32.mrb[0].mxu0
  %219 = vmatprep.mubr.bf16.mxu0 0
  %220 = vmatmul.mubr.bf16.gmra.mrb[0].mxu0 %v129
  %v221 = vpop.f32.mrb[0].mxu0
  %v222 = vadd.f32 0.0, %v221
  %v223 = vpop.f32.mrb[0].mxu0
  %v224 = vpop.f32.mrb[0].mxu0
  %v225 = vadd.f32 0.0, %v224
  %v226 = vpop.f32.mrb[0].mxu0
  %227 = vdwg.mxu0
  %v228 = vld [vmem:[%s2] sm:$0x1]
  %v230 = vlaneseq
  %v231 = vshrl.u32 %v230, 7
  %v232 = vsub.s32 0, %v231
  %v233 = vrot.slane %v228, %v232
  %v235 = vmul.f32 %v166, %v233
  %v236 = vmul.f32 %v169, %v233
  %v237 = vmul.f32 %v174, %v233
  %v238 = vmul.f32 %v177, %v233
  %v239 = vmul.f32 %v182, %v233
  %v240 = vmul.f32 %v185, %v233
  %v241 = vmul.f32 %v190, %v233
  %v242 = vmul.f32 %v193, %v233
  %v243 = vmul.f32 %v198, %v233
  %v244 = vmul.f32 %v201, %v233
  %v245 = vmul.f32 %v206, %v233
  %v246 = vmul.f32 %v209, %v233
  %v247 = vmul.f32 %v214, %v233
  %v248 = vmul.f32 %v217, %v233
  %v249 = vmul.f32 %v222, %v233
  %v250 = vmul.f32 %v225, %v233
  %v251 = vld [vmem:[%s3] sm:$0x1]
  %v253 = vlaneseq
  %v254 = vshrl.u32 %v253, 7
  %v255 = vsub.s32 0, %v254
  %v256 = vrot.slane %v251, %v255
  %v258 = vadd.f32 %v235, %v256
  %v259 = vadd.f32 %v236, %v256
  %v260 = vadd.f32 %v237, %v256
  %v261 = vadd.f32 %v238, %v256
  %v262 = vadd.f32 %v239, %v256
  %v263 = vadd.f32 %v240, %v256
  %v264 = vadd.f32 %v241, %v256
  %v265 = vadd.f32 %v242, %v256
  %v266 = vadd.f32 %v243, %v256
  %v267 = vadd.f32 %v244, %v256
  %v268 = vadd.f32 %v245, %v256
  %v269 = vadd.f32 %v246, %v256
  %v270 = vadd.f32 %v247, %v256
  %v271 = vadd.f32 %v248, %v256
  %v272 = vadd.f32 %v249, %v256
  %v273 = vadd.f32 %v250, %v256
  %v274 = vmax.f32 %v258, 0.0
  %v275 = vmax.f32 %v259, 0.0
  %v276 = vmax.f32 %v260, 0.0
  %v277 = vmax.f32 %v261, 0.0
  %v278 = vmax.f32 %v262, 0.0
  %v279 = vmax.f32 %v263, 0.0
  %v280 = vmax.f32 %v264, 0.0
  %v281 = vmax.f32 %v265, 0.0
  %v282 = vmax.f32 %v266, 0.0
  %v283 = vmax.f32 %v267, 0.0
  %v284 = vmax.f32 %v268, 0.0
  %v285 = vmax.f32 %v269, 0.0
  %v286 = vmax.f32 %v270, 0.0
  %v287 = vmax.f32 %v271, 0.0
  %v288 = vmax.f32 %v272, 0.0
  %v289 = vmax.f32 %v273, 0.0
  %vm290 = vcmask 261120
  %291 = vst.msk [vmem:[%s4] sm:$0xff] %vm290, %v274
  %292 = vst.msk [vmem:[%s4 + $0x8] sm:$0xff] %vm290, %v275
  %293 = vst.msk [vmem:[%s4 + $0x10] sm:$0xff] %vm290, %v276
  %294 = vst.msk [vmem:[%s4 + $0x18] sm:$0xff] %vm290, %v277
  %295 = vst.msk [vmem:[%s4 + $0x20] sm:$0xff] %vm290, %v278
  %296 = vst.msk [vmem:[%s4 + $0x28] sm:$0xff] %vm290, %v279
  %297 = vst.msk [vmem:[%s4 + $0x30] sm:$0xff] %vm290, %v280
  %298 = vst.msk [vmem:[%s4 + $0x38] sm:$0xff] %vm290, %v281
  %299 = vst.msk [vmem:[%s4 + $0x40] sm:$0xff] %vm290, %v282
  %300 = vst.msk [vmem:[%s4 + $0x48] sm:$0xff] %vm290, %v283
  %301 = vst.msk [vmem:[%s4 + $0x50] sm:$0xff] %vm290, %v284
  %302 = vst.msk [vmem:[%s4 + $0x58] sm:$0xff] %vm290, %v285
  %303 = vst.msk [vmem:[%s4 + $0x60] sm:$0xff] %vm290, %v286
  %304 = vst.msk [vmem:[%s4 + $0x68] sm:$0xff] %vm290, %v287
  %305 = vst.msk [vmem:[%s4 + $0x70] sm:$0xff] %vm290, %v288
  %306 = vst.msk [vmem:[%s4 + $0x78] sm:$0xff] %vm290, %v289
  // Predicated region
  $region18: #{_lambda_.32} parent=0 // pred_check
    _
  $region19: #{_lambda_.32} parent=0 // pred_check_branch
    %308 = sbr.rel (0) target = $region21
  $region20: #{_lambda_.32} parent=0 // pred_region
    _
  $region21: #{_lambda_.32} parent=0 // pred_fallthru
    _
  // Predicated region
  $region22: #{_lambda_.32} parent=0 // pred_check
    _
  $region23: #{_lambda_.32} parent=0 // pred_check_branch
    %310 = sbr.rel (0) target = $region25
  $region24: #{_lambda_.32} parent=0 // pred_region
    _
  $region25: #{_lambda_.32} parent=0 // pred_fallthru
    _

// kernel: _lambda_.31
$region0: #{_lambda_.31}
  #allocation0 [shape = 'u32[]', space=smem, size = 0x4, offset = 0x4, fixed_abs, tag = 'smem constant byte address 0x4 - core index']
  #allocation1 [shape = 'u32[144,128]{1,0:T(1,128)}', space=vmem, size = 0x12000, scoped, tag = 'internal scratch']
  %s0 = inlined_call_operand.vmem [shape: bf16[32,64], index: 0, kind: input, shape index: {}]
  %s1 = inlined_call_operand.vmem [shape: bf16[64,128], index: 1, kind: input, shape index: {}]
  %s2 = inlined_call_operand.vmem [shape: f32[1,128], index: 2, kind: input, shape index: {}]
  %s3 = inlined_call_operand.vmem [shape: f32[1,128], index: 3, kind: input, shape index: {}]
  %s4 = inlined_call_operand.vmem [shape: f32[32,128], index: 4, kind: output, shape index: {}]
  %s5 = sld [smem:[#allocation0]]
  $region26: #{_lambda_.31} parent=0
    _
  %s7 = ssub.s32 1, %s5
  %s8 = scalar_select 0, %s7, %s5
  // Predicated region
  $region2: #{_lambda_.31} parent=0 // pred_check
    _
  $region3: #{_lambda_.31} parent=0 // pred_check_branch
    %10 = sbr.rel (0) target = $region5
  $region4: #{_lambda_.31} parent=0 // pred_region
    _
  $region5: #{_lambda_.31} parent=0 // pred_fallthru
    _
  // Predicated region
  $region6: #{_lambda_.31} parent=0 // pred_check
    _
  $region7: #{_lambda_.31} parent=0 // pred_check_branch
    %12 = sbr.rel (0) target = $region9
  $region8: #{_lambda_.31} parent=0 // pred_region
    _
  $region9: #{_lambda_.31} parent=0 // pred_fallthru
    _
  // Predicated region
  $region10: #{_lambda_.31} parent=0 // pred_check
    _
  $region11: #{_lambda_.31} parent=0 // pred_check_branch
    %14 = sbr.rel (0) target = $region13
  $region12: #{_lambda_.31} parent=0 // pred_region
    _
  $region13: #{_lambda_.31} parent=0 // pred_fallthru
    _
  // Predicated region
  $region14: #{_lambda_.31} parent=0 // pred_check
    _
  $region15: #{_lambda_.31} parent=0 // pred_check_branch
    %16 = sbr.rel (0) target = $region17
  $region16: #{_lambda_.31} parent=0 // pred_region
    _
  $region17: #{_lambda_.31} parent=0 // pred_fallthru
    _
  %v18 = vld [vmem:[%s0] sm:$0xf]
  %v19 = vld [vmem:[%s0 + $0x4] sm:$0xf]
  %v20 = vld [vmem:[%s0 + $0x8] sm:$0xf]
  %v21 = vld [vmem:[%s0 + $0xc] sm:$0xf]
  %v22 = vld [vmem:[%s1] sm:$0xf]
  %v23 = vld [vmem:[%s1 + $0x4] sm:$0xf]
  %v24 = vld [vmem:[%s1 + $0x8] sm:$0xf]
  %v25 = vld [vmem:[%s1 + $0xc] sm:$0xf]
  %v26 = vld [vmem:[%s1 + $0x10] sm:$0xf]
  %v27 = vld [vmem:[%s1 + $0x14] sm:$0xf]
  %v28 = vld [vmem:[%s1 + $0x18] sm:$0xf]
  %v29 = vld [vmem:[%s1 + $0x1c] sm:$0xf]
  %v34 = vunpack.c.l.b16 %v18
  %v35 = vunpack.c.l.b16 %v19
  %v36 = vunpack.c.l.b16 %v20
  %v37 = vunpack.c.l.b16 %v21
  %v38 = vpack.c.b16 %v35, %v34
  %v39 = vpack.c.b16 %v37, %v36
  %v48 = vunpack.c.l.b16 %v22
  %v49 = vunpack.c.l.b16 %v23
  %v50 = vunpack.c.l.b16 %v24
  %v51 = vunpack.c.l.b16 %v25
  %v52 = vunpack.c.l.b16 %v26
  %v53 = vunpack.c.l.b16 %v27
  %v54 = vunpack.c.l.b16 %v28
  %v55 = vunpack.c.l.b16 %v29
  %v56 = vpack.c.b16 %v49, %v48
  %v57 = vpack.c.b16 %v51, %v50
  %v58 = vpack.c.b16 %v53, %v52
  %v59 = vpack.c.b16 %v55, %v54
  %vm64 = vcmask 523264
  %v66 = vsel %vm64, %v38, 0
  %v69 = vsel %vm64, %v39, 0
  %71 = vmatprep.subr.bf16.mxu0 0
  %72 = vmatpush1.bf16.msra.mxu0 %v56
  %73 = vmatprep.subr.bf16.mxu0 0
  %74 = vmatpush1.bf16.msra.mxu0 %v57
  %75 = vmatprep.subr.bf16.mxu0 0
  %76 = vmatpush1.bf16.msra.mxu0 %v58
  %77 = vmatprep.subr.bf16.mxu0 0
  %78 = vmatpush1.bf16.msra.mxu0 %v59
  %79 = vmatprep.subr.bf16.mxu0 0
  %80 = vmatpush1.bf16.msra.mxu0 0
  %81 = vmatprep.subr.bf16.mxu0 0
  %82 = vmatpush1.bf16.msra.mxu0 0
  %83 = vmatprep.subr.bf16.mxu0 0
  %84 = vmatpush1.bf16.msra.mxu0 0
  %85 = vmatprep.subr.bf16.mxu0 0
  %86 = vmatpush1.bf16.msra.mxu0 0
  %87 = vmatprep.subr.bf16.mxu0 0
  %88 = vmatpush1.bf16.msra.mxu0 0
  %89 = vmatprep.subr.bf16.mxu0 0
  %90 = vmatpush1.bf16.msra.mxu0 0
  %91 = vmatprep.subr.bf16.mxu0 0
  %92 = vmatpush1.bf16.msra.mxu0 0
  %93 = vmatprep.subr.bf16.mxu0 0
  %94 = vmatpush1.bf16.msra.mxu0 0
  %95 = vmatprep.subr.bf16.mxu0 0
  %96 = vmatpush1.bf16.msra.mxu0 0
  %97 = vmatprep.subr.bf16.mxu0 0
  %98 = vmatpush1.bf16.msra.mxu0 0
  %99 = vmatprep.subr.bf16.mxu0 0
  %100 = vmatpush1.bf16.msra.mxu0 0
  %101 = vmatprep.subr.bf16.mxu0 0
  %102 = vmatpush1.bf16.msra.mxu0 0
  %103 = vmatprep.mubr.bf16.mxu0 0
  %104 = vmatmul.mubr.bf16.gmra.mrb[0].mxu0 %v66
  %v105 = vpop.f32.mrb[0].mxu0
  %v106 = vadd.f32 0.0, %v105
  %v107 = vpop.f32.mrb[0].mxu0
  %v108 = vpop.f32.mrb[0].mxu0
  %v109 = vadd.f32 0.0, %v108
  %v110 = vpop.f32.mrb[0].mxu0
  %111 = vmatprep.mubr.bf16.mxu0 0
  %112 = vmatmul.mubr.bf16.gmra.mrb[0].mxu0 %v69
  %v113 = vpop.f32.mrb[0].mxu0
  %v114 = vadd.f32 0.0, %v113
  %v115 = vpop.f32.mrb[0].mxu0
  %v116 = vpop.f32.mrb[0].mxu0
  %v117 = vadd.f32 0.0, %v116
  %v118 = vpop.f32.mrb[0].mxu0
  %119 = vdwg.mxu0
  %v120 = vld [vmem:[%s2] sm:$0x1]
  %v122 = vlaneseq
  %v123 = vshrl.u32 %v122, 7
  %v124 = vsub.s32 0, %v123
  %v125 = vrot.slane %v120, %v124
  %v127 = vmul.f32 %v106, %v125
  %v128 = vmul.f32 %v109, %v125
  %v129 = vmul.f32 %v114, %v125
  %v130 = vmul.f32 %v117, %v125
  %v131 = vld [vmem:[%s3] sm:$0x1]
  %v133 = vlaneseq
  %v134 = vshrl.u32 %v133, 7
  %v135 = vsub.s32 0, %v134
  %v136 = vrot.slane %v131, %v135
  %v138 = vadd.f32 %v127, %v136
  %v139 = vadd.f32 %v128, %v136
  %v140 = vadd.f32 %v129, %v136
  %v141 = vadd.f32 %v130, %v136
  %142 = vst [vmem:[%s4] sm:$0xff] %v138
  %143 = vst [vmem:[%s4 + $0x8] sm:$0xff] %v139
  %144 = vst [vmem:[%s4 + $0x10] sm:$0xff] %v140
  %145 = vst [vmem:[%s4 + $0x18] sm:$0xff] %v141
  // Predicated region
  $region18: #{_lambda_.31} parent=0 // pred_check
    _
  $region19: #{_lambda_.31} parent=0 // pred_check_branch
    %147 = sbr.rel (0) target = $region21
  $region20: #{_lambda_.31} parent=0 // pred_region
    _
  $region21: #{_lambda_.31} parent=0 // pred_fallthru
    _
  // Predicated region
  $region22: #{_lambda_.31} parent=0 // pred_check
    _
  $region23: #{_lambda_.31} parent=0 // pred_check_branch
    %149 = sbr.rel (0) target = $region25
  $region24: #{_lambda_.31} parent=0 // pred_region
    _
  $region25: #{_lambda_.31} parent=0 // pred_fallthru
    _

// kernel: _lambda_.33
$region0: #{_lambda_.33}
  #allocation0 [shape = 'u32[]', space=smem, size = 0x4, offset = 0x4, fixed_abs, tag = 'smem constant byte address 0x4 - core index']
  #allocation1 [shape = 'u32[144,128]{1,0:T(1,128)}', space=vmem, size = 0x12000, scoped, tag = 'internal scratch']
  %s0 = inlined_call_operand.vmem [shape: bf16[32,288], index: 0, kind: input, shape index: {}]
  %s1 = inlined_call_operand.vmem [shape: bf16[288,32], index: 1, kind: input, shape index: {}]
  %s2 = inlined_call_operand.vmem [shape: f32[1,32], index: 2, kind: input, shape index: {}]
  %s3 = inlined_call_operand.vmem [shape: f32[1,32], index: 3, kind: input, shape index: {}]
  %s4 = inlined_call_operand.vmem [shape: f32[32,32], index: 4, kind: output, shape index: {}]
  %s5 = sld [smem:[#allocation0]]
  $region26: #{_lambda_.33} parent=0
    _
  %s7 = ssub.s32 1, %s5
  %s8 = scalar_select 0, %s7, %s5
  // Predicated region
  $region2: #{_lambda_.33} parent=0 // pred_check
    _
  $region3: #{_lambda_.33} parent=0 // pred_check_branch
    %10 = sbr.rel (0) target = $region5
  $region4: #{_lambda_.33} parent=0 // pred_region
    _
  $region5: #{_lambda_.33} parent=0 // pred_fallthru
    _
  // Predicated region
  $region6: #{_lambda_.33} parent=0 // pred_check
    _
  $region7: #{_lambda_.33} parent=0 // pred_check_branch
    %12 = sbr.rel (0) target = $region9
  $region8: #{_lambda_.33} parent=0 // pred_region
    _
  $region9: #{_lambda_.33} parent=0 // pred_fallthru
    _
  // Predicated region
  $region10: #{_lambda_.33} parent=0 // pred_check
    _
  $region11: #{_lambda_.33} parent=0 // pred_check_branch
    %14 = sbr.rel (0) target = $region13
  $region12: #{_lambda_.33} parent=0 // pred_region
    _
  $region13: #{_lambda_.33} parent=0 // pred_fallthru
    _
  // Predicated region
  $region14: #{_lambda_.33} parent=0 // pred_check
    _
  $region15: #{_lambda_.33} parent=0 // pred_check_branch
    %16 = sbr.rel (0) target = $region17
  $region16: #{_lambda_.33} parent=0 // pred_region
    _
  $region17: #{_lambda_.33} parent=0 // pred_fallthru
    _
  %v18 = vld [vmem:[%s0] sm:$0xff]
  %v19 = vld [vmem:[%s0 + $0x8] sm:$0xf]
  %v20 = vld [vmem:[%s0 + $0xc] sm:$0xff]
  %v21 = vld [vmem:[%s0 + $0x14] sm:$0xf]
  %v22 = vld [vmem:[%s0 + $0x18] sm:$0xff]
  %v23 = vld [vmem:[%s0 + $0x20] sm:$0xf]
  %v24 = vld [vmem:[%s0 + $0x24] sm:$0xff]
  %v25 = vld [vmem:[%s0 + $0x2c] sm:$0xf]
  %v26 = vld [vmem:[%s1] sm:$0xf]
  %v27 = vld [vmem:[%s1 + $0x4] sm:$0xf]
  %v28 = vld [vmem:[%s1 + $0x8] sm:$0xf]
  %v29 = vld [vmem:[%s1 + $0xc] sm:$0xf]
  %v30 = vld [vmem:[%s1 + $0x10] sm:$0xf]
  %v31 = vld [vmem:[%s1 + $0x14] sm:$0xf]
  %v32 = vld [vmem:[%s1 + $0x18] sm:$0xf]
  %v33 = vld [vmem:[%s1 + $0x1c] sm:$0xf]
  %v34 = vld [vmem:[%s1 + $0x20] sm:$0xf]
  %v35 = vld [vmem:[%s1 + $0x24] sm:$0xf]
  %v36 = vld [vmem:[%s1 + $0x28] sm:$0xf]
  %v37 = vld [vmem:[%s1 + $0x2c] sm:$0xf]
  %v38 = vld [vmem:[%s1 + $0x30] sm:$0xf]
  %v39 = vld [vmem:[%s1 + $0x34] sm:$0xf]
  %v40 = vld [vmem:[%s1 + $0x38] sm:$0xf]
  %v41 = vld [vmem:[%s1 + $0x3c] sm:$0xf]
  %v42 = vld [vmem:[%s1 + $0x40] sm:$0xf]
  %v43 = vld [vmem:[%s1 + $0x44] sm:$0xf]
  %v44 = vld [vmem:[%s1 + $0x48] sm:$0xf]
  %v45 = vld [vmem:[%s1 + $0x4c] sm:$0xf]
  %v46 = vld [vmem:[%s1 + $0x50] sm:$0xf]
  %v47 = vld [vmem:[%s1 + $0x54] sm:$0xf]
  %v48 = vld [vmem:[%s1 + $0x58] sm:$0xf]
  %v49 = vld [vmem:[%s1 + $0x5c] sm:$0xf]
  %v50 = vld [vmem:[%s1 + $0x60] sm:$0xf]
  %v51 = vld [vmem:[%s1 + $0x64] sm:$0xf]
  %v52 = vld [vmem:[%s1 + $0x68] sm:$0xf]
  %v53 = vld [vmem:[%s1 + $0x6c] sm:$0xf]
  %v54 = vld [vmem:[%s1 + $0x70] sm:$0xf]
  %v55 = vld [vmem:[%s1 + $0x74] sm:$0xf]
  %v56 = vld [vmem:[%s1 + $0x78] sm:$0xf]
  %v57 = vld [vmem:[%s1 + $0x7c] sm:$0xf]
  %v58 = vld [vmem:[%s1 + $0x80] sm:$0xf]
  %v59 = vld [vmem:[%s1 + $0x84] sm:$0xf]
  %v60 = vld [vmem:[%s1 + $0x88] sm:$0xf]
  %v61 = vld [vmem:[%s1 + $0x8c] sm:$0xf]
  %v70 = vunpack.c.l.b16 %v18
  %v71 = vunpack.c.h.b16 %v18
  %v72 = vunpack.c.l.b16 %v19
  %v73 = vunpack.c.l.b16 %v20
  %v74 = vunpack.c.h.b16 %v20
  %v75 = vunpack.c.l.b16 %v21
  %v76 = vunpack.c.l.b16 %v22
  %v77 = vunpack.c.h.b16 %v22
  %v78 = vunpack.c.l.b16 %v23
  %v79 = vunpack.c.l.b16 %v24
  %v80 = vunpack.c.h.b16 %v24
  %v81 = vunpack.c.l.b16 %v25
  %v82 = vpack.c.b16 %v73, %v70
  %v83 = vpack.c.b16 %v74, %v71
  %v84 = vpack.c.b16 %v75, %v72
  %v85 = vpack.c.b16 %v79, %v76
  %v86 = vpack.c.b16 %v80, %v77
  %v87 = vpack.c.b16 %v81, %v78
  %v128 = vunpack.c.l.b16 %v26
  %v129 = vunpack.c.l.b16 %v27
  %v130 = vunpack.c.l.b16 %v28
  %v131 = vunpack.c.l.b16 %v29
  %v132 = vunpack.c.l.b16 %v30
  %v133 = vunpack.c.l.b16 %v31
  %v134 = vunpack.c.l.b16 %v32
  %v135 = vunpack.c.l.b16 %v33
  %v136 = vunpack.c.l.b16 %v34
  %v137 = vunpack.c.l.b16 %v35
  %v138 = vunpack.c.l.b16 %v36
  %v139 = vunpack.c.l.b16 %v37
  %v140 = vunpack.c.l.b16 %v38
  %v141 = vunpack.c.l.b16 %v39
  %v142 = vunpack.c.l.b16 %v40
  %v143 = vunpack.c.l.b16 %v41
  %v144 = vunpack.c.l.b16 %v42
  %v145 = vunpack.c.l.b16 %v43
  %v146 = vunpack.c.l.b16 %v44
  %v147 = vunpack.c.l.b16 %v45
  %v148 = vunpack.c.l.b16 %v46
  %v149 = vunpack.c.l.b16 %v47
  %v150 = vunpack.c.l.b16 %v48
  %v151 = vunpack.c.l.b16 %v49
  %v152 = vunpack.c.l.b16 %v50
  %v153 = vunpack.c.l.b16 %v51
  %v154 = vunpack.c.l.b16 %v52
  %v155 = vunpack.c.l.b16 %v53
  %v156 = vunpack.c.l.b16 %v54
  %v157 = vunpack.c.l.b16 %v55
  %v158 = vunpack.c.l.b16 %v56
  %v159 = vunpack.c.l.b16 %v57
  %v160 = vunpack.c.l.b16 %v58
  %v161 = vunpack.c.l.b16 %v59
  %v162 = vunpack.c.l.b16 %v60
  %v163 = vunpack.c.l.b16 %v61
  %v164 = vpack.c.b16 %v129, %v128
  %v165 = vpack.c.b16 %v131, %v130
  %v166 = vpack.c.b16 %v133, %v132
  %v167 = vpack.c.b16 %v135, %v134
  %v168 = vpack.c.b16 %v137, %v136
  %v169 = vpack.c.b16 %v139, %v138
  %v170 = vpack.c.b16 %v141, %v140
  %v171 = vpack.c.b16 %v143, %v142
  %v172 = vpack.c.b16 %v145, %v144
  %v173 = vpack.c.b16 %v147, %v146
  %v174 = vpack.c.b16 %v149, %v148
  %v175 = vpack.c.b16 %v151, %v150
  %v176 = vpack.c.b16 %v153, %v152
  %v177 = vpack.c.b16 %v155, %v154
  %v178 = vpack.c.b16 %v157, %v156
  %v179 = vpack.c.b16 %v159, %v158
  %v180 = vpack.c.b16 %v161, %v160
  %v181 = vpack.c.b16 %v163, %v162
  %vm200 = vcmask 261120
  %v202 = vsel %vm200, %v84, 0
  %v205 = vsel %vm200, %v87, 0
  %207 = vmatprep.subr.bf16.mxu0 0
  %208 = vmatpush1.bf16.msra.mxu0 %v164
  %209 = vmatprep.subr.bf16.mxu0 0
  %210 = vmatpush1.bf16.msra.mxu0 %v165
  %211 = vmatprep.subr.bf16.mxu0 0
  %212 = vmatpush1.bf16.msra.mxu0 %v166
  %213 = vmatprep.subr.bf16.mxu0 0
  %214 = vmatpush1.bf16.msra.mxu0 %v167
  %215 = vmatprep.subr.bf16.mxu0 0
  %216 = vmatpush1.bf16.msra.mxu0 %v168
  %217 = vmatprep.subr.bf16.mxu0 0
  %218 = vmatpush1.bf16.msra.mxu0 %v169
  %219 = vmatprep.subr.bf16.mxu0 0
  %220 = vmatpush1.bf16.msra.mxu0 %v170
  %221 = vmatprep.subr.bf16.mxu0 0
  %222 = vmatpush1.bf16.msra.mxu0 %v171
  %223 = vmatprep.subr.bf16.mxu0 0
  %224 = vmatpush1.bf16.msra.mxu0 %v172
  %225 = vmatprep.subr.bf16.mxu0 0
  %226 = vmatpush1.bf16.msra.mxu0 %v173
  %227 = vmatprep.subr.bf16.mxu0 0
  %228 = vmatpush1.bf16.msra.mxu0 %v174
  %229 = vmatprep.subr.bf16.mxu0 0
  %230 = vmatpush1.bf16.msra.mxu0 %v175
  %231 = vmatprep.subr.bf16.mxu0 0
  %232 = vmatpush1.bf16.msra.mxu0 %v176
  %233 = vmatprep.subr.bf16.mxu0 0
  %234 = vmatpush1.bf16.msra.mxu0 %v177
  %235 = vmatprep.subr.bf16.mxu0 0
  %236 = vmatpush1.bf16.msra.mxu0 %v178
  %237 = vmatprep.subr.bf16.mxu0 0
  %238 = vmatpush1.bf16.msra.mxu0 %v179
  %239 = vmatprep.mubr.bf16.mxu0 %v83
  %240 = vmatmul.mubr.bf16.gmra.mrb[0].mxu0 %v82
  %v241 = vpop.f32.mrb[0].mxu0
  %v242 = vadd.f32 0.0, %v241
  %v243 = vpop.f32.mrb[0].mxu0
  %v244 = vpop.f32.mrb[0].mxu0
  %v245 = vadd.f32 0.0, %v244
  %v246 = vpop.f32.mrb[0].mxu0
  %247 = vmatprep.mubr.bf16.mxu0 %v86
  %248 = vmatmul.mubr.bf16.gmra.mrb[0].mxu0 %v85
  %v249 = vpop.f32.mrb[0].mxu0
  %v250 = vadd.f32 0.0, %v249
  %v251 = vpop.f32.mrb[0].mxu0
  %v252 = vpop.f32.mrb[0].mxu0
  %v253 = vadd.f32 0.0, %v252
  %v254 = vpop.f32.mrb[0].mxu0
  %255 = vdwg.mxu0
  %256 = vmatprep.subr.bf16.mxu0 0
  %257 = vmatpush1.bf16.msra.mxu0 %v180
  %258 = vmatprep.subr.bf16.mxu0 0
  %259 = vmatpush1.bf16.msra.mxu0 %v181
  %260 = vmatprep.subr.bf16.mxu0 0
  %261 = vmatpush1.bf16.msra.mxu0 0
  %262 = vmatprep.subr.bf16.mxu0 0
  %263 = vmatpush1.bf16.msra.mxu0 0
  %264 = vmatprep.subr.bf16.mxu0 0
  %265 = vmatpush1.bf16.msra.mxu0 0
  %266 = vmatprep.subr.bf16.mxu0 0
  %267 = vmatpush1.bf16.msra.mxu0 0
  %268 = vmatprep.subr.bf16.mxu0 0
  %269 = vmatpush1.bf16.msra.mxu0 0
  %270 = vmatprep.subr.bf16.mxu0 0
  %271 = vmatpush1.bf16.msra.mxu0 0
  %272 = vmatprep.subr.bf16.mxu0 0
  %273 = vmatpush1.bf16.msra.mxu0 0
  %274 = vmatprep.subr.bf16.mxu0 0
  %275 = vmatpush1.bf16.msra.mxu0 0
  %276 = vmatprep.subr.bf16.mxu0 0
  %277 = vmatpush1.bf16.msra.mxu0 0
  %278 = vmatprep.subr.bf16.mxu0 0
  %279 = vmatpush1.bf16.msra.mxu0 0
  %280 = vmatprep.subr.bf16.mxu0 0
  %281 = vmatpush1.bf16.msra.mxu0 0
  %282 = vmatprep.subr.bf16.mxu0 0
  %283 = vmatpush1.bf16.msra.mxu0 0
  %284 = vmatprep.subr.bf16.mxu0 0
  %285 = vmatpush1.bf16.msra.mxu0 0
  %286 = vmatprep.subr.bf16.mxu0 0
  %287 = vmatpush1.bf16.msra.mxu0 0
  %288 = vmatprep.mubr.bf16.mxu0 0
  %289 = vmatmul.mubr.bf16.gmra.mrb[0].mxu0 %v202
  %v290 = vpop.f32.mrb[0].mxu0
  %v291 = vadd.f32 %v242, %v290
  %v292 = vpop.f32.mrb[0].mxu0
  %v293 = vpop.f32.mrb[0].mxu0
  %v294 = vadd.f32 %v245, %v293
  %v295 = vpop.f32.mrb[0].mxu0
  %296 = vmatprep.mubr.bf16.mxu0 0
  %297 = vmatmul.mubr.bf16.gmra.mrb[0].mxu0 %v205
  %v298 = vpop.f32.mrb[0].mxu0
  %v299 = vadd.f32 %v250, %v298
  %v300 = vpop.f32.mrb[0].mxu0
  %v301 = vpop.f32.mrb[0].mxu0
  %v302 = vadd.f32 %v253, %v301
  %v303 = vpop.f32.mrb[0].mxu0
  %304 = vdwg.mxu0
  %v305 = vld [vmem:[%s2] sm:$0x1]
  %v307 = vlaneseq
  %v308 = vshrl.u32 %v307, 7
  %v309 = vsub.s32 0, %v308
  %v310 = vrot.slane %v305, %v309
  %v312 = vmul.f32 %v291, %v310
  %v313 = vmul.f32 %v294, %v310
  %v314 = vmul.f32 %v299, %v310
  %v315 = vmul.f32 %v302, %v310
  %v316 = vld [vmem:[%s3] sm:$0x1]
  %v318 = vlaneseq
  %v319 = vshrl.u32 %v318, 7
  %v320 = vsub.s32 0, %v319
  %v321 = vrot.slane %v316, %v320
  %v323 = vadd.f32 %v312, %v321
  %v324 = vadd.f32 %v313, %v321
  %v325 = vadd.f32 %v314, %v321
  %v326 = vadd.f32 %v315, %v321
  %v327 = vmax.f32 %v323, 0.0
  %v328 = vmax.f32 %v324, 0.0
  %v329 = vmax.f32 %v325, 0.0
  %v330 = vmax.f32 %v326, 0.0
  %331 = vst.msk [vmem:[%s4] sm:$0xff] %vm200, %v327
  %332 = vst.msk [vmem:[%s4 + $0x8] sm:$0xff] %vm200, %v328
  %333 = vst.msk [vmem:[%s4 + $0x10] sm:$0xff] %vm200, %v329
  %334 = vst.msk [vmem:[%s4 + $0x18] sm:$0xff] %vm200, %v330
  // Predicated region
  $region18: #{_lambda_.33} parent=0 // pred_check
    _
  $region19: #{_lambda_.33} parent=0 // pred_check_branch
    %336 = sbr.rel (0) target = $region21
  $region20: #{_lambda_.33} parent=0 // pred_region
    _
  $region21: #{_lambda_.33} parent=0 // pred_fallthru
    _
  // Predicated region
  $region22: #{_lambda_.33} parent=0 // pred_check
    _
  $region23: #{_lambda_.33} parent=0 // pred_check_branch
    %338 = sbr.rel (0) target = $region25
  $region24: #{_lambda_.33} parent=0 // pred_region
    _
  $region25: #{_lambda_.33} parent=0 // pred_fallthru
    _

// kernel: _lambda_.34
$region0: #{_lambda_.34}
  #allocation0 [shape = 'u32[]', space=smem, size = 0x4, offset = 0x4, fixed_abs, tag = 'smem constant byte address 0x4 - core index']
  #allocation1 [shape = 'u32[144,128]{1,0:T(1,128)}', space=vmem, size = 0x12000, scoped, tag = 'internal scratch']
  %s0 = inlined_call_operand.vmem [shape: bf16[32,32], index: 0, kind: input, shape index: {}]
  %s1 = inlined_call_operand.vmem [shape: bf16[32,128], index: 1, kind: input, shape index: {}]
  %s2 = inlined_call_operand.vmem [shape: f32[1,128], index: 2, kind: input, shape index: {}]
  %s3 = inlined_call_operand.vmem [shape: f32[1,128], index: 3, kind: input, shape index: {}]
  %s4 = inlined_call_operand.vmem [shape: f32[32,128], index: 4, kind: input, shape index: {}]
  %s5 = inlined_call_operand.vmem [shape: f32[32,128], index: 5, kind: output, shape index: {}]
  %s6 = sld [smem:[#allocation0]]
  $region30: #{_lambda_.34} parent=0
    _
  %s8 = ssub.s32 1, %s6
  %s9 = scalar_select 0, %s8, %s6
  // Predicated region
  $region2: #{_lambda_.34} parent=0 // pred_check
    _
  $region3: #{_lambda_.34} parent=0 // pred_check_branch
    %11 = sbr.rel (0) target = $region5
  $region4: #{_lambda_.34} parent=0 // pred_region
    _
  $region5: #{_lambda_.34} parent=0 // pred_fallthru
    _
  // Predicated region
  $region6: #{_lambda_.34} parent=0 // pred_check
    _
  $region7: #{_lambda_.34} parent=0 // pred_check_branch
    %13 = sbr.rel (0) target = $region9
  $region8: #{_lambda_.34} parent=0 // pred_region
    _
  $region9: #{_lambda_.34} parent=0 // pred_fallthru
    _
  // Predicated region
  $region10: #{_lambda_.34} parent=0 // pred_check
    _
  $region11: #{_lambda_.34} parent=0 // pred_check_branch
    %15 = sbr.rel (0) target = $region13
  $region12: #{_lambda_.34} parent=0 // pred_region
    _
  $region13: #{_lambda_.34} parent=0 // pred_fallthru
    _
  // Predicated region
  $region14: #{_lambda_.34} parent=0 // pred_check
    _
  $region15: #{_lambda_.34} parent=0 // pred_check_branch
    %17 = sbr.rel (0) target = $region17
  $region16: #{_lambda_.34} parent=0 // pred_region
    _
  $region17: #{_lambda_.34} parent=0 // pred_fallthru
    _
  // Predicated region
  $region18: #{_lambda_.34} parent=0 // pred_check
    _
  $region19: #{_lambda_.34} parent=0 // pred_check_branch
    %19 = sbr.rel (0) target = $region21
  $region20: #{_lambda_.34} parent=0 // pred_region
    _
  $region21: #{_lambda_.34} parent=0 // pred_fallthru
    _
  %v21 = vld [vmem:[%s0] sm:$0xf]
  %v22 = vld [vmem:[%s0 + $0x4] sm:$0xf]
  %v23 = vld [vmem:[%s0 + $0x8] sm:$0xf]
  %v24 = vld [vmem:[%s0 + $0xc] sm:$0xf]
  %v25 = vld [vmem:[%s1] sm:$0xf]
  %v26 = vld [vmem:[%s1 + $0x4] sm:$0xf]
  %v27 = vld [vmem:[%s1 + $0x8] sm:$0xf]
  %v28 = vld [vmem:[%s1 + $0xc] sm:$0xf]
  %v33 = vunpack.c.l.b16 %v21
  %v34 = vunpack.c.l.b16 %v22
  %v35 = vunpack.c.l.b16 %v23
  %v36 = vunpack.c.l.b16 %v24
  %v37 = vpack.c.b16 %v34, %v33
  %v38 = vpack.c.b16 %v36, %v35
  %v43 = vunpack.c.l.b16 %v25
  %v44 = vunpack.c.l.b16 %v26
  %v45 = vunpack.c.l.b16 %v27
  %v46 = vunpack.c.l.b16 %v28
  %v47 = vpack.c.b16 %v44, %v43
  %v48 = vpack.c.b16 %v46, %v45
  %vm51 = vcmask 261120
  %v53 = vsel %vm51, %v37, 0
  %v56 = vsel %vm51, %v38, 0
  %58 = vmatprep.subr.bf16.mxu0 0
  %59 = vmatpush1.bf16.msra.mxu0 %v47
  %60 = vmatprep.subr.bf16.mxu0 0
  %61 = vmatpush1.bf16.msra.mxu0 %v48
  %62 = vmatprep.subr.bf16.mxu0 0
  %63 = vmatpush1.bf16.msra.mxu0 0
  %64 = vmatprep.subr.bf16.mxu0 0
  %65 = vmatpush1.bf16.msra.mxu0 0
  %66 = vmatprep.subr.bf16.mxu0 0
  %67 = vmatpush1.bf16.msra.mxu0 0
  %68 = vmatprep.subr.bf16.mxu0 0
  %69 = vmatpush1.bf16.msra.mxu0 0
  %70 = vmatprep.subr.bf16.mxu0 0
  %71 = vmatpush1.bf16.msra.mxu0 0
  %72 = vmatprep.subr.bf16.mxu0 0
  %73 = vmatpush1.bf16.msra.mxu0 0
  %74 = vmatprep.subr.bf16.mxu0 0
  %75 = vmatpush1.bf16.msra.mxu0 0
  %76 = vmatprep.subr.bf16.mxu0 0
  %77 = vmatpush1.bf16.msra.mxu0 0
  %78 = vmatprep.subr.bf16.mxu0 0
  %79 = vmatpush1.bf16.msra.mxu0 0
  %80 = vmatprep.subr.bf16.mxu0 0
  %81 = vmatpush1.bf16.msra.mxu0 0
  %82 = vmatprep.subr.bf16.mxu0 0
  %83 = vmatpush1.bf16.msra.mxu0 0
  %84 = vmatprep.subr.bf16.mxu0 0
  %85 = vmatpush1.bf16.msra.mxu0 0
  %86 = vmatprep.subr.bf16.mxu0 0
  %87 = vmatpush1.bf16.msra.mxu0 0
  %88 = vmatprep.subr.bf16.mxu0 0
  %89 = vmatpush1.bf16.msra.mxu0 0
  %90 = vmatprep.mubr.bf16.mxu0 0
  %91 = vmatmul.mubr.bf16.gmra.mrb[0].mxu0 %v53
  %v92 = vpop.f32.mrb[0].mxu0
  %v93 = vadd.f32 0.0, %v92
  %v94 = vpop.f32.mrb[0].mxu0
  %v95 = vpop.f32.mrb[0].mxu0
  %v96 = vadd.f32 0.0, %v95
  %v97 = vpop.f32.mrb[0].mxu0
  %98 = vmatprep.mubr.bf16.mxu0 0
  %99 = vmatmul.mubr.bf16.gmra.mrb[0].mxu0 %v56
  %v100 = vpop.f32.mrb[0].mxu0
  %v101 = vadd.f32 0.0, %v100
  %v102 = vpop.f32.mrb[0].mxu0
  %v103 = vpop.f32.mrb[0].mxu0
  %v104 = vadd.f32 0.0, %v103
  %v105 = vpop.f32.mrb[0].mxu0
  %106 = vdwg.mxu0
  %v107 = vld [vmem:[%s2] sm:$0x1]
  %v109 = vlaneseq
  %v110 = vshrl.u32 %v109, 7
  %v111 = vsub.s32 0, %v110
  %v112 = vrot.slane %v107, %v111
  %v114 = vmul.f32 %v93, %v112
  %v115 = vmul.f32 %v96, %v112
  %v116 = vmul.f32 %v101, %v112
  %v117 = vmul.f32 %v104, %v112
  %v118 = vld [vmem:[%s3] sm:$0x1]
  %v120 = vlaneseq
  %v121 = vshrl.u32 %v120, 7
  %v122 = vsub.s32 0, %v121
  %v123 = vrot.slane %v118, %v122
  %v125 = vadd.f32 %v114, %v123
  %v126 = vadd.f32 %v115, %v123
  %v127 = vadd.f32 %v116, %v123
  %v128 = vadd.f32 %v117, %v123
  %v129 = vld [vmem:[%s4] sm:$0xff]
  %v130 = vld [vmem:[%s4 + $0x8] sm:$0xff]
  %v131 = vld [vmem:[%s4 + $0x10] sm:$0xff]
  %v132 = vld [vmem:[%s4 + $0x18] sm:$0xff]
  %v133 = vadd.f32 %v125, %v129
  %v134 = vadd.f32 %v126, %v130
  %v135 = vadd.f32 %v127, %v131
  %v136 = vadd.f32 %v128, %v132
  %v137 = vmax.f32 %v133, 0.0
  %v138 = vmax.f32 %v134, 0.0
  %v139 = vmax.f32 %v135, 0.0
  %v140 = vmax.f32 %v136, 0.0
  %141 = vst [vmem:[%s5] sm:$0xff] %v137
  %142 = vst [vmem:[%s5 + $0x8] sm:$0xff] %v138
  %143 = vst [vmem:[%s5 + $0x10] sm:$0xff] %v139
  %144 = vst [vmem:[%s5 + $0x18] sm:$0xff] %v140
  // Predicated region
  $region22: #{_lambda_.34} parent=0 // pred_check
    _
  $region23: #{_lambda_.34} parent=0 // pred_check_branch
    %146 = sbr.rel (0) target = $region25
  $region24: #{_lambda_.34} parent=0 // pred_region
    _
  $region25: #{_lambda_.34} parent=0 // pred_fallthru
    _
  // Predicated region
  $region26: #{_lambda_.34} parent=0 // pred_check
    _
  $region27: #{_lambda_.34} parent=0 // pred_check_branch
    %148 = sbr.rel (0) target = $region29
  $region28: #{_lambda_.34} parent=0 // pred_region
    _
  $region29: #{_lambda_.34} parent=0 // pred_fallthru
    _

// kernel: _lambda_.35
$region0: #{_lambda_.35}
  #allocation0 [shape = 'u32[]', space=smem, size = 0x4, offset = 0x4, fixed_abs, tag = 'smem constant byte address 0x4 - core index']
  #allocation1 [shape = 'u32[144,128]{1,0:T(1,128)}', space=vmem, size = 0x12000, scoped, tag = 'internal scratch']
  %s0 = inlined_call_operand.vmem [shape: f32[2,4,4,128], index: 0, kind: input, shape index: {}]
  %s1 = inlined_call_operand.vmem [shape: f32[2,1,1,128], index: 1, kind: output, shape index: {}]
  %s2 = sld [smem:[#allocation0]]
  $region37: #{_lambda_.35} parent=0
    _
  %s4 = ssub.s32 1, %s2
  %s5 = scalar_select 0, %s4, %s2
  loop: start=0, step=1, limit=4
  $region2: #{_lambda_.35} parent=0 // loop_pre_header
    _
  $region3: #{_lambda_.35} parent=0 // loop_header
    %s7 = sphi 0, %s11
    %p8 = scmp.ge.s32.totalorder %s7, 4
    %s17 = sphi 0, %s19
    %s20 = sphi 0, %s17
    %s21 = sphi 0, %s20
    %s37 = sphi 0, %s21
    %s43 = sphi 0, %s45
    %s46 = sphi 0, %s43
    %s47 = sphi 0, %s46
    %s63 = sphi 0, %s47
  $region4: #{_lambda_.35} parent=0 // loop_header_branch
    %10 = sbr.rel (%p8) target = $region8
  $region5: #{_lambda_.35} parent=0 // loop_body
    %s12 = ssub.s32 %s7, 1
    %s13 = ssub.s32 %s7, 2
    %s14 = sadd.s32 %s7, 1
    %s15 = ssub.s32 %s7, %s14
    %p16 = scmp.eq.s32.totalorder %s15, 0
    %s18 = sadd.s32 %s17, 1
    %s19 = scalar_select %p16, %s17, %s18
    %p22 = pneg %p16
    %p23 = scmp.eq.s32.totalorder %s7, 1
    %p24 = por %p22, %p23
    %p25 = scmp.ne.s32.totalorder %s17, %s20
    %p26 = scmp.eq.s32.totalorder %s7, 0
    %p27 = por %p25, %p26
    %p28 = scmp.ne.s32.totalorder %s17, %s20
    %p29 = scmp.eq.s32.totalorder %s12, 1
    %p30 = por %p28, %p29
    %p31 = scmp.ne.s32.totalorder %s20, %s21
    %p32 = scmp.eq.s32.totalorder %s12, 0
    %p33 = por %p31, %p32
    %p34 = scmp.ne.s32.totalorder %s20, %s21
    %p35 = scmp.eq.s32.totalorder %s13, 1
    %p36 = por %p34, %p35
    %p38 = scmp.ne.s32.totalorder %s21, %s37
    %p39 = scmp.eq.s32.totalorder %s13, 0
    %p40 = por %p38, %p39
    %s41 = ssub.s32 %s7, %s14
    %p42 = scmp.eq.s32.totalorder %s41, 0
    %s44 = sadd.s32 %s43, 1
    %s45 = scalar_select %p42, %s43, %s44
    %p48 = pneg %p42
    %p49 = scmp.eq.s32.totalorder %s7, 1
    %p50 = por %p48, %p49
    %p51 = scmp.ne.s32.totalorder %s43, %s46
    %p52 = scmp.eq.s32.totalorder %s7, 0
    %p53 = por %p51, %p52
    %p54 = scmp.ne.s32.totalorder %s43, %s46
    %p55 = scmp.eq.s32.totalorder %s12, 1
    %p56 = por %p54, %p55
    %p57 = scmp.ne.s32.totalorder %s46, %s47
    %p58 = scmp.eq.s32.totalorder %s12, 0
    %p59 = por %p57, %p58
    %p60 = scmp.ne.s32.totalorder %s46, %s47
    %p61 = scmp.eq.s32.totalorder %s13, 1
    %p62 = por %p60, %p61
    %p64 = scmp.ne.s32.totalorder %s47, %s63
    %p65 = scmp.eq.s32.totalorder %s13, 0
    %p66 = por %p64, %p65
    %p67 = scmp.le.s32.totalorder 1, %s7
    %p68 = scmp.lt.s32.totalorder %s7, 3
    %p69 = pnand %p67, %p68
    %p70 = pneg %p69
    // Predicated region
    $region9: #{_lambda_.35} parent=5 // pred_check
      _
    $region10: #{_lambda_.35} parent=5 // pred_check_branch
      %72 = sbr.rel (%p69) target = $region12
    $region11: #{_lambda_.35} parent=5 // pred_region
      %s73 = ssub.s32 %s7, 1
    $region12: #{_lambda_.35} parent=5 // pred_fallthru
      _
    %p74 = scmp.lt.s32.totalorder %s7, 2
    // Predicated region
    $region13: #{_lambda_.35} parent=5 // pred_check
      %p75 = pneg %p74
    $region14: #{_lambda_.35} parent=5 // pred_check_branch
      %77 = sbr.rel (%p75) target = $region16
    $region15: #{_lambda_.35} parent=5 // pred_region
      // Predicated region
      $region17: #{_lambda_.35} parent=15 // pred_check
        %p78 = pneg %p27
      $region18: #{_lambda_.35} parent=15 // pred_check_branch
        %80 = sbr.rel (%p78) target = $region20
      $region19: #{_lambda_.35} parent=15 // pred_region
        %p81 = scmp.lt.s32.totalorder %s7, 1
        %s82 = scalar_select %p81, %s7, 1
        %s83 = smul.addr %s82, 4
        %s84 = smul.addr %s83, 4
        %s85 = scalar_lea.vmem %s0, %s84
      $region20: #{_lambda_.35} parent=15 // pred_fallthru
        _
    $region16: #{_lambda_.35} parent=5 // pred_fallthru
      _
    %p86 = scmp.le.s32.totalorder 1, %s7
    %p87 = scmp.lt.s32.totalorder %s7, 3
    %p88 = pnand %p86, %p87
    %p89 = pneg %p88
    // Predicated region
    $region21: #{_lambda_.35} parent=5 // pred_check
      _
    $region22: #{_lambda_.35} parent=5 // pred_check_branch
      %91 = sbr.rel (%p88) target = $region24
    $region23: #{_lambda_.35} parent=5 // pred_region
      %s92 = ssub.s32 %s7, 1
      %p93 = scmp.lt.s32.totalorder %s12, 1
      %s94 = scalar_select %p93, %s12, 1
      %s95 = smul.addr %s94, 4
      %s96 = smul.addr %s95, 4
      %s97 = scalar_lea.vmem %s0, %s96
      %p98 = pneg %p33
      %p99 = pneg %p30
      %p100 = pneg %p59
      %p101 = pneg %p56
      %p102 = scmp.lt.s32.totalorder %s12, 1
      %s103 = scalar_select %p102, %s12, 1
      %s104 = scalar_lea.vmem %s1, %s103
      %p105 = scmp.lt.s32.totalorder %s12, 1
      %s106 = scalar_select %p105, %s12, 1
      %s107 = smul.addr %s106, 4
      %s108 = smul.addr %s107, 4
      %s109 = scalar_lea.vmem %s0, %s108
      %p110 = scmp.lt.s32.totalorder %s12, 1
      %s111 = scalar_select %p110, %s12, 1
      %s112 = scalar_lea.vmem %s1, %s111
      %v113 = vld [vmem:[%s109] sm:$0xf]
      %v114 = vld [vmem:[%s109 + $0x4] sm:$0xf]
      %v115 = vld [vmem:[%s109 + $0x8] sm:$0xf]
      %v116 = vld [vmem:[%s109 + $0xc] sm:$0xf]
      %vm117 = vcmask 1043456
      %v118 = vsel %vm117, %v113, 0.0
      %v119 = vsel %vm117, %v114, 0.0
      %v120 = vadd.f32 %v118, %v119
      %v121 = vsel %vm117, %v115, 0.0
      %v122 = vadd.f32 %v120, %v121
      %v123 = vsel %vm117, %v116, 0.0
      %v124 = vadd.f32 %v122, %v123
      %v125 = vsel %vm117, %v124, 0.0
      %v126 = vrot.slane %v125, 4
      %v127 = vadd.f32 %v125, %v126
      %v128 = vrot.slane %v127, 2
      %v129 = vadd.f32 %v127, %v128
      %v130 = vrot.slane %v129, 1
      %v131 = vadd.f32 %v129, %v130
      %v132 = vmul.f32 %v131, 0.0625
      %133 = vst [vmem:[%s112] sm:$0x1] %v132
      %p134 = scmp.lt.s32.totalorder %s12, 1
      %s135 = scalar_select %p134, %s12, 1
      %s136 = scalar_lea.vmem %s1, %s135
      // Predicated region
      $region25: #{_lambda_.35} parent=23 // pred_check
        %p137 = pneg %p56
      $region26: #{_lambda_.35} parent=23 // pred_check_branch
        %139 = sbr.rel (%p137) target = $region28
      $region27: #{_lambda_.35} parent=23 // pred_region
        _
      $region28: #{_lambda_.35} parent=23 // pred_fallthru
        _
    $region24: #{_lambda_.35} parent=5 // pred_fallthru
      _
    %p140 = scmp.le.s32.totalorder 2, %s7
    // Predicated region
    $region29: #{_lambda_.35} parent=5 // pred_check
      %p141 = pneg %p140
    $region30: #{_lambda_.35} parent=5 // pred_check_branch
      %143 = sbr.rel (%p141) target = $region32
    $region31: #{_lambda_.35} parent=5 // pred_region
      %s144 = ssub.s32 %s7, 2
      // Predicated region
      $region33: #{_lambda_.35} parent=31 // pred_check
        %p145 = pneg %p62
      $region34: #{_lambda_.35} parent=31 // pred_check_branch
        %147 = sbr.rel (%p145) target = $region36
      $region35: #{_lambda_.35} parent=31 // pred_region
        %p148 = scmp.lt.s32.totalorder %s13, 1
        %s149 = scalar_select %p148, %s13, 1
        %s150 = scalar_lea.vmem %s1, %s149
      $region36: #{_lambda_.35} parent=31 // pred_fallthru
        _
    $region32: #{_lambda_.35} parent=5 // pred_fallthru
      _
  $region6: #{_lambda_.35} parent=0 // loop_footer
    %s11 = sadd.s32 1, %s7
  $region7: #{_lambda_.35} parent=0 // loop_footer_branch
    %6 = sbr.rel target = $region3
  $region8: #{_lambda_.35} parent=0 // loop_exit
    _

// kernel: _lambda_.37
$region0: #{_lambda_.37}
  #allocation0 [shape = 'u32[]', space=smem, size = 0x4, offset = 0x4, fixed_abs, tag = 'smem constant byte address 0x4 - core index']
  #allocation1 [shape = 'u32[144,128]{1,0:T(1,128)}', space=vmem, size = 0x12000, scoped, tag = 'internal scratch']
  %s0 = inlined_call_operand.vmem [shape: bf16[32,128], index: 0, kind: input, shape index: {}]
  %s1 = inlined_call_operand.vmem [shape: bf16[128,128], index: 1, kind: input, shape index: {}]
  %s2 = inlined_call_operand.vmem [shape: f32[1,128], index: 2, kind: input, shape index: {}]
  %s3 = inlined_call_operand.vmem [shape: f32[1,128], index: 3, kind: input, shape index: {}]
  %s4 = inlined_call_operand.vmem [shape: f32[32,128], index: 4, kind: output, shape index: {}]
  %s5 = sld [smem:[#allocation0]]
  $region26: #{_lambda_.37} parent=0
    _
  %s7 = ssub.s32 1, %s5
  %s8 = scalar_select 0, %s7, %s5
  // Predicated region
  $region2: #{_lambda_.37} parent=0 // pred_check
    _
  $region3: #{_lambda_.37} parent=0 // pred_check_branch
    %10 = sbr.rel (0) target = $region5
  $region4: #{_lambda_.37} parent=0 // pred_region
    _
  $region5: #{_lambda_.37} parent=0 // pred_fallthru
    _
  // Predicated region
  $region6: #{_lambda_.37} parent=0 // pred_check
    _
  $region7: #{_lambda_.37} parent=0 // pred_check_branch
    %12 = sbr.rel (0) target = $region9
  $region8: #{_lambda_.37} parent=0 // pred_region
    _
  $region9: #{_lambda_.37} parent=0 // pred_fallthru
    _
  // Predicated region
  $region10: #{_lambda_.37} parent=0 // pred_check
    _
  $region11: #{_lambda_.37} parent=0 // pred_check_branch
    %14 = sbr.rel (0) target = $region13
  $region12: #{_lambda_.37} parent=0 // pred_region
    _
  $region13: #{_lambda_.37} parent=0 // pred_fallthru
    _
  // Predicated region
  $region14: #{_lambda_.37} parent=0 // pred_check
    _
  $region15: #{_lambda_.37} parent=0 // pred_check_branch
    %16 = sbr.rel (0) target = $region17
  $region16: #{_lambda_.37} parent=0 // pred_region
    _
  $region17: #{_lambda_.37} parent=0 // pred_fallthru
    _
  %v18 = vld [vmem:[%s0] sm:$0xf]
  %v19 = vld [vmem:[%s0 + $0x4] sm:$0xf]
  %v20 = vld [vmem:[%s0 + $0x8] sm:$0xf]
  %v21 = vld [vmem:[%s0 + $0xc] sm:$0xf]
  %v22 = vld [vmem:[%s1] sm:$0xf]
  %v23 = vld [vmem:[%s1 + $0x4] sm:$0xf]
  %v24 = vld [vmem:[%s1 + $0x8] sm:$0xf]
  %v25 = vld [vmem:[%s1 + $0xc] sm:$0xf]
  %v26 = vld [vmem:[%s1 + $0x10] sm:$0xf]
  %v27 = vld [vmem:[%s1 + $0x14] sm:$0xf]
  %v28 = vld [vmem:[%s1 + $0x18] sm:$0xf]
  %v29 = vld [vmem:[%s1 + $0x1c] sm:$0xf]
  %v30 = vld [vmem:[%s1 + $0x20] sm:$0xf]
  %v31 = vld [vmem:[%s1 + $0x24] sm:$0xf]
  %v32 = vld [vmem:[%s1 + $0x28] sm:$0xf]
  %v33 = vld [vmem:[%s1 + $0x2c] sm:$0xf]
  %v34 = vld [vmem:[%s1 + $0x30] sm:$0xf]
  %v35 = vld [vmem:[%s1 + $0x34] sm:$0xf]
  %v36 = vld [vmem:[%s1 + $0x38] sm:$0xf]
  %v37 = vld [vmem:[%s1 + $0x3c] sm:$0xf]
  %v42 = vunpack.c.l.b16 %v18
  %v43 = vunpack.c.l.b16 %v19
  %v44 = vunpack.c.l.b16 %v20
  %v45 = vunpack.c.l.b16 %v21
  %v46 = vpack.c.b16 %v43, %v42
  %v47 = vpack.c.b16 %v45, %v44
  %v66 = vunpack.c.l.b16 %v22
  %v67 = vunpack.c.l.b16 %v23
  %v68 = vunpack.c.l.b16 %v24
  %v69 = vunpack.c.l.b16 %v25
  %v70 = vunpack.c.l.b16 %v26
  %v71 = vunpack.c.l.b16 %v27
  %v72 = vunpack.c.l.b16 %v28
  %v73 = vunpack.c.l.b16 %v29
  %v74 = vunpack.c.l.b16 %v30
  %v75 = vunpack.c.l.b16 %v31
  %v76 = vunpack.c.l.b16 %v32
  %v77 = vunpack.c.l.b16 %v33
  %v78 = vunpack.c.l.b16 %v34
  %v79 = vunpack.c.l.b16 %v35
  %v80 = vunpack.c.l.b16 %v36
  %v81 = vunpack.c.l.b16 %v37
  %v82 = vpack.c.b16 %v67, %v66
  %v83 = vpack.c.b16 %v69, %v68
  %v84 = vpack.c.b16 %v71, %v70
  %v85 = vpack.c.b16 %v73, %v72
  %v86 = vpack.c.b16 %v75, %v74
  %v87 = vpack.c.b16 %v77, %v76
  %v88 = vpack.c.b16 %v79, %v78
  %v89 = vpack.c.b16 %v81, %v80
  %98 = vmatprep.subr.bf16.mxu0 0
  %99 = vmatpush1.bf16.msra.mxu0 %v82
  %100 = vmatprep.subr.bf16.mxu0 0
  %101 = vmatpush1.bf16.msra.mxu0 %v83
  %102 = vmatprep.subr.bf16.mxu0 0
  %103 = vmatpush1.bf16.msra.mxu0 %v84
  %104 = vmatprep.subr.bf16.mxu0 0
  %105 = vmatpush1.bf16.msra.mxu0 %v85
  %106 = vmatprep.subr.bf16.mxu0 0
  %107 = vmatpush1.bf16.msra.mxu0 %v86
  %108 = vmatprep.subr.bf16.mxu0 0
  %109 = vmatpush1.bf16.msra.mxu0 %v87
  %110 = vmatprep.subr.bf16.mxu0 0
  %111 = vmatpush1.bf16.msra.mxu0 %v88
  %112 = vmatprep.subr.bf16.mxu0 0
  %113 = vmatpush1.bf16.msra.mxu0 %v89
  %114 = vmatprep.subr.bf16.mxu0 0
  %115 = vmatpush1.bf16.msra.mxu0 0
  %116 = vmatprep.subr.bf16.mxu0 0
  %117 = vmatpush1.bf16.msra.mxu0 0
  %118 = vmatprep.subr.bf16.mxu0 0
  %119 = vmatpush1.bf16.msra.mxu0 0
  %120 = vmatprep.subr.bf16.mxu0 0
  %121 = vmatpush1.bf16.msra.mxu0 0
  %122 = vmatprep.subr.bf16.mxu0 0
  %123 = vmatpush1.bf16.msra.mxu0 0
  %124 = vmatprep.subr.bf16.mxu0 0
  %125 = vmatpush1.bf16.msra.mxu0 0
  %126 = vmatprep.subr.bf16.mxu0 0
  %127 = vmatpush1.bf16.msra.mxu0 0
  %128 = vmatprep.subr.bf16.mxu0 0
  %129 = vmatpush1.bf16.msra.mxu0 0
  %130 = vmatprep.mubr.bf16.mxu0 0
  %131 = vmatmul.mubr.bf16.gmra.mrb[0].mxu0 %v46
  %v132 = vpop.f32.mrb[0].mxu0
  %v133 = vadd.f32 0.0, %v132
  %v134 = vpop.f32.mrb[0].mxu0
  %v135 = vpop.f32.mrb[0].mxu0
  %v136 = vadd.f32 0.0, %v135
  %v137 = vpop.f32.mrb[0].mxu0
  %138 = vmatprep.mubr.bf16.mxu0 0
  %139 = vmatmul.mubr.bf16.gmra.mrb[0].mxu0 %v47
  %v140 = vpop.f32.mrb[0].mxu0
  %v141 = vadd.f32 0.0, %v140
  %v142 = vpop.f32.mrb[0].mxu0
  %v143 = vpop.f32.mrb[0].mxu0
  %v144 = vadd.f32 0.0, %v143
  %v145 = vpop.f32.mrb[0].mxu0
  %146 = vdwg.mxu0
  %v147 = vld [vmem:[%s2] sm:$0x1]
  %v149 = vlaneseq
  %v150 = vshrl.u32 %v149, 7
  %v151 = vsub.s32 0, %v150
  %v152 = vrot.slane %v147, %v151
  %v154 = vmul.f32 %v133, %v152
  %v155 = vmul.f32 %v136, %v152
  %v156 = vmul.f32 %v141, %v152
  %v157 = vmul.f32 %v144, %v152
  %v158 = vld [vmem:[%s3] sm:$0x1]
  %v160 = vlaneseq
  %v161 = vshrl.u32 %v160, 7
  %v162 = vsub.s32 0, %v161
  %v163 = vrot.slane %v158, %v162
  %v165 = vadd.f32 %v154, %v163
  %v166 = vadd.f32 %v155, %v163
  %v167 = vadd.f32 %v156, %v163
  %v168 = vadd.f32 %v157, %v163
  %v169 = vmax.f32 %v165, 0.0
  %v170 = vmax.f32 %v166, 0.0
  %v171 = vmax.f32 %v167, 0.0
  %v172 = vmax.f32 %v168, 0.0
  %173 = vst [vmem:[%s4] sm:$0xff] %v169
  %174 = vst [vmem:[%s4 + $0x8] sm:$0xff] %v170
  %175 = vst [vmem:[%s4 + $0x10] sm:$0xff] %v171
  %176 = vst [vmem:[%s4 + $0x18] sm:$0xff] %v172
  // Predicated region
  $region18: #{_lambda_.37} parent=0 // pred_check
    _
  $region19: #{_lambda_.37} parent=0 // pred_check_branch
    %178 = sbr.rel (0) target = $region21
  $region20: #{_lambda_.37} parent=0 // pred_region
    _
  $region21: #{_lambda_.37} parent=0 // pred_fallthru
    _
  // Predicated region
  $region22: #{_lambda_.37} parent=0 // pred_check
    _
  $region23: #{_lambda_.37} parent=0 // pred_check_branch
    %180 = sbr.rel (0) target = $region25
  $region24: #{_lambda_.37} parent=0 // pred_region
    _
  $region25: #{_lambda_.37} parent=0 // pred_fallthru
    _

// kernel: _lambda_.36
$region0: #{_lambda_.36}
  #allocation0 [shape = 'u32[]', space=smem, size = 0x4, offset = 0x4, fixed_abs, tag = 'smem constant byte address 0x4 - core index']
  #allocation1 [shape = 'u32[144,128]{1,0:T(1,128)}', space=vmem, size = 0x12000, scoped, tag = 'internal scratch']
  %s0 = inlined_call_operand.vmem [shape: bf16[8,128], index: 0, kind: input, shape index: {}]
  %s1 = inlined_call_operand.vmem [shape: bf16[128,128], index: 1, kind: input, shape index: {}]
  %s2 = inlined_call_operand.vmem [shape: f32[1,128], index: 2, kind: input, shape index: {}]
  %s3 = inlined_call_operand.vmem [shape: f32[1,128], index: 3, kind: input, shape index: {}]
  %s4 = inlined_call_operand.vmem [shape: f32[8,128], index: 4, kind: output, shape index: {}]
  %s5 = sld [smem:[#allocation0]]
  $region26: #{_lambda_.36} parent=0
    _
  %s7 = ssub.s32 1, %s5
  %s8 = scalar_select 0, %s7, %s5
  // Predicated region
  $region2: #{_lambda_.36} parent=0 // pred_check
    _
  $region3: #{_lambda_.36} parent=0 // pred_check_branch
    %10 = sbr.rel (0) target = $region5
  $region4: #{_lambda_.36} parent=0 // pred_region
    _
  $region5: #{_lambda_.36} parent=0 // pred_fallthru
    _
  // Predicated region
  $region6: #{_lambda_.36} parent=0 // pred_check
    _
  $region7: #{_lambda_.36} parent=0 // pred_check_branch
    %12 = sbr.rel (0) target = $region9
  $region8: #{_lambda_.36} parent=0 // pred_region
    _
  $region9: #{_lambda_.36} parent=0 // pred_fallthru
    _
  // Predicated region
  $region10: #{_lambda_.36} parent=0 // pred_check
    _
  $region11: #{_lambda_.36} parent=0 // pred_check_branch
    %14 = sbr.rel (0) target = $region13
  $region12: #{_lambda_.36} parent=0 // pred_region
    _
  $region13: #{_lambda_.36} parent=0 // pred_fallthru
    _
  // Predicated region
  $region14: #{_lambda_.36} parent=0 // pred_check
    _
  $region15: #{_lambda_.36} parent=0 // pred_check_branch
    %16 = sbr.rel (0) target = $region17
  $region16: #{_lambda_.36} parent=0 // pred_region
    _
  $region17: #{_lambda_.36} parent=0 // pred_fallthru
    _
  %v18 = vld [vmem:[%s0] sm:$0xf]
  %v19 = vld [vmem:[%s1] sm:$0xf]
  %v20 = vld [vmem:[%s1 + $0x4] sm:$0xf]
  %v21 = vld [vmem:[%s1 + $0x8] sm:$0xf]
  %v22 = vld [vmem:[%s1 + $0xc] sm:$0xf]
  %v23 = vld [vmem:[%s1 + $0x10] sm:$0xf]
  %v24 = vld [vmem:[%s1 + $0x14] sm:$0xf]
  %v25 = vld [vmem:[%s1 + $0x18] sm:$0xf]
  %v26 = vld [vmem:[%s1 + $0x1c] sm:$0xf]
  %v27 = vld [vmem:[%s1 + $0x20] sm:$0xf]
  %v28 = vld [vmem:[%s1 + $0x24] sm:$0xf]
  %v29 = vld [vmem:[%s1 + $0x28] sm:$0xf]
  %v30 = vld [vmem:[%s1 + $0x2c] sm:$0xf]
  %v31 = vld [vmem:[%s1 + $0x30] sm:$0xf]
  %v32 = vld [vmem:[%s1 + $0x34] sm:$0xf]
  %v33 = vld [vmem:[%s1 + $0x38] sm:$0xf]
  %v34 = vld [vmem:[%s1 + $0x3c] sm:$0xf]
  %v51 = vunpack.c.l.b16 %v19
  %v52 = vunpack.c.l.b16 %v20
  %v53 = vunpack.c.l.b16 %v21
  %v54 = vunpack.c.l.b16 %v22
  %v55 = vunpack.c.l.b16 %v23
  %v56 = vunpack.c.l.b16 %v24
  %v57 = vunpack.c.l.b16 %v25
  %v58 = vunpack.c.l.b16 %v26
  %v59 = vunpack.c.l.b16 %v27
  %v60 = vunpack.c.l.b16 %v28
  %v61 = vunpack.c.l.b16 %v29
  %v62 = vunpack.c.l.b16 %v30
  %v63 = vunpack.c.l.b16 %v31
  %v64 = vunpack.c.l.b16 %v32
  %v65 = vunpack.c.l.b16 %v33
  %v66 = vunpack.c.l.b16 %v34
  %v67 = vpack.c.b16 %v52, %v51
  %v68 = vpack.c.b16 %v54, %v53
  %v69 = vpack.c.b16 %v56, %v55
  %v70 = vpack.c.b16 %v58, %v57
  %v71 = vpack.c.b16 %v60, %v59
  %v72 = vpack.c.b16 %v62, %v61
  %v73 = vpack.c.b16 %v64, %v63
  %v74 = vpack.c.b16 %v66, %v65
  %83 = vmatprep.subr.bf16.mxu0 0
  %84 = vmatpush1.bf16.msra.mxu0 %v67
  %85 = vmatprep.subr.bf16.mxu0 0
  %86 = vmatpush1.bf16.msra.mxu0 %v68
  %87 = vmatprep.subr.bf16.mxu0 0
  %88 = vmatpush1.bf16.msra.mxu0 %v69
  %89 = vmatprep.subr.bf16.mxu0 0
  %90 = vmatpush1.bf16.msra.mxu0 %v70
  %91 = vmatprep.subr.bf16.mxu0 0
  %92 = vmatpush1.bf16.msra.mxu0 %v71
  %93 = vmatprep.subr.bf16.mxu0 0
  %94 = vmatpush1.bf16.msra.mxu0 %v72
  %95 = vmatprep.subr.bf16.mxu0 0
  %96 = vmatpush1.bf16.msra.mxu0 %v73
  %97 = vmatprep.subr.bf16.mxu0 0
  %98 = vmatpush1.bf16.msra.mxu0 %v74
  %99 = vmatprep.subr.bf16.mxu0 0
  %100 = vmatpush1.bf16.msra.mxu0 0
  %101 = vmatprep.subr.bf16.mxu0 0
  %102 = vmatpush1.bf16.msra.mxu0 0
  %103 = vmatprep.subr.bf16.mxu0 0
  %104 = vmatpush1.bf16.msra.mxu0 0
  %105 = vmatprep.subr.bf16.mxu0 0
  %106 = vmatpush1.bf16.msra.mxu0 0
  %107 = vmatprep.subr.bf16.mxu0 0
  %108 = vmatpush1.bf16.msra.mxu0 0
  %109 = vmatprep.subr.bf16.mxu0 0
  %110 = vmatpush1.bf16.msra.mxu0 0
  %111 = vmatprep.subr.bf16.mxu0 0
  %112 = vmatpush1.bf16.msra.mxu0 0
  %113 = vmatprep.subr.bf16.mxu0 0
  %114 = vmatpush1.bf16.msra.mxu0 0
  %115 = vmatprep.mubr.bf16.mxu0 0
  %116 = vmatmul.mubr.bf16.gmra.mrb[0].mxu0 %v18
  %v117 = vpop.f32.mrb[0].mxu0
  %v118 = vadd.f32 0.0, %v117
  %v119 = vpop.f32.mrb[0].mxu0
  %v120 = vpop.f32.mrb[0].mxu0
  %v121 = vpop.f32.mrb[0].mxu0
  %122 = vdwg.mxu0
  %v123 = vld [vmem:[%s2] sm:$0x1]
  %v125 = vlaneseq
  %v126 = vshrl.u32 %v125, 7
  %v127 = vsub.s32 0, %v126
  %v128 = vrot.slane %v123, %v127
  %v130 = vmul.f32 %v118, %v128
  %v131 = vld [vmem:[%s3] sm:$0x1]
  %v133 = vlaneseq
  %v134 = vshrl.u32 %v133, 7
  %v135 = vsub.s32 0, %v134
  %v136 = vrot.slane %v131, %v135
  %v138 = vadd.f32 %v130, %v136
  %v139 = vmax.f32 %v138, 0.0
  %140 = vst [vmem:[%s4] sm:$0xff] %v139
  // Predicated region
  $region18: #{_lambda_.36} parent=0 // pred_check
    _
  $region19: #{_lambda_.36} parent=0 // pred_check_branch
    %142 = sbr.rel (0) target = $region21
  $region20: #{_lambda_.36} parent=0 // pred_region
    _
  $region21: #{_lambda_.36} parent=0 // pred_fallthru
    _
  // Predicated region
  $region22: #{_lambda_.36} parent=0 // pred_check
    _
  $region23: #{_lambda_.36} parent=0 // pred_check_branch
    %144 = sbr.rel (0) target = $region25
  $region24: #{_lambda_.36} parent=0 // pred_region
    _
  $region25: #{_lambda_.36} parent=0 // pred_fallthru
    _

// kernel: _lambda_.38
$region0: #{_lambda_.38}
  #allocation0 [shape = 'u32[]', space=smem, size = 0x4, offset = 0x4, fixed_abs, tag = 'smem constant byte address 0x4 - core index']
  #allocation1 [shape = 'u32[144,128]{1,0:T(1,128)}', space=vmem, size = 0x12000, scoped, tag = 'internal scratch']
  %s0 = inlined_call_operand.vmem [shape: bf16[32,1152], index: 0, kind: input, shape index: {}]
  %s1 = inlined_call_operand.vmem [shape: bf16[1152,128], index: 1, kind: input, shape index: {}]
  %s2 = inlined_call_operand.vmem [shape: f32[1,128], index: 2, kind: input, shape index: {}]
  %s3 = inlined_call_operand.vmem [shape: f32[1,128], index: 3, kind: input, shape index: {}]
  %s4 = inlined_call_operand.vmem [shape: f32[32,128], index: 4, kind: output, shape index: {}]
  %s5 = sld [smem:[#allocation0]]
  $region26: #{_lambda_.38} parent=0
    _
  %s7 = ssub.s32 1, %s5
  %s8 = scalar_select 0, %s7, %s5
  // Predicated region
  $region2: #{_lambda_.38} parent=0 // pred_check
    _
  $region3: #{_lambda_.38} parent=0 // pred_check_branch
    %10 = sbr.rel (0) target = $region5
  $region4: #{_lambda_.38} parent=0 // pred_region
    _
  $region5: #{_lambda_.38} parent=0 // pred_fallthru
    _
  // Predicated region
  $region6: #{_lambda_.38} parent=0 // pred_check
    _
  $region7: #{_lambda_.38} parent=0 // pred_check_branch
    %12 = sbr.rel (0) target = $region9
  $region8: #{_lambda_.38} parent=0 // pred_region
    _
  $region9: #{_lambda_.38} parent=0 // pred_fallthru
    _
  // Predicated region
  $region10: #{_lambda_.38} parent=0 // pred_check
    _
  $region11: #{_lambda_.38} parent=0 // pred_check_branch
    %14 = sbr.rel (0) target = $region13
  $region12: #{_lambda_.38} parent=0 // pred_region
    _
  $region13: #{_lambda_.38} parent=0 // pred_fallthru
    _
  // Predicated region
  $region14: #{_lambda_.38} parent=0 // pred_check
    _
  $region15: #{_lambda_.38} parent=0 // pred_check_branch
    %16 = sbr.rel (0) target = $region17
  $region16: #{_lambda_.38} parent=0 // pred_region
    _
  $region17: #{_lambda_.38} parent=0 // pred_fallthru
    _
  %v18 = vld [vmem:[%s0] sm:$0xff]
  %v19 = vld [vmem:[%s0 + $0x8] sm:$0xff]
  %v20 = vld [vmem:[%s0 + $0x10] sm:$0xff]
  %v21 = vld [vmem:[%s0 + $0x18] sm:$0xff]
  %v22 = vld [vmem:[%s0 + $0x20] sm:$0xf]
  %v23 = vld [vmem:[%s0 + $0x24] sm:$0xff]
  %v24 = vld [vmem:[%s0 + $0x2c] sm:$0xff]
  %v25 = vld [vmem:[%s0 + $0x34] sm:$0xff]
  %v26 = vld [vmem:[%s0 + $0x3c] sm:$0xff]
  %v27 = vld [vmem:[%s0 + $0x44] sm:$0xf]
  %v28 = vld [vmem:[%s0 + $0x48] sm:$0xff]
  %v29 = vld [vmem:[%s0 + $0x50] sm:$0xff]
  %v30 = vld [vmem:[%s0 + $0x58] sm:$0xff]
  %v31 = vld [vmem:[%s0 + $0x60] sm:$0xff]
  %v32 = vld [vmem:[%s0 + $0x68] sm:$0xf]
  %v33 = vld [vmem:[%s0 + $0x6c] sm:$0xff]
  %v34 = vld [vmem:[%s0 + $0x74] sm:$0xff]
  %v35 = vld [vmem:[%s0 + $0x7c] sm:$0xff]
  %v36 = vld [vmem:[%s0 + $0x84] sm:$0xff]
  %v37 = vld [vmem:[%s0 + $0x8c] sm:$0xf]
  %v38 = vld [vmem:[%s1] sm:$0xf]
  %v39 = vld [vmem:[%s1 + $0x4] sm:$0xf]
  %v40 = vld [vmem:[%s1 + $0x8] sm:$0xf]
  %v41 = vld [vmem:[%s1 + $0xc] sm:$0xf]
  %v42 = vld [vmem:[%s1 + $0x10] sm:$0xf]
  %v43 = vld [vmem:[%s1 + $0x14] sm:$0xf]
  %v44 = vld [vmem:[%s1 + $0x18] sm:$0xf]
  %v45 = vld [vmem:[%s1 + $0x1c] sm:$0xf]
  %v46 = vld [vmem:[%s1 + $0x20] sm:$0xf]
  %v47 = vld [vmem:[%s1 + $0x24] sm:$0xf]
  %v48 = vld [vmem:[%s1 + $0x28] sm:$0xf]
  %v49 = vld [vmem:[%s1 + $0x2c] sm:$0xf]
  %v50 = vld [vmem:[%s1 + $0x30] sm:$0xf]
  %v51 = vld [vmem:[%s1 + $0x34] sm:$0xf]
  %v52 = vld [vmem:[%s1 + $0x38] sm:$0xf]
  %v53 = vld [vmem:[%s1 + $0x3c] sm:$0xf]
  %v54 = vld [vmem:[%s1 + $0x40] sm:$0xf]
  %v55 = vld [vmem:[%s1 + $0x44] sm:$0xf]
  %v56 = vld [vmem:[%s1 + $0x48] sm:$0xf]
  %v57 = vld [vmem:[%s1 + $0x4c] sm:$0xf]
  %v58 = vld [vmem:[%s1 + $0x50] sm:$0xf]
  %v59 = vld [vmem:[%s1 + $0x54] sm:$0xf]
  %v60 = vld [vmem:[%s1 + $0x58] sm:$0xf]
  %v61 = vld [vmem:[%s1 + $0x5c] sm:$0xf]
  %v62 = vld [vmem:[%s1 + $0x60] sm:$0xf]
  %v63 = vld [vmem:[%s1 + $0x64] sm:$0xf]
  %v64 = vld [vmem:[%s1 + $0x68] sm:$0xf]
  %v65 = vld [vmem:[%s1 + $0x6c] sm:$0xf]
  %v66 = vld [vmem:[%s1 + $0x70] sm:$0xf]
  %v67 = vld [vmem:[%s1 + $0x74] sm:$0xf]
  %v68 = vld [vmem:[%s1 + $0x78] sm:$0xf]
  %v69 = vld [vmem:[%s1 + $0x7c] sm:$0xf]
  %v70 = vld [vmem:[%s1 + $0x80] sm:$0xf]
  %v71 = vld [vmem:[%s1 + $0x84] sm:$0xf]
  %v72 = vld [vmem:[%s1 + $0x88] sm:$0xf]
  %v73 = vld [vmem:[%s1 + $0x8c] sm:$0xf]
  %v74 = vld [vmem:[%s1 + $0x90] sm:$0xf]
  %v75 = vld [vmem:[%s1 + $0x94] sm:$0xf]
  %v76 = vld [vmem:[%s1 + $0x98] sm:$0xf]
  %v77 = vld [vmem:[%s1 + $0x9c] sm:$0xf]
  %v78 = vld [vmem:[%s1 + $0xa0] sm:$0xf]
  %v79 = vld [vmem:[%s1 + $0xa4] sm:$0xf]
  %v80 = vld [vmem:[%s1 + $0xa8] sm:$0xf]
  %v81 = vld [vmem:[%s1 + $0xac] sm:$0xf]
  %v82 = vld [vmem:[%s1 + $0xb0] sm:$0xf]
  %v83 = vld [vmem:[%s1 + $0xb4] sm:$0xf]
  %v84 = vld [vmem:[%s1 + $0xb8] sm:$0xf]
  %v85 = vld [vmem:[%s1 + $0xbc] sm:$0xf]
  %v86 = vld [vmem:[%s1 + $0xc0] sm:$0xf]
  %v87 = vld [vmem:[%s1 + $0xc4] sm:$0xf]
  %v88 = vld [vmem:[%s1 + $0xc8] sm:$0xf]
  %v89 = vld [vmem:[%s1 + $0xcc] sm:$0xf]
  %v90 = vld [vmem:[%s1 + $0xd0] sm:$0xf]
  %v91 = vld [vmem:[%s1 + $0xd4] sm:$0xf]
  %v92 = vld [vmem:[%s1 + $0xd8] sm:$0xf]
  %v93 = vld [vmem:[%s1 + $0xdc] sm:$0xf]
  %v94 = vld [vmem:[%s1 + $0xe0] sm:$0xf]
  %v95 = vld [vmem:[%s1 + $0xe4] sm:$0xf]
  %v96 = vld [vmem:[%s1 + $0xe8] sm:$0xf]
  %v97 = vld [vmem:[%s1 + $0xec] sm:$0xf]
  %v98 = vld [vmem:[%s1 + $0xf0] sm:$0xf]
  %v99 = vld [vmem:[%s1 + $0xf4] sm:$0xf]
  %v100 = vld [vmem:[%s1 + $0xf8] sm:$0xf]
  %v101 = vld [vmem:[%s1 + $0xfc] sm:$0xf]
  %v102 = vld [vmem:[%s1 + $0x100] sm:$0xf]
  %v103 = vld [vmem:[%s1 + $0x104] sm:$0xf]
  %v104 = vld [vmem:[%s1 + $0x108] sm:$0xf]
  %v105 = vld [vmem:[%s1 + $0x10c] sm:$0xf]
  %v106 = vld [vmem:[%s1 + $0x110] sm:$0xf]
  %v107 = vld [vmem:[%s1 + $0x114] sm:$0xf]
  %v108 = vld [vmem:[%s1 + $0x118] sm:$0xf]
  %v109 = vld [vmem:[%s1 + $0x11c] sm:$0xf]
  %v110 = vld [vmem:[%s1 + $0x120] sm:$0xf]
  %v111 = vld [vmem:[%s1 + $0x124] sm:$0xf]
  %v112 = vld [vmem:[%s1 + $0x128] sm:$0xf]
  %v113 = vld [vmem:[%s1 + $0x12c] sm:$0xf]
  %v114 = vld [vmem:[%s1 + $0x130] sm:$0xf]
  %v115 = vld [vmem:[%s1 + $0x134] sm:$0xf]
  %v116 = vld [vmem:[%s1 + $0x138] sm:$0xf]
  %v117 = vld [vmem:[%s1 + $0x13c] sm:$0xf]
  %v118 = vld [vmem:[%s1 + $0x140] sm:$0xf]
  %v119 = vld [vmem:[%s1 + $0x144] sm:$0xf]
  %v120 = vld [vmem:[%s1 + $0x148] sm:$0xf]
  %v121 = vld [vmem:[%s1 + $0x14c] sm:$0xf]
  %v122 = vld [vmem:[%s1 + $0x150] sm:$0xf]
  %v123 = vld [vmem:[%s1 + $0x154] sm:$0xf]
  %v124 = vld [vmem:[%s1 + $0x158] sm:$0xf]
  %v125 = vld [vmem:[%s1 + $0x15c] sm:$0xf]
  %v126 = vld [vmem:[%s1 + $0x160] sm:$0xf]
  %v127 = vld [vmem:[%s1 + $0x164] sm:$0xf]
  %v128 = vld [vmem:[%s1 + $0x168] sm:$0xf]
  %v129 = vld [vmem:[%s1 + $0x16c] sm:$0xf]
  %v130 = vld [vmem:[%s1 + $0x170] sm:$0xf]
  %v131 = vld [vmem:[%s1 + $0x174] sm:$0xf]
  %v132 = vld [vmem:[%s1 + $0x178] sm:$0xf]
  %v133 = vld [vmem:[%s1 + $0x17c] sm:$0xf]
  %v134 = vld [vmem:[%s1 + $0x180] sm:$0xf]
  %v135 = vld [vmem:[%s1 + $0x184] sm:$0xf]
  %v136 = vld [vmem:[%s1 + $0x188] sm:$0xf]
  %v137 = vld [vmem:[%s1 + $0x18c] sm:$0xf]
  %v138 = vld [vmem:[%s1 + $0x190] sm:$0xf]
  %v139 = vld [vmem:[%s1 + $0x194] sm:$0xf]
  %v140 = vld [vmem:[%s1 + $0x198] sm:$0xf]
  %v141 = vld [vmem:[%s1 + $0x19c] sm:$0xf]
  %v142 = vld [vmem:[%s1 + $0x1a0] sm:$0xf]
  %v143 = vld [vmem:[%s1 + $0x1a4] sm:$0xf]
  %v144 = vld [vmem:[%s1 + $0x1a8] sm:$0xf]
  %v145 = vld [vmem:[%s1 + $0x1ac] sm:$0xf]
  %v146 = vld [vmem:[%s1 + $0x1b0] sm:$0xf]
  %v147 = vld [vmem:[%s1 + $0x1b4] sm:$0xf]
  %v148 = vld [vmem:[%s1 + $0x1b8] sm:$0xf]
  %v149 = vld [vmem:[%s1 + $0x1bc] sm:$0xf]
  %v150 = vld [vmem:[%s1 + $0x1c0] sm:$0xf]
  %v151 = vld [vmem:[%s1 + $0x1c4] sm:$0xf]
  %v152 = vld [vmem:[%s1 + $0x1c8] sm:$0xf]
  %v153 = vld [vmem:[%s1 + $0x1cc] sm:$0xf]
  %v154 = vld [vmem:[%s1 + $0x1d0] sm:$0xf]
  %v155 = vld [vmem:[%s1 + $0x1d4] sm:$0xf]
  %v156 = vld [vmem:[%s1 + $0x1d8] sm:$0xf]
  %v157 = vld [vmem:[%s1 + $0x1dc] sm:$0xf]
  %v158 = vld [vmem:[%s1 + $0x1e0] sm:$0xf]
  %v159 = vld [vmem:[%s1 + $0x1e4] sm:$0xf]
  %v160 = vld [vmem:[%s1 + $0x1e8] sm:$0xf]
  %v161 = vld [vmem:[%s1 + $0x1ec] sm:$0xf]
  %v162 = vld [vmem:[%s1 + $0x1f0] sm:$0xf]
  %v163 = vld [vmem:[%s1 + $0x1f4] sm:$0xf]
  %v164 = vld [vmem:[%s1 + $0x1f8] sm:$0xf]
  %v165 = vld [vmem:[%s1 + $0x1fc] sm:$0xf]
  %v166 = vld [vmem:[%s1 + $0x200] sm:$0xf]
  %v167 = vld [vmem:[%s1 + $0x204] sm:$0xf]
  %v168 = vld [vmem:[%s1 + $0x208] sm:$0xf]
  %v169 = vld [vmem:[%s1 + $0x20c] sm:$0xf]
  %v170 = vld [vmem:[%s1 + $0x210] sm:$0xf]
  %v171 = vld [vmem:[%s1 + $0x214] sm:$0xf]
  %v172 = vld [vmem:[%s1 + $0x218] sm:$0xf]
  %v173 = vld [vmem:[%s1 + $0x21c] sm:$0xf]
  %v174 = vld [vmem:[%s1 + $0x220] sm:$0xf]
  %v175 = vld [vmem:[%s1 + $0x224] sm:$0xf]
  %v176 = vld [vmem:[%s1 + $0x228] sm:$0xf]
  %v177 = vld [vmem:[%s1 + $0x22c] sm:$0xf]
  %v178 = vld [vmem:[%s1 + $0x230] sm:$0xf]
  %v179 = vld [vmem:[%s1 + $0x234] sm:$0xf]
  %v180 = vld [vmem:[%s1 + $0x238] sm:$0xf]
  %v181 = vld [vmem:[%s1 + $0x23c] sm:$0xf]
  %v202 = vunpack.c.l.b16 %v18
  %v203 = vunpack.c.h.b16 %v18
  %v204 = vunpack.c.l.b16 %v19
  %v205 = vunpack.c.h.b16 %v19
  %v206 = vunpack.c.l.b16 %v20
  %v207 = vunpack.c.h.b16 %v20
  %v208 = vunpack.c.l.b16 %v21
  %v209 = vunpack.c.h.b16 %v21
  %v210 = vunpack.c.l.b16 %v22
  %v211 = vunpack.c.l.b16 %v23
  %v212 = vunpack.c.h.b16 %v23
  %v213 = vunpack.c.l.b16 %v24
  %v214 = vunpack.c.h.b16 %v24
  %v215 = vunpack.c.l.b16 %v25
  %v216 = vunpack.c.h.b16 %v25
  %v217 = vunpack.c.l.b16 %v26
  %v218 = vunpack.c.h.b16 %v26
  %v219 = vunpack.c.l.b16 %v27
  %v220 = vunpack.c.l.b16 %v28
  %v221 = vunpack.c.h.b16 %v28
  %v222 = vunpack.c.l.b16 %v29
  %v223 = vunpack.c.h.b16 %v29
  %v224 = vunpack.c.l.b16 %v30
  %v225 = vunpack.c.h.b16 %v30
  %v226 = vunpack.c.l.b16 %v31
  %v227 = vunpack.c.h.b16 %v31
  %v228 = vunpack.c.l.b16 %v32
  %v229 = vunpack.c.l.b16 %v33
  %v230 = vunpack.c.h.b16 %v33
  %v231 = vunpack.c.l.b16 %v34
  %v232 = vunpack.c.h.b16 %v34
  %v233 = vunpack.c.l.b16 %v35
  %v234 = vunpack.c.h.b16 %v35
  %v235 = vunpack.c.l.b16 %v36
  %v236 = vunpack.c.h.b16 %v36
  %v237 = vunpack.c.l.b16 %v37
  %v238 = vpack.c.b16 %v211, %v202
  %v239 = vpack.c.b16 %v212, %v203
  %v240 = vpack.c.b16 %v213, %v204
  %v241 = vpack.c.b16 %v214, %v205
  %v242 = vpack.c.b16 %v215, %v206
  %v243 = vpack.c.b16 %v216, %v207
  %v244 = vpack.c.b16 %v217, %v208
  %v245 = vpack.c.b16 %v218, %v209
  %v246 = vpack.c.b16 %v219, %v210
  %v247 = vpack.c.b16 %v229, %v220
  %v248 = vpack.c.b16 %v230, %v221
  %v249 = vpack.c.b16 %v231, %v222
  %v250 = vpack.c.b16 %v232, %v223
  %v251 = vpack.c.b16 %v233, %v224
  %v252 = vpack.c.b16 %v234, %v225
  %v253 = vpack.c.b16 %v235, %v226
  %v254 = vpack.c.b16 %v236, %v227
  %v255 = vpack.c.b16 %v237, %v228
  %v418 = vunpack.c.l.b16 %v38
  %v419 = vunpack.c.l.b16 %v39
  %v420 = vunpack.c.l.b16 %v40
  %v421 = vunpack.c.l.b16 %v41
  %v422 = vunpack.c.l.b16 %v42
  %v423 = vunpack.c.l.b16 %v43
  %v424 = vunpack.c.l.b16 %v44
  %v425 = vunpack.c.l.b16 %v45
  %v426 = vunpack.c.l.b16 %v46
  %v427 = vunpack.c.l.b16 %v47
  %v428 = vunpack.c.l.b16 %v48
  %v429 = vunpack.c.l.b16 %v49
  %v430 = vunpack.c.l.b16 %v50
  %v431 = vunpack.c.l.b16 %v51
  %v432 = vunpack.c.l.b16 %v52
  %v433 = vunpack.c.l.b16 %v53
  %v434 = vunpack.c.l.b16 %v54
  %v435 = vunpack.c.l.b16 %v55
  %v436 = vunpack.c.l.b16 %v56
  %v437 = vunpack.c.l.b16 %v57
  %v438 = vunpack.c.l.b16 %v58
  %v439 = vunpack.c.l.b16 %v59
  %v440 = vunpack.c.l.b16 %v60
  %v441 = vunpack.c.l.b16 %v61
  %v442 = vunpack.c.l.b16 %v62
  %v443 = vunpack.c.l.b16 %v63
  %v444 = vunpack.c.l.b16 %v64
  %v445 = vunpack.c.l.b16 %v65
  %v446 = vunpack.c.l.b16 %v66
  %v447 = vunpack.c.l.b16 %v67
  %v448 = vunpack.c.l.b16 %v68
  %v449 = vunpack.c.l.b16 %v69
  %v450 = vunpack.c.l.b16 %v70
  %v451 = vunpack.c.l.b16 %v71
  %v452 = vunpack.c.l.b16 %v72
  %v453 = vunpack.c.l.b16 %v73
  %v454 = vunpack.c.l.b16 %v74
  %v455 = vunpack.c.l.b16 %v75
  %v456 = vunpack.c.l.b16 %v76
  %v457 = vunpack.c.l.b16 %v77
  %v458 = vunpack.c.l.b16 %v78
  %v459 = vunpack.c.l.b16 %v79
  %v460 = vunpack.c.l.b16 %v80
  %v461 = vunpack.c.l.b16 %v81
  %v462 = vunpack.c.l.b16 %v82
  %v463 = vunpack.c.l.b16 %v83
  %v464 = vunpack.c.l.b16 %v84
  %v465 = vunpack.c.l.b16 %v85
  %v466 = vunpack.c.l.b16 %v86
  %v467 = vunpack.c.l.b16 %v87
  %v468 = vunpack.c.l.b16 %v88
  %v469 = vunpack.c.l.b16 %v89
  %v470 = vunpack.c.l.b16 %v90
  %v471 = vunpack.c.l.b16 %v91
  %v472 = vunpack.c.l.b16 %v92
  %v473 = vunpack.c.l.b16 %v93
  %v474 = vunpack.c.l.b16 %v94
  %v475 = vunpack.c.l.b16 %v95
  %v476 = vunpack.c.l.b16 %v96
  %v477 = vunpack.c.l.b16 %v97
  %v478 = vunpack.c.l.b16 %v98
  %v479 = vunpack.c.l.b16 %v99
  %v480 = vunpack.c.l.b16 %v100
  %v481 = vunpack.c.l.b16 %v101
  %v482 = vunpack.c.l.b16 %v102
  %v483 = vunpack.c.l.b16 %v103
  %v484 = vunpack.c.l.b16 %v104
  %v485 = vunpack.c.l.b16 %v105
  %v486 = vunpack.c.l.b16 %v106
  %v487 = vunpack.c.l.b16 %v107
  %v488 = vunpack.c.l.b16 %v108
  %v489 = vunpack.c.l.b16 %v109
  %v490 = vunpack.c.l.b16 %v110
  %v491 = vunpack.c.l.b16 %v111
  %v492 = vunpack.c.l.b16 %v112
  %v493 = vunpack.c.l.b16 %v113
  %v494 = vunpack.c.l.b16 %v114
  %v495 = vunpack.c.l.b16 %v115
  %v496 = vunpack.c.l.b16 %v116
  %v497 = vunpack.c.l.b16 %v117
  %v498 = vunpack.c.l.b16 %v118
  %v499 = vunpack.c.l.b16 %v119
  %v500 = vunpack.c.l.b16 %v120
  %v501 = vunpack.c.l.b16 %v121
  %v502 = vunpack.c.l.b16 %v122
  %v503 = vunpack.c.l.b16 %v123
  %v504 = vunpack.c.l.b16 %v124
  %v505 = vunpack.c.l.b16 %v125
  %v506 = vunpack.c.l.b16 %v126
  %v507 = vunpack.c.l.b16 %v127
  %v508 = vunpack.c.l.b16 %v128
  %v509 = vunpack.c.l.b16 %v129
  %v510 = vunpack.c.l.b16 %v130
  %v511 = vunpack.c.l.b16 %v131
  %v512 = vunpack.c.l.b16 %v132
  %v513 = vunpack.c.l.b16 %v133
  %v514 = vunpack.c.l.b16 %v134
  %v515 = vunpack.c.l.b16 %v135
  %v516 = vunpack.c.l.b16 %v136
  %v517 = vunpack.c.l.b16 %v137
  %v518 = vunpack.c.l.b16 %v138
  %v519 = vunpack.c.l.b16 %v139
  %v520 = vunpack.c.l.b16 %v140
  %v521 = vunpack.c.l.b16 %v141
  %v522 = vunpack.c.l.b16 %v142
  %v523 = vunpack.c.l.b16 %v143
  %v524 = vunpack.c.l.b16 %v144
  %v525 = vunpack.c.l.b16 %v145
  %v526 = vunpack.c.l.b16 %v146
  %v527 = vunpack.c.l.b16 %v147
  %v528 = vunpack.c.l.b16 %v148
  %v529 = vunpack.c.l.b16 %v149
  %v530 = vunpack.c.l.b16 %v150
  %v531 = vunpack.c.l.b16 %v151
  %v532 = vunpack.c.l.b16 %v152
  %v533 = vunpack.c.l.b16 %v153
  %v534 = vunpack.c.l.b16 %v154
  %v535 = vunpack.c.l.b16 %v155
  %v536 = vunpack.c.l.b16 %v156
  %v537 = vunpack.c.l.b16 %v157
  %v538 = vunpack.c.l.b16 %v158
  %v539 = vunpack.c.l.b16 %v159
  %v540 = vunpack.c.l.b16 %v160
  %v541 = vunpack.c.l.b16 %v161
  %v542 = vunpack.c.l.b16 %v162
  %v543 = vunpack.c.l.b16 %v163
  %v544 = vunpack.c.l.b16 %v164
  %v545 = vunpack.c.l.b16 %v165
  %v546 = vunpack.c.l.b16 %v166
  %v547 = vunpack.c.l.b16 %v167
  %v548 = vunpack.c.l.b16 %v168
  %v549 = vunpack.c.l.b16 %v169
  %v550 = vunpack.c.l.b16 %v170
  %v551 = vunpack.c.l.b16 %v171
  %v552 = vunpack.c.l.b16 %v172
  %v553 = vunpack.c.l.b16 %v173
  %v554 = vunpack.c.l.b16 %v174
  %v555 = vunpack.c.l.b16 %v175
  %v556 = vunpack.c.l.b16 %v176
  %v557 = vunpack.c.l.b16 %v177
  %v558 = vunpack.c.l.b16 %v178
  %v559 = vunpack.c.l.b16 %v179
  %v560 = vunpack.c.l.b16 %v180
  %v561 = vunpack.c.l.b16 %v181
  %v562 = vpack.c.b16 %v419, %v418
  %v563 = vpack.c.b16 %v421, %v420
  %v564 = vpack.c.b16 %v423, %v422
  %v565 = vpack.c.b16 %v425, %v424
  %v566 = vpack.c.b16 %v427, %v426
  %v567 = vpack.c.b16 %v429, %v428
  %v568 = vpack.c.b16 %v431, %v430
  %v569 = vpack.c.b16 %v433, %v432
  %v570 = vpack.c.b16 %v435, %v434
  %v571 = vpack.c.b16 %v437, %v436
  %v572 = vpack.c.b16 %v439, %v438
  %v573 = vpack.c.b16 %v441, %v440
  %v574 = vpack.c.b16 %v443, %v442
  %v575 = vpack.c.b16 %v445, %v444
  %v576 = vpack.c.b16 %v447, %v446
  %v577 = vpack.c.b16 %v449, %v448
  %v578 = vpack.c.b16 %v451, %v450
  %v579 = vpack.c.b16 %v453, %v452
  %v580 = vpack.c.b16 %v455, %v454
  %v581 = vpack.c.b16 %v457, %v456
  %v582 = vpack.c.b16 %v459, %v458
  %v583 = vpack.c.b16 %v461, %v460
  %v584 = vpack.c.b16 %v463, %v462
  %v585 = vpack.c.b16 %v465, %v464
  %v586 = vpack.c.b16 %v467, %v466
  %v587 = vpack.c.b16 %v469, %v468
  %v588 = vpack.c.b16 %v471, %v470
  %v589 = vpack.c.b16 %v473, %v472
  %v590 = vpack.c.b16 %v475, %v474
  %v591 = vpack.c.b16 %v477, %v476
  %v592 = vpack.c.b16 %v479, %v478
  %v593 = vpack.c.b16 %v481, %v480
  %v594 = vpack.c.b16 %v483, %v482
  %v595 = vpack.c.b16 %v485, %v484
  %v596 = vpack.c.b16 %v487, %v486
  %v597 = vpack.c.b16 %v489, %v488
  %v598 = vpack.c.b16 %v491, %v490
  %v599 = vpack.c.b16 %v493, %v492
  %v600 = vpack.c.b16 %v495, %v494
  %v601 = vpack.c.b16 %v497, %v496
  %v602 = vpack.c.b16 %v499, %v498
  %v603 = vpack.c.b16 %v501, %v500
  %v604 = vpack.c.b16 %v503, %v502
  %v605 = vpack.c.b16 %v505, %v504
  %v606 = vpack.c.b16 %v507, %v506
  %v607 = vpack.c.b16 %v509, %v508
  %v608 = vpack.c.b16 %v511, %v510
  %v609 = vpack.c.b16 %v513, %v512
  %v610 = vpack.c.b16 %v515, %v514
  %v611 = vpack.c.b16 %v517, %v516
  %v612 = vpack.c.b16 %v519, %v518
  %v613 = vpack.c.b16 %v521, %v520
  %v614 = vpack.c.b16 %v523, %v522
  %v615 = vpack.c.b16 %v525, %v524
  %v616 = vpack.c.b16 %v527, %v526
  %v617 = vpack.c.b16 %v529, %v528
  %v618 = vpack.c.b16 %v531, %v530
  %v619 = vpack.c.b16 %v533, %v532
  %v620 = vpack.c.b16 %v535, %v534
  %v621 = vpack.c.b16 %v537, %v536
  %v622 = vpack.c.b16 %v539, %v538
  %v623 = vpack.c.b16 %v541, %v540
  %v624 = vpack.c.b16 %v543, %v542
  %v625 = vpack.c.b16 %v545, %v544
  %v626 = vpack.c.b16 %v547, %v546
  %v627 = vpack.c.b16 %v549, %v548
  %v628 = vpack.c.b16 %v551, %v550
  %v629 = vpack.c.b16 %v553, %v552
  %v630 = vpack.c.b16 %v555, %v554
  %v631 = vpack.c.b16 %v557, %v556
  %v632 = vpack.c.b16 %v559, %v558
  %v633 = vpack.c.b16 %v561, %v560
  %706 = vmatprep.subr.bf16.mxu0 0
  %707 = vmatpush1.bf16.msra.mxu0 %v562
  %708 = vmatprep.subr.bf16.mxu0 0
  %709 = vmatpush1.bf16.msra.mxu0 %v563
  %710 = vmatprep.subr.bf16.mxu0 0
  %711 = vmatpush1.bf16.msra.mxu0 %v564
  %712 = vmatprep.subr.bf16.mxu0 0
  %713 = vmatpush1.bf16.msra.mxu0 %v565
  %714 = vmatprep.subr.bf16.mxu0 0
  %715 = vmatpush1.bf16.msra.mxu0 %v566
  %716 = vmatprep.subr.bf16.mxu0 0
  %717 = vmatpush1.bf16.msra.mxu0 %v567
  %718 = vmatprep.subr.bf16.mxu0 0
  %719 = vmatpush1.bf16.msra.mxu0 %v568
  %720 = vmatprep.subr.bf16.mxu0 0
  %721 = vmatpush1.bf16.msra.mxu0 %v569
  %722 = vmatprep.subr.bf16.mxu0 0
  %723 = vmatpush1.bf16.msra.mxu0 %v570
  %724 = vmatprep.subr.bf16.mxu0 0
  %725 = vmatpush1.bf16.msra.mxu0 %v571
  %726 = vmatprep.subr.bf16.mxu0 0
  %727 = vmatpush1.bf16.msra.mxu0 %v572
  %728 = vmatprep.subr.bf16.mxu0 0
  %729 = vmatpush1.bf16.msra.mxu0 %v573
  %730 = vmatprep.subr.bf16.mxu0 0
  %731 = vmatpush1.bf16.msra.mxu0 %v574
  %732 = vmatprep.subr.bf16.mxu0 0
  %733 = vmatpush1.bf16.msra.mxu0 %v575
  %734 = vmatprep.subr.bf16.mxu0 0
  %735 = vmatpush1.bf16.msra.mxu0 %v576
  %736 = vmatprep.subr.bf16.mxu0 0
  %737 = vmatpush1.bf16.msra.mxu0 %v577
  %738 = vmatprep.mubr.bf16.mxu0 %v239
  %739 = vmatmul.mubr.bf16.gmra.mrb[0].mxu0 %v238
  %v740 = vpop.f32.mrb[0].mxu0
  %v741 = vadd.f32 0.0, %v740
  %v742 = vpop.f32.mrb[0].mxu0
  %v743 = vpop.f32.mrb[0].mxu0
  %v744 = vadd.f32 0.0, %v743
  %v745 = vpop.f32.mrb[0].mxu0
  %746 = vmatprep.mubr.bf16.mxu0 %v248
  %747 = vmatmul.mubr.bf16.gmra.mrb[0].mxu0 %v247
  %v748 = vpop.f32.mrb[0].mxu0
  %v749 = vadd.f32 0.0, %v748
  %v750 = vpop.f32.mrb[0].mxu0
  %v751 = vpop.f32.mrb[0].mxu0
  %v752 = vadd.f32 0.0, %v751
  %v753 = vpop.f32.mrb[0].mxu0
  %754 = vdwg.mxu0
  %755 = vmatprep.subr.bf16.mxu0 0
  %756 = vmatpush1.bf16.msra.mxu0 %v578
  %757 = vmatprep.subr.bf16.mxu0 0
  %758 = vmatpush1.bf16.msra.mxu0 %v579
  %759 = vmatprep.subr.bf16.mxu0 0
  %760 = vmatpush1.bf16.msra.mxu0 %v580
  %761 = vmatprep.subr.bf16.mxu0 0
  %762 = vmatpush1.bf16.msra.mxu0 %v581
  %763 = vmatprep.subr.bf16.mxu0 0
  %764 = vmatpush1.bf16.msra.mxu0 %v582
  %765 = vmatprep.subr.bf16.mxu0 0
  %766 = vmatpush1.bf16.msra.mxu0 %v583
  %767 = vmatprep.subr.bf16.mxu0 0
  %768 = vmatpush1.bf16.msra.mxu0 %v584
  %769 = vmatprep.subr.bf16.mxu0 0
  %770 = vmatpush1.bf16.msra.mxu0 %v585
  %771 = vmatprep.subr.bf16.mxu0 0
  %772 = vmatpush1.bf16.msra.mxu0 %v586
  %773 = vmatprep.subr.bf16.mxu0 0
  %774 = vmatpush1.bf16.msra.mxu0 %v587
  %775 = vmatprep.subr.bf16.mxu0 0
  %776 = vmatpush1.bf16.msra.mxu0 %v588
  %777 = vmatprep.subr.bf16.mxu0 0
  %778 = vmatpush1.bf16.msra.mxu0 %v589
  %779 = vmatprep.subr.bf16.mxu0 0
  %780 = vmatpush1.bf16.msra.mxu0 %v590
  %781 = vmatprep.subr.bf16.mxu0 0
  %782 = vmatpush1.bf16.msra.mxu0 %v591
  %783 = vmatprep.subr.bf16.mxu0 0
  %784 = vmatpush1.bf16.msra.mxu0 %v592
  %785 = vmatprep.subr.bf16.mxu0 0
  %786 = vmatpush1.bf16.msra.mxu0 %v593
  %787 = vmatprep.mubr.bf16.mxu0 %v241
  %788 = vmatmul.mubr.bf16.gmra.mrb[0].mxu0 %v240
  %v789 = vpop.f32.mrb[0].mxu0
  %v790 = vadd.f32 %v741, %v789
  %v791 = vpop.f32.mrb[0].mxu0
  %v792 = vpop.f32.mrb[0].mxu0
  %v793 = vadd.f32 %v744, %v792
  %v794 = vpop.f32.mrb[0].mxu0
  %795 = vmatprep.mubr.bf16.mxu0 %v250
  %796 = vmatmul.mubr.bf16.gmra.mrb[0].mxu0 %v249
  %v797 = vpop.f32.mrb[0].mxu0
  %v798 = vadd.f32 %v749, %v797
  %v799 = vpop.f32.mrb[0].mxu0
  %v800 = vpop.f32.mrb[0].mxu0
  %v801 = vadd.f32 %v752, %v800
  %v802 = vpop.f32.mrb[0].mxu0
  %803 = vdwg.mxu0
  %804 = vmatprep.subr.bf16.mxu0 0
  %805 = vmatpush1.bf16.msra.mxu0 %v594
  %806 = vmatprep.subr.bf16.mxu0 0
  %807 = vmatpush1.bf16.msra.mxu0 %v595
  %808 = vmatprep.subr.bf16.mxu0 0
  %809 = vmatpush1.bf16.msra.mxu0 %v596
  %810 = vmatprep.subr.bf16.mxu0 0
  %811 = vmatpush1.bf16.msra.mxu0 %v597
  %812 = vmatprep.subr.bf16.mxu0 0
  %813 = vmatpush1.bf16.msra.mxu0 %v598
  %814 = vmatprep.subr.bf16.mxu0 0
  %815 = vmatpush1.bf16.msra.mxu0 %v599
  %816 = vmatprep.subr.bf16.mxu0 0
  %817 = vmatpush1.bf16.msra.mxu0 %v600
  %818 = vmatprep.subr.bf16.mxu0 0
  %819 = vmatpush1.bf16.msra.mxu0 %v601
  %820 = vmatprep.subr.bf16.mxu0 0
  %821 = vmatpush1.bf16.msra.mxu0 %v602
  %822 = vmatprep.subr.bf16.mxu0 0
  %823 = vmatpush1.bf16.msra.mxu0 %v603
  %824 = vmatprep.subr.bf16.mxu0 0
  %825 = vmatpush1.bf16.msra.mxu0 %v604
  %826 = vmatprep.subr.bf16.mxu0 0
  %827 = vmatpush1.bf16.msra.mxu0 %v605
  %828 = vmatprep.subr.bf16.mxu0 0
  %829 = vmatpush1.bf16.msra.mxu0 %v606
  %830 = vmatprep.subr.bf16.mxu0 0
  %831 = vmatpush1.bf16.msra.mxu0 %v607
  %832 = vmatprep.subr.bf16.mxu0 0
  %833 = vmatpush1.bf16.msra.mxu0 %v608
  %834 = vmatprep.subr.bf16.mxu0 0
  %835 = vmatpush1.bf16.msra.mxu0 %v609
  %836 = vmatprep.mubr.bf16.mxu0 %v243
  %837 = vmatmul.mubr.bf16.gmra.mrb[0].mxu0 %v242
  %v838 = vpop.f32.mrb[0].mxu0
  %v839 = vadd.f32 %v790, %v838
  %v840 = vpop.f32.mrb[0].mxu0
  %v841 = vpop.f32.mrb[0].mxu0
  %v842 = vadd.f32 %v793, %v841
  %v843 = vpop.f32.mrb[0].mxu0
  %844 = vmatprep.mubr.bf16.mxu0 %v252
  %845 = vmatmul.mubr.bf16.gmra.mrb[0].mxu0 %v251
  %v846 = vpop.f32.mrb[0].mxu0
  %v847 = vadd.f32 %v798, %v846
  %v848 = vpop.f32.mrb[0].mxu0
  %v849 = vpop.f32.mrb[0].mxu0
  %v850 = vadd.f32 %v801, %v849
  %v851 = vpop.f32.mrb[0].mxu0
  %852 = vdwg.mxu0
  %853 = vmatprep.subr.bf16.mxu0 0
  %854 = vmatpush1.bf16.msra.mxu0 %v610
  %855 = vmatprep.subr.bf16.mxu0 0
  %856 = vmatpush1.bf16.msra.mxu0 %v611
  %857 = vmatprep.subr.bf16.mxu0 0
  %858 = vmatpush1.bf16.msra.mxu0 %v612
  %859 = vmatprep.subr.bf16.mxu0 0
  %860 = vmatpush1.bf16.msra.mxu0 %v613
  %861 = vmatprep.subr.bf16.mxu0 0
  %862 = vmatpush1.bf16.msra.mxu0 %v614
  %863 = vmatprep.subr.bf16.mxu0 0
  %864 = vmatpush1.bf16.msra.mxu0 %v615
  %865 = vmatprep.subr.bf16.mxu0 0
  %866 = vmatpush1.bf16.msra.mxu0 %v616
  %867 = vmatprep.subr.bf16.mxu0 0
  %868 = vmatpush1.bf16.msra.mxu0 %v617
  %869 = vmatprep.subr.bf16.mxu0 0
  %870 = vmatpush1.bf16.msra.mxu0 %v618
  %871 = vmatprep.subr.bf16.mxu0 0
  %872 = vmatpush1.bf16.msra.mxu0 %v619
  %873 = vmatprep.subr.bf16.mxu0 0
  %874 = vmatpush1.bf16.msra.mxu0 %v620
  %875 = vmatprep.subr.bf16.mxu0 0
  %876 = vmatpush1.bf16.msra.mxu0 %v621
  %877 = vmatprep.subr.bf16.mxu0 0
  %878 = vmatpush1.bf16.msra.mxu0 %v622
  %879 = vmatprep.subr.bf16.mxu0 0
  %880 = vmatpush1.bf16.msra.mxu0 %v623
  %881 = vmatprep.subr.bf16.mxu0 0
  %882 = vmatpush1.bf16.msra.mxu0 %v624
  %883 = vmatprep.subr.bf16.mxu0 0
  %884 = vmatpush1.bf16.msra.mxu0 %v625
  %885 = vmatprep.mubr.bf16.mxu0 %v245
  %886 = vmatmul.mubr.bf16.gmra.mrb[0].mxu0 %v244
  %v887 = vpop.f32.mrb[0].mxu0
  %v888 = vadd.f32 %v839, %v887
  %v889 = vpop.f32.mrb[0].mxu0
  %v890 = vpop.f32.mrb[0].mxu0
  %v891 = vadd.f32 %v842, %v890
  %v892 = vpop.f32.mrb[0].mxu0
  %893 = vmatprep.mubr.bf16.mxu0 %v254
  %894 = vmatmul.mubr.bf16.gmra.mrb[0].mxu0 %v253
  %v895 = vpop.f32.mrb[0].mxu0
  %v896 = vadd.f32 %v847, %v895
  %v897 = vpop.f32.mrb[0].mxu0
  %v898 = vpop.f32.mrb[0].mxu0
  %v899 = vadd.f32 %v850, %v898
  %v900 = vpop.f32.mrb[0].mxu0
  %901 = vdwg.mxu0
  %902 = vmatprep.subr.bf16.mxu0 0
  %903 = vmatpush1.bf16.msra.mxu0 %v626
  %904 = vmatprep.subr.bf16.mxu0 0
  %905 = vmatpush1.bf16.msra.mxu0 %v627
  %906 = vmatprep.subr.bf16.mxu0 0
  %907 = vmatpush1.bf16.msra.mxu0 %v628
  %908 = vmatprep.subr.bf16.mxu0 0
  %909 = vmatpush1.bf16.msra.mxu0 %v629
  %910 = vmatprep.subr.bf16.mxu0 0
  %911 = vmatpush1.bf16.msra.mxu0 %v630
  %912 = vmatprep.subr.bf16.mxu0 0
  %913 = vmatpush1.bf16.msra.mxu0 %v631
  %914 = vmatprep.subr.bf16.mxu0 0
  %915 = vmatpush1.bf16.msra.mxu0 %v632
  %916 = vmatprep.subr.bf16.mxu0 0
  %917 = vmatpush1.bf16.msra.mxu0 %v633
  %918 = vmatprep.subr.bf16.mxu0 0
  %919 = vmatpush1.bf16.msra.mxu0 0
  %920 = vmatprep.subr.bf16.mxu0 0
  %921 = vmatpush1.bf16.msra.mxu0 0
  %922 = vmatprep.subr.bf16.mxu0 0
  %923 = vmatpush1.bf16.msra.mxu0 0
  %924 = vmatprep.subr.bf16.mxu0 0
  %925 = vmatpush1.bf16.msra.mxu0 0
  %926 = vmatprep.subr.bf16.mxu0 0
  %927 = vmatpush1.bf16.msra.mxu0 0
  %928 = vmatprep.subr.bf16.mxu0 0
  %929 = vmatpush1.bf16.msra.mxu0 0
  %930 = vmatprep.subr.bf16.mxu0 0
  %931 = vmatpush1.bf16.msra.mxu0 0
  %932 = vmatprep.subr.bf16.mxu0 0
  %933 = vmatpush1.bf16.msra.mxu0 0
  %934 = vmatprep.mubr.bf16.mxu0 0
  %935 = vmatmul.mubr.bf16.gmra.mrb[0].mxu0 %v246
  %v936 = vpop.f32.mrb[0].mxu0
  %v937 = vadd.f32 %v888, %v936
  %v938 = vpop.f32.mrb[0].mxu0
  %v939 = vpop.f32.mrb[0].mxu0
  %v940 = vadd.f32 %v891, %v939
  %v941 = vpop.f32.mrb[0].mxu0
  %942 = vmatprep.mubr.bf16.mxu0 0
  %943 = vmatmul.mubr.bf16.gmra.mrb[0].mxu0 %v255
  %v944 = vpop.f32.mrb[0].mxu0
  %v945 = vadd.f32 %v896, %v944
  %v946 = vpop.f32.mrb[0].mxu0
  %v947 = vpop.f32.mrb[0].mxu0
  %v948 = vadd.f32 %v899, %v947
  %v949 = vpop.f32.mrb[0].mxu0
  %950 = vdwg.mxu0
  %v951 = vld [vmem:[%s2] sm:$0x1]
  %v953 = vlaneseq
  %v954 = vshrl.u32 %v953, 7
  %v955 = vsub.s32 0, %v954
  %v956 = vrot.slane %v951, %v955
  %v958 = vmul.f32 %v937, %v956
  %v959 = vmul.f32 %v940, %v956
  %v960 = vmul.f32 %v945, %v956
  %v961 = vmul.f32 %v948, %v956
  %v962 = vld [vmem:[%s3] sm:$0x1]
  %v964 = vlaneseq
  %v965 = vshrl.u32 %v964, 7
  %v966 = vsub.s32 0, %v965
  %v967 = vrot.slane %v962, %v966
  %v969 = vadd.f32 %v958, %v967
  %v970 = vadd.f32 %v959, %v967
  %v971 = vadd.f32 %v960, %v967
  %v972 = vadd.f32 %v961, %v967
  %v973 = vmax.f32 %v969, 0.0
  %v974 = vmax.f32 %v970, 0.0
  %v975 = vmax.f32 %v971, 0.0
  %v976 = vmax.f32 %v972, 0.0
  %977 = vst [vmem:[%s4] sm:$0xff] %v973
  %978 = vst [vmem:[%s4 + $0x8] sm:$0xff] %v974
  %979 = vst [vmem:[%s4 + $0x10] sm:$0xff] %v975
  %980 = vst [vmem:[%s4 + $0x18] sm:$0xff] %v976
  // Predicated region
  $region18: #{_lambda_.38} parent=0 // pred_check
    _
  $region19: #{_lambda_.38} parent=0 // pred_check_branch
    %982 = sbr.rel (0) target = $region21
  $region20: #{_lambda_.38} parent=0 // pred_region
    _
  $region21: #{_lambda_.38} parent=0 // pred_fallthru
    _
  // Predicated region
  $region22: #{_lambda_.38} parent=0 // pred_check
    _
  $region23: #{_lambda_.38} parent=0 // pred_check_branch
    %984 = sbr.rel (0) target = $region25
  $region24: #{_lambda_.38} parent=0 // pred_region
    _
  $region25: #{_lambda_.38} parent=0 // pred_fallthru
    _

// kernel: _lambda_.41
$region0: #{_lambda_.41}
  #allocation0 [shape = 'u32[]', space=smem, size = 0x4, offset = 0x4, fixed_abs, tag = 'smem constant byte address 0x4 - core index']
  #allocation1 [shape = 'u32[144,128]{1,0:T(1,128)}', space=vmem, size = 0x12000, scoped, tag = 'internal scratch']
  %s0 = inlined_call_operand.vmem [shape: bf16[32,128], index: 0, kind: input, shape index: {}]
  %s1 = inlined_call_operand.vmem [shape: bf16[32,128], index: 1, kind: input, shape index: {}]
  %s2 = inlined_call_operand.vmem [shape: bf16[32,128], index: 2, kind: input, shape index: {}]
  %s3 = inlined_call_operand.vmem [shape: bf16[32,128], index: 3, kind: input, shape index: {}]
  %s4 = inlined_call_operand.vmem [shape: bf16[32,128], index: 4, kind: input, shape index: {}]
  %s5 = inlined_call_operand.vmem [shape: bf16[128,128], index: 5, kind: input, shape index: {}]
  %s6 = inlined_call_operand.vmem [shape: bf16[128,128], index: 6, kind: input, shape index: {}]
  %s7 = inlined_call_operand.vmem [shape: bf16[128,128], index: 7, kind: input, shape index: {}]
  %s8 = inlined_call_operand.vmem [shape: bf16[128,128], index: 8, kind: input, shape index: {}]
  %s9 = inlined_call_operand.vmem [shape: bf16[128,128], index: 9, kind: input, shape index: {}]
  %s10 = inlined_call_operand.vmem [shape: f32[1,128], index: 10, kind: input, shape index: {}]
  %s11 = inlined_call_operand.vmem [shape: f32[1,128], index: 11, kind: input, shape index: {}]
  %s12 = inlined_call_operand.hbm [shape: f32[32,128], index: 12, kind: output, shape index: {}]
  %s13 = sld [smem:[#allocation0]]
  $region58: #{_lambda_.41} parent=0
    _
  %s15 = ssub.s32 1, %s13
  %s16 = scalar_select 0, %s15, %s13
  $region1: #{_lambda_.41} parent=0
    #allocation2 [shape = 'u8[16384]{0}', space=vmem, size = 0x4000, scoped, tag = 'output window, operand 0, single buffered']
    #allocation3 [shape = 's32[1]{0}', space=sflag, size = 0x4, scoped, tag = 'scoped memory for _lambda_.41']
    %17 = vsyncpa [#allocation3], 0
    // Predicated region
    $region2: #{_lambda_.41} parent=1 // pred_check
      _
    $region3: #{_lambda_.41} parent=1 // pred_check_branch
      %19 = sbr.rel (0) target = $region5
    $region4: #{_lambda_.41} parent=1 // pred_region
      _
    $region5: #{_lambda_.41} parent=1 // pred_fallthru
      _
    // Predicated region
    $region6: #{_lambda_.41} parent=1 // pred_check
      _
    $region7: #{_lambda_.41} parent=1 // pred_check_branch
      %21 = sbr.rel (0) target = $region9
    $region8: #{_lambda_.41} parent=1 // pred_region
      _
    $region9: #{_lambda_.41} parent=1 // pred_fallthru
      _
    // Predicated region
    $region10: #{_lambda_.41} parent=1 // pred_check
      _
    $region11: #{_lambda_.41} parent=1 // pred_check_branch
      %23 = sbr.rel (0) target = $region13
    $region12: #{_lambda_.41} parent=1 // pred_region
      _
    $region13: #{_lambda_.41} parent=1 // pred_fallthru
      _
    // Predicated region
    $region14: #{_lambda_.41} parent=1 // pred_check
      _
    $region15: #{_lambda_.41} parent=1 // pred_check_branch
      %25 = sbr.rel (0) target = $region17
    $region16: #{_lambda_.41} parent=1 // pred_region
      _
    $region17: #{_lambda_.41} parent=1 // pred_fallthru
      _
    // Predicated region
    $region18: #{_lambda_.41} parent=1 // pred_check
      _
    $region19: #{_lambda_.41} parent=1 // pred_check_branch
      %27 = sbr.rel (0) target = $region21
    $region20: #{_lambda_.41} parent=1 // pred_region
      _
    $region21: #{_lambda_.41} parent=1 // pred_fallthru
      _
    // Predicated region
    $region22: #{_lambda_.41} parent=1 // pred_check
      _
    $region23: #{_lambda_.41} parent=1 // pred_check_branch
      %29 = sbr.rel (0) target = $region25
    $region24: #{_lambda_.41} parent=1 // pred_region
      _
    $region25: #{_lambda_.41} parent=1 // pred_fallthru
      _
    // Predicated region
    $region26: #{_lambda_.41} parent=1 // pred_check
      _
    $region27: #{_lambda_.41} parent=1 // pred_check_branch
      %31 = sbr.rel (0) target = $region29
    $region28: #{_lambda_.41} parent=1 // pred_region
      _
    $region29: #{_lambda_.41} parent=1 // pred_fallthru
      _
    // Predicated region
    $region30: #{_lambda_.41} parent=1 // pred_check
      _
    $region31: #{_lambda_.41} parent=1 // pred_check_branch
      %33 = sbr.rel (0) target = $region33
    $region32: #{_lambda_.41} parent=1 // pred_region
      _
    $region33: #{_lambda_.41} parent=1 // pred_fallthru
      _
    // Predicated region
    $region34: #{_lambda_.41} parent=1 // pred_check
      _
    $region35: #{_lambda_.41} parent=1 // pred_check_branch
      %35 = sbr.rel (0) target = $region37
    $region36: #{_lambda_.41} parent=1 // pred_region
      _
    $region37: #{_lambda_.41} parent=1 // pred_fallthru
      _
    // Predicated region
    $region38: #{_lambda_.41} parent=1 // pred_check
      _
    $region39: #{_lambda_.41} parent=1 // pred_check_branch
      %37 = sbr.rel (0) target = $region41
    $region40: #{_lambda_.41} parent=1 // pred_region
      _
    $region41: #{_lambda_.41} parent=1 // pred_fallthru
      _
    // Predicated region
    $region42: #{_lambda_.41} parent=1 // pred_check
      _
    $region43: #{_lambda_.41} parent=1 // pred_check_branch
      %39 = sbr.rel (0) target = $region45
    $region44: #{_lambda_.41} parent=1 // pred_region
      _
    $region45: #{_lambda_.41} parent=1 // pred_fallthru
      _
    // Predicated region
    $region46: #{_lambda_.41} parent=1 // pred_check
      _
    $region47: #{_lambda_.41} parent=1 // pred_check_branch
      %41 = sbr.rel (0) target = $region49
    $region48: #{_lambda_.41} parent=1 // pred_region
      _
    $region49: #{_lambda_.41} parent=1 // pred_fallthru
      _
    %v43 = vld [vmem:[%s0] sm:$0xf]
    %v44 = vld [vmem:[%s0 + $0x4] sm:$0xf]
    %v45 = vld [vmem:[%s0 + $0x8] sm:$0xf]
    %v46 = vld [vmem:[%s0 + $0xc] sm:$0xf]
    %v47 = vld [vmem:[%s5] sm:$0xf]
    %v48 = vld [vmem:[%s5 + $0x4] sm:$0xf]
    %v49 = vld [vmem:[%s5 + $0x8] sm:$0xf]
    %v50 = vld [vmem:[%s5 + $0xc] sm:$0xf]
    %v51 = vld [vmem:[%s5 + $0x10] sm:$0xf]
    %v52 = vld [vmem:[%s5 + $0x14] sm:$0xf]
    %v53 = vld [vmem:[%s5 + $0x18] sm:$0xf]
    %v54 = vld [vmem:[%s5 + $0x1c] sm:$0xf]
    %v55 = vld [vmem:[%s5 + $0x20] sm:$0xf]
    %v56 = vld [vmem:[%s5 + $0x24] sm:$0xf]
    %v57 = vld [vmem:[%s5 + $0x28] sm:$0xf]
    %v58 = vld [vmem:[%s5 + $0x2c] sm:$0xf]
    %v59 = vld [vmem:[%s5 + $0x30] sm:$0xf]
    %v60 = vld [vmem:[%s5 + $0x34] sm:$0xf]
    %v61 = vld [vmem:[%s5 + $0x38] sm:$0xf]
    %v62 = vld [vmem:[%s5 + $0x3c] sm:$0xf]
    %v63 = vld [vmem:[%s1] sm:$0xf]
    %v64 = vld [vmem:[%s1 + $0x4] sm:$0xf]
    %v65 = vld [vmem:[%s1 + $0x8] sm:$0xf]
    %v66 = vld [vmem:[%s1 + $0xc] sm:$0xf]
    %v67 = vld [vmem:[%s6] sm:$0xf]
    %v68 = vld [vmem:[%s6 + $0x4] sm:$0xf]
    %v69 = vld [vmem:[%s6 + $0x8] sm:$0xf]
    %v70 = vld [vmem:[%s6 + $0xc] sm:$0xf]
    %v71 = vld [vmem:[%s6 + $0x10] sm:$0xf]
    %v72 = vld [vmem:[%s6 + $0x14] sm:$0xf]
    %v73 = vld [vmem:[%s6 + $0x18] sm:$0xf]
    %v74 = vld [vmem:[%s6 + $0x1c] sm:$0xf]
    %v75 = vld [vmem:[%s6 + $0x20] sm:$0xf]
    %v76 = vld [vmem:[%s6 + $0x24] sm:$0xf]
    %v77 = vld [vmem:[%s6 + $0x28] sm:$0xf]
    %v78 = vld [vmem:[%s6 + $0x2c] sm:$0xf]
    %v79 = vld [vmem:[%s6 + $0x30] sm:$0xf]
    %v80 = vld [vmem:[%s6 + $0x34] sm:$0xf]
    %v81 = vld [vmem:[%s6 + $0x38] sm:$0xf]
    %v82 = vld [vmem:[%s6 + $0x3c] sm:$0xf]
    %v87 = vunpack.c.l.b16 %v63
    %v88 = vunpack.c.l.b16 %v64
    %v89 = vunpack.c.l.b16 %v65
    %v90 = vunpack.c.l.b16 %v66
    %v91 = vpack.c.b16 %v88, %v87
    %v92 = vpack.c.b16 %v90, %v89
    %v111 = vunpack.c.l.b16 %v67
    %v112 = vunpack.c.l.b16 %v68
    %v113 = vunpack.c.l.b16 %v69
    %v114 = vunpack.c.l.b16 %v70
    %v115 = vunpack.c.l.b16 %v71
    %v116 = vunpack.c.l.b16 %v72
    %v117 = vunpack.c.l.b16 %v73
    %v118 = vunpack.c.l.b16 %v74
    %v119 = vunpack.c.l.b16 %v75
    %v120 = vunpack.c.l.b16 %v76
    %v121 = vunpack.c.l.b16 %v77
    %v122 = vunpack.c.l.b16 %v78
    %v123 = vunpack.c.l.b16 %v79
    %v124 = vunpack.c.l.b16 %v80
    %v125 = vunpack.c.l.b16 %v81
    %v126 = vunpack.c.l.b16 %v82
    %v127 = vpack.c.b16 %v112, %v111
    %v128 = vpack.c.b16 %v114, %v113
    %v129 = vpack.c.b16 %v116, %v115
    %v130 = vpack.c.b16 %v118, %v117
    %v131 = vpack.c.b16 %v120, %v119
    %v132 = vpack.c.b16 %v122, %v121
    %v133 = vpack.c.b16 %v124, %v123
    %v134 = vpack.c.b16 %v126, %v125
    %143 = vmatprep.subr.bf16.mxu0 0
    %144 = vmatpush1.bf16.msra.mxu0 %v127
    %145 = vmatprep.subr.bf16.mxu0 0
    %146 = vmatpush1.bf16.msra.mxu0 %v128
    %147 = vmatprep.subr.bf16.mxu0 0
    %148 = vmatpush1.bf16.msra.mxu0 %v129
    %149 = vmatprep.subr.bf16.mxu0 0
    %150 = vmatpush1.bf16.msra.mxu0 %v130
    %151 = vmatprep.subr.bf16.mxu0 0
    %152 = vmatpush1.bf16.msra.mxu0 %v131
    %153 = vmatprep.subr.bf16.mxu0 0
    %154 = vmatpush1.bf16.msra.mxu0 %v132
    %155 = vmatprep.subr.bf16.mxu0 0
    %156 = vmatpush1.bf16.msra.mxu0 %v133
    %157 = vmatprep.subr.bf16.mxu0 0
    %158 = vmatpush1.bf16.msra.mxu0 %v134
    %159 = vmatprep.subr.bf16.mxu0 0
    %160 = vmatpush1.bf16.msra.mxu0 0
    %161 = vmatprep.subr.bf16.mxu0 0
    %162 = vmatpush1.bf16.msra.mxu0 0
    %163 = vmatprep.subr.bf16.mxu0 0
    %164 = vmatpush1.bf16.msra.mxu0 0
    %165 = vmatprep.subr.bf16.mxu0 0
    %166 = vmatpush1.bf16.msra.mxu0 0
    %167 = vmatprep.subr.bf16.mxu0 0
    %168 = vmatpush1.bf16.msra.mxu0 0
    %169 = vmatprep.subr.bf16.mxu0 0
    %170 = vmatpush1.bf16.msra.mxu0 0
    %171 = vmatprep.subr.bf16.mxu0 0
    %172 = vmatpush1.bf16.msra.mxu0 0
    %173 = vmatprep.subr.bf16.mxu0 0
    %174 = vmatpush1.bf16.msra.mxu0 0
    %175 = vmatprep.mubr.bf16.mxu0 0
    %176 = vmatmul.mubr.bf16.gmra.mrb[0].mxu0 %v91
    %v177 = vpop.f32.mrb[0].mxu0
    %v178 = vadd.f32 0.0, %v177
    %v179 = vpop.f32.mrb[0].mxu0
    %v180 = vpop.f32.mrb[0].mxu0
    %v181 = vadd.f32 0.0, %v180
    %v182 = vpop.f32.mrb[0].mxu0
    %183 = vmatprep.mubr.bf16.mxu0 0
    %184 = vmatmul.mubr.bf16.gmra.mrb[0].mxu0 %v92
    %v185 = vpop.f32.mrb[0].mxu0
    %v186 = vadd.f32 0.0, %v185
    %v187 = vpop.f32.mrb[0].mxu0
    %v188 = vpop.f32.mrb[0].mxu0
    %v189 = vadd.f32 0.0, %v188
    %v190 = vpop.f32.mrb[0].mxu0
    %191 = vdwg.mxu0
    %v196 = vunpack.c.l.b16 %v43
    %v197 = vunpack.c.l.b16 %v44
    %v198 = vunpack.c.l.b16 %v45
    %v199 = vunpack.c.l.b16 %v46
    %v200 = vpack.c.b16 %v197, %v196
    %v201 = vpack.c.b16 %v199, %v198
    %v220 = vunpack.c.l.b16 %v47
    %v221 = vunpack.c.l.b16 %v48
    %v222 = vunpack.c.l.b16 %v49
    %v223 = vunpack.c.l.b16 %v50
    %v224 = vunpack.c.l.b16 %v51
    %v225 = vunpack.c.l.b16 %v52
    %v226 = vunpack.c.l.b16 %v53
    %v227 = vunpack.c.l.b16 %v54
    %v228 = vunpack.c.l.b16 %v55
    %v229 = vunpack.c.l.b16 %v56
    %v230 = vunpack.c.l.b16 %v57
    %v231 = vunpack.c.l.b16 %v58
    %v232 = vunpack.c.l.b16 %v59
    %v233 = vunpack.c.l.b16 %v60
    %v234 = vunpack.c.l.b16 %v61
    %v235 = vunpack.c.l.b16 %v62
    %v236 = vpack.c.b16 %v221, %v220
    %v237 = vpack.c.b16 %v223, %v222
    %v238 = vpack.c.b16 %v225, %v224
    %v239 = vpack.c.b16 %v227, %v226
    %v240 = vpack.c.b16 %v229, %v228
    %v241 = vpack.c.b16 %v231, %v230
    %v242 = vpack.c.b16 %v233, %v232
    %v243 = vpack.c.b16 %v235, %v234
    %252 = vmatprep.subr.bf16.mxu0 0
    %253 = vmatpush1.bf16.msra.mxu0 %v236
    %254 = vmatprep.subr.bf16.mxu0 0
    %255 = vmatpush1.bf16.msra.mxu0 %v237
    %256 = vmatprep.subr.bf16.mxu0 0
    %257 = vmatpush1.bf16.msra.mxu0 %v238
    %258 = vmatprep.subr.bf16.mxu0 0
    %259 = vmatpush1.bf16.msra.mxu0 %v239
    %260 = vmatprep.subr.bf16.mxu0 0
    %261 = vmatpush1.bf16.msra.mxu0 %v240
    %262 = vmatprep.subr.bf16.mxu0 0
    %263 = vmatpush1.bf16.msra.mxu0 %v241
    %264 = vmatprep.subr.bf16.mxu0 0
    %265 = vmatpush1.bf16.msra.mxu0 %v242
    %266 = vmatprep.subr.bf16.mxu0 0
    %267 = vmatpush1.bf16.msra.mxu0 %v243
    %268 = vmatprep.subr.bf16.mxu0 0
    %269 = vmatpush1.bf16.msra.mxu0 0
    %270 = vmatprep.subr.bf16.mxu0 0
    %271 = vmatpush1.bf16.msra.mxu0 0
    %272 = vmatprep.subr.bf16.mxu0 0
    %273 = vmatpush1.bf16.msra.mxu0 0
    %274 = vmatprep.subr.bf16.mxu0 0
    %275 = vmatpush1.bf16.msra.mxu0 0
    %276 = vmatprep.subr.bf16.mxu0 0
    %277 = vmatpush1.bf16.msra.mxu0 0
    %278 = vmatprep.subr.bf16.mxu0 0
    %279 = vmatpush1.bf16.msra.mxu0 0
    %280 = vmatprep.subr.bf16.mxu0 0
    %281 = vmatpush1.bf16.msra.mxu0 0
    %282 = vmatprep.subr.bf16.mxu0 0
    %283 = vmatpush1.bf16.msra.mxu0 0
    %284 = vmatprep.mubr.bf16.mxu0 0
    %285 = vmatmul.mubr.bf16.gmra.mrb[0].mxu0 %v200
    %v286 = vpop.f32.mrb[0].mxu0
    %v287 = vadd.f32 %v178, %v286
    %v288 = vpop.f32.mrb[0].mxu0
    %v289 = vpop.f32.mrb[0].mxu0
    %v290 = vadd.f32 %v181, %v289
    %v291 = vpop.f32.mrb[0].mxu0
    %292 = vmatprep.mubr.bf16.mxu0 0
    %293 = vmatmul.mubr.bf16.gmra.mrb[0].mxu0 %v201
    %v294 = vpop.f32.mrb[0].mxu0
    %v295 = vadd.f32 %v186, %v294
    %v296 = vpop.f32.mrb[0].mxu0
    %v297 = vpop.f32.mrb[0].mxu0
    %v298 = vadd.f32 %v189, %v297
    %v299 = vpop.f32.mrb[0].mxu0
    %300 = vdwg.mxu0
    %v301 = vld [vmem:[%s2] sm:$0xf]
    %v302 = vld [vmem:[%s2 + $0x4] sm:$0xf]
    %v303 = vld [vmem:[%s2 + $0x8] sm:$0xf]
    %v304 = vld [vmem:[%s2 + $0xc] sm:$0xf]
    %v305 = vld [vmem:[%s7] sm:$0xf]
    %v306 = vld [vmem:[%s7 + $0x4] sm:$0xf]
    %v307 = vld [vmem:[%s7 + $0x8] sm:$0xf]
    %v308 = vld [vmem:[%s7 + $0xc] sm:$0xf]
    %v309 = vld [vmem:[%s7 + $0x10] sm:$0xf]
    %v310 = vld [vmem:[%s7 + $0x14] sm:$0xf]
    %v311 = vld [vmem:[%s7 + $0x18] sm:$0xf]
    %v312 = vld [vmem:[%s7 + $0x1c] sm:$0xf]
    %v313 = vld [vmem:[%s7 + $0x20] sm:$0xf]
    %v314 = vld [vmem:[%s7 + $0x24] sm:$0xf]
    %v315 = vld [vmem:[%s7 + $0x28] sm:$0xf]
    %v316 = vld [vmem:[%s7 + $0x2c] sm:$0xf]
    %v317 = vld [vmem:[%s7 + $0x30] sm:$0xf]
    %v318 = vld [vmem:[%s7 + $0x34] sm:$0xf]
    %v319 = vld [vmem:[%s7 + $0x38] sm:$0xf]
    %v320 = vld [vmem:[%s7 + $0x3c] sm:$0xf]
    %v325 = vunpack.c.l.b16 %v301
    %v326 = vunpack.c.l.b16 %v302
    %v327 = vunpack.c.l.b16 %v303
    %v328 = vunpack.c.l.b16 %v304
    %v329 = vpack.c.b16 %v326, %v325
    %v330 = vpack.c.b16 %v328, %v327
    %v349 = vunpack.c.l.b16 %v305
    %v350 = vunpack.c.l.b16 %v306
    %v351 = vunpack.c.l.b16 %v307
    %v352 = vunpack.c.l.b16 %v308
    %v353 = vunpack.c.l.b16 %v309
    %v354 = vunpack.c.l.b16 %v310
    %v355 = vunpack.c.l.b16 %v311
    %v356 = vunpack.c.l.b16 %v312
    %v357 = vunpack.c.l.b16 %v313
    %v358 = vunpack.c.l.b16 %v314
    %v359 = vunpack.c.l.b16 %v315
    %v360 = vunpack.c.l.b16 %v316
    %v361 = vunpack.c.l.b16 %v317
    %v362 = vunpack.c.l.b16 %v318
    %v363 = vunpack.c.l.b16 %v319
    %v364 = vunpack.c.l.b16 %v320
    %v365 = vpack.c.b16 %v350, %v349
    %v366 = vpack.c.b16 %v352, %v351
    %v367 = vpack.c.b16 %v354, %v353
    %v368 = vpack.c.b16 %v356, %v355
    %v369 = vpack.c.b16 %v358, %v357
    %v370 = vpack.c.b16 %v360, %v359
    %v371 = vpack.c.b16 %v362, %v361
    %v372 = vpack.c.b16 %v364, %v363
    %381 = vmatprep.subr.bf16.mxu0 0
    %382 = vmatpush1.bf16.msra.mxu0 %v365
    %383 = vmatprep.subr.bf16.mxu0 0
    %384 = vmatpush1.bf16.msra.mxu0 %v366
    %385 = vmatprep.subr.bf16.mxu0 0
    %386 = vmatpush1.bf16.msra.mxu0 %v367
    %387 = vmatprep.subr.bf16.mxu0 0
    %388 = vmatpush1.bf16.msra.mxu0 %v368
    %389 = vmatprep.subr.bf16.mxu0 0
    %390 = vmatpush1.bf16.msra.mxu0 %v369
    %391 = vmatprep.subr.bf16.mxu0 0
    %392 = vmatpush1.bf16.msra.mxu0 %v370
    %393 = vmatprep.subr.bf16.mxu0 0
    %394 = vmatpush1.bf16.msra.mxu0 %v371
    %395 = vmatprep.subr.bf16.mxu0 0
    %396 = vmatpush1.bf16.msra.mxu0 %v372
    %397 = vmatprep.subr.bf16.mxu0 0
    %398 = vmatpush1.bf16.msra.mxu0 0
    %399 = vmatprep.subr.bf16.mxu0 0
    %400 = vmatpush1.bf16.msra.mxu0 0
    %401 = vmatprep.subr.bf16.mxu0 0
    %402 = vmatpush1.bf16.msra.mxu0 0
    %403 = vmatprep.subr.bf16.mxu0 0
    %404 = vmatpush1.bf16.msra.mxu0 0
    %405 = vmatprep.subr.bf16.mxu0 0
    %406 = vmatpush1.bf16.msra.mxu0 0
    %407 = vmatprep.subr.bf16.mxu0 0
    %408 = vmatpush1.bf16.msra.mxu0 0
    %409 = vmatprep.subr.bf16.mxu0 0
    %410 = vmatpush1.bf16.msra.mxu0 0
    %411 = vmatprep.subr.bf16.mxu0 0
    %412 = vmatpush1.bf16.msra.mxu0 0
    %413 = vmatprep.mubr.bf16.mxu0 0
    %414 = vmatmul.mubr.bf16.gmra.mrb[0].mxu0 %v329
    %v415 = vpop.f32.mrb[0].mxu0
    %v416 = vadd.f32 0.0, %v415
    %v417 = vpop.f32.mrb[0].mxu0
    %v418 = vpop.f32.mrb[0].mxu0
    %v419 = vadd.f32 0.0, %v418
    %v420 = vpop.f32.mrb[0].mxu0
    %421 = vmatprep.mubr.bf16.mxu0 0
    %422 = vmatmul.mubr.bf16.gmra.mrb[0].mxu0 %v330
    %v423 = vpop.f32.mrb[0].mxu0
    %v424 = vadd.f32 0.0, %v423
    %v425 = vpop.f32.mrb[0].mxu0
    %v426 = vpop.f32.mrb[0].mxu0
    %v427 = vadd.f32 0.0, %v426
    %v428 = vpop.f32.mrb[0].mxu0
    %429 = vdwg.mxu0
    %v430 = vadd.f32 %v287, %v416
    %v431 = vadd.f32 %v290, %v419
    %v432 = vadd.f32 %v295, %v424
    %v433 = vadd.f32 %v298, %v427
    %v434 = vld [vmem:[%s3] sm:$0xf]
    %v435 = vld [vmem:[%s3 + $0x4] sm:$0xf]
    %v436 = vld [vmem:[%s3 + $0x8] sm:$0xf]
    %v437 = vld [vmem:[%s3 + $0xc] sm:$0xf]
    %v438 = vld [vmem:[%s8] sm:$0xf]
    %v439 = vld [vmem:[%s8 + $0x4] sm:$0xf]
    %v440 = vld [vmem:[%s8 + $0x8] sm:$0xf]
    %v441 = vld [vmem:[%s8 + $0xc] sm:$0xf]
    %v442 = vld [vmem:[%s8 + $0x10] sm:$0xf]
    %v443 = vld [vmem:[%s8 + $0x14] sm:$0xf]
    %v444 = vld [vmem:[%s8 + $0x18] sm:$0xf]
    %v445 = vld [vmem:[%s8 + $0x1c] sm:$0xf]
    %v446 = vld [vmem:[%s8 + $0x20] sm:$0xf]
    %v447 = vld [vmem:[%s8 + $0x24] sm:$0xf]
    %v448 = vld [vmem:[%s8 + $0x28] sm:$0xf]
    %v449 = vld [vmem:[%s8 + $0x2c] sm:$0xf]
    %v450 = vld [vmem:[%s8 + $0x30] sm:$0xf]
    %v451 = vld [vmem:[%s8 + $0x34] sm:$0xf]
    %v452 = vld [vmem:[%s8 + $0x38] sm:$0xf]
    %v453 = vld [vmem:[%s8 + $0x3c] sm:$0xf]
    %v458 = vunpack.c.l.b16 %v434
    %v459 = vunpack.c.l.b16 %v435
    %v460 = vunpack.c.l.b16 %v436
    %v461 = vunpack.c.l.b16 %v437
    %v462 = vpack.c.b16 %v459, %v458
    %v463 = vpack.c.b16 %v461, %v460
    %v482 = vunpack.c.l.b16 %v438
    %v483 = vunpack.c.l.b16 %v439
    %v484 = vunpack.c.l.b16 %v440
    %v485 = vunpack.c.l.b16 %v441
    %v486 = vunpack.c.l.b16 %v442
    %v487 = vunpack.c.l.b16 %v443
    %v488 = vunpack.c.l.b16 %v444
    %v489 = vunpack.c.l.b16 %v445
    %v490 = vunpack.c.l.b16 %v446
    %v491 = vunpack.c.l.b16 %v447
    %v492 = vunpack.c.l.b16 %v448
    %v493 = vunpack.c.l.b16 %v449
    %v494 = vunpack.c.l.b16 %v450
    %v495 = vunpack.c.l.b16 %v451
    %v496 = vunpack.c.l.b16 %v452
    %v497 = vunpack.c.l.b16 %v453
    %v498 = vpack.c.b16 %v483, %v482
    %v499 = vpack.c.b16 %v485, %v484
    %v500 = vpack.c.b16 %v487, %v486
    %v501 = vpack.c.b16 %v489, %v488
    %v502 = vpack.c.b16 %v491, %v490
    %v503 = vpack.c.b16 %v493, %v492
    %v504 = vpack.c.b16 %v495, %v494
    %v505 = vpack.c.b16 %v497, %v496
    %514 = vmatprep.subr.bf16.mxu0 0
    %515 = vmatpush1.bf16.msra.mxu0 %v498
    %516 = vmatprep.subr.bf16.mxu0 0
    %517 = vmatpush1.bf16.msra.mxu0 %v499
    %518 = vmatprep.subr.bf16.mxu0 0
    %519 = vmatpush1.bf16.msra.mxu0 %v500
    %520 = vmatprep.subr.bf16.mxu0 0
    %521 = vmatpush1.bf16.msra.mxu0 %v501
    %522 = vmatprep.subr.bf16.mxu0 0
    %523 = vmatpush1.bf16.msra.mxu0 %v502
    %524 = vmatprep.subr.bf16.mxu0 0
    %525 = vmatpush1.bf16.msra.mxu0 %v503
    %526 = vmatprep.subr.bf16.mxu0 0
    %527 = vmatpush1.bf16.msra.mxu0 %v504
    %528 = vmatprep.subr.bf16.mxu0 0
    %529 = vmatpush1.bf16.msra.mxu0 %v505
    %530 = vmatprep.subr.bf16.mxu0 0
    %531 = vmatpush1.bf16.msra.mxu0 0
    %532 = vmatprep.subr.bf16.mxu0 0
    %533 = vmatpush1.bf16.msra.mxu0 0
    %534 = vmatprep.subr.bf16.mxu0 0
    %535 = vmatpush1.bf16.msra.mxu0 0
    %536 = vmatprep.subr.bf16.mxu0 0
    %537 = vmatpush1.bf16.msra.mxu0 0
    %538 = vmatprep.subr.bf16.mxu0 0
    %539 = vmatpush1.bf16.msra.mxu0 0
    %540 = vmatprep.subr.bf16.mxu0 0
    %541 = vmatpush1.bf16.msra.mxu0 0
    %542 = vmatprep.subr.bf16.mxu0 0
    %543 = vmatpush1.bf16.msra.mxu0 0
    %544 = vmatprep.subr.bf16.mxu0 0
    %545 = vmatpush1.bf16.msra.mxu0 0
    %546 = vmatprep.mubr.bf16.mxu0 0
    %547 = vmatmul.mubr.bf16.gmra.mrb[0].mxu0 %v462
    %v548 = vpop.f32.mrb[0].mxu0
    %v549 = vadd.f32 0.0, %v548
    %v550 = vpop.f32.mrb[0].mxu0
    %v551 = vpop.f32.mrb[0].mxu0
    %v552 = vadd.f32 0.0, %v551
    %v553 = vpop.f32.mrb[0].mxu0
    %554 = vmatprep.mubr.bf16.mxu0 0
    %555 = vmatmul.mubr.bf16.gmra.mrb[0].mxu0 %v463
    %v556 = vpop.f32.mrb[0].mxu0
    %v557 = vadd.f32 0.0, %v556
    %v558 = vpop.f32.mrb[0].mxu0
    %v559 = vpop.f32.mrb[0].mxu0
    %v560 = vadd.f32 0.0, %v559
    %v561 = vpop.f32.mrb[0].mxu0
    %562 = vdwg.mxu0
    %v563 = vadd.f32 %v430, %v549
    %v564 = vadd.f32 %v431, %v552
    %v565 = vadd.f32 %v432, %v557
    %v566 = vadd.f32 %v433, %v560
    %v567 = vld [vmem:[%s4] sm:$0xf]
    %v568 = vld [vmem:[%s4 + $0x4] sm:$0xf]
    %v569 = vld [vmem:[%s4 + $0x8] sm:$0xf]
    %v570 = vld [vmem:[%s4 + $0xc] sm:$0xf]
    %v571 = vld [vmem:[%s9] sm:$0xf]
    %v572 = vld [vmem:[%s9 + $0x4] sm:$0xf]
    %v573 = vld [vmem:[%s9 + $0x8] sm:$0xf]
    %v574 = vld [vmem:[%s9 + $0xc] sm:$0xf]
    %v575 = vld [vmem:[%s9 + $0x10] sm:$0xf]
    %v576 = vld [vmem:[%s9 + $0x14] sm:$0xf]
    %v577 = vld [vmem:[%s9 + $0x18] sm:$0xf]
    %v578 = vld [vmem:[%s9 + $0x1c] sm:$0xf]
    %v579 = vld [vmem:[%s9 + $0x20] sm:$0xf]
    %v580 = vld [vmem:[%s9 + $0x24] sm:$0xf]
    %v581 = vld [vmem:[%s9 + $0x28] sm:$0xf]
    %v582 = vld [vmem:[%s9 + $0x2c] sm:$0xf]
    %v583 = vld [vmem:[%s9 + $0x30] sm:$0xf]
    %v584 = vld [vmem:[%s9 + $0x34] sm:$0xf]
    %v585 = vld [vmem:[%s9 + $0x38] sm:$0xf]
    %v586 = vld [vmem:[%s9 + $0x3c] sm:$0xf]
    %v591 = vunpack.c.l.b16 %v567
    %v592 = vunpack.c.l.b16 %v568
    %v593 = vunpack.c.l.b16 %v569
    %v594 = vunpack.c.l.b16 %v570
    %v595 = vpack.c.b16 %v592, %v591
    %v596 = vpack.c.b16 %v594, %v593
    %v615 = vunpack.c.l.b16 %v571
    %v616 = vunpack.c.l.b16 %v572
    %v617 = vunpack.c.l.b16 %v573
    %v618 = vunpack.c.l.b16 %v574
    %v619 = vunpack.c.l.b16 %v575
    %v620 = vunpack.c.l.b16 %v576
    %v621 = vunpack.c.l.b16 %v577
    %v622 = vunpack.c.l.b16 %v578
    %v623 = vunpack.c.l.b16 %v579
    %v624 = vunpack.c.l.b16 %v580
    %v625 = vunpack.c.l.b16 %v581
    %v626 = vunpack.c.l.b16 %v582
    %v627 = vunpack.c.l.b16 %v583
    %v628 = vunpack.c.l.b16 %v584
    %v629 = vunpack.c.l.b16 %v585
    %v630 = vunpack.c.l.b16 %v586
    %v631 = vpack.c.b16 %v616, %v615
    %v632 = vpack.c.b16 %v618, %v617
    %v633 = vpack.c.b16 %v620, %v619
    %v634 = vpack.c.b16 %v622, %v621
    %v635 = vpack.c.b16 %v624, %v623
    %v636 = vpack.c.b16 %v626, %v625
    %v637 = vpack.c.b16 %v628, %v627
    %v638 = vpack.c.b16 %v630, %v629
    %647 = vmatprep.subr.bf16.mxu0 0
    %648 = vmatpush1.bf16.msra.mxu0 %v631
    %649 = vmatprep.subr.bf16.mxu0 0
    %650 = vmatpush1.bf16.msra.mxu0 %v632
    %651 = vmatprep.subr.bf16.mxu0 0
    %652 = vmatpush1.bf16.msra.mxu0 %v633
    %653 = vmatprep.subr.bf16.mxu0 0
    %654 = vmatpush1.bf16.msra.mxu0 %v634
    %655 = vmatprep.subr.bf16.mxu0 0
    %656 = vmatpush1.bf16.msra.mxu0 %v635
    %657 = vmatprep.subr.bf16.mxu0 0
    %658 = vmatpush1.bf16.msra.mxu0 %v636
    %659 = vmatprep.subr.bf16.mxu0 0
    %660 = vmatpush1.bf16.msra.mxu0 %v637
    %661 = vmatprep.subr.bf16.mxu0 0
    %662 = vmatpush1.bf16.msra.mxu0 %v638
    %663 = vmatprep.subr.bf16.mxu0 0
    %664 = vmatpush1.bf16.msra.mxu0 0
    %665 = vmatprep.subr.bf16.mxu0 0
    %666 = vmatpush1.bf16.msra.mxu0 0
    %667 = vmatprep.subr.bf16.mxu0 0
    %668 = vmatpush1.bf16.msra.mxu0 0
    %669 = vmatprep.subr.bf16.mxu0 0
    %670 = vmatpush1.bf16.msra.mxu0 0
    %671 = vmatprep.subr.bf16.mxu0 0
    %672 = vmatpush1.bf16.msra.mxu0 0
    %673 = vmatprep.subr.bf16.mxu0 0
    %674 = vmatpush1.bf16.msra.mxu0 0
    %675 = vmatprep.subr.bf16.mxu0 0
    %676 = vmatpush1.bf16.msra.mxu0 0
    %677 = vmatprep.subr.bf16.mxu0 0
    %678 = vmatpush1.bf16.msra.mxu0 0
    %679 = vmatprep.mubr.bf16.mxu0 0
    %680 = vmatmul.mubr.bf16.gmra.mrb[0].mxu0 %v595
    %v681 = vpop.f32.mrb[0].mxu0
    %v682 = vadd.f32 0.0, %v681
    %v683 = vpop.f32.mrb[0].mxu0
    %v684 = vpop.f32.mrb[0].mxu0
    %v685 = vadd.f32 0.0, %v684
    %v686 = vpop.f32.mrb[0].mxu0
    %687 = vmatprep.mubr.bf16.mxu0 0
    %688 = vmatmul.mubr.bf16.gmra.mrb[0].mxu0 %v596
    %v689 = vpop.f32.mrb[0].mxu0
    %v690 = vadd.f32 0.0, %v689
    %v691 = vpop.f32.mrb[0].mxu0
    %v692 = vpop.f32.mrb[0].mxu0
    %v693 = vadd.f32 0.0, %v692
    %v694 = vpop.f32.mrb[0].mxu0
    %695 = vdwg.mxu0
    %v696 = vadd.f32 %v563, %v682
    %v697 = vadd.f32 %v564, %v685
    %v698 = vadd.f32 %v565, %v690
    %v699 = vadd.f32 %v566, %v693
    %v700 = vld [vmem:[%s10] sm:$0x1]
    %v702 = vlaneseq
    %v703 = vshrl.u32 %v702, 7
    %v704 = vsub.s32 0, %v703
    %v705 = vrot.slane %v700, %v704
    %v707 = vmul.f32 %v696, %v705
    %v708 = vmul.f32 %v697, %v705
    %v709 = vmul.f32 %v698, %v705
    %v710 = vmul.f32 %v699, %v705
    %v711 = vld [vmem:[%s11] sm:$0x1]
    %v713 = vlaneseq
    %v714 = vshrl.u32 %v713, 7
    %v715 = vsub.s32 0, %v714
    %v716 = vrot.slane %v711, %v715
    %v718 = vadd.f32 %v707, %v716
    %v719 = vadd.f32 %v708, %v716
    %v720 = vadd.f32 %v709, %v716
    %v721 = vadd.f32 %v710, %v716
    %v722 = vmax.f32 %v718, 0.0
    %v723 = vmax.f32 %v719, 0.0
    %v724 = vmax.f32 %v720, 0.0
    %v725 = vmax.f32 %v721, 0.0
    %726 = vst [vmem:[#allocation2] sm:$0xff] %v722
    %727 = vst [vmem:[#allocation2 + $0x8] sm:$0xff] %v723
    %728 = vst [vmem:[#allocation2 + $0x10] sm:$0xff] %v724
    %729 = vst [vmem:[#allocation2 + $0x18] sm:$0xff] %v725
    // Predicated region
    $region50: #{_lambda_.41} parent=1 // pred_check
      _
    $region51: #{_lambda_.41} parent=1 // pred_check_branch
      %731 = sbr.rel (0) target = $region53
    $region52: #{_lambda_.41} parent=1 // pred_region
      %s733 = ssub.s32 512, 512
      %734 = vsyncadd [#allocation3], %s733
      %s735 = sshll.u32 [#allocation2], 4
      %s736 = int_to_ptr.vmem [resolvable:$true] %s735
      %741 = dma.vmem_to_hbm [thread:$0]  %s736, 512, %s12, [#allocation3], 128, 128, 8
    $region53: #{_lambda_.41} parent=1 // pred_fallthru
      _
    // Predicated region
    $region54: #{_lambda_.41} parent=1 // pred_check
      _
    $region55: #{_lambda_.41} parent=1 // pred_check_branch
      %743 = sbr.rel (0) target = $region57
    $region56: #{_lambda_.41} parent=1 // pred_region
      %744 = dma.done [#allocation3], 512
    $region57: #{_lambda_.41} parent=1 // pred_fallthru
      _
    %745 = vsyncpa [#allocation3], 1

</llo_original>
